<compile_context>
chip_gen: v5e
topology: v5e:2x2
jax: 0.10.0
libtpu: 0.0.40
codegen_flags: <defaults>
</compile_context>

<pallas_src>
import functools

import jax
import jax.numpy as jnp
from jax.experimental import pallas as pl
from jax.experimental.pallas import tpu as pltpu

# ---- config (DEF_CONFIG from the PyTorch module) ----------------------------
IMAGE_SIZE = 64
PATCH_SIZE = 16          # SiglipVisionConfig default
NUM_CHANNELS = 1
DMODEL = 128             # hidden_size
DINTER = 256             # intermediate_size
NHEADS = 4
DHEAD = DMODEL // NHEADS
NLAYERS = 2
NUM_PATCHES = (IMAGE_SIZE // PATCH_SIZE) ** 2        # 16 tokens per image
PATCH_DIM = NUM_CHANNELS * PATCH_SIZE * PATCH_SIZE   # 256
LN_EPS = 1e-6            # Siglip layer_norm_eps default
MARGIN = 0.2
ATTN_SCALE = DHEAD ** -0.5

# ---- packed weight-slab layouts (lane concat; all offsets 128-aligned) -------
_LAYER_MAT_LAYOUT = (("qkv_w", 3 * DMODEL), ("wo", DMODEL), ("fc1_w", DINTER))
_LAYER_VEC_LAYOUT = (("ln1_g", DMODEL), ("ln1_b", DMODEL), ("qkv_b", 3 * DMODEL),
                     ("bo", DMODEL), ("ln2_g", DMODEL), ("ln2_b", DMODEL),
                     ("fc1_b", DINTER), ("fc2_b", DMODEL))
_HEAD_MAT_LAYOUT = (("h_wq", DMODEL), ("h_kv_w", 2 * DMODEL),
                    ("h_wo", DMODEL), ("h_fc1_w", DINTER))
_WIDE_MAT_LAYOUT = (("patch_w", DMODEL), ("h_fc2_w", DMODEL))   # both have 256 input rows
_MISC_VEC_LAYOUT = (("patch_b", DMODEL), ("post_g", DMODEL), ("post_b", DMODEL),
                    ("probe", DMODEL), ("h_bq", DMODEL), ("h_kv_b", 2 * DMODEL),
                    ("h_bo", DMODEL), ("h_ln_g", DMODEL), ("h_ln_b", DMODEL),
                    ("h_fc1_b", DINTER), ("h_fc2_b", DMODEL))


def _lane_offsets(layout):
  offs, o = {}, 0
  for name, w in layout:
    offs[name] = (o, o + w)
    o += w
  return offs, o


_LM_OFF, _LM_W = _lane_offsets(_LAYER_MAT_LAYOUT)   # 768
_LV_OFF, _LV_W = _lane_offsets(_LAYER_VEC_LAYOUT)   # 1408
_HM_OFF, _HM_W = _lane_offsets(_HEAD_MAT_LAYOUT)    # 768
_WM_OFF, _WM_W = _lane_offsets(_WIDE_MAT_LAYOUT)    # 256
_MV_OFF, _MV_W = _lane_offsets(_MISC_VEC_LAYOUT)    # 1664

_SLAB_KEYS = ("layer_mats", "layer_fc2", "layer_vecs", "head_mats",
              "wide_mats", "misc_vecs", "pos_emb")


# =========================== fused Pallas kernel =============================
def _siglip_fused_kernel(
    x_ref,          # (IPS, S, PATCH_DIM)  f32 patches for this step's images
    layer_mats,     # (L, DMODEL, 768)     bf16  [qkv_w | wo | fc1_w]
    layer_fc2,      # (L, DINTER, DMODEL)  bf16
    layer_vecs,     # (L, 1, 1408)         f32   biases + LN params
    head_mats,      # (DMODEL, 768)        bf16  [h_wq | h_kv_w | h_wo | h_fc1_w]
    wide_mats,      # (256, 256)           bf16  [patch_w | h_fc2_w]
    misc_vecs,      # (1, 1664)            f32
    pos_emb,        # (S, DMODEL)          f32
    out_ref,        # (1, IPS, DMODEL)     f32
):
  f32, bf16 = jnp.float32, jnp.bfloat16
  n_img = x_ref.shape[0]
  S = NUM_PATCHES
  M = n_img * S

  def _sl(offs, name):
    lo, hi = offs[name]
    return slice(lo, hi)

  def mv(name):      return misc_vecs[:, _sl(_MV_OFF, name)]        # (1, w)  f32
  def hm(name):      return head_mats[:, _sl(_HM_OFF, name)]        # (128,w) bf16
  def wmat(name):    return wide_mats[:, _sl(_WM_OFF, name)]        # (256,w) bf16
  def lm(l, name):   return layer_mats[l, :, _sl(_LM_OFF, name)]    # (128,w) bf16
  def lv(l, name):   return layer_vecs[l, :, _sl(_LV_OFF, name)]    # (1, w)  f32

  def ln(x, g, b):
    mu = jnp.mean(x, axis=-1, keepdims=True)
    xc = x - mu
    var = jnp.mean(xc * xc, axis=-1, keepdims=True)
    return xc * jax.lax.rsqrt(var + LN_EPS) * g + b

  def gelu(x):  # exact (erf) GELU — DEF_CONFIG uses hidden_act='gelu'
    return 0.5 * x * (1.0 + jax.lax.erf(x * f32(0.7071067811865476)))

  def mm(x, w, b):
    # bf16 x bf16 matmul with f32 accumulation (MXU-native on v5e/v6e/v7x).
    return jnp.dot(x.astype(bf16), w, preferred_element_type=f32) + b

  def mha(q, k, v):
    """Multi-head SDPA batched over the images of this step.

    q: (n_img*Sq, D), k/v: (n_img*Sk, D).  Heads are static lane slices;
    images are the einsum batch dim (avoids in-kernel 4-D transposes).
    """
    sq = q.shape[0] // n_img
    sk = k.shape[0] // n_img
    q3 = q.reshape(n_img, sq, DMODEL).astype(bf16)
    k3 = k.reshape(n_img, sk, DMODEL).astype(bf16)
    v3 = v.reshape(n_img, sk, DMODEL).astype(bf16)
    outs = []
    for hd in range(NHEADS):
      lo, hi = hd * DHEAD, (hd + 1) * DHEAD
      s = jnp.einsum("bqd,bkd->bqk", q3[..., lo:hi], k3[..., lo:hi],
                     preferred_element_type=f32) * f32(ATTN_SCALE)
      s = s - jnp.max(s, axis=-1, keepdims=True)
      p = jnp.exp(s)
      p = p / jnp.sum(p, axis=-1, keepdims=True)     # exact softmax division
      outs.append(jnp.einsum("bqk,bkd->bqd", p.astype(bf16), v3[..., lo:hi],
                             preferred_element_type=f32))
    o = jnp.concatenate(outs, axis=-1)               # (n_img, sq, D)
    return o.reshape(n_img * sq, DMODEL)

  # ---- patch embedding (im2col matmul) + position embedding ----
  x = x_ref[...].reshape(M, PATCH_DIM)                               # (M, 256) f32
  h = mm(x, wmat("patch_w"), mv("patch_b"))                          # (M, 128)
  h = (h.reshape(n_img, S, DMODEL) + pos_emb[...]).reshape(M, DMODEL)

  # ---- transformer encoder layers (pre-LN) ----
  for l in range(NLAYERS):
    xn = ln(h, lv(l, "ln1_g"), lv(l, "ln1_b"))
    qkv = mm(xn, lm(l, "qkv_w"), lv(l, "qkv_b"))                     # (M, 384)
    attn = mha(qkv[:, :DMODEL], qkv[:, DMODEL:2 * DMODEL], qkv[:, 2 * DMODEL:])
    h = h + mm(attn, lm(l, "wo"), lv(l, "bo"))
    xn = ln(h, lv(l, "ln2_g"), lv(l, "ln2_b"))
    y = gelu(mm(xn, lm(l, "fc1_w"), lv(l, "fc1_b")))
    h = h + mm(y, layer_fc2[l], lv(l, "fc2_b"))

  # ---- final LayerNorm ----
  h = ln(h, mv("post_g"), mv("post_b"))

  # ---- SiglipMultiheadAttentionPoolingHead ----
  q = mm(mv("probe"), hm("h_wq"), mv("h_bq"))                        # (1, D)
  q = jnp.broadcast_to(q, (n_img, DMODEL))                           # same probe per image
  kv = mm(h, hm("h_kv_w"), mv("h_kv_b"))                             # (M, 2D)
  o = mha(q, kv[:, :DMODEL], kv[:, DMODEL:])                         # (n_img, D), Sq=1
  o = mm(o, hm("h_wo"), mv("h_bo"))                                  # out_proj
  y = gelu(mm(ln(o, mv("h_ln_g"), mv("h_ln_b")), hm("h_fc1_w"), mv("h_fc1_b")))
  pooled = o + mm(y, wmat("h_fc2_w"), mv("h_fc2_b"))                 # (n_img, D)

  out_ref[0] = pooled.astype(out_ref.dtype)


# ============================ Siglip vision model ============================
def siglip_vision_model(p, pixel_values):
  """Returns pooler_output of shape (N, DMODEL). pixel_values: NCHW float32."""
  N, C, H, W = pixel_values.shape
  ps = PATCH_SIZE
  # im2col for the stride==kernel "valid" patch conv, channel-major (c, ph, pw)
  # ordering — matches Conv2d weight.reshape(D, C*ps*ps).
  x = pixel_values.reshape(N, C, H // ps, ps, W // ps, ps)
  x = x.transpose(0, 2, 4, 1, 3, 5).reshape(N, NUM_PATCHES, C * ps * ps)

  # 2 grid steps when possible (keeps both v7x TensorCores busy); otherwise one
  # big step (best for single-TC v5e/v6e, and the single extra step on those
  # chips costs ~0.35 us).
  n_steps = 2 if (N % 2 == 0 and N > 1) else 1
  ips = N // n_steps                    # images per grid step
  assert ips * n_steps == N

  weights = [p[k] for k in _SLAB_KEYS]

  def full_spec(arr):
    nd = arr.ndim
    return pl.BlockSpec(arr.shape, lambda *_: (0,) * nd)

  out = pl.pallas_call(
      _siglip_fused_kernel,
      grid=(n_steps,),
      in_specs=[pl.BlockSpec((ips, NUM_PATCHES, C * ps * ps), lambda i: (i, 0, 0))]
               + [full_spec(w) for w in weights],
      out_specs=pl.BlockSpec((1, ips, DMODEL), lambda i: (i, 0, 0)),
      out_shape=jax.ShapeDtypeStruct((n_steps, ips, DMODEL), jnp.float32),
      compiler_params=pltpu.CompilerParams(
          dimension_semantics=("parallel",)),     # v7x: shard steps over 2 TCs
  )(x, *weights)
  return out.reshape(N, DMODEL)


# ============================ SiglipEecoder.forward ==========================
@functools.partial(jax.jit, static_argnames=("training",))
def siglip_eecoder_forward(params, anchor, pos, neg, training=True):
  data = jnp.concatenate([anchor, pos, neg], axis=0)           # (3B, C, H, W)
  embs = siglip_vision_model(params, data)                     # (3B, D)
  B = anchor.shape[0]
  a_emb, p_emb, n_emb = embs[:B], embs[B:2 * B], embs[2 * B:]  # '(n b) d -> n b d'
  if training:
    # F.pairwise_distance semantics: ||x1 - x2 + eps||_2 (eps added pre-norm).
    eps = 1e-6
    pos_dist = jnp.sqrt(jnp.sum((a_emb - p_emb + eps) ** 2, axis=-1))
    neg_dist = jnp.sqrt(jnp.sum((a_emb - n_emb + eps) ** 2, axis=-1))
    loss = jnp.mean(jnp.maximum(pos_dist - neg_dist + MARGIN, 0.0))
    return {"loss": loss}
  else:
    return {"anchor_emb": a_emb, "pos_emb": p_emb, "neg_emb": n_emb}


# ================================ parameters =================================
def init_params(key):
  """Weights packed directly into the kernel's fused slab layout."""
  keys = iter(jax.random.split(key, 64))
  f32, bf16 = jnp.float32, jnp.bfloat16

  def dense(n_in, n_out):
    return jax.random.normal(next(keys), (n_in, n_out), f32) * 0.02

  zeros = lambda *s: jnp.zeros(s, f32)
  ones = lambda *s: jnp.ones(s, f32)
  L = NLAYERS

  layer_mats, layer_fc2, layer_vecs = [], [], []
  for _ in range(L):
    mats = {
        "qkv_w": jnp.concatenate([dense(DMODEL, DMODEL) for _ in range(3)], axis=1),
        "wo": dense(DMODEL, DMODEL),
        "fc1_w": dense(DMODEL, DINTER),
    }
    vecs = {
        "ln1_g": ones(1, DMODEL), "ln1_b": zeros(1, DMODEL),
        "qkv_b": zeros(1, 3 * DMODEL), "bo": zeros(1, DMODEL),
        "ln2_g": ones(1, DMODEL), "ln2_b": zeros(1, DMODEL),
        "fc1_b": zeros(1, DINTER), "fc2_b": zeros(1, DMODEL),
    }
    layer_mats.append(jnp.concatenate([mats[n] for n, _ in _LAYER_MAT_LAYOUT], axis=-1))
    layer_vecs.append(jnp.concatenate([vecs[n] for n, _ in _LAYER_VEC_LAYOUT], axis=-1))
    layer_fc2.append(dense(DINTER, DMODEL))

  head = {
      "h_wq": dense(DMODEL, DMODEL),
      "h_kv_w": jnp.concatenate([dense(DMODEL, DMODEL), dense(DMODEL, DMODEL)], axis=1),
      "h_wo": dense(DMODEL, DMODEL),
      "h_fc1_w": dense(DMODEL, DINTER),
  }
  wide = {"patch_w": dense(PATCH_DIM, DMODEL), "h_fc2_w": dense(DINTER, DMODEL)}
  misc = {
      "patch_b": zeros(1, DMODEL),
      "post_g": ones(1, DMODEL), "post_b": zeros(1, DMODEL),
      "probe": jax.random.normal(next(keys), (1, DMODEL), f32),
      "h_bq": zeros(1, DMODEL),
      "h_kv_b": zeros(1, 2 * DMODEL),
      "h_bo": zeros(1, DMODEL),
      "h_ln_g": ones(1, DMODEL), "h_ln_b": zeros(1, DMODEL),
      "h_fc1_b": zeros(1, DINTER),
      "h_fc2_b": zeros(1, DMODEL),
  }

  return {
      # matrix slabs stored in bf16 (halves DMA bytes; MXU-native), vectors f32
      "layer_mats": jnp.stack(layer_mats).astype(bf16),     # (L, 128, 768)
      "layer_fc2": jnp.stack(layer_fc2).astype(bf16),       # (L, 256, 128)
      "layer_vecs": jnp.stack(layer_vecs),                  # (L, 1, 1408) f32
      "head_mats": jnp.concatenate(
          [head[n] for n, _ in _HEAD_MAT_LAYOUT], axis=-1).astype(bf16),  # (128, 768)
      "wide_mats": jnp.concatenate(
          [wide[n] for n, _ in _WIDE_MAT_LAYOUT], axis=-1).astype(bf16),  # (256, 256)
      "misc_vecs": jnp.concatenate(
          [misc[n] for n, _ in _MISC_VEC_LAYOUT], axis=-1),               # (1, 1664) f32
      "pos_emb": jax.random.normal(next(keys), (NUM_PATCHES, DMODEL), f32) * 0.02,
  }


# =================================== main ====================================
if __name__ == "__main__":
  key = jax.random.PRNGKey(0)
  k_param, k_a, k_p, k_n = jax.random.split(key, 4)
  params = init_params(k_param)

  B = 2
  anchor = jax.random.normal(k_a, (B, NUM_CHANNELS, IMAGE_SIZE, IMAGE_SIZE), jnp.float32)
  pos = jax.random.normal(k_p, (B, NUM_CHANNELS, IMAGE_SIZE, IMAGE_SIZE), jnp.float32)
  neg = jax.random.normal(k_n, (B, NUM_CHANNELS, IMAGE_SIZE, IMAGE_SIZE), jnp.float32)

  out_train = siglip_eecoder_forward(params, anchor, pos, neg, training=True)
  jax.block_until_ready(out_train["loss"])

  out_eval = siglip_eecoder_forward(params, anchor, pos, neg, training=False)
  jax.block_until_ready(out_eval["anchor_emb"])

  assert out_train["loss"].shape == ()
  assert out_eval["anchor_emb"].shape == (B, DMODEL)
  assert bool(jnp.isfinite(out_train["loss"]))
  print("KERNEL_OK")
</pallas_src>

<mosaic_0001>
module attributes {stable_mosaic.version = 11 : i64} {
  func.func @_siglip_fused_kernel(%arg0: i32, %arg1: memref<3x16x256xf32, #tpu.memory_space<vmem>>, %arg2: memref<2x128x768xbf16, #tpu.memory_space<vmem>>, %arg3: memref<2x256x128xbf16, #tpu.memory_space<vmem>>, %arg4: memref<2x1x1408xf32, #tpu.memory_space<vmem>>, %arg5: memref<128x768xbf16, #tpu.memory_space<vmem>>, %arg6: memref<256x256xbf16, #tpu.memory_space<vmem>>, %arg7: memref<1x1664xf32, #tpu.memory_space<vmem>>, %arg8: memref<16x128xf32, #tpu.memory_space<vmem>>, %arg9: memref<1x3x128xf32, #tpu.memory_space<vmem>>) attributes {dimension_semantics = [#tpu.dimension_semantics<parallel>], iteration_bounds = array<i64: 2>, scalar_prefetch = 0 : i64, scratch_operands = 0 : i64, tpu.core_type = #tpu.core_type<tc>, window_params = [{transform_indices = @transform_0, window_bounds = array<i64: 3, 16, 256>}, {pipeline_mode = #tpu.pipeline_mode<synchronous>, transform_indices = @transform_1, window_bounds = array<i64: 2, 128, 768>}, {pipeline_mode = #tpu.pipeline_mode<synchronous>, transform_indices = @transform_2, window_bounds = array<i64: 2, 256, 128>}, {pipeline_mode = #tpu.pipeline_mode<synchronous>, transform_indices = @transform_3, window_bounds = array<i64: 2, 1, 1408>}, {pipeline_mode = #tpu.pipeline_mode<synchronous>, transform_indices = @transform_4, window_bounds = array<i64: 128, 768>}, {pipeline_mode = #tpu.pipeline_mode<synchronous>, transform_indices = @transform_5, window_bounds = array<i64: 256, 256>}, {pipeline_mode = #tpu.pipeline_mode<synchronous>, transform_indices = @transform_6, window_bounds = array<i64: 1, 1664>}, {pipeline_mode = #tpu.pipeline_mode<synchronous>, transform_indices = @transform_7, window_bounds = array<i64: 16, 128>}, {transform_indices = @transform_8, window_bounds = array<i64: 1, 3, 128>}]} {
    %c0 = arith.constant 0 : index
    %c0_0 = arith.constant 0 : index
    %c0_1 = arith.constant 0 : index
    %0 = vector.load %arg1[%c0, %c0_0, %c0_1] : memref<3x16x256xf32, #tpu.memory_space<vmem>>, vector<3x16x256xf32>
    %1 = vector.shape_cast %0 : vector<3x16x256xf32> to vector<48x256xf32>
    %c0_2 = arith.constant 0 : index
    %c0_3 = arith.constant 0 : index
    %2 = vector.load %arg6[%c0_2, %c0_3] : memref<256x256xbf16, #tpu.memory_space<vmem>>, vector<256x128xbf16>
    %c0_4 = arith.constant 0 : index
    %c0_5 = arith.constant 0 : index
    %3 = vector.load %arg7[%c0_4, %c0_5] : memref<1x1664xf32, #tpu.memory_space<vmem>>, vector<1x128xf32>
    %4 = arith.truncf %1 : vector<48x256xf32> to vector<48x256xbf16>
    %cst = arith.constant dense<0.000000e+00> : vector<48x128xf32>
    %5 = tpu.matmul %4, %2, %cst {dimension_numbers = #tpu.dot_dimension_numbers<[1], [0], [0], [1], [0, 0, 1, 1], [], []>} : vector<48x256xbf16>, vector<256x128xbf16>, vector<48x128xf32> -> vector<48x128xf32>
    %6 = vector.broadcast %3 : vector<1x128xf32> to vector<48x128xf32>
    %7 = arith.addf %5, %6 : vector<48x128xf32>
    %8 = vector.shape_cast %7 : vector<48x128xf32> to vector<3x16x128xf32>
    %c0_6 = arith.constant 0 : index
    %c0_7 = arith.constant 0 : index
    %9 = vector.load %arg8[%c0_6, %c0_7] : memref<16x128xf32, #tpu.memory_space<vmem>>, vector<16x128xf32>
    %10 = vector.shape_cast %9 : vector<16x128xf32> to vector<1x16x128xf32>
    %11 = vector.broadcast %10 : vector<1x16x128xf32> to vector<3x16x128xf32>
    %12 = arith.addf %8, %11 : vector<3x16x128xf32>
    %13 = vector.shape_cast %12 : vector<3x16x128xf32> to vector<48x128xf32>
    %c0_8 = arith.constant 0 : index
    %c0_9 = arith.constant 0 : index
    %c0_10 = arith.constant 0 : index
    %14 = vector.load %arg4[%c0_8, %c0_9, %c0_10] : memref<2x1x1408xf32, #tpu.memory_space<vmem>>, vector<1x1x128xf32>
    %15 = vector.shape_cast %14 : vector<1x1x128xf32> to vector<1x128xf32>
    %c0_11 = arith.constant 0 : index
    %c0_12 = arith.constant 0 : index
    %c128 = arith.constant 128 : index
    %16 = vector.load %arg4[%c0_11, %c0_12, %c128] : memref<2x1x1408xf32, #tpu.memory_space<vmem>>, vector<1x1x128xf32>
    %17 = vector.shape_cast %16 : vector<1x1x128xf32> to vector<1x128xf32>
    %cst_13 = arith.constant dense<0.000000e+00> : vector<48xf32>
    %18 = vector.multi_reduction <add>, %13, %cst_13 [1] : vector<48x128xf32> to vector<48xf32>
    %19 = vector.shape_cast %18 : vector<48xf32> to vector<48x1xf32>
    %cst_14 = arith.constant 1.280000e+02 : f32
    %20 = vector.broadcast %cst_14 : f32 to vector<48x1xf32>
    %21 = arith.divf %19, %20 : vector<48x1xf32>
    %22 = vector.broadcast %21 : vector<48x1xf32> to vector<48x128xf32>
    %23 = arith.subf %13, %22 : vector<48x128xf32>
    %24 = arith.mulf %23, %23 : vector<48x128xf32>
    %cst_15 = arith.constant dense<0.000000e+00> : vector<48xf32>
    %25 = vector.multi_reduction <add>, %24, %cst_15 [1] : vector<48x128xf32> to vector<48xf32>
    %26 = vector.shape_cast %25 : vector<48xf32> to vector<48x1xf32>
    %cst_16 = arith.constant 1.280000e+02 : f32
    %27 = vector.broadcast %cst_16 : f32 to vector<48x1xf32>
    %28 = arith.divf %26, %27 : vector<48x1xf32>
    %cst_17 = arith.constant 9.99999997E-7 : f32
    %29 = vector.broadcast %cst_17 : f32 to vector<48x1xf32>
    %30 = arith.addf %28, %29 : vector<48x1xf32>
    %31 = math.rsqrt %30 : vector<48x1xf32>
    %32 = vector.broadcast %31 : vector<48x1xf32> to vector<48x128xf32>
    %33 = arith.mulf %23, %32 : vector<48x128xf32>
    %34 = vector.broadcast %15 : vector<1x128xf32> to vector<48x128xf32>
    %35 = arith.mulf %33, %34 : vector<48x128xf32>
    %36 = vector.broadcast %17 : vector<1x128xf32> to vector<48x128xf32>
    %37 = arith.addf %35, %36 : vector<48x128xf32>
    %c0_18 = arith.constant 0 : index
    %c0_19 = arith.constant 0 : index
    %c0_20 = arith.constant 0 : index
    %38 = vector.load %arg2[%c0_18, %c0_19, %c0_20] : memref<2x128x768xbf16, #tpu.memory_space<vmem>>, vector<1x128x384xbf16>
    %39 = vector.shape_cast %38 : vector<1x128x384xbf16> to vector<128x384xbf16>
    %c0_21 = arith.constant 0 : index
    %c0_22 = arith.constant 0 : index
    %c256 = arith.constant 256 : index
    %40 = vector.load %arg4[%c0_21, %c0_22, %c256] : memref<2x1x1408xf32, #tpu.memory_space<vmem>>, vector<1x1x384xf32>
    %41 = vector.shape_cast %40 : vector<1x1x384xf32> to vector<1x384xf32>
    %42 = arith.truncf %37 : vector<48x128xf32> to vector<48x128xbf16>
    %cst_23 = arith.constant dense<0.000000e+00> : vector<48x384xf32>
    %43 = tpu.matmul %42, %39, %cst_23 {dimension_numbers = #tpu.dot_dimension_numbers<[1], [0], [0], [1], [0, 0, 1, 1], [], []>} : vector<48x128xbf16>, vector<128x384xbf16>, vector<48x384xf32> -> vector<48x384xf32>
    %44 = vector.broadcast %41 : vector<1x384xf32> to vector<48x384xf32>
    %45 = arith.addf %43, %44 : vector<48x384xf32>
    %46 = vector.extract_strided_slice %45 {offsets = [0, 0], sizes = [48, 128], strides = [1, 1]} : vector<48x384xf32> to vector<48x128xf32>
    %47 = vector.extract_strided_slice %45 {offsets = [0, 128], sizes = [48, 128], strides = [1, 1]} : vector<48x384xf32> to vector<48x128xf32>
    %48 = vector.extract_strided_slice %45 {offsets = [0, 256], sizes = [48, 128], strides = [1, 1]} : vector<48x384xf32> to vector<48x128xf32>
    %49 = vector.shape_cast %46 : vector<48x128xf32> to vector<3x16x128xf32>
    %50 = arith.truncf %49 : vector<3x16x128xf32> to vector<3x16x128xbf16>
    %51 = vector.shape_cast %47 : vector<48x128xf32> to vector<3x16x128xf32>
    %52 = arith.truncf %51 : vector<3x16x128xf32> to vector<3x16x128xbf16>
    %53 = vector.shape_cast %48 : vector<48x128xf32> to vector<3x16x128xf32>
    %54 = arith.truncf %53 : vector<3x16x128xf32> to vector<3x16x128xbf16>
    %55 = vector.extract_strided_slice %50 {offsets = [0, 0, 0], sizes = [3, 16, 32], strides = [1, 1, 1]} : vector<3x16x128xbf16> to vector<3x16x32xbf16>
    %56 = vector.extract_strided_slice %52 {offsets = [0, 0, 0], sizes = [3, 16, 32], strides = [1, 1, 1]} : vector<3x16x128xbf16> to vector<3x16x32xbf16>
    "tpu.trace_start"() <{level = 10 : i32, message = "bqd,bkd->bqk"}> : () -> ()
    %cst_24 = arith.constant dense<0.000000e+00> : vector<3x16x16xf32>
    %57 = tpu.matmul %55, %56, %cst_24 {dimension_numbers = #tpu.dot_dimension_numbers<[2], [2], [1], [1], [0, 0, 0, 1, 1, 1], [0], [0]>} : vector<3x16x32xbf16>, vector<3x16x32xbf16>, vector<3x16x16xf32> -> vector<3x16x16xf32>
    "tpu.trace_stop"() : () -> ()
    %cst_25 = arith.constant 0.176776692 : f32
    %58 = vector.broadcast %cst_25 : f32 to vector<3x16x16xf32>
    %59 = arith.mulf %57, %58 : vector<3x16x16xf32>
    %cst_26 = arith.constant dense<0xFF800000> : vector<3x16xf32>
    %60 = vector.multi_reduction <maximumf>, %59, %cst_26 [2] : vector<3x16x16xf32> to vector<3x16xf32>
    %61 = vector.shape_cast %60 : vector<3x16xf32> to vector<3x16x1xf32>
    %62 = vector.broadcast %61 : vector<3x16x1xf32> to vector<3x16x16xf32>
    %63 = arith.subf %59, %62 : vector<3x16x16xf32>
    %64 = math.exp %63 : vector<3x16x16xf32>
    %cst_27 = arith.constant dense<0.000000e+00> : vector<3x16xf32>
    %65 = vector.multi_reduction <add>, %64, %cst_27 [2] : vector<3x16x16xf32> to vector<3x16xf32>
    %66 = vector.shape_cast %65 : vector<3x16xf32> to vector<3x16x1xf32>
    %67 = vector.broadcast %66 : vector<3x16x1xf32> to vector<3x16x16xf32>
    %68 = arith.divf %64, %67 : vector<3x16x16xf32>
    %69 = arith.truncf %68 : vector<3x16x16xf32> to vector<3x16x16xbf16>
    %70 = vector.extract_strided_slice %54 {offsets = [0, 0, 0], sizes = [3, 16, 32], strides = [1, 1, 1]} : vector<3x16x128xbf16> to vector<3x16x32xbf16>
    "tpu.trace_start"() <{level = 10 : i32, message = "bqk,bkd->bqd"}> : () -> ()
    %cst_28 = arith.constant dense<0.000000e+00> : vector<3x16x32xf32>
    %71 = tpu.matmul %69, %70, %cst_28 {dimension_numbers = #tpu.dot_dimension_numbers<[2], [1], [1], [2], [0, 0, 0, 1, 1, 2], [0], [0]>} : vector<3x16x16xbf16>, vector<3x16x32xbf16>, vector<3x16x32xf32> -> vector<3x16x32xf32>
    "tpu.trace_stop"() : () -> ()
    %72 = vector.extract_strided_slice %50 {offsets = [0, 0, 32], sizes = [3, 16, 32], strides = [1, 1, 1]} : vector<3x16x128xbf16> to vector<3x16x32xbf16>
    %73 = vector.extract_strided_slice %52 {offsets = [0, 0, 32], sizes = [3, 16, 32], strides = [1, 1, 1]} : vector<3x16x128xbf16> to vector<3x16x32xbf16>
    "tpu.trace_start"() <{level = 10 : i32, message = "bqd,bkd->bqk"}> : () -> ()
    %cst_29 = arith.constant dense<0.000000e+00> : vector<3x16x16xf32>
    %74 = tpu.matmul %72, %73, %cst_29 {dimension_numbers = #tpu.dot_dimension_numbers<[2], [2], [1], [1], [0, 0, 0, 1, 1, 1], [0], [0]>} : vector<3x16x32xbf16>, vector<3x16x32xbf16>, vector<3x16x16xf32> -> vector<3x16x16xf32>
    "tpu.trace_stop"() : () -> ()
    %cst_30 = arith.constant 0.176776692 : f32
    %75 = vector.broadcast %cst_30 : f32 to vector<3x16x16xf32>
    %76 = arith.mulf %74, %75 : vector<3x16x16xf32>
    %cst_31 = arith.constant dense<0xFF800000> : vector<3x16xf32>
    %77 = vector.multi_reduction <maximumf>, %76, %cst_31 [2] : vector<3x16x16xf32> to vector<3x16xf32>
    %78 = vector.shape_cast %77 : vector<3x16xf32> to vector<3x16x1xf32>
    %79 = vector.broadcast %78 : vector<3x16x1xf32> to vector<3x16x16xf32>
    %80 = arith.subf %76, %79 : vector<3x16x16xf32>
    %81 = math.exp %80 : vector<3x16x16xf32>
    %cst_32 = arith.constant dense<0.000000e+00> : vector<3x16xf32>
    %82 = vector.multi_reduction <add>, %81, %cst_32 [2] : vector<3x16x16xf32> to vector<3x16xf32>
    %83 = vector.shape_cast %82 : vector<3x16xf32> to vector<3x16x1xf32>
    %84 = vector.broadcast %83 : vector<3x16x1xf32> to vector<3x16x16xf32>
    %85 = arith.divf %81, %84 : vector<3x16x16xf32>
    %86 = arith.truncf %85 : vector<3x16x16xf32> to vector<3x16x16xbf16>
    %87 = vector.extract_strided_slice %54 {offsets = [0, 0, 32], sizes = [3, 16, 32], strides = [1, 1, 1]} : vector<3x16x128xbf16> to vector<3x16x32xbf16>
    "tpu.trace_start"() <{level = 10 : i32, message = "bqk,bkd->bqd"}> : () -> ()
    %cst_33 = arith.constant dense<0.000000e+00> : vector<3x16x32xf32>
    %88 = tpu.matmul %86, %87, %cst_33 {dimension_numbers = #tpu.dot_dimension_numbers<[2], [1], [1], [2], [0, 0, 0, 1, 1, 2], [0], [0]>} : vector<3x16x16xbf16>, vector<3x16x32xbf16>, vector<3x16x32xf32> -> vector<3x16x32xf32>
    "tpu.trace_stop"() : () -> ()
    %89 = vector.extract_strided_slice %50 {offsets = [0, 0, 64], sizes = [3, 16, 32], strides = [1, 1, 1]} : vector<3x16x128xbf16> to vector<3x16x32xbf16>
    %90 = vector.extract_strided_slice %52 {offsets = [0, 0, 64], sizes = [3, 16, 32], strides = [1, 1, 1]} : vector<3x16x128xbf16> to vector<3x16x32xbf16>
    "tpu.trace_start"() <{level = 10 : i32, message = "bqd,bkd->bqk"}> : () -> ()
    %cst_34 = arith.constant dense<0.000000e+00> : vector<3x16x16xf32>
    %91 = tpu.matmul %89, %90, %cst_34 {dimension_numbers = #tpu.dot_dimension_numbers<[2], [2], [1], [1], [0, 0, 0, 1, 1, 1], [0], [0]>} : vector<3x16x32xbf16>, vector<3x16x32xbf16>, vector<3x16x16xf32> -> vector<3x16x16xf32>
    "tpu.trace_stop"() : () -> ()
    %cst_35 = arith.constant 0.176776692 : f32
    %92 = vector.broadcast %cst_35 : f32 to vector<3x16x16xf32>
    %93 = arith.mulf %91, %92 : vector<3x16x16xf32>
    %cst_36 = arith.constant dense<0xFF800000> : vector<3x16xf32>
    %94 = vector.multi_reduction <maximumf>, %93, %cst_36 [2] : vector<3x16x16xf32> to vector<3x16xf32>
    %95 = vector.shape_cast %94 : vector<3x16xf32> to vector<3x16x1xf32>
    %96 = vector.broadcast %95 : vector<3x16x1xf32> to vector<3x16x16xf32>
    %97 = arith.subf %93, %96 : vector<3x16x16xf32>
    %98 = math.exp %97 : vector<3x16x16xf32>
    %cst_37 = arith.constant dense<0.000000e+00> : vector<3x16xf32>
    %99 = vector.multi_reduction <add>, %98, %cst_37 [2] : vector<3x16x16xf32> to vector<3x16xf32>
    %100 = vector.shape_cast %99 : vector<3x16xf32> to vector<3x16x1xf32>
    %101 = vector.broadcast %100 : vector<3x16x1xf32> to vector<3x16x16xf32>
    %102 = arith.divf %98, %101 : vector<3x16x16xf32>
    %103 = arith.truncf %102 : vector<3x16x16xf32> to vector<3x16x16xbf16>
    %104 = vector.extract_strided_slice %54 {offsets = [0, 0, 64], sizes = [3, 16, 32], strides = [1, 1, 1]} : vector<3x16x128xbf16> to vector<3x16x32xbf16>
    "tpu.trace_start"() <{level = 10 : i32, message = "bqk,bkd->bqd"}> : () -> ()
    %cst_38 = arith.constant dense<0.000000e+00> : vector<3x16x32xf32>
    %105 = tpu.matmul %103, %104, %cst_38 {dimension_numbers = #tpu.dot_dimension_numbers<[2], [1], [1], [2], [0, 0, 0, 1, 1, 2], [0], [0]>} : vector<3x16x16xbf16>, vector<3x16x32xbf16>, vector<3x16x32xf32> -> vector<3x16x32xf32>
    "tpu.trace_stop"() : () -> ()
    %106 = vector.extract_strided_slice %50 {offsets = [0, 0, 96], sizes = [3, 16, 32], strides = [1, 1, 1]} : vector<3x16x128xbf16> to vector<3x16x32xbf16>
    %107 = vector.extract_strided_slice %52 {offsets = [0, 0, 96], sizes = [3, 16, 32], strides = [1, 1, 1]} : vector<3x16x128xbf16> to vector<3x16x32xbf16>
    "tpu.trace_start"() <{level = 10 : i32, message = "bqd,bkd->bqk"}> : () -> ()
    %cst_39 = arith.constant dense<0.000000e+00> : vector<3x16x16xf32>
    %108 = tpu.matmul %106, %107, %cst_39 {dimension_numbers = #tpu.dot_dimension_numbers<[2], [2], [1], [1], [0, 0, 0, 1, 1, 1], [0], [0]>} : vector<3x16x32xbf16>, vector<3x16x32xbf16>, vector<3x16x16xf32> -> vector<3x16x16xf32>
    "tpu.trace_stop"() : () -> ()
    %cst_40 = arith.constant 0.176776692 : f32
    %109 = vector.broadcast %cst_40 : f32 to vector<3x16x16xf32>
    %110 = arith.mulf %108, %109 : vector<3x16x16xf32>
    %cst_41 = arith.constant dense<0xFF800000> : vector<3x16xf32>
    %111 = vector.multi_reduction <maximumf>, %110, %cst_41 [2] : vector<3x16x16xf32> to vector<3x16xf32>
    %112 = vector.shape_cast %111 : vector<3x16xf32> to vector<3x16x1xf32>
    %113 = vector.broadcast %112 : vector<3x16x1xf32> to vector<3x16x16xf32>
    %114 = arith.subf %110, %113 : vector<3x16x16xf32>
    %115 = math.exp %114 : vector<3x16x16xf32>
    %cst_42 = arith.constant dense<0.000000e+00> : vector<3x16xf32>
    %116 = vector.multi_reduction <add>, %115, %cst_42 [2] : vector<3x16x16xf32> to vector<3x16xf32>
    %117 = vector.shape_cast %116 : vector<3x16xf32> to vector<3x16x1xf32>
    %118 = vector.broadcast %117 : vector<3x16x1xf32> to vector<3x16x16xf32>
    %119 = arith.divf %115, %118 : vector<3x16x16xf32>
    %120 = arith.truncf %119 : vector<3x16x16xf32> to vector<3x16x16xbf16>
    %121 = vector.extract_strided_slice %54 {offsets = [0, 0, 96], sizes = [3, 16, 32], strides = [1, 1, 1]} : vector<3x16x128xbf16> to vector<3x16x32xbf16>
    "tpu.trace_start"() <{level = 10 : i32, message = "bqk,bkd->bqd"}> : () -> ()
    %cst_43 = arith.constant dense<0.000000e+00> : vector<3x16x32xf32>
    %122 = tpu.matmul %120, %121, %cst_43 {dimension_numbers = #tpu.dot_dimension_numbers<[2], [1], [1], [2], [0, 0, 0, 1, 1, 2], [0], [0]>} : vector<3x16x16xbf16>, vector<3x16x32xbf16>, vector<3x16x32xf32> -> vector<3x16x32xf32>
    "tpu.trace_stop"() : () -> ()
    %123 = tpu.concatenate %71, %88, %105, %122 in 2 : vector<3x16x32xf32>, vector<3x16x32xf32>, vector<3x16x32xf32>, vector<3x16x32xf32> -> vector<3x16x128xf32>
    %124 = vector.shape_cast %123 : vector<3x16x128xf32> to vector<48x128xf32>
    %c0_44 = arith.constant 0 : index
    %c0_45 = arith.constant 0 : index
    %c384 = arith.constant 384 : index
    %125 = vector.load %arg2[%c0_44, %c0_45, %c384] : memref<2x128x768xbf16, #tpu.memory_space<vmem>>, vector<1x128x128xbf16>
    %126 = vector.shape_cast %125 : vector<1x128x128xbf16> to vector<128x128xbf16>
    %c0_46 = arith.constant 0 : index
    %c0_47 = arith.constant 0 : index
    %c640 = arith.constant 640 : index
    %127 = vector.load %arg4[%c0_46, %c0_47, %c640] : memref<2x1x1408xf32, #tpu.memory_space<vmem>>, vector<1x1x128xf32>
    %128 = vector.shape_cast %127 : vector<1x1x128xf32> to vector<1x128xf32>
    %129 = arith.truncf %124 : vector<48x128xf32> to vector<48x128xbf16>
    %cst_48 = arith.constant dense<0.000000e+00> : vector<48x128xf32>
    %130 = tpu.matmul %129, %126, %cst_48 {dimension_numbers = #tpu.dot_dimension_numbers<[1], [0], [0], [1], [0, 0, 1, 1], [], []>} : vector<48x128xbf16>, vector<128x128xbf16>, vector<48x128xf32> -> vector<48x128xf32>
    %131 = vector.broadcast %128 : vector<1x128xf32> to vector<48x128xf32>
    %132 = arith.addf %130, %131 : vector<48x128xf32>
    %133 = arith.addf %13, %132 : vector<48x128xf32>
    %c0_49 = arith.constant 0 : index
    %c0_50 = arith.constant 0 : index
    %c768 = arith.constant 768 : index
    %134 = vector.load %arg4[%c0_49, %c0_50, %c768] : memref<2x1x1408xf32, #tpu.memory_space<vmem>>, vector<1x1x128xf32>
    %135 = vector.shape_cast %134 : vector<1x1x128xf32> to vector<1x128xf32>
    %c0_51 = arith.constant 0 : index
    %c0_52 = arith.constant 0 : index
    %c896 = arith.constant 896 : index
    %136 = vector.load %arg4[%c0_51, %c0_52, %c896] : memref<2x1x1408xf32, #tpu.memory_space<vmem>>, vector<1x1x128xf32>
    %137 = vector.shape_cast %136 : vector<1x1x128xf32> to vector<1x128xf32>
    %cst_53 = arith.constant dense<0.000000e+00> : vector<48xf32>
    %138 = vector.multi_reduction <add>, %133, %cst_53 [1] : vector<48x128xf32> to vector<48xf32>
    %139 = vector.shape_cast %138 : vector<48xf32> to vector<48x1xf32>
    %cst_54 = arith.constant 1.280000e+02 : f32
    %140 = vector.broadcast %cst_54 : f32 to vector<48x1xf32>
    %141 = arith.divf %139, %140 : vector<48x1xf32>
    %142 = vector.broadcast %141 : vector<48x1xf32> to vector<48x128xf32>
    %143 = arith.subf %133, %142 : vector<48x128xf32>
    %144 = arith.mulf %143, %143 : vector<48x128xf32>
    %cst_55 = arith.constant dense<0.000000e+00> : vector<48xf32>
    %145 = vector.multi_reduction <add>, %144, %cst_55 [1] : vector<48x128xf32> to vector<48xf32>
    %146 = vector.shape_cast %145 : vector<48xf32> to vector<48x1xf32>
    %cst_56 = arith.constant 1.280000e+02 : f32
    %147 = vector.broadcast %cst_56 : f32 to vector<48x1xf32>
    %148 = arith.divf %146, %147 : vector<48x1xf32>
    %cst_57 = arith.constant 9.99999997E-7 : f32
    %149 = vector.broadcast %cst_57 : f32 to vector<48x1xf32>
    %150 = arith.addf %148, %149 : vector<48x1xf32>
    %151 = math.rsqrt %150 : vector<48x1xf32>
    %152 = vector.broadcast %151 : vector<48x1xf32> to vector<48x128xf32>
    %153 = arith.mulf %143, %152 : vector<48x128xf32>
    %154 = vector.broadcast %135 : vector<1x128xf32> to vector<48x128xf32>
    %155 = arith.mulf %153, %154 : vector<48x128xf32>
    %156 = vector.broadcast %137 : vector<1x128xf32> to vector<48x128xf32>
    %157 = arith.addf %155, %156 : vector<48x128xf32>
    %c0_58 = arith.constant 0 : index
    %c0_59 = arith.constant 0 : index
    %c512 = arith.constant 512 : index
    %158 = vector.load %arg2[%c0_58, %c0_59, %c512] : memref<2x128x768xbf16, #tpu.memory_space<vmem>>, vector<1x128x256xbf16>
    %159 = vector.shape_cast %158 : vector<1x128x256xbf16> to vector<128x256xbf16>
    %c0_60 = arith.constant 0 : index
    %c0_61 = arith.constant 0 : index
    %c1024 = arith.constant 1024 : index
    %160 = vector.load %arg4[%c0_60, %c0_61, %c1024] : memref<2x1x1408xf32, #tpu.memory_space<vmem>>, vector<1x1x256xf32>
    %161 = vector.shape_cast %160 : vector<1x1x256xf32> to vector<1x256xf32>
    %162 = arith.truncf %157 : vector<48x128xf32> to vector<48x128xbf16>
    %cst_62 = arith.constant dense<0.000000e+00> : vector<48x256xf32>
    %163 = tpu.matmul %162, %159, %cst_62 {dimension_numbers = #tpu.dot_dimension_numbers<[1], [0], [0], [1], [0, 0, 1, 1], [], []>} : vector<48x128xbf16>, vector<128x256xbf16>, vector<48x256xf32> -> vector<48x256xf32>
    %164 = vector.broadcast %161 : vector<1x256xf32> to vector<48x256xf32>
    %165 = arith.addf %163, %164 : vector<48x256xf32>
    %cst_63 = arith.constant 5.000000e-01 : f32
    %166 = vector.broadcast %cst_63 : f32 to vector<48x256xf32>
    %167 = arith.mulf %166, %165 : vector<48x256xf32>
    %cst_64 = arith.constant 0.707106769 : f32
    %168 = vector.broadcast %cst_64 : f32 to vector<48x256xf32>
    %169 = arith.mulf %165, %168 : vector<48x256xf32>
    %170 = math.erf %169 : vector<48x256xf32>
    %cst_65 = arith.constant 1.000000e+00 : f32
    %171 = vector.broadcast %cst_65 : f32 to vector<48x256xf32>
    %172 = arith.addf %171, %170 : vector<48x256xf32>
    %173 = arith.mulf %167, %172 : vector<48x256xf32>
    %c0_66 = arith.constant 0 : index
    %c0_67 = arith.constant 0 : index
    %c0_68 = arith.constant 0 : index
    %174 = vector.load %arg3[%c0_66, %c0_67, %c0_68] : memref<2x256x128xbf16, #tpu.memory_space<vmem>>, vector<1x256x128xbf16>
    %175 = vector.shape_cast %174 : vector<1x256x128xbf16> to vector<256x128xbf16>
    %c0_69 = arith.constant 0 : index
    %c0_70 = arith.constant 0 : index
    %c1280 = arith.constant 1280 : index
    %176 = vector.load %arg4[%c0_69, %c0_70, %c1280] : memref<2x1x1408xf32, #tpu.memory_space<vmem>>, vector<1x1x128xf32>
    %177 = vector.shape_cast %176 : vector<1x1x128xf32> to vector<1x128xf32>
    %178 = arith.truncf %173 : vector<48x256xf32> to vector<48x256xbf16>
    %cst_71 = arith.constant dense<0.000000e+00> : vector<48x128xf32>
    %179 = tpu.matmul %178, %175, %cst_71 {dimension_numbers = #tpu.dot_dimension_numbers<[1], [0], [0], [1], [0, 0, 1, 1], [], []>} : vector<48x256xbf16>, vector<256x128xbf16>, vector<48x128xf32> -> vector<48x128xf32>
    %180 = vector.broadcast %177 : vector<1x128xf32> to vector<48x128xf32>
    %181 = arith.addf %179, %180 : vector<48x128xf32>
    %182 = arith.addf %133, %181 : vector<48x128xf32>
    %c1 = arith.constant 1 : index
    %c0_72 = arith.constant 0 : index
    %c0_73 = arith.constant 0 : index
    %183 = vector.load %arg4[%c1, %c0_72, %c0_73] : memref<2x1x1408xf32, #tpu.memory_space<vmem>>, vector<1x1x128xf32>
    %184 = vector.shape_cast %183 : vector<1x1x128xf32> to vector<1x128xf32>
    %c1_74 = arith.constant 1 : index
    %c0_75 = arith.constant 0 : index
    %c128_76 = arith.constant 128 : index
    %185 = vector.load %arg4[%c1_74, %c0_75, %c128_76] : memref<2x1x1408xf32, #tpu.memory_space<vmem>>, vector<1x1x128xf32>
    %186 = vector.shape_cast %185 : vector<1x1x128xf32> to vector<1x128xf32>
    %cst_77 = arith.constant dense<0.000000e+00> : vector<48xf32>
    %187 = vector.multi_reduction <add>, %182, %cst_77 [1] : vector<48x128xf32> to vector<48xf32>
    %188 = vector.shape_cast %187 : vector<48xf32> to vector<48x1xf32>
    %cst_78 = arith.constant 1.280000e+02 : f32
    %189 = vector.broadcast %cst_78 : f32 to vector<48x1xf32>
    %190 = arith.divf %188, %189 : vector<48x1xf32>
    %191 = vector.broadcast %190 : vector<48x1xf32> to vector<48x128xf32>
    %192 = arith.subf %182, %191 : vector<48x128xf32>
    %193 = arith.mulf %192, %192 : vector<48x128xf32>
    %cst_79 = arith.constant dense<0.000000e+00> : vector<48xf32>
    %194 = vector.multi_reduction <add>, %193, %cst_79 [1] : vector<48x128xf32> to vector<48xf32>
    %195 = vector.shape_cast %194 : vector<48xf32> to vector<48x1xf32>
    %cst_80 = arith.constant 1.280000e+02 : f32
    %196 = vector.broadcast %cst_80 : f32 to vector<48x1xf32>
    %197 = arith.divf %195, %196 : vector<48x1xf32>
    %cst_81 = arith.constant 9.99999997E-7 : f32
    %198 = vector.broadcast %cst_81 : f32 to vector<48x1xf32>
    %199 = arith.addf %197, %198 : vector<48x1xf32>
    %200 = math.rsqrt %199 : vector<48x1xf32>
    %201 = vector.broadcast %200 : vector<48x1xf32> to vector<48x128xf32>
    %202 = arith.mulf %192, %201 : vector<48x128xf32>
    %203 = vector.broadcast %184 : vector<1x128xf32> to vector<48x128xf32>
    %204 = arith.mulf %202, %203 : vector<48x128xf32>
    %205 = vector.broadcast %186 : vector<1x128xf32> to vector<48x128xf32>
    %206 = arith.addf %204, %205 : vector<48x128xf32>
    %c1_82 = arith.constant 1 : index
    %c0_83 = arith.constant 0 : index
    %c0_84 = arith.constant 0 : index
    %207 = vector.load %arg2[%c1_82, %c0_83, %c0_84] : memref<2x128x768xbf16, #tpu.memory_space<vmem>>, vector<1x128x384xbf16>
    %208 = vector.shape_cast %207 : vector<1x128x384xbf16> to vector<128x384xbf16>
    %c1_85 = arith.constant 1 : index
    %c0_86 = arith.constant 0 : index
    %c256_87 = arith.constant 256 : index
    %209 = vector.load %arg4[%c1_85, %c0_86, %c256_87] : memref<2x1x1408xf32, #tpu.memory_space<vmem>>, vector<1x1x384xf32>
    %210 = vector.shape_cast %209 : vector<1x1x384xf32> to vector<1x384xf32>
    %211 = arith.truncf %206 : vector<48x128xf32> to vector<48x128xbf16>
    %cst_88 = arith.constant dense<0.000000e+00> : vector<48x384xf32>
    %212 = tpu.matmul %211, %208, %cst_88 {dimension_numbers = #tpu.dot_dimension_numbers<[1], [0], [0], [1], [0, 0, 1, 1], [], []>} : vector<48x128xbf16>, vector<128x384xbf16>, vector<48x384xf32> -> vector<48x384xf32>
    %213 = vector.broadcast %210 : vector<1x384xf32> to vector<48x384xf32>
    %214 = arith.addf %212, %213 : vector<48x384xf32>
    %215 = vector.extract_strided_slice %214 {offsets = [0, 0], sizes = [48, 128], strides = [1, 1]} : vector<48x384xf32> to vector<48x128xf32>
    %216 = vector.extract_strided_slice %214 {offsets = [0, 128], sizes = [48, 128], strides = [1, 1]} : vector<48x384xf32> to vector<48x128xf32>
    %217 = vector.extract_strided_slice %214 {offsets = [0, 256], sizes = [48, 128], strides = [1, 1]} : vector<48x384xf32> to vector<48x128xf32>
    %218 = vector.shape_cast %215 : vector<48x128xf32> to vector<3x16x128xf32>
    %219 = arith.truncf %218 : vector<3x16x128xf32> to vector<3x16x128xbf16>
    %220 = vector.shape_cast %216 : vector<48x128xf32> to vector<3x16x128xf32>
    %221 = arith.truncf %220 : vector<3x16x128xf32> to vector<3x16x128xbf16>
    %222 = vector.shape_cast %217 : vector<48x128xf32> to vector<3x16x128xf32>
    %223 = arith.truncf %222 : vector<3x16x128xf32> to vector<3x16x128xbf16>
    %224 = vector.extract_strided_slice %219 {offsets = [0, 0, 0], sizes = [3, 16, 32], strides = [1, 1, 1]} : vector<3x16x128xbf16> to vector<3x16x32xbf16>
    %225 = vector.extract_strided_slice %221 {offsets = [0, 0, 0], sizes = [3, 16, 32], strides = [1, 1, 1]} : vector<3x16x128xbf16> to vector<3x16x32xbf16>
    "tpu.trace_start"() <{level = 10 : i32, message = "bqd,bkd->bqk"}> : () -> ()
    %cst_89 = arith.constant dense<0.000000e+00> : vector<3x16x16xf32>
    %226 = tpu.matmul %224, %225, %cst_89 {dimension_numbers = #tpu.dot_dimension_numbers<[2], [2], [1], [1], [0, 0, 0, 1, 1, 1], [0], [0]>} : vector<3x16x32xbf16>, vector<3x16x32xbf16>, vector<3x16x16xf32> -> vector<3x16x16xf32>
    "tpu.trace_stop"() : () -> ()
    %cst_90 = arith.constant 0.176776692 : f32
    %227 = vector.broadcast %cst_90 : f32 to vector<3x16x16xf32>
    %228 = arith.mulf %226, %227 : vector<3x16x16xf32>
    %cst_91 = arith.constant dense<0xFF800000> : vector<3x16xf32>
    %229 = vector.multi_reduction <maximumf>, %228, %cst_91 [2] : vector<3x16x16xf32> to vector<3x16xf32>
    %230 = vector.shape_cast %229 : vector<3x16xf32> to vector<3x16x1xf32>
    %231 = vector.broadcast %230 : vector<3x16x1xf32> to vector<3x16x16xf32>
    %232 = arith.subf %228, %231 : vector<3x16x16xf32>
    %233 = math.exp %232 : vector<3x16x16xf32>
    %cst_92 = arith.constant dense<0.000000e+00> : vector<3x16xf32>
    %234 = vector.multi_reduction <add>, %233, %cst_92 [2] : vector<3x16x16xf32> to vector<3x16xf32>
    %235 = vector.shape_cast %234 : vector<3x16xf32> to vector<3x16x1xf32>
    %236 = vector.broadcast %235 : vector<3x16x1xf32> to vector<3x16x16xf32>
    %237 = arith.divf %233, %236 : vector<3x16x16xf32>
    %238 = arith.truncf %237 : vector<3x16x16xf32> to vector<3x16x16xbf16>
    %239 = vector.extract_strided_slice %223 {offsets = [0, 0, 0], sizes = [3, 16, 32], strides = [1, 1, 1]} : vector<3x16x128xbf16> to vector<3x16x32xbf16>
    "tpu.trace_start"() <{level = 10 : i32, message = "bqk,bkd->bqd"}> : () -> ()
    %cst_93 = arith.constant dense<0.000000e+00> : vector<3x16x32xf32>
    %240 = tpu.matmul %238, %239, %cst_93 {dimension_numbers = #tpu.dot_dimension_numbers<[2], [1], [1], [2], [0, 0, 0, 1, 1, 2], [0], [0]>} : vector<3x16x16xbf16>, vector<3x16x32xbf16>, vector<3x16x32xf32> -> vector<3x16x32xf32>
    "tpu.trace_stop"() : () -> ()
    %241 = vector.extract_strided_slice %219 {offsets = [0, 0, 32], sizes = [3, 16, 32], strides = [1, 1, 1]} : vector<3x16x128xbf16> to vector<3x16x32xbf16>
    %242 = vector.extract_strided_slice %221 {offsets = [0, 0, 32], sizes = [3, 16, 32], strides = [1, 1, 1]} : vector<3x16x128xbf16> to vector<3x16x32xbf16>
    "tpu.trace_start"() <{level = 10 : i32, message = "bqd,bkd->bqk"}> : () -> ()
    %cst_94 = arith.constant dense<0.000000e+00> : vector<3x16x16xf32>
    %243 = tpu.matmul %241, %242, %cst_94 {dimension_numbers = #tpu.dot_dimension_numbers<[2], [2], [1], [1], [0, 0, 0, 1, 1, 1], [0], [0]>} : vector<3x16x32xbf16>, vector<3x16x32xbf16>, vector<3x16x16xf32> -> vector<3x16x16xf32>
    "tpu.trace_stop"() : () -> ()
    %cst_95 = arith.constant 0.176776692 : f32
    %244 = vector.broadcast %cst_95 : f32 to vector<3x16x16xf32>
    %245 = arith.mulf %243, %244 : vector<3x16x16xf32>
    %cst_96 = arith.constant dense<0xFF800000> : vector<3x16xf32>
    %246 = vector.multi_reduction <maximumf>, %245, %cst_96 [2] : vector<3x16x16xf32> to vector<3x16xf32>
    %247 = vector.shape_cast %246 : vector<3x16xf32> to vector<3x16x1xf32>
    %248 = vector.broadcast %247 : vector<3x16x1xf32> to vector<3x16x16xf32>
    %249 = arith.subf %245, %248 : vector<3x16x16xf32>
    %250 = math.exp %249 : vector<3x16x16xf32>
    %cst_97 = arith.constant dense<0.000000e+00> : vector<3x16xf32>
    %251 = vector.multi_reduction <add>, %250, %cst_97 [2] : vector<3x16x16xf32> to vector<3x16xf32>
    %252 = vector.shape_cast %251 : vector<3x16xf32> to vector<3x16x1xf32>
    %253 = vector.broadcast %252 : vector<3x16x1xf32> to vector<3x16x16xf32>
    %254 = arith.divf %250, %253 : vector<3x16x16xf32>
    %255 = arith.truncf %254 : vector<3x16x16xf32> to vector<3x16x16xbf16>
    %256 = vector.extract_strided_slice %223 {offsets = [0, 0, 32], sizes = [3, 16, 32], strides = [1, 1, 1]} : vector<3x16x128xbf16> to vector<3x16x32xbf16>
    "tpu.trace_start"() <{level = 10 : i32, message = "bqk,bkd->bqd"}> : () -> ()
    %cst_98 = arith.constant dense<0.000000e+00> : vector<3x16x32xf32>
    %257 = tpu.matmul %255, %256, %cst_98 {dimension_numbers = #tpu.dot_dimension_numbers<[2], [1], [1], [2], [0, 0, 0, 1, 1, 2], [0], [0]>} : vector<3x16x16xbf16>, vector<3x16x32xbf16>, vector<3x16x32xf32> -> vector<3x16x32xf32>
    "tpu.trace_stop"() : () -> ()
    %258 = vector.extract_strided_slice %219 {offsets = [0, 0, 64], sizes = [3, 16, 32], strides = [1, 1, 1]} : vector<3x16x128xbf16> to vector<3x16x32xbf16>
    %259 = vector.extract_strided_slice %221 {offsets = [0, 0, 64], sizes = [3, 16, 32], strides = [1, 1, 1]} : vector<3x16x128xbf16> to vector<3x16x32xbf16>
    "tpu.trace_start"() <{level = 10 : i32, message = "bqd,bkd->bqk"}> : () -> ()
    %cst_99 = arith.constant dense<0.000000e+00> : vector<3x16x16xf32>
    %260 = tpu.matmul %258, %259, %cst_99 {dimension_numbers = #tpu.dot_dimension_numbers<[2], [2], [1], [1], [0, 0, 0, 1, 1, 1], [0], [0]>} : vector<3x16x32xbf16>, vector<3x16x32xbf16>, vector<3x16x16xf32> -> vector<3x16x16xf32>
    "tpu.trace_stop"() : () -> ()
    %cst_100 = arith.constant 0.176776692 : f32
    %261 = vector.broadcast %cst_100 : f32 to vector<3x16x16xf32>
    %262 = arith.mulf %260, %261 : vector<3x16x16xf32>
    %cst_101 = arith.constant dense<0xFF800000> : vector<3x16xf32>
    %263 = vector.multi_reduction <maximumf>, %262, %cst_101 [2] : vector<3x16x16xf32> to vector<3x16xf32>
    %264 = vector.shape_cast %263 : vector<3x16xf32> to vector<3x16x1xf32>
    %265 = vector.broadcast %264 : vector<3x16x1xf32> to vector<3x16x16xf32>
    %266 = arith.subf %262, %265 : vector<3x16x16xf32>
    %267 = math.exp %266 : vector<3x16x16xf32>
    %cst_102 = arith.constant dense<0.000000e+00> : vector<3x16xf32>
    %268 = vector.multi_reduction <add>, %267, %cst_102 [2] : vector<3x16x16xf32> to vector<3x16xf32>
    %269 = vector.shape_cast %268 : vector<3x16xf32> to vector<3x16x1xf32>
    %270 = vector.broadcast %269 : vector<3x16x1xf32> to vector<3x16x16xf32>
    %271 = arith.divf %267, %270 : vector<3x16x16xf32>
    %272 = arith.truncf %271 : vector<3x16x16xf32> to vector<3x16x16xbf16>
    %273 = vector.extract_strided_slice %223 {offsets = [0, 0, 64], sizes = [3, 16, 32], strides = [1, 1, 1]} : vector<3x16x128xbf16> to vector<3x16x32xbf16>
    "tpu.trace_start"() <{level = 10 : i32, message = "bqk,bkd->bqd"}> : () -> ()
    %cst_103 = arith.constant dense<0.000000e+00> : vector<3x16x32xf32>
    %274 = tpu.matmul %272, %273, %cst_103 {dimension_numbers = #tpu.dot_dimension_numbers<[2], [1], [1], [2], [0, 0, 0, 1, 1, 2], [0], [0]>} : vector<3x16x16xbf16>, vector<3x16x32xbf16>, vector<3x16x32xf32> -> vector<3x16x32xf32>
    "tpu.trace_stop"() : () -> ()
    %275 = vector.extract_strided_slice %219 {offsets = [0, 0, 96], sizes = [3, 16, 32], strides = [1, 1, 1]} : vector<3x16x128xbf16> to vector<3x16x32xbf16>
    %276 = vector.extract_strided_slice %221 {offsets = [0, 0, 96], sizes = [3, 16, 32], strides = [1, 1, 1]} : vector<3x16x128xbf16> to vector<3x16x32xbf16>
    "tpu.trace_start"() <{level = 10 : i32, message = "bqd,bkd->bqk"}> : () -> ()
    %cst_104 = arith.constant dense<0.000000e+00> : vector<3x16x16xf32>
    %277 = tpu.matmul %275, %276, %cst_104 {dimension_numbers = #tpu.dot_dimension_numbers<[2], [2], [1], [1], [0, 0, 0, 1, 1, 1], [0], [0]>} : vector<3x16x32xbf16>, vector<3x16x32xbf16>, vector<3x16x16xf32> -> vector<3x16x16xf32>
    "tpu.trace_stop"() : () -> ()
    %cst_105 = arith.constant 0.176776692 : f32
    %278 = vector.broadcast %cst_105 : f32 to vector<3x16x16xf32>
    %279 = arith.mulf %277, %278 : vector<3x16x16xf32>
    %cst_106 = arith.constant dense<0xFF800000> : vector<3x16xf32>
    %280 = vector.multi_reduction <maximumf>, %279, %cst_106 [2] : vector<3x16x16xf32> to vector<3x16xf32>
    %281 = vector.shape_cast %280 : vector<3x16xf32> to vector<3x16x1xf32>
    %282 = vector.broadcast %281 : vector<3x16x1xf32> to vector<3x16x16xf32>
    %283 = arith.subf %279, %282 : vector<3x16x16xf32>
    %284 = math.exp %283 : vector<3x16x16xf32>
    %cst_107 = arith.constant dense<0.000000e+00> : vector<3x16xf32>
    %285 = vector.multi_reduction <add>, %284, %cst_107 [2] : vector<3x16x16xf32> to vector<3x16xf32>
    %286 = vector.shape_cast %285 : vector<3x16xf32> to vector<3x16x1xf32>
    %287 = vector.broadcast %286 : vector<3x16x1xf32> to vector<3x16x16xf32>
    %288 = arith.divf %284, %287 : vector<3x16x16xf32>
    %289 = arith.truncf %288 : vector<3x16x16xf32> to vector<3x16x16xbf16>
    %290 = vector.extract_strided_slice %223 {offsets = [0, 0, 96], sizes = [3, 16, 32], strides = [1, 1, 1]} : vector<3x16x128xbf16> to vector<3x16x32xbf16>
    "tpu.trace_start"() <{level = 10 : i32, message = "bqk,bkd->bqd"}> : () -> ()
    %cst_108 = arith.constant dense<0.000000e+00> : vector<3x16x32xf32>
    %291 = tpu.matmul %289, %290, %cst_108 {dimension_numbers = #tpu.dot_dimension_numbers<[2], [1], [1], [2], [0, 0, 0, 1, 1, 2], [0], [0]>} : vector<3x16x16xbf16>, vector<3x16x32xbf16>, vector<3x16x32xf32> -> vector<3x16x32xf32>
    "tpu.trace_stop"() : () -> ()
    %292 = tpu.concatenate %240, %257, %274, %291 in 2 : vector<3x16x32xf32>, vector<3x16x32xf32>, vector<3x16x32xf32>, vector<3x16x32xf32> -> vector<3x16x128xf32>
    %293 = vector.shape_cast %292 : vector<3x16x128xf32> to vector<48x128xf32>
    %c1_109 = arith.constant 1 : index
    %c0_110 = arith.constant 0 : index
    %c384_111 = arith.constant 384 : index
    %294 = vector.load %arg2[%c1_109, %c0_110, %c384_111] : memref<2x128x768xbf16, #tpu.memory_space<vmem>>, vector<1x128x128xbf16>
    %295 = vector.shape_cast %294 : vector<1x128x128xbf16> to vector<128x128xbf16>
    %c1_112 = arith.constant 1 : index
    %c0_113 = arith.constant 0 : index
    %c640_114 = arith.constant 640 : index
    %296 = vector.load %arg4[%c1_112, %c0_113, %c640_114] : memref<2x1x1408xf32, #tpu.memory_space<vmem>>, vector<1x1x128xf32>
    %297 = vector.shape_cast %296 : vector<1x1x128xf32> to vector<1x128xf32>
    %298 = arith.truncf %293 : vector<48x128xf32> to vector<48x128xbf16>
    %cst_115 = arith.constant dense<0.000000e+00> : vector<48x128xf32>
    %299 = tpu.matmul %298, %295, %cst_115 {dimension_numbers = #tpu.dot_dimension_numbers<[1], [0], [0], [1], [0, 0, 1, 1], [], []>} : vector<48x128xbf16>, vector<128x128xbf16>, vector<48x128xf32> -> vector<48x128xf32>
    %300 = vector.broadcast %297 : vector<1x128xf32> to vector<48x128xf32>
    %301 = arith.addf %299, %300 : vector<48x128xf32>
    %302 = arith.addf %182, %301 : vector<48x128xf32>
    %c1_116 = arith.constant 1 : index
    %c0_117 = arith.constant 0 : index
    %c768_118 = arith.constant 768 : index
    %303 = vector.load %arg4[%c1_116, %c0_117, %c768_118] : memref<2x1x1408xf32, #tpu.memory_space<vmem>>, vector<1x1x128xf32>
    %304 = vector.shape_cast %303 : vector<1x1x128xf32> to vector<1x128xf32>
    %c1_119 = arith.constant 1 : index
    %c0_120 = arith.constant 0 : index
    %c896_121 = arith.constant 896 : index
    %305 = vector.load %arg4[%c1_119, %c0_120, %c896_121] : memref<2x1x1408xf32, #tpu.memory_space<vmem>>, vector<1x1x128xf32>
    %306 = vector.shape_cast %305 : vector<1x1x128xf32> to vector<1x128xf32>
    %cst_122 = arith.constant dense<0.000000e+00> : vector<48xf32>
    %307 = vector.multi_reduction <add>, %302, %cst_122 [1] : vector<48x128xf32> to vector<48xf32>
    %308 = vector.shape_cast %307 : vector<48xf32> to vector<48x1xf32>
    %cst_123 = arith.constant 1.280000e+02 : f32
    %309 = vector.broadcast %cst_123 : f32 to vector<48x1xf32>
    %310 = arith.divf %308, %309 : vector<48x1xf32>
    %311 = vector.broadcast %310 : vector<48x1xf32> to vector<48x128xf32>
    %312 = arith.subf %302, %311 : vector<48x128xf32>
    %313 = arith.mulf %312, %312 : vector<48x128xf32>
    %cst_124 = arith.constant dense<0.000000e+00> : vector<48xf32>
    %314 = vector.multi_reduction <add>, %313, %cst_124 [1] : vector<48x128xf32> to vector<48xf32>
    %315 = vector.shape_cast %314 : vector<48xf32> to vector<48x1xf32>
    %cst_125 = arith.constant 1.280000e+02 : f32
    %316 = vector.broadcast %cst_125 : f32 to vector<48x1xf32>
    %317 = arith.divf %315, %316 : vector<48x1xf32>
    %cst_126 = arith.constant 9.99999997E-7 : f32
    %318 = vector.broadcast %cst_126 : f32 to vector<48x1xf32>
    %319 = arith.addf %317, %318 : vector<48x1xf32>
    %320 = math.rsqrt %319 : vector<48x1xf32>
    %321 = vector.broadcast %320 : vector<48x1xf32> to vector<48x128xf32>
    %322 = arith.mulf %312, %321 : vector<48x128xf32>
    %323 = vector.broadcast %304 : vector<1x128xf32> to vector<48x128xf32>
    %324 = arith.mulf %322, %323 : vector<48x128xf32>
    %325 = vector.broadcast %306 : vector<1x128xf32> to vector<48x128xf32>
    %326 = arith.addf %324, %325 : vector<48x128xf32>
    %c1_127 = arith.constant 1 : index
    %c0_128 = arith.constant 0 : index
    %c512_129 = arith.constant 512 : index
    %327 = vector.load %arg2[%c1_127, %c0_128, %c512_129] : memref<2x128x768xbf16, #tpu.memory_space<vmem>>, vector<1x128x256xbf16>
    %328 = vector.shape_cast %327 : vector<1x128x256xbf16> to vector<128x256xbf16>
    %c1_130 = arith.constant 1 : index
    %c0_131 = arith.constant 0 : index
    %c1024_132 = arith.constant 1024 : index
    %329 = vector.load %arg4[%c1_130, %c0_131, %c1024_132] : memref<2x1x1408xf32, #tpu.memory_space<vmem>>, vector<1x1x256xf32>
    %330 = vector.shape_cast %329 : vector<1x1x256xf32> to vector<1x256xf32>
    %331 = arith.truncf %326 : vector<48x128xf32> to vector<48x128xbf16>
    %cst_133 = arith.constant dense<0.000000e+00> : vector<48x256xf32>
    %332 = tpu.matmul %331, %328, %cst_133 {dimension_numbers = #tpu.dot_dimension_numbers<[1], [0], [0], [1], [0, 0, 1, 1], [], []>} : vector<48x128xbf16>, vector<128x256xbf16>, vector<48x256xf32> -> vector<48x256xf32>
    %333 = vector.broadcast %330 : vector<1x256xf32> to vector<48x256xf32>
    %334 = arith.addf %332, %333 : vector<48x256xf32>
    %cst_134 = arith.constant 5.000000e-01 : f32
    %335 = vector.broadcast %cst_134 : f32 to vector<48x256xf32>
    %336 = arith.mulf %335, %334 : vector<48x256xf32>
    %cst_135 = arith.constant 0.707106769 : f32
    %337 = vector.broadcast %cst_135 : f32 to vector<48x256xf32>
    %338 = arith.mulf %334, %337 : vector<48x256xf32>
    %339 = math.erf %338 : vector<48x256xf32>
    %cst_136 = arith.constant 1.000000e+00 : f32
    %340 = vector.broadcast %cst_136 : f32 to vector<48x256xf32>
    %341 = arith.addf %340, %339 : vector<48x256xf32>
    %342 = arith.mulf %336, %341 : vector<48x256xf32>
    %c1_137 = arith.constant 1 : index
    %c0_138 = arith.constant 0 : index
    %c0_139 = arith.constant 0 : index
    %343 = vector.load %arg3[%c1_137, %c0_138, %c0_139] : memref<2x256x128xbf16, #tpu.memory_space<vmem>>, vector<1x256x128xbf16>
    %344 = vector.shape_cast %343 : vector<1x256x128xbf16> to vector<256x128xbf16>
    %c1_140 = arith.constant 1 : index
    %c0_141 = arith.constant 0 : index
    %c1280_142 = arith.constant 1280 : index
    %345 = vector.load %arg4[%c1_140, %c0_141, %c1280_142] : memref<2x1x1408xf32, #tpu.memory_space<vmem>>, vector<1x1x128xf32>
    %346 = vector.shape_cast %345 : vector<1x1x128xf32> to vector<1x128xf32>
    %347 = arith.truncf %342 : vector<48x256xf32> to vector<48x256xbf16>
    %cst_143 = arith.constant dense<0.000000e+00> : vector<48x128xf32>
    %348 = tpu.matmul %347, %344, %cst_143 {dimension_numbers = #tpu.dot_dimension_numbers<[1], [0], [0], [1], [0, 0, 1, 1], [], []>} : vector<48x256xbf16>, vector<256x128xbf16>, vector<48x128xf32> -> vector<48x128xf32>
    %349 = vector.broadcast %346 : vector<1x128xf32> to vector<48x128xf32>
    %350 = arith.addf %348, %349 : vector<48x128xf32>
    %351 = arith.addf %302, %350 : vector<48x128xf32>
    %c0_144 = arith.constant 0 : index
    %c128_145 = arith.constant 128 : index
    %352 = vector.load %arg7[%c0_144, %c128_145] : memref<1x1664xf32, #tpu.memory_space<vmem>>, vector<1x128xf32>
    %c0_146 = arith.constant 0 : index
    %c256_147 = arith.constant 256 : index
    %353 = vector.load %arg7[%c0_146, %c256_147] : memref<1x1664xf32, #tpu.memory_space<vmem>>, vector<1x128xf32>
    %cst_148 = arith.constant dense<0.000000e+00> : vector<48xf32>
    %354 = vector.multi_reduction <add>, %351, %cst_148 [1] : vector<48x128xf32> to vector<48xf32>
    %355 = vector.shape_cast %354 : vector<48xf32> to vector<48x1xf32>
    %cst_149 = arith.constant 1.280000e+02 : f32
    %356 = vector.broadcast %cst_149 : f32 to vector<48x1xf32>
    %357 = arith.divf %355, %356 : vector<48x1xf32>
    %358 = vector.broadcast %357 : vector<48x1xf32> to vector<48x128xf32>
    %359 = arith.subf %351, %358 : vector<48x128xf32>
    %360 = arith.mulf %359, %359 : vector<48x128xf32>
    %cst_150 = arith.constant dense<0.000000e+00> : vector<48xf32>
    %361 = vector.multi_reduction <add>, %360, %cst_150 [1] : vector<48x128xf32> to vector<48xf32>
    %362 = vector.shape_cast %361 : vector<48xf32> to vector<48x1xf32>
    %cst_151 = arith.constant 1.280000e+02 : f32
    %363 = vector.broadcast %cst_151 : f32 to vector<48x1xf32>
    %364 = arith.divf %362, %363 : vector<48x1xf32>
    %cst_152 = arith.constant 9.99999997E-7 : f32
    %365 = vector.broadcast %cst_152 : f32 to vector<48x1xf32>
    %366 = arith.addf %364, %365 : vector<48x1xf32>
    %367 = math.rsqrt %366 : vector<48x1xf32>
    %368 = vector.broadcast %367 : vector<48x1xf32> to vector<48x128xf32>
    %369 = arith.mulf %359, %368 : vector<48x128xf32>
    %370 = vector.broadcast %352 : vector<1x128xf32> to vector<48x128xf32>
    %371 = arith.mulf %369, %370 : vector<48x128xf32>
    %372 = vector.broadcast %353 : vector<1x128xf32> to vector<48x128xf32>
    %373 = arith.addf %371, %372 : vector<48x128xf32>
    %c0_153 = arith.constant 0 : index
    %c384_154 = arith.constant 384 : index
    %374 = vector.load %arg7[%c0_153, %c384_154] : memref<1x1664xf32, #tpu.memory_space<vmem>>, vector<1x128xf32>
    %c0_155 = arith.constant 0 : index
    %c0_156 = arith.constant 0 : index
    %375 = vector.load %arg5[%c0_155, %c0_156] : memref<128x768xbf16, #tpu.memory_space<vmem>>, vector<128x128xbf16>
    %c0_157 = arith.constant 0 : index
    %c512_158 = arith.constant 512 : index
    %376 = vector.load %arg7[%c0_157, %c512_158] : memref<1x1664xf32, #tpu.memory_space<vmem>>, vector<1x128xf32>
    %377 = arith.truncf %374 : vector<1x128xf32> to vector<1x128xbf16>
    %cst_159 = arith.constant dense<0.000000e+00> : vector<1x128xf32>
    %378 = tpu.matmul %377, %375, %cst_159 {dimension_numbers = #tpu.dot_dimension_numbers<[1], [0], [0], [1], [0, 0, 1, 1], [], []>} : vector<1x128xbf16>, vector<128x128xbf16>, vector<1x128xf32> -> vector<1x128xf32>
    %379 = arith.addf %378, %376 : vector<1x128xf32>
    %380 = vector.shape_cast %379 : vector<1x128xf32> to vector<1x128xf32>
    %381 = vector.broadcast %380 : vector<1x128xf32> to vector<3x128xf32>
    %c0_160 = arith.constant 0 : index
    %c128_161 = arith.constant 128 : index
    %382 = vector.load %arg5[%c0_160, %c128_161] : memref<128x768xbf16, #tpu.memory_space<vmem>>, vector<128x256xbf16>
    %c0_162 = arith.constant 0 : index
    %c640_163 = arith.constant 640 : index
    %383 = vector.load %arg7[%c0_162, %c640_163] : memref<1x1664xf32, #tpu.memory_space<vmem>>, vector<1x256xf32>
    %384 = arith.truncf %373 : vector<48x128xf32> to vector<48x128xbf16>
    %cst_164 = arith.constant dense<0.000000e+00> : vector<48x256xf32>
    %385 = tpu.matmul %384, %382, %cst_164 {dimension_numbers = #tpu.dot_dimension_numbers<[1], [0], [0], [1], [0, 0, 1, 1], [], []>} : vector<48x128xbf16>, vector<128x256xbf16>, vector<48x256xf32> -> vector<48x256xf32>
    %386 = vector.broadcast %383 : vector<1x256xf32> to vector<48x256xf32>
    %387 = arith.addf %385, %386 : vector<48x256xf32>
    %388 = vector.extract_strided_slice %387 {offsets = [0, 0], sizes = [48, 128], strides = [1, 1]} : vector<48x256xf32> to vector<48x128xf32>
    %389 = vector.extract_strided_slice %387 {offsets = [0, 128], sizes = [48, 128], strides = [1, 1]} : vector<48x256xf32> to vector<48x128xf32>
    %390 = vector.shape_cast %381 : vector<3x128xf32> to vector<3x1x128xf32>
    %391 = arith.truncf %390 : vector<3x1x128xf32> to vector<3x1x128xbf16>
    %392 = vector.shape_cast %388 : vector<48x128xf32> to vector<3x16x128xf32>
    %393 = arith.truncf %392 : vector<3x16x128xf32> to vector<3x16x128xbf16>
    %394 = vector.shape_cast %389 : vector<48x128xf32> to vector<3x16x128xf32>
    %395 = arith.truncf %394 : vector<3x16x128xf32> to vector<3x16x128xbf16>
    %396 = vector.extract_strided_slice %391 {offsets = [0, 0, 0], sizes = [3, 1, 32], strides = [1, 1, 1]} : vector<3x1x128xbf16> to vector<3x1x32xbf16>
    %397 = vector.extract_strided_slice %393 {offsets = [0, 0, 0], sizes = [3, 16, 32], strides = [1, 1, 1]} : vector<3x16x128xbf16> to vector<3x16x32xbf16>
    "tpu.trace_start"() <{level = 10 : i32, message = "bqd,bkd->bqk"}> : () -> ()
    %cst_165 = arith.constant dense<0.000000e+00> : vector<3x1x16xf32>
    %398 = tpu.matmul %396, %397, %cst_165 {dimension_numbers = #tpu.dot_dimension_numbers<[2], [2], [1], [1], [0, 0, 0, 1, 1, 1], [0], [0]>} : vector<3x1x32xbf16>, vector<3x16x32xbf16>, vector<3x1x16xf32> -> vector<3x1x16xf32>
    "tpu.trace_stop"() : () -> ()
    %cst_166 = arith.constant 0.176776692 : f32
    %399 = vector.broadcast %cst_166 : f32 to vector<3x1x16xf32>
    %400 = arith.mulf %398, %399 : vector<3x1x16xf32>
    %cst_167 = arith.constant dense<0xFF800000> : vector<3x1xf32>
    %401 = vector.multi_reduction <maximumf>, %400, %cst_167 [2] : vector<3x1x16xf32> to vector<3x1xf32>
    %402 = vector.shape_cast %401 : vector<3x1xf32> to vector<3x1x1xf32>
    %403 = vector.broadcast %402 : vector<3x1x1xf32> to vector<3x1x16xf32>
    %404 = arith.subf %400, %403 : vector<3x1x16xf32>
    %405 = math.exp %404 : vector<3x1x16xf32>
    %cst_168 = arith.constant dense<0.000000e+00> : vector<3x1xf32>
    %406 = vector.multi_reduction <add>, %405, %cst_168 [2] : vector<3x1x16xf32> to vector<3x1xf32>
    %407 = vector.shape_cast %406 : vector<3x1xf32> to vector<3x1x1xf32>
    %408 = vector.broadcast %407 : vector<3x1x1xf32> to vector<3x1x16xf32>
    %409 = arith.divf %405, %408 : vector<3x1x16xf32>
    %410 = arith.truncf %409 : vector<3x1x16xf32> to vector<3x1x16xbf16>
    %411 = vector.extract_strided_slice %395 {offsets = [0, 0, 0], sizes = [3, 16, 32], strides = [1, 1, 1]} : vector<3x16x128xbf16> to vector<3x16x32xbf16>
    "tpu.trace_start"() <{level = 10 : i32, message = "bqk,bkd->bqd"}> : () -> ()
    %cst_169 = arith.constant dense<0.000000e+00> : vector<3x1x32xf32>
    %412 = tpu.matmul %410, %411, %cst_169 {dimension_numbers = #tpu.dot_dimension_numbers<[2], [1], [1], [2], [0, 0, 0, 1, 1, 2], [0], [0]>} : vector<3x1x16xbf16>, vector<3x16x32xbf16>, vector<3x1x32xf32> -> vector<3x1x32xf32>
    "tpu.trace_stop"() : () -> ()
    %413 = vector.extract_strided_slice %391 {offsets = [0, 0, 32], sizes = [3, 1, 32], strides = [1, 1, 1]} : vector<3x1x128xbf16> to vector<3x1x32xbf16>
    %414 = vector.extract_strided_slice %393 {offsets = [0, 0, 32], sizes = [3, 16, 32], strides = [1, 1, 1]} : vector<3x16x128xbf16> to vector<3x16x32xbf16>
    "tpu.trace_start"() <{level = 10 : i32, message = "bqd,bkd->bqk"}> : () -> ()
    %cst_170 = arith.constant dense<0.000000e+00> : vector<3x1x16xf32>
    %415 = tpu.matmul %413, %414, %cst_170 {dimension_numbers = #tpu.dot_dimension_numbers<[2], [2], [1], [1], [0, 0, 0, 1, 1, 1], [0], [0]>} : vector<3x1x32xbf16>, vector<3x16x32xbf16>, vector<3x1x16xf32> -> vector<3x1x16xf32>
    "tpu.trace_stop"() : () -> ()
    %cst_171 = arith.constant 0.176776692 : f32
    %416 = vector.broadcast %cst_171 : f32 to vector<3x1x16xf32>
    %417 = arith.mulf %415, %416 : vector<3x1x16xf32>
    %cst_172 = arith.constant dense<0xFF800000> : vector<3x1xf32>
    %418 = vector.multi_reduction <maximumf>, %417, %cst_172 [2] : vector<3x1x16xf32> to vector<3x1xf32>
    %419 = vector.shape_cast %418 : vector<3x1xf32> to vector<3x1x1xf32>
    %420 = vector.broadcast %419 : vector<3x1x1xf32> to vector<3x1x16xf32>
    %421 = arith.subf %417, %420 : vector<3x1x16xf32>
    %422 = math.exp %421 : vector<3x1x16xf32>
    %cst_173 = arith.constant dense<0.000000e+00> : vector<3x1xf32>
    %423 = vector.multi_reduction <add>, %422, %cst_173 [2] : vector<3x1x16xf32> to vector<3x1xf32>
    %424 = vector.shape_cast %423 : vector<3x1xf32> to vector<3x1x1xf32>
    %425 = vector.broadcast %424 : vector<3x1x1xf32> to vector<3x1x16xf32>
    %426 = arith.divf %422, %425 : vector<3x1x16xf32>
    %427 = arith.truncf %426 : vector<3x1x16xf32> to vector<3x1x16xbf16>
    %428 = vector.extract_strided_slice %395 {offsets = [0, 0, 32], sizes = [3, 16, 32], strides = [1, 1, 1]} : vector<3x16x128xbf16> to vector<3x16x32xbf16>
    "tpu.trace_start"() <{level = 10 : i32, message = "bqk,bkd->bqd"}> : () -> ()
    %cst_174 = arith.constant dense<0.000000e+00> : vector<3x1x32xf32>
    %429 = tpu.matmul %427, %428, %cst_174 {dimension_numbers = #tpu.dot_dimension_numbers<[2], [1], [1], [2], [0, 0, 0, 1, 1, 2], [0], [0]>} : vector<3x1x16xbf16>, vector<3x16x32xbf16>, vector<3x1x32xf32> -> vector<3x1x32xf32>
    "tpu.trace_stop"() : () -> ()
    %430 = vector.extract_strided_slice %391 {offsets = [0, 0, 64], sizes = [3, 1, 32], strides = [1, 1, 1]} : vector<3x1x128xbf16> to vector<3x1x32xbf16>
    %431 = vector.extract_strided_slice %393 {offsets = [0, 0, 64], sizes = [3, 16, 32], strides = [1, 1, 1]} : vector<3x16x128xbf16> to vector<3x16x32xbf16>
    "tpu.trace_start"() <{level = 10 : i32, message = "bqd,bkd->bqk"}> : () -> ()
    %cst_175 = arith.constant dense<0.000000e+00> : vector<3x1x16xf32>
    %432 = tpu.matmul %430, %431, %cst_175 {dimension_numbers = #tpu.dot_dimension_numbers<[2], [2], [1], [1], [0, 0, 0, 1, 1, 1], [0], [0]>} : vector<3x1x32xbf16>, vector<3x16x32xbf16>, vector<3x1x16xf32> -> vector<3x1x16xf32>
    "tpu.trace_stop"() : () -> ()
    %cst_176 = arith.constant 0.176776692 : f32
    %433 = vector.broadcast %cst_176 : f32 to vector<3x1x16xf32>
    %434 = arith.mulf %432, %433 : vector<3x1x16xf32>
    %cst_177 = arith.constant dense<0xFF800000> : vector<3x1xf32>
    %435 = vector.multi_reduction <maximumf>, %434, %cst_177 [2] : vector<3x1x16xf32> to vector<3x1xf32>
    %436 = vector.shape_cast %435 : vector<3x1xf32> to vector<3x1x1xf32>
    %437 = vector.broadcast %436 : vector<3x1x1xf32> to vector<3x1x16xf32>
    %438 = arith.subf %434, %437 : vector<3x1x16xf32>
    %439 = math.exp %438 : vector<3x1x16xf32>
    %cst_178 = arith.constant dense<0.000000e+00> : vector<3x1xf32>
    %440 = vector.multi_reduction <add>, %439, %cst_178 [2] : vector<3x1x16xf32> to vector<3x1xf32>
    %441 = vector.shape_cast %440 : vector<3x1xf32> to vector<3x1x1xf32>
    %442 = vector.broadcast %441 : vector<3x1x1xf32> to vector<3x1x16xf32>
    %443 = arith.divf %439, %442 : vector<3x1x16xf32>
    %444 = arith.truncf %443 : vector<3x1x16xf32> to vector<3x1x16xbf16>
    %445 = vector.extract_strided_slice %395 {offsets = [0, 0, 64], sizes = [3, 16, 32], strides = [1, 1, 1]} : vector<3x16x128xbf16> to vector<3x16x32xbf16>
    "tpu.trace_start"() <{level = 10 : i32, message = "bqk,bkd->bqd"}> : () -> ()
    %cst_179 = arith.constant dense<0.000000e+00> : vector<3x1x32xf32>
    %446 = tpu.matmul %444, %445, %cst_179 {dimension_numbers = #tpu.dot_dimension_numbers<[2], [1], [1], [2], [0, 0, 0, 1, 1, 2], [0], [0]>} : vector<3x1x16xbf16>, vector<3x16x32xbf16>, vector<3x1x32xf32> -> vector<3x1x32xf32>
    "tpu.trace_stop"() : () -> ()
    %447 = vector.extract_strided_slice %391 {offsets = [0, 0, 96], sizes = [3, 1, 32], strides = [1, 1, 1]} : vector<3x1x128xbf16> to vector<3x1x32xbf16>
    %448 = vector.extract_strided_slice %393 {offsets = [0, 0, 96], sizes = [3, 16, 32], strides = [1, 1, 1]} : vector<3x16x128xbf16> to vector<3x16x32xbf16>
    "tpu.trace_start"() <{level = 10 : i32, message = "bqd,bkd->bqk"}> : () -> ()
    %cst_180 = arith.constant dense<0.000000e+00> : vector<3x1x16xf32>
    %449 = tpu.matmul %447, %448, %cst_180 {dimension_numbers = #tpu.dot_dimension_numbers<[2], [2], [1], [1], [0, 0, 0, 1, 1, 1], [0], [0]>} : vector<3x1x32xbf16>, vector<3x16x32xbf16>, vector<3x1x16xf32> -> vector<3x1x16xf32>
    "tpu.trace_stop"() : () -> ()
    %cst_181 = arith.constant 0.176776692 : f32
    %450 = vector.broadcast %cst_181 : f32 to vector<3x1x16xf32>
    %451 = arith.mulf %449, %450 : vector<3x1x16xf32>
    %cst_182 = arith.constant dense<0xFF800000> : vector<3x1xf32>
    %452 = vector.multi_reduction <maximumf>, %451, %cst_182 [2] : vector<3x1x16xf32> to vector<3x1xf32>
    %453 = vector.shape_cast %452 : vector<3x1xf32> to vector<3x1x1xf32>
    %454 = vector.broadcast %453 : vector<3x1x1xf32> to vector<3x1x16xf32>
    %455 = arith.subf %451, %454 : vector<3x1x16xf32>
    %456 = math.exp %455 : vector<3x1x16xf32>
    %cst_183 = arith.constant dense<0.000000e+00> : vector<3x1xf32>
    %457 = vector.multi_reduction <add>, %456, %cst_183 [2] : vector<3x1x16xf32> to vector<3x1xf32>
    %458 = vector.shape_cast %457 : vector<3x1xf32> to vector<3x1x1xf32>
    %459 = vector.broadcast %458 : vector<3x1x1xf32> to vector<3x1x16xf32>
    %460 = arith.divf %456, %459 : vector<3x1x16xf32>
    %461 = arith.truncf %460 : vector<3x1x16xf32> to vector<3x1x16xbf16>
    %462 = vector.extract_strided_slice %395 {offsets = [0, 0, 96], sizes = [3, 16, 32], strides = [1, 1, 1]} : vector<3x16x128xbf16> to vector<3x16x32xbf16>
    "tpu.trace_start"() <{level = 10 : i32, message = "bqk,bkd->bqd"}> : () -> ()
    %cst_184 = arith.constant dense<0.000000e+00> : vector<3x1x32xf32>
    %463 = tpu.matmul %461, %462, %cst_184 {dimension_numbers = #tpu.dot_dimension_numbers<[2], [1], [1], [2], [0, 0, 0, 1, 1, 2], [0], [0]>} : vector<3x1x16xbf16>, vector<3x16x32xbf16>, vector<3x1x32xf32> -> vector<3x1x32xf32>
    "tpu.trace_stop"() : () -> ()
    %464 = tpu.concatenate %412, %429, %446, %463 in 2 : vector<3x1x32xf32>, vector<3x1x32xf32>, vector<3x1x32xf32>, vector<3x1x32xf32> -> vector<3x1x128xf32>
    %465 = vector.shape_cast %464 : vector<3x1x128xf32> to vector<3x128xf32>
    %c0_185 = arith.constant 0 : index
    %c384_186 = arith.constant 384 : index
    %466 = vector.load %arg5[%c0_185, %c384_186] : memref<128x768xbf16, #tpu.memory_space<vmem>>, vector<128x128xbf16>
    %c0_187 = arith.constant 0 : index
    %c896_188 = arith.constant 896 : index
    %467 = vector.load %arg7[%c0_187, %c896_188] : memref<1x1664xf32, #tpu.memory_space<vmem>>, vector<1x128xf32>
    %468 = arith.truncf %465 : vector<3x128xf32> to vector<3x128xbf16>
    %cst_189 = arith.constant dense<0.000000e+00> : vector<3x128xf32>
    %469 = tpu.matmul %468, %466, %cst_189 {dimension_numbers = #tpu.dot_dimension_numbers<[1], [0], [0], [1], [0, 0, 1, 1], [], []>} : vector<3x128xbf16>, vector<128x128xbf16>, vector<3x128xf32> -> vector<3x128xf32>
    %470 = vector.broadcast %467 : vector<1x128xf32> to vector<3x128xf32>
    %471 = arith.addf %469, %470 : vector<3x128xf32>
    %c0_190 = arith.constant 0 : index
    %c1024_191 = arith.constant 1024 : index
    %472 = vector.load %arg7[%c0_190, %c1024_191] : memref<1x1664xf32, #tpu.memory_space<vmem>>, vector<1x128xf32>
    %c0_192 = arith.constant 0 : index
    %c1152 = arith.constant 1152 : index
    %473 = vector.load %arg7[%c0_192, %c1152] : memref<1x1664xf32, #tpu.memory_space<vmem>>, vector<1x128xf32>
    %cst_193 = arith.constant dense<0.000000e+00> : vector<3xf32>
    %474 = vector.multi_reduction <add>, %471, %cst_193 [1] : vector<3x128xf32> to vector<3xf32>
    %475 = vector.shape_cast %474 : vector<3xf32> to vector<3x1xf32>
    %cst_194 = arith.constant 1.280000e+02 : f32
    %476 = vector.broadcast %cst_194 : f32 to vector<3x1xf32>
    %477 = arith.divf %475, %476 : vector<3x1xf32>
    %478 = vector.broadcast %477 : vector<3x1xf32> to vector<3x128xf32>
    %479 = arith.subf %471, %478 : vector<3x128xf32>
    %480 = arith.mulf %479, %479 : vector<3x128xf32>
    %cst_195 = arith.constant dense<0.000000e+00> : vector<3xf32>
    %481 = vector.multi_reduction <add>, %480, %cst_195 [1] : vector<3x128xf32> to vector<3xf32>
    %482 = vector.shape_cast %481 : vector<3xf32> to vector<3x1xf32>
    %cst_196 = arith.constant 1.280000e+02 : f32
    %483 = vector.broadcast %cst_196 : f32 to vector<3x1xf32>
    %484 = arith.divf %482, %483 : vector<3x1xf32>
    %cst_197 = arith.constant 9.99999997E-7 : f32
    %485 = vector.broadcast %cst_197 : f32 to vector<3x1xf32>
    %486 = arith.addf %484, %485 : vector<3x1xf32>
    %487 = math.rsqrt %486 : vector<3x1xf32>
    %488 = vector.broadcast %487 : vector<3x1xf32> to vector<3x128xf32>
    %489 = arith.mulf %479, %488 : vector<3x128xf32>
    %490 = vector.broadcast %472 : vector<1x128xf32> to vector<3x128xf32>
    %491 = arith.mulf %489, %490 : vector<3x128xf32>
    %492 = vector.broadcast %473 : vector<1x128xf32> to vector<3x128xf32>
    %493 = arith.addf %491, %492 : vector<3x128xf32>
    %c0_198 = arith.constant 0 : index
    %c512_199 = arith.constant 512 : index
    %494 = vector.load %arg5[%c0_198, %c512_199] : memref<128x768xbf16, #tpu.memory_space<vmem>>, vector<128x256xbf16>
    %c0_200 = arith.constant 0 : index
    %c1280_201 = arith.constant 1280 : index
    %495 = vector.load %arg7[%c0_200, %c1280_201] : memref<1x1664xf32, #tpu.memory_space<vmem>>, vector<1x256xf32>
    %496 = arith.truncf %493 : vector<3x128xf32> to vector<3x128xbf16>
    %cst_202 = arith.constant dense<0.000000e+00> : vector<3x256xf32>
    %497 = tpu.matmul %496, %494, %cst_202 {dimension_numbers = #tpu.dot_dimension_numbers<[1], [0], [0], [1], [0, 0, 1, 1], [], []>} : vector<3x128xbf16>, vector<128x256xbf16>, vector<3x256xf32> -> vector<3x256xf32>
    %498 = vector.broadcast %495 : vector<1x256xf32> to vector<3x256xf32>
    %499 = arith.addf %497, %498 : vector<3x256xf32>
    %cst_203 = arith.constant 5.000000e-01 : f32
    %500 = vector.broadcast %cst_203 : f32 to vector<3x256xf32>
    %501 = arith.mulf %500, %499 : vector<3x256xf32>
    %cst_204 = arith.constant 0.707106769 : f32
    %502 = vector.broadcast %cst_204 : f32 to vector<3x256xf32>
    %503 = arith.mulf %499, %502 : vector<3x256xf32>
    %504 = math.erf %503 : vector<3x256xf32>
    %cst_205 = arith.constant 1.000000e+00 : f32
    %505 = vector.broadcast %cst_205 : f32 to vector<3x256xf32>
    %506 = arith.addf %505, %504 : vector<3x256xf32>
    %507 = arith.mulf %501, %506 : vector<3x256xf32>
    %c0_206 = arith.constant 0 : index
    %c128_207 = arith.constant 128 : index
    %508 = vector.load %arg6[%c0_206, %c128_207] : memref<256x256xbf16, #tpu.memory_space<vmem>>, vector<256x128xbf16>
    %c0_208 = arith.constant 0 : index
    %c1536 = arith.constant 1536 : index
    %509 = vector.load %arg7[%c0_208, %c1536] : memref<1x1664xf32, #tpu.memory_space<vmem>>, vector<1x128xf32>
    %510 = arith.truncf %507 : vector<3x256xf32> to vector<3x256xbf16>
    %cst_209 = arith.constant dense<0.000000e+00> : vector<3x128xf32>
    %511 = tpu.matmul %510, %508, %cst_209 {dimension_numbers = #tpu.dot_dimension_numbers<[1], [0], [0], [1], [0, 0, 1, 1], [], []>} : vector<3x256xbf16>, vector<256x128xbf16>, vector<3x128xf32> -> vector<3x128xf32>
    %512 = vector.broadcast %509 : vector<1x128xf32> to vector<3x128xf32>
    %513 = arith.addf %511, %512 : vector<3x128xf32>
    %514 = arith.addf %471, %513 : vector<3x128xf32>
    %c0_210 = arith.constant 0 : index
    %c0_211 = arith.constant 0 : index
    %c0_212 = arith.constant 0 : index
    %515 = vector.load %arg9[%c0_210, %c0_211, %c0_212] : memref<1x3x128xf32, #tpu.memory_space<vmem>>, vector<1x3x128xf32>
    %516 = vector.shape_cast %515 : vector<1x3x128xf32> to vector<3x128xf32>
    %517 = vector.shape_cast %514 : vector<3x128xf32> to vector<1x3x128xf32>
    tpu.vector_store %arg9[%c0_210, %c0_211, %c0_212], %517 {strides = array<i32>} : memref<1x3x128xf32, #tpu.memory_space<vmem>>, vector<1x3x128xf32>,
    return
  }
  func.func @transform_0(%arg0: i32) -> (i32, i32, i32) {
    %c0_i32 = arith.constant 0 : i32
    %c0_i32_0 = arith.constant 0 : i32
    %c0_i32_1 = arith.constant 0 : i32
    return %arg0, %c0_i32, %c0_i32_0 : i32, i32, i32
  }
  func.func @transform_1(%arg0: i32) -> (i32, i32, i32) {
    %c0_i32 = arith.constant 0 : i32
    %c0_i32_0 = arith.constant 0 : i32
    %c0_i32_1 = arith.constant 0 : i32
    %c0_i32_2 = arith.constant 0 : i32
    return %c0_i32, %c0_i32_0, %c0_i32_1 : i32, i32, i32
  }
  func.func @transform_2(%arg0: i32) -> (i32, i32, i32) {
    %c0_i32 = arith.constant 0 : i32
    %c0_i32_0 = arith.constant 0 : i32
    %c0_i32_1 = arith.constant 0 : i32
    %c0_i32_2 = arith.constant 0 : i32
    return %c0_i32, %c0_i32_0, %c0_i32_1 : i32, i32, i32
  }
  func.func @transform_3(%arg0: i32) -> (i32, i32, i32) {
    %c0_i32 = arith.constant 0 : i32
    %c0_i32_0 = arith.constant 0 : i32
    %c0_i32_1 = arith.constant 0 : i32
    %c0_i32_2 = arith.constant 0 : i32
    return %c0_i32, %c0_i32_0, %c0_i32_1 : i32, i32, i32
  }
  func.func @transform_4(%arg0: i32) -> (i32, i32) {
    %c0_i32 = arith.constant 0 : i32
    %c0_i32_0 = arith.constant 0 : i32
    %c0_i32_1 = arith.constant 0 : i32
    return %c0_i32, %c0_i32_0 : i32, i32
  }
  func.func @transform_5(%arg0: i32) -> (i32, i32) {
    %c0_i32 = arith.constant 0 : i32
    %c0_i32_0 = arith.constant 0 : i32
    %c0_i32_1 = arith.constant 0 : i32
    return %c0_i32, %c0_i32_0 : i32, i32
  }
  func.func @transform_6(%arg0: i32) -> (i32, i32) {
    %c0_i32 = arith.constant 0 : i32
    %c0_i32_0 = arith.constant 0 : i32
    %c0_i32_1 = arith.constant 0 : i32
    return %c0_i32, %c0_i32_0 : i32, i32
  }
  func.func @transform_7(%arg0: i32) -> (i32, i32) {
    %c0_i32 = arith.constant 0 : i32
    %c0_i32_0 = arith.constant 0 : i32
    %c0_i32_1 = arith.constant 0 : i32
    return %c0_i32, %c0_i32_0 : i32, i32
  }
  func.func @transform_8(%arg0: i32) -> (i32, i32, i32) {
    %c0_i32 = arith.constant 0 : i32
    %c0_i32_0 = arith.constant 0 : i32
    %c0_i32_1 = arith.constant 0 : i32
    return %arg0, %c0_i32, %c0_i32_0 : i32, i32, i32
  }
}

</mosaic_0001>

<llo_original>
// kernel: siglip_eecoder_forward.1
$region0: #{siglip_eecoder_forward.1}
  #allocation0 [shape = 'u32[]', space=smem, size = 0x4, offset = 0x4, fixed_abs, tag = 'smem constant byte address 0x4 - core index']
  #allocation1 [shape = 'u32[72,128]{1,0:T(1,128)}', space=vmem, size = 0x9000, scoped, tag = 'internal scratch']
  %s0 = inlined_call_operand.vmem [shape: f32[6,16,256], index: 0, kind: input, shape index: {}]
  %s1 = inlined_call_operand.vmem [shape: bf16[2,128,768], index: 1, kind: input, shape index: {}]
  %s2 = inlined_call_operand.vmem [shape: bf16[2,256,128], index: 2, kind: input, shape index: {}]
  %s3 = inlined_call_operand.vmem [shape: f32[2,1,1408], index: 3, kind: input, shape index: {}]
  %s4 = inlined_call_operand.vmem [shape: bf16[128,768], index: 4, kind: input, shape index: {}]
  %s5 = inlined_call_operand.vmem [shape: bf16[256,256], index: 5, kind: input, shape index: {}]
  %s6 = inlined_call_operand.vmem [shape: f32[1,1664], index: 6, kind: input, shape index: {}]
  %s7 = inlined_call_operand.vmem [shape: f32[16,128], index: 7, kind: input, shape index: {}]
  %s8 = inlined_call_operand.vmem [shape: f32[2,3,128], index: 8, kind: output, shape index: {}]
  %s9 = sld [smem:[#allocation0]]
  $region65: #{siglip_eecoder_forward.1} parent=0
    _
  %s11 = ssub.s32 1, %s9
  %s12 = scalar_select 0, %s11, %s9
  loop: start=0, step=1, limit=4
  $region2: #{siglip_eecoder_forward.1} parent=0 // loop_pre_header
    _
  $region3: #{siglip_eecoder_forward.1} parent=0 // loop_header
    %s14 = sphi 0, %s18
    %p15 = scmp.ge.s32.totalorder %s14, 4
    %s24 = sphi 0, %s26
    %s27 = sphi 0, %s24
    %s28 = sphi 0, %s27
    %s44 = sphi 0, %s28
    %s48 = sphi 0, %s48
    %s50 = sphi 0, %s48
    %s51 = sphi 0, %s50
    %s65 = sphi 0, %s51
    %s69 = sphi 0, %s69
    %s71 = sphi 0, %s69
    %s72 = sphi 0, %s71
    %s86 = sphi 0, %s72
    %s90 = sphi 0, %s90
    %s92 = sphi 0, %s90
    %s93 = sphi 0, %s92
    %s107 = sphi 0, %s93
    %s111 = sphi 0, %s111
    %s113 = sphi 0, %s111
    %s114 = sphi 0, %s113
    %s128 = sphi 0, %s114
    %s132 = sphi 0, %s132
    %s134 = sphi 0, %s132
    %s135 = sphi 0, %s134
    %s149 = sphi 0, %s135
    %s153 = sphi 0, %s153
    %s155 = sphi 0, %s153
    %s156 = sphi 0, %s155
    %s170 = sphi 0, %s156
    %s174 = sphi 0, %s174
    %s176 = sphi 0, %s174
    %s177 = sphi 0, %s176
    %s191 = sphi 0, %s177
    %s197 = sphi 0, %s199
    %s200 = sphi 0, %s197
    %s201 = sphi 0, %s200
    %s217 = sphi 0, %s201
  $region4: #{siglip_eecoder_forward.1} parent=0 // loop_header_branch
    %17 = sbr.rel (%p15) target = $region8
  $region5: #{siglip_eecoder_forward.1} parent=0 // loop_body
    %s19 = ssub.s32 %s14, 1
    %s20 = ssub.s32 %s14, 2
    %s21 = sadd.s32 %s14, 1
    %s22 = ssub.s32 %s14, %s21
    %p23 = scmp.eq.s32.totalorder %s22, 0
    %s25 = sadd.s32 %s24, 1
    %s26 = scalar_select %p23, %s24, %s25
    %p29 = pneg %p23
    %p30 = scmp.eq.s32.totalorder %s14, 1
    %p31 = por %p29, %p30
    %p32 = scmp.ne.s32.totalorder %s24, %s27
    %p33 = scmp.eq.s32.totalorder %s14, 0
    %p34 = por %p32, %p33
    %p35 = scmp.ne.s32.totalorder %s24, %s27
    %p36 = scmp.eq.s32.totalorder %s19, 1
    %p37 = por %p35, %p36
    %p38 = scmp.ne.s32.totalorder %s27, %s28
    %p39 = scmp.eq.s32.totalorder %s19, 0
    %p40 = por %p38, %p39
    %p41 = scmp.ne.s32.totalorder %s27, %s28
    %p42 = scmp.eq.s32.totalorder %s20, 1
    %p43 = por %p41, %p42
    %p45 = scmp.ne.s32.totalorder %s28, %s44
    %p46 = scmp.eq.s32.totalorder %s20, 0
    %p47 = por %p45, %p46
    %s49 = sadd.s32 %s48, 1
    %p52 = scmp.eq.s32.totalorder %s14, 1
    %p53 = scmp.ne.s32.totalorder %s48, %s50
    %p54 = scmp.eq.s32.totalorder %s14, 0
    %p55 = por %p53, %p54
    %p56 = scmp.ne.s32.totalorder %s48, %s50
    %p57 = scmp.eq.s32.totalorder %s19, 1
    %p58 = por %p56, %p57
    %p59 = scmp.ne.s32.totalorder %s50, %s51
    %p60 = scmp.eq.s32.totalorder %s19, 0
    %p61 = por %p59, %p60
    %p62 = scmp.ne.s32.totalorder %s50, %s51
    %p63 = scmp.eq.s32.totalorder %s20, 1
    %p64 = por %p62, %p63
    %p66 = scmp.ne.s32.totalorder %s51, %s65
    %p67 = scmp.eq.s32.totalorder %s20, 0
    %p68 = por %p66, %p67
    %s70 = sadd.s32 %s69, 1
    %p73 = scmp.eq.s32.totalorder %s14, 1
    %p74 = scmp.ne.s32.totalorder %s69, %s71
    %p75 = scmp.eq.s32.totalorder %s14, 0
    %p76 = por %p74, %p75
    %p77 = scmp.ne.s32.totalorder %s69, %s71
    %p78 = scmp.eq.s32.totalorder %s19, 1
    %p79 = por %p77, %p78
    %p80 = scmp.ne.s32.totalorder %s71, %s72
    %p81 = scmp.eq.s32.totalorder %s19, 0
    %p82 = por %p80, %p81
    %p83 = scmp.ne.s32.totalorder %s71, %s72
    %p84 = scmp.eq.s32.totalorder %s20, 1
    %p85 = por %p83, %p84
    %p87 = scmp.ne.s32.totalorder %s72, %s86
    %p88 = scmp.eq.s32.totalorder %s20, 0
    %p89 = por %p87, %p88
    %s91 = sadd.s32 %s90, 1
    %p94 = scmp.eq.s32.totalorder %s14, 1
    %p95 = scmp.ne.s32.totalorder %s90, %s92
    %p96 = scmp.eq.s32.totalorder %s14, 0
    %p97 = por %p95, %p96
    %p98 = scmp.ne.s32.totalorder %s90, %s92
    %p99 = scmp.eq.s32.totalorder %s19, 1
    %p100 = por %p98, %p99
    %p101 = scmp.ne.s32.totalorder %s92, %s93
    %p102 = scmp.eq.s32.totalorder %s19, 0
    %p103 = por %p101, %p102
    %p104 = scmp.ne.s32.totalorder %s92, %s93
    %p105 = scmp.eq.s32.totalorder %s20, 1
    %p106 = por %p104, %p105
    %p108 = scmp.ne.s32.totalorder %s93, %s107
    %p109 = scmp.eq.s32.totalorder %s20, 0
    %p110 = por %p108, %p109
    %s112 = sadd.s32 %s111, 1
    %p115 = scmp.eq.s32.totalorder %s14, 1
    %p116 = scmp.ne.s32.totalorder %s111, %s113
    %p117 = scmp.eq.s32.totalorder %s14, 0
    %p118 = por %p116, %p117
    %p119 = scmp.ne.s32.totalorder %s111, %s113
    %p120 = scmp.eq.s32.totalorder %s19, 1
    %p121 = por %p119, %p120
    %p122 = scmp.ne.s32.totalorder %s113, %s114
    %p123 = scmp.eq.s32.totalorder %s19, 0
    %p124 = por %p122, %p123
    %p125 = scmp.ne.s32.totalorder %s113, %s114
    %p126 = scmp.eq.s32.totalorder %s20, 1
    %p127 = por %p125, %p126
    %p129 = scmp.ne.s32.totalorder %s114, %s128
    %p130 = scmp.eq.s32.totalorder %s20, 0
    %p131 = por %p129, %p130
    %s133 = sadd.s32 %s132, 1
    %p136 = scmp.eq.s32.totalorder %s14, 1
    %p137 = scmp.ne.s32.totalorder %s132, %s134
    %p138 = scmp.eq.s32.totalorder %s14, 0
    %p139 = por %p137, %p138
    %p140 = scmp.ne.s32.totalorder %s132, %s134
    %p141 = scmp.eq.s32.totalorder %s19, 1
    %p142 = por %p140, %p141
    %p143 = scmp.ne.s32.totalorder %s134, %s135
    %p144 = scmp.eq.s32.totalorder %s19, 0
    %p145 = por %p143, %p144
    %p146 = scmp.ne.s32.totalorder %s134, %s135
    %p147 = scmp.eq.s32.totalorder %s20, 1
    %p148 = por %p146, %p147
    %p150 = scmp.ne.s32.totalorder %s135, %s149
    %p151 = scmp.eq.s32.totalorder %s20, 0
    %p152 = por %p150, %p151
    %s154 = sadd.s32 %s153, 1
    %p157 = scmp.eq.s32.totalorder %s14, 1
    %p158 = scmp.ne.s32.totalorder %s153, %s155
    %p159 = scmp.eq.s32.totalorder %s14, 0
    %p160 = por %p158, %p159
    %p161 = scmp.ne.s32.totalorder %s153, %s155
    %p162 = scmp.eq.s32.totalorder %s19, 1
    %p163 = por %p161, %p162
    %p164 = scmp.ne.s32.totalorder %s155, %s156
    %p165 = scmp.eq.s32.totalorder %s19, 0
    %p166 = por %p164, %p165
    %p167 = scmp.ne.s32.totalorder %s155, %s156
    %p168 = scmp.eq.s32.totalorder %s20, 1
    %p169 = por %p167, %p168
    %p171 = scmp.ne.s32.totalorder %s156, %s170
    %p172 = scmp.eq.s32.totalorder %s20, 0
    %p173 = por %p171, %p172
    %s175 = sadd.s32 %s174, 1
    %p178 = scmp.eq.s32.totalorder %s14, 1
    %p179 = scmp.ne.s32.totalorder %s174, %s176
    %p180 = scmp.eq.s32.totalorder %s14, 0
    %p181 = por %p179, %p180
    %p182 = scmp.ne.s32.totalorder %s174, %s176
    %p183 = scmp.eq.s32.totalorder %s19, 1
    %p184 = por %p182, %p183
    %p185 = scmp.ne.s32.totalorder %s176, %s177
    %p186 = scmp.eq.s32.totalorder %s19, 0
    %p187 = por %p185, %p186
    %p188 = scmp.ne.s32.totalorder %s176, %s177
    %p189 = scmp.eq.s32.totalorder %s20, 1
    %p190 = por %p188, %p189
    %p192 = scmp.ne.s32.totalorder %s177, %s191
    %p193 = scmp.eq.s32.totalorder %s20, 0
    %p194 = por %p192, %p193
    %s195 = ssub.s32 %s14, %s21
    %p196 = scmp.eq.s32.totalorder %s195, 0
    %s198 = sadd.s32 %s197, 1
    %s199 = scalar_select %p196, %s197, %s198
    %p202 = pneg %p196
    %p203 = scmp.eq.s32.totalorder %s14, 1
    %p204 = por %p202, %p203
    %p205 = scmp.ne.s32.totalorder %s197, %s200
    %p206 = scmp.eq.s32.totalorder %s14, 0
    %p207 = por %p205, %p206
    %p208 = scmp.ne.s32.totalorder %s197, %s200
    %p209 = scmp.eq.s32.totalorder %s19, 1
    %p210 = por %p208, %p209
    %p211 = scmp.ne.s32.totalorder %s200, %s201
    %p212 = scmp.eq.s32.totalorder %s19, 0
    %p213 = por %p211, %p212
    %p214 = scmp.ne.s32.totalorder %s200, %s201
    %p215 = scmp.eq.s32.totalorder %s20, 1
    %p216 = por %p214, %p215
    %p218 = scmp.ne.s32.totalorder %s201, %s217
    %p219 = scmp.eq.s32.totalorder %s20, 0
    %p220 = por %p218, %p219
    %p221 = scmp.le.s32.totalorder 1, %s14
    %p222 = scmp.lt.s32.totalorder %s14, 3
    %p223 = pnand %p221, %p222
    %p224 = pneg %p223
    // Predicated region
    $region9: #{siglip_eecoder_forward.1} parent=5 // pred_check
      _
    $region10: #{siglip_eecoder_forward.1} parent=5 // pred_check_branch
      %226 = sbr.rel (%p223) target = $region12
    $region11: #{siglip_eecoder_forward.1} parent=5 // pred_region
      %s227 = ssub.s32 %s14, 1
      // Predicated region
      $region13: #{siglip_eecoder_forward.1} parent=11 // pred_check
        %p228 = pneg %p61
      $region14: #{siglip_eecoder_forward.1} parent=11 // pred_check_branch
        %230 = sbr.rel (%p228) target = $region16
      $region15: #{siglip_eecoder_forward.1} parent=11 // pred_region
        _
      $region16: #{siglip_eecoder_forward.1} parent=11 // pred_fallthru
        _
      // Predicated region
      $region17: #{siglip_eecoder_forward.1} parent=11 // pred_check
        %p231 = pneg %p82
      $region18: #{siglip_eecoder_forward.1} parent=11 // pred_check_branch
        %233 = sbr.rel (%p231) target = $region20
      $region19: #{siglip_eecoder_forward.1} parent=11 // pred_region
        _
      $region20: #{siglip_eecoder_forward.1} parent=11 // pred_fallthru
        _
      // Predicated region
      $region21: #{siglip_eecoder_forward.1} parent=11 // pred_check
        %p234 = pneg %p103
      $region22: #{siglip_eecoder_forward.1} parent=11 // pred_check_branch
        %236 = sbr.rel (%p234) target = $region24
      $region23: #{siglip_eecoder_forward.1} parent=11 // pred_region
        _
      $region24: #{siglip_eecoder_forward.1} parent=11 // pred_fallthru
        _
      // Predicated region
      $region25: #{siglip_eecoder_forward.1} parent=11 // pred_check
        %p237 = pneg %p124
      $region26: #{siglip_eecoder_forward.1} parent=11 // pred_check_branch
        %239 = sbr.rel (%p237) target = $region28
      $region27: #{siglip_eecoder_forward.1} parent=11 // pred_region
        _
      $region28: #{siglip_eecoder_forward.1} parent=11 // pred_fallthru
        _
      // Predicated region
      $region29: #{siglip_eecoder_forward.1} parent=11 // pred_check
        %p240 = pneg %p145
      $region30: #{siglip_eecoder_forward.1} parent=11 // pred_check_branch
        %242 = sbr.rel (%p240) target = $region32
      $region31: #{siglip_eecoder_forward.1} parent=11 // pred_region
        _
      $region32: #{siglip_eecoder_forward.1} parent=11 // pred_fallthru
        _
      // Predicated region
      $region33: #{siglip_eecoder_forward.1} parent=11 // pred_check
        %p243 = pneg %p166
      $region34: #{siglip_eecoder_forward.1} parent=11 // pred_check_branch
        %245 = sbr.rel (%p243) target = $region36
      $region35: #{siglip_eecoder_forward.1} parent=11 // pred_region
        _
      $region36: #{siglip_eecoder_forward.1} parent=11 // pred_fallthru
        _
      // Predicated region
      $region37: #{siglip_eecoder_forward.1} parent=11 // pred_check
        %p246 = pneg %p187
      $region38: #{siglip_eecoder_forward.1} parent=11 // pred_check_branch
        %248 = sbr.rel (%p246) target = $region40
      $region39: #{siglip_eecoder_forward.1} parent=11 // pred_region
        _
      $region40: #{siglip_eecoder_forward.1} parent=11 // pred_fallthru
        _
    $region12: #{siglip_eecoder_forward.1} parent=5 // pred_fallthru
      _
    %p249 = scmp.lt.s32.totalorder %s14, 2
    // Predicated region
    $region41: #{siglip_eecoder_forward.1} parent=5 // pred_check
      %p250 = pneg %p249
    $region42: #{siglip_eecoder_forward.1} parent=5 // pred_check_branch
      %252 = sbr.rel (%p250) target = $region44
    $region43: #{siglip_eecoder_forward.1} parent=5 // pred_region
      // Predicated region
      $region45: #{siglip_eecoder_forward.1} parent=43 // pred_check
        %p253 = pneg %p34
      $region46: #{siglip_eecoder_forward.1} parent=43 // pred_check_branch
        %255 = sbr.rel (%p253) target = $region48
      $region47: #{siglip_eecoder_forward.1} parent=43 // pred_region
        %s256 = smul.u32 3, %s14
        %p257 = scmp.lt.s32.totalorder %s256, 5
        %s258 = scalar_select %p257, %s256, 5
        %s259 = smul.addr %s258, 4
        %s260 = smul.addr %s259, 8
        %s261 = scalar_lea.vmem %s0, %s260
        %s262 = smul.u32 3, %s14
      $region48: #{siglip_eecoder_forward.1} parent=43 // pred_fallthru
        _
    $region44: #{siglip_eecoder_forward.1} parent=5 // pred_fallthru
      _
    %p263 = scmp.le.s32.totalorder 1, %s14
    %p264 = scmp.lt.s32.totalorder %s14, 3
    %p265 = pnand %p263, %p264
    %p266 = pneg %p265
    // Predicated region
    $region49: #{siglip_eecoder_forward.1} parent=5 // pred_check
      _
    $region50: #{siglip_eecoder_forward.1} parent=5 // pred_check_branch
      %268 = sbr.rel (%p265) target = $region52
    $region51: #{siglip_eecoder_forward.1} parent=5 // pred_region
      %s269 = ssub.s32 %s14, 1
      %s270 = smul.u32 3, %s19
      %p271 = scmp.lt.s32.totalorder %s270, 5
      %s272 = scalar_select %p271, %s270, 5
      %s273 = smul.addr %s272, 4
      %s274 = smul.addr %s273, 8
      %s275 = scalar_lea.vmem %s0, %s274
      %p276 = pneg %p40
      %p277 = pneg %p37
      %p278 = pneg %p61
      %p279 = pneg %p58
      %p280 = pneg %p82
      %p281 = pneg %p79
      %p282 = pneg %p103
      %p283 = pneg %p100
      %p284 = pneg %p124
      %p285 = pneg %p121
      %p286 = pneg %p145
      %p287 = pneg %p142
      %p288 = pneg %p166
      %p289 = pneg %p163
      %p290 = pneg %p187
      %p291 = pneg %p184
      %p292 = pneg %p213
      %p293 = pneg %p210
      %p294 = scmp.lt.s32.totalorder %s19, 1
      %s295 = scalar_select %p294, %s19, 1
      %s296 = smul.addr %s295, 4
      %s297 = scalar_lea.vmem %s8, %s296
      %s298 = smul.u32 3, %s19
      %p299 = scmp.lt.s32.totalorder %s298, 5
      %s300 = scalar_select %p299, %s298, 5
      %s301 = smul.addr %s300, 4
      %s302 = smul.addr %s301, 8
      %s303 = scalar_lea.vmem %s0, %s302
      %s304 = smul.u32 3, %s19
      %p305 = scmp.lt.s32.totalorder %s19, 1
      %s306 = scalar_select %p305, %s19, 1
      %s307 = smul.addr %s306, 4
      %s308 = scalar_lea.vmem %s8, %s307
      %v310 = vld [vmem:[%s303] sm:$0xff]
      %v311 = vld [vmem:[%s303 + $0x8] sm:$0xff]
      %v312 = vld [vmem:[%s303 + $0x10] sm:$0xff]
      %v313 = vld [vmem:[%s303 + $0x18] sm:$0xff]
      %v314 = vld [vmem:[%s303 + $0x20] sm:$0xff]
      %v315 = vld [vmem:[%s303 + $0x28] sm:$0xff]
      %v316 = vld [vmem:[%s303 + $0x30] sm:$0xff]
      %v317 = vld [vmem:[%s303 + $0x38] sm:$0xff]
      %v318 = vld [vmem:[%s303 + $0x40] sm:$0xff]
      %v319 = vld [vmem:[%s303 + $0x48] sm:$0xff]
      %v320 = vld [vmem:[%s303 + $0x50] sm:$0xff]
      %v321 = vld [vmem:[%s303 + $0x58] sm:$0xff]
      %v322 = vld [vmem:[%s5] sm:$0xf]
      %v323 = vld [vmem:[%s5 + $0x8] sm:$0xf]
      %v324 = vld [vmem:[%s5 + $0x10] sm:$0xf]
      %v325 = vld [vmem:[%s5 + $0x18] sm:$0xf]
      %v326 = vld [vmem:[%s5 + $0x20] sm:$0xf]
      %v327 = vld [vmem:[%s5 + $0x28] sm:$0xf]
      %v328 = vld [vmem:[%s5 + $0x30] sm:$0xf]
      %v329 = vld [vmem:[%s5 + $0x38] sm:$0xf]
      %v330 = vld [vmem:[%s5 + $0x40] sm:$0xf]
      %v331 = vld [vmem:[%s5 + $0x48] sm:$0xf]
      %v332 = vld [vmem:[%s5 + $0x50] sm:$0xf]
      %v333 = vld [vmem:[%s5 + $0x58] sm:$0xf]
      %v334 = vld [vmem:[%s5 + $0x60] sm:$0xf]
      %v335 = vld [vmem:[%s5 + $0x68] sm:$0xf]
      %v336 = vld [vmem:[%s5 + $0x70] sm:$0xf]
      %v337 = vld [vmem:[%s5 + $0x78] sm:$0xf]
      %v338 = vld [vmem:[%s5 + $0x80] sm:$0xf]
      %v339 = vld [vmem:[%s5 + $0x88] sm:$0xf]
      %v340 = vld [vmem:[%s5 + $0x90] sm:$0xf]
      %v341 = vld [vmem:[%s5 + $0x98] sm:$0xf]
      %v342 = vld [vmem:[%s5 + $0xa0] sm:$0xf]
      %v343 = vld [vmem:[%s5 + $0xa8] sm:$0xf]
      %v344 = vld [vmem:[%s5 + $0xb0] sm:$0xf]
      %v345 = vld [vmem:[%s5 + $0xb8] sm:$0xf]
      %v346 = vld [vmem:[%s5 + $0xc0] sm:$0xf]
      %v347 = vld [vmem:[%s5 + $0xc8] sm:$0xf]
      %v348 = vld [vmem:[%s5 + $0xd0] sm:$0xf]
      %v349 = vld [vmem:[%s5 + $0xd8] sm:$0xf]
      %v350 = vld [vmem:[%s5 + $0xe0] sm:$0xf]
      %v351 = vld [vmem:[%s5 + $0xe8] sm:$0xf]
      %v352 = vld [vmem:[%s5 + $0xf0] sm:$0xf]
      %v353 = vld [vmem:[%s5 + $0xf8] sm:$0xf]
      %v354 = vld [vmem:[%s6] sm:$0x1]
      %v355 = vpack.c.bf16 %v312, %v310
      %v356 = vpack.c.bf16 %v313, %v311
      %v357 = vpack.c.bf16 %v316, %v314
      %v358 = vpack.c.bf16 %v317, %v315
      %v359 = vpack.c.bf16 %v320, %v318
      %v360 = vpack.c.bf16 %v321, %v319
      %v362 = vperm.slane %v354, 0
      %v396 = vunpack.c.l.b16 %v322
      %v397 = vunpack.c.l.b16 %v323
      %v398 = vunpack.c.l.b16 %v324
      %v399 = vunpack.c.l.b16 %v325
      %v400 = vunpack.c.l.b16 %v326
      %v401 = vunpack.c.l.b16 %v327
      %v402 = vunpack.c.l.b16 %v328
      %v403 = vunpack.c.l.b16 %v329
      %v404 = vunpack.c.l.b16 %v330
      %v405 = vunpack.c.l.b16 %v331
      %v406 = vunpack.c.l.b16 %v332
      %v407 = vunpack.c.l.b16 %v333
      %v408 = vunpack.c.l.b16 %v334
      %v409 = vunpack.c.l.b16 %v335
      %v410 = vunpack.c.l.b16 %v336
      %v411 = vunpack.c.l.b16 %v337
      %v412 = vunpack.c.l.b16 %v338
      %v413 = vunpack.c.l.b16 %v339
      %v414 = vunpack.c.l.b16 %v340
      %v415 = vunpack.c.l.b16 %v341
      %v416 = vunpack.c.l.b16 %v342
      %v417 = vunpack.c.l.b16 %v343
      %v418 = vunpack.c.l.b16 %v344
      %v419 = vunpack.c.l.b16 %v345
      %v420 = vunpack.c.l.b16 %v346
      %v421 = vunpack.c.l.b16 %v347
      %v422 = vunpack.c.l.b16 %v348
      %v423 = vunpack.c.l.b16 %v349
      %v424 = vunpack.c.l.b16 %v350
      %v425 = vunpack.c.l.b16 %v351
      %v426 = vunpack.c.l.b16 %v352
      %v427 = vunpack.c.l.b16 %v353
      %v428 = vpack.c.b16 %v397, %v396
      %v429 = vpack.c.b16 %v399, %v398
      %v430 = vpack.c.b16 %v401, %v400
      %v431 = vpack.c.b16 %v403, %v402
      %v432 = vpack.c.b16 %v405, %v404
      %v433 = vpack.c.b16 %v407, %v406
      %v434 = vpack.c.b16 %v409, %v408
      %v435 = vpack.c.b16 %v411, %v410
      %v436 = vpack.c.b16 %v413, %v412
      %v437 = vpack.c.b16 %v415, %v414
      %v438 = vpack.c.b16 %v417, %v416
      %v439 = vpack.c.b16 %v419, %v418
      %v440 = vpack.c.b16 %v421, %v420
      %v441 = vpack.c.b16 %v423, %v422
      %v442 = vpack.c.b16 %v425, %v424
      %v443 = vpack.c.b16 %v427, %v426
      %460 = vmatpush.bf16.msra.mxu0 %v435
      %461 = vmatpush.bf16.msra.mxu0 %v434
      %462 = vmatpush.bf16.msra.mxu0 %v433
      %463 = vmatpush.bf16.msra.mxu0 %v432
      %464 = vmatpush.bf16.msra.mxu0 %v431
      %465 = vmatpush.bf16.msra.mxu0 %v430
      %466 = vmatpush.bf16.msra.mxu0 %v429
      %467 = vmatpush.bf16.msra.mxu0 %v428
      %468 = vmatmul.bf16.gmra.mxu0 %v355
      %v469 = vpop.f32.mrf.mxu0
      %v470 = vadd.f32 %v362, %v469
      %v471 = vpop.f32.mrf.mxu0
      %v472 = vadd.f32 %v362, %v471
      %473 = vmatmul.bf16.gmra.mxu0 %v357
      %v474 = vpop.f32.mrf.mxu0
      %v475 = vadd.f32 %v362, %v474
      %v476 = vpop.f32.mrf.mxu0
      %v477 = vadd.f32 %v362, %v476
      %478 = vmatmul.bf16.gmra.mxu0 %v359
      %v479 = vpop.f32.mrf.mxu0
      %v480 = vadd.f32 %v362, %v479
      %v481 = vpop.f32.mrf.mxu0
      %v482 = vadd.f32 %v362, %v481
      %483 = vdwg.mxu0
      %484 = vmatpush.bf16.msra.mxu0 %v443
      %485 = vmatpush.bf16.msra.mxu0 %v442
      %486 = vmatpush.bf16.msra.mxu0 %v441
      %487 = vmatpush.bf16.msra.mxu0 %v440
      %488 = vmatpush.bf16.msra.mxu0 %v439
      %489 = vmatpush.bf16.msra.mxu0 %v438
      %490 = vmatpush.bf16.msra.mxu0 %v437
      %491 = vmatpush.bf16.msra.mxu0 %v436
      %492 = vmatmul.bf16.gmra.mxu0 %v356
      %v493 = vpop.f32.mrf.mxu0
      %v494 = vadd.f32 %v470, %v493
      %v495 = vpop.f32.mrf.mxu0
      %v496 = vadd.f32 %v472, %v495
      %497 = vmatmul.bf16.gmra.mxu0 %v358
      %v498 = vpop.f32.mrf.mxu0
      %v499 = vadd.f32 %v475, %v498
      %v500 = vpop.f32.mrf.mxu0
      %v501 = vadd.f32 %v477, %v500
      %502 = vmatmul.bf16.gmra.mxu0 %v360
      %v503 = vpop.f32.mrf.mxu0
      %v504 = vadd.f32 %v480, %v503
      %v505 = vpop.f32.mrf.mxu0
      %v506 = vadd.f32 %v482, %v505
      %507 = vdwg.mxu0
      %v508 = vld [vmem:[%s7] sm:$0xff]
      %v509 = vld [vmem:[%s7 + $0x8] sm:$0xff]
      %v510 = vadd.f32 %v494, %v508
      %v511 = vadd.f32 %v496, %v509
      %v512 = vadd.f32 %v499, %v508
      %v513 = vadd.f32 %v501, %v509
      %v514 = vadd.f32 %v504, %v508
      %v515 = vadd.f32 %v506, %v509
      %v516 = vld [vmem:[%s3] sm:$0x1]
      %v517 = vld [vmem:[%s3 + $0x1] sm:$0x1]
      %518 = vadd.xlane.f32.xlu0 %v510
      %v519 = vpop.xlane.xlu0 %518
      %520 = vadd.xlane.f32.xlu0 %v511
      %v521 = vpop.xlane.xlu0 %520
      %522 = vadd.xlane.f32.xlu0 %v512
      %v523 = vpop.xlane.xlu0 %522
      %524 = vadd.xlane.f32.xlu0 %v513
      %v525 = vpop.xlane.xlu0 %524
      %526 = vadd.xlane.f32.xlu0 %v514
      %v527 = vpop.xlane.xlu0 %526
      %528 = vadd.xlane.f32.xlu0 %v515
      %v529 = vpop.xlane.xlu0 %528
      %v530 = vrcp.pop 128.0
      %v531 = vmul.f32 128.0, %v530
      %v532 = vsub.f32 1.0, %v531
      %v533 = vmul.f32 %v530, %v532
      %v534 = vadd.f32 %v530, %v533
      %vm535 = vweird.f32 %v530
      %v536 = vsel %vm535, %v530, %v534
      %v537 = vmul.f32 %v519, %v536
      %v538 = vmul.f32 %v521, %v536
      %v539 = vmul.f32 %v523, %v536
      %v540 = vmul.f32 %v525, %v536
      %v541 = vmul.f32 %v527, %v536
      %v542 = vmul.f32 %v529, %v536
      %v543 = vsub.f32 %v510, %v537
      %v544 = vsub.f32 %v511, %v538
      %v545 = vsub.f32 %v512, %v539
      %v546 = vsub.f32 %v513, %v540
      %v547 = vsub.f32 %v514, %v541
      %v548 = vsub.f32 %v515, %v542
      %v549 = vmul.f32 %v543, %v543
      %v550 = vmul.f32 %v544, %v544
      %v551 = vmul.f32 %v545, %v545
      %v552 = vmul.f32 %v546, %v546
      %v553 = vmul.f32 %v547, %v547
      %v554 = vmul.f32 %v548, %v548
      %555 = vadd.xlane.f32.xlu0 %v549
      %v556 = vpop.xlane.xlu0 %555
      %557 = vadd.xlane.f32.xlu0 %v550
      %v558 = vpop.xlane.xlu0 %557
      %559 = vadd.xlane.f32.xlu0 %v551
      %v560 = vpop.xlane.xlu0 %559
      %561 = vadd.xlane.f32.xlu0 %v552
      %v562 = vpop.xlane.xlu0 %561
      %563 = vadd.xlane.f32.xlu0 %v553
      %v564 = vpop.xlane.xlu0 %563
      %565 = vadd.xlane.f32.xlu0 %v554
      %v566 = vpop.xlane.xlu0 %565
      %v567 = vmul.f32 %v556, %v536
      %v568 = vmul.f32 %v558, %v536
      %v569 = vmul.f32 %v560, %v536
      %v570 = vmul.f32 %v562, %v536
      %v571 = vmul.f32 %v564, %v536
      %v572 = vmul.f32 %v566, %v536
      %v573 = vadd.f32 %v567, 1e-06
      %v574 = vadd.f32 %v568, 1e-06
      %v575 = vadd.f32 %v569, 1e-06
      %v576 = vadd.f32 %v570, 1e-06
      %v577 = vadd.f32 %v571, 1e-06
      %v578 = vadd.f32 %v572, 1e-06
      %v579 = vrsqrt.pop %v573
      %v580 = vmul.f32 %v579, %v573
      %v581 = vmul.f32 %v580, %v579
      %v582 = vmul.f32 0.5, %v581
      %v583 = vsub.f32 1.5, %v582
      %v584 = vmul.f32 %v579, %v583
      %vm585 = vweird.f32 %v573
      %vm586 = vweird.f32 %v579
      %vm587 = vmor %vm585, %vm586
      %v588 = vsel %vm587, %v579, %v584
      %v589 = vrsqrt.pop %v574
      %v590 = vmul.f32 %v589, %v574
      %v591 = vmul.f32 %v590, %v589
      %v592 = vmul.f32 0.5, %v591
      %v593 = vsub.f32 1.5, %v592
      %v594 = vmul.f32 %v589, %v593
      %vm595 = vweird.f32 %v574
      %vm596 = vweird.f32 %v589
      %vm597 = vmor %vm595, %vm596
      %v598 = vsel %vm597, %v589, %v594
      %v599 = vrsqrt.pop %v575
      %v600 = vmul.f32 %v599, %v575
      %v601 = vmul.f32 %v600, %v599
      %v602 = vmul.f32 0.5, %v601
      %v603 = vsub.f32 1.5, %v602
      %v604 = vmul.f32 %v599, %v603
      %vm605 = vweird.f32 %v575
      %vm606 = vweird.f32 %v599
      %vm607 = vmor %vm605, %vm606
      %v608 = vsel %vm607, %v599, %v604
      %v609 = vrsqrt.pop %v576
      %v610 = vmul.f32 %v609, %v576
      %v611 = vmul.f32 %v610, %v609
      %v612 = vmul.f32 0.5, %v611
      %v613 = vsub.f32 1.5, %v612
      %v614 = vmul.f32 %v609, %v613
      %vm615 = vweird.f32 %v576
      %vm616 = vweird.f32 %v609
      %vm617 = vmor %vm615, %vm616
      %v618 = vsel %vm617, %v609, %v614
      %v619 = vrsqrt.pop %v577
      %v620 = vmul.f32 %v619, %v577
      %v621 = vmul.f32 %v620, %v619
      %v622 = vmul.f32 0.5, %v621
      %v623 = vsub.f32 1.5, %v622
      %v624 = vmul.f32 %v619, %v623
      %vm625 = vweird.f32 %v577
      %vm626 = vweird.f32 %v619
      %vm627 = vmor %vm625, %vm626
      %v628 = vsel %vm627, %v619, %v624
      %v629 = vrsqrt.pop %v578
      %v630 = vmul.f32 %v629, %v578
      %v631 = vmul.f32 %v630, %v629
      %v632 = vmul.f32 0.5, %v631
      %v633 = vsub.f32 1.5, %v632
      %v634 = vmul.f32 %v629, %v633
      %vm635 = vweird.f32 %v578
      %vm636 = vweird.f32 %v629
      %vm637 = vmor %vm635, %vm636
      %v638 = vsel %vm637, %v629, %v634
      %v639 = vmul.f32 %v543, %v588
      %v640 = vmul.f32 %v544, %v598
      %v641 = vmul.f32 %v545, %v608
      %v642 = vmul.f32 %v546, %v618
      %v643 = vmul.f32 %v547, %v628
      %v644 = vmul.f32 %v548, %v638
      %v646 = vperm.slane %v516, 0
      %v648 = vmul.f32 %v639, %v646
      %v649 = vmul.f32 %v640, %v646
      %v650 = vmul.f32 %v641, %v646
      %v651 = vmul.f32 %v642, %v646
      %v652 = vmul.f32 %v643, %v646
      %v653 = vmul.f32 %v644, %v646
      %v655 = vperm.slane %v517, 0
      %v657 = vadd.f32 %v648, %v655
      %v658 = vadd.f32 %v649, %v655
      %v659 = vadd.f32 %v650, %v655
      %v660 = vadd.f32 %v651, %v655
      %v661 = vadd.f32 %v652, %v655
      %v662 = vadd.f32 %v653, %v655
      %v663 = vld [vmem:[%s1] sm:$0xff]
      %v664 = vld [vmem:[%s1 + $0x8] sm:$0xf]
      %v665 = vld [vmem:[%s1 + $0x18] sm:$0xff]
      %v666 = vld [vmem:[%s1 + $0x20] sm:$0xf]
      %v667 = vld [vmem:[%s1 + $0x30] sm:$0xff]
      %v668 = vld [vmem:[%s1 + $0x38] sm:$0xf]
      %v669 = vld [vmem:[%s1 + $0x48] sm:$0xff]
      %v670 = vld [vmem:[%s1 + $0x50] sm:$0xf]
      %v671 = vld [vmem:[%s1 + $0x60] sm:$0xff]
      %v672 = vld [vmem:[%s1 + $0x68] sm:$0xf]
      %v673 = vld [vmem:[%s1 + $0x78] sm:$0xff]
      %v674 = vld [vmem:[%s1 + $0x80] sm:$0xf]
      %v675 = vld [vmem:[%s1 + $0x90] sm:$0xff]
      %v676 = vld [vmem:[%s1 + $0x98] sm:$0xf]
      %v677 = vld [vmem:[%s1 + $0xa8] sm:$0xff]
      %v678 = vld [vmem:[%s1 + $0xb0] sm:$0xf]
      %v679 = vld [vmem:[%s1 + $0xc0] sm:$0xff]
      %v680 = vld [vmem:[%s1 + $0xc8] sm:$0xf]
      %v681 = vld [vmem:[%s1 + $0xd8] sm:$0xff]
      %v682 = vld [vmem:[%s1 + $0xe0] sm:$0xf]
      %v683 = vld [vmem:[%s1 + $0xf0] sm:$0xff]
      %v684 = vld [vmem:[%s1 + $0xf8] sm:$0xf]
      %v685 = vld [vmem:[%s1 + $0x108] sm:$0xff]
      %v686 = vld [vmem:[%s1 + $0x110] sm:$0xf]
      %v687 = vld [vmem:[%s1 + $0x120] sm:$0xff]
      %v688 = vld [vmem:[%s1 + $0x128] sm:$0xf]
      %v689 = vld [vmem:[%s1 + $0x138] sm:$0xff]
      %v690 = vld [vmem:[%s1 + $0x140] sm:$0xf]
      %v691 = vld [vmem:[%s1 + $0x150] sm:$0xff]
      %v692 = vld [vmem:[%s1 + $0x158] sm:$0xf]
      %v693 = vld [vmem:[%s1 + $0x168] sm:$0xff]
      %v694 = vld [vmem:[%s1 + $0x170] sm:$0xf]
      %v695 = vld [vmem:[%s3 + $0x2] sm:$0x7]
      %v696 = vpack.c.bf16 %v658, %v657
      %v697 = vpack.c.bf16 %v660, %v659
      %v698 = vpack.c.bf16 %v662, %v661
      %v700 = vperm.slane %v695, 0
      %v701 = vperm.slane %v695, 1
      %v702 = vperm.slane %v695, 2
      %v738 = vunpack.c.l.b16 %v663
      %v739 = vunpack.c.h.b16 %v663
      %v740 = vunpack.c.l.b16 %v664
      %v741 = vunpack.c.l.b16 %v665
      %v742 = vunpack.c.h.b16 %v665
      %v743 = vunpack.c.l.b16 %v666
      %v744 = vunpack.c.l.b16 %v667
      %v745 = vunpack.c.h.b16 %v667
      %v746 = vunpack.c.l.b16 %v668
      %v747 = vunpack.c.l.b16 %v669
      %v748 = vunpack.c.h.b16 %v669
      %v749 = vunpack.c.l.b16 %v670
      %v750 = vunpack.c.l.b16 %v671
      %v751 = vunpack.c.h.b16 %v671
      %v752 = vunpack.c.l.b16 %v672
      %v753 = vunpack.c.l.b16 %v673
      %v754 = vunpack.c.h.b16 %v673
      %v755 = vunpack.c.l.b16 %v674
      %v756 = vunpack.c.l.b16 %v675
      %v757 = vunpack.c.h.b16 %v675
      %v758 = vunpack.c.l.b16 %v676
      %v759 = vunpack.c.l.b16 %v677
      %v760 = vunpack.c.h.b16 %v677
      %v761 = vunpack.c.l.b16 %v678
      %v762 = vunpack.c.l.b16 %v679
      %v763 = vunpack.c.h.b16 %v679
      %v764 = vunpack.c.l.b16 %v680
      %v765 = vunpack.c.l.b16 %v681
      %v766 = vunpack.c.h.b16 %v681
      %v767 = vunpack.c.l.b16 %v682
      %v768 = vunpack.c.l.b16 %v683
      %v769 = vunpack.c.h.b16 %v683
      %v770 = vunpack.c.l.b16 %v684
      %v771 = vunpack.c.l.b16 %v685
      %v772 = vunpack.c.h.b16 %v685
      %v773 = vunpack.c.l.b16 %v686
      %v774 = vunpack.c.l.b16 %v687
      %v775 = vunpack.c.h.b16 %v687
      %v776 = vunpack.c.l.b16 %v688
      %v777 = vunpack.c.l.b16 %v689
      %v778 = vunpack.c.h.b16 %v689
      %v779 = vunpack.c.l.b16 %v690
      %v780 = vunpack.c.l.b16 %v691
      %v781 = vunpack.c.h.b16 %v691
      %v782 = vunpack.c.l.b16 %v692
      %v783 = vunpack.c.l.b16 %v693
      %v784 = vunpack.c.h.b16 %v693
      %v785 = vunpack.c.l.b16 %v694
      %v786 = vpack.c.b16 %v741, %v738
      %v787 = vpack.c.b16 %v742, %v739
      %v788 = vpack.c.b16 %v743, %v740
      %v789 = vpack.c.b16 %v747, %v744
      %v790 = vpack.c.b16 %v748, %v745
      %v791 = vpack.c.b16 %v749, %v746
      %v792 = vpack.c.b16 %v753, %v750
      %v793 = vpack.c.b16 %v754, %v751
      %v794 = vpack.c.b16 %v755, %v752
      %v795 = vpack.c.b16 %v759, %v756
      %v796 = vpack.c.b16 %v760, %v757
      %v797 = vpack.c.b16 %v761, %v758
      %v798 = vpack.c.b16 %v765, %v762
      %v799 = vpack.c.b16 %v766, %v763
      %v800 = vpack.c.b16 %v767, %v764
      %v801 = vpack.c.b16 %v771, %v768
      %v802 = vpack.c.b16 %v772, %v769
      %v803 = vpack.c.b16 %v773, %v770
      %v804 = vpack.c.b16 %v777, %v774
      %v805 = vpack.c.b16 %v778, %v775
      %v806 = vpack.c.b16 %v779, %v776
      %v807 = vpack.c.b16 %v783, %v780
      %v808 = vpack.c.b16 %v784, %v781
      %v809 = vpack.c.b16 %v785, %v782
      %834 = vmatpush.bf16.msra.mxu0 %v807
      %835 = vmatpush.bf16.msra.mxu0 %v804
      %836 = vmatpush.bf16.msra.mxu0 %v801
      %837 = vmatpush.bf16.msra.mxu0 %v798
      %838 = vmatpush.bf16.msra.mxu0 %v795
      %839 = vmatpush.bf16.msra.mxu0 %v792
      %840 = vmatpush.bf16.msra.mxu0 %v789
      %841 = vmatpush.bf16.msra.mxu0 %v786
      %842 = vmatmul.bf16.gmra.mxu0 %v696
      %v843 = vpop.f32.mrf.mxu0
      %v844 = vadd.f32 %v700, %v843
      %v845 = vpop.f32.mrf.mxu0
      %v846 = vadd.f32 %v700, %v845
      %847 = vmatmul.bf16.gmra.mxu0 %v697
      %v848 = vpop.f32.mrf.mxu0
      %v849 = vadd.f32 %v700, %v848
      %v850 = vpop.f32.mrf.mxu0
      %v851 = vadd.f32 %v700, %v850
      %852 = vmatmul.bf16.gmra.mxu0 %v698
      %v853 = vpop.f32.mrf.mxu0
      %v854 = vadd.f32 %v700, %v853
      %v855 = vpop.f32.mrf.mxu0
      %v856 = vadd.f32 %v700, %v855
      %857 = vdwg.mxu0
      %858 = vmatpush.bf16.msra.mxu0 %v808
      %859 = vmatpush.bf16.msra.mxu0 %v805
      %860 = vmatpush.bf16.msra.mxu0 %v802
      %861 = vmatpush.bf16.msra.mxu0 %v799
      %862 = vmatpush.bf16.msra.mxu0 %v796
      %863 = vmatpush.bf16.msra.mxu0 %v793
      %864 = vmatpush.bf16.msra.mxu0 %v790
      %865 = vmatpush.bf16.msra.mxu0 %v787
      %866 = vmatmul.bf16.gmra.mxu0 %v696
      %v867 = vpop.f32.mrf.mxu0
      %v868 = vadd.f32 %v701, %v867
      %v869 = vpop.f32.mrf.mxu0
      %v870 = vadd.f32 %v701, %v869
      %871 = vmatmul.bf16.gmra.mxu0 %v697
      %v872 = vpop.f32.mrf.mxu0
      %v873 = vadd.f32 %v701, %v872
      %v874 = vpop.f32.mrf.mxu0
      %v875 = vadd.f32 %v701, %v874
      %876 = vmatmul.bf16.gmra.mxu0 %v698
      %v877 = vpop.f32.mrf.mxu0
      %v878 = vadd.f32 %v701, %v877
      %v879 = vpop.f32.mrf.mxu0
      %v880 = vadd.f32 %v701, %v879
      %881 = vdwg.mxu0
      %882 = vmatpush.bf16.msra.mxu0 %v809
      %883 = vmatpush.bf16.msra.mxu0 %v806
      %884 = vmatpush.bf16.msra.mxu0 %v803
      %885 = vmatpush.bf16.msra.mxu0 %v800
      %886 = vmatpush.bf16.msra.mxu0 %v797
      %887 = vmatpush.bf16.msra.mxu0 %v794
      %888 = vmatpush.bf16.msra.mxu0 %v791
      %889 = vmatpush.bf16.msra.mxu0 %v788
      %890 = vmatmul.bf16.gmra.mxu0 %v696
      %v891 = vpop.f32.mrf.mxu0
      %v892 = vadd.f32 %v702, %v891
      %v893 = vpop.f32.mrf.mxu0
      %v894 = vadd.f32 %v702, %v893
      %895 = vmatmul.bf16.gmra.mxu0 %v697
      %v896 = vpop.f32.mrf.mxu0
      %v897 = vadd.f32 %v702, %v896
      %v898 = vpop.f32.mrf.mxu0
      %v899 = vadd.f32 %v702, %v898
      %900 = vmatmul.bf16.gmra.mxu0 %v698
      %v901 = vpop.f32.mrf.mxu0
      %v902 = vadd.f32 %v702, %v901
      %v903 = vpop.f32.mrf.mxu0
      %v904 = vadd.f32 %v702, %v903
      %905 = vdwg.mxu0
      %v906 = vpack.c.bf16 %v844, %v844
      %v907 = vpack.c.bf16 %v846, %v846
      %v908 = vpack.c.bf16 %v849, %v849
      %v909 = vpack.c.bf16 %v851, %v851
      %v910 = vpack.c.bf16 %v854, %v854
      %v911 = vpack.c.bf16 %v856, %v856
      %v912 = vpack.c.bf16 %v868, %v868
      %v913 = vpack.c.bf16 %v870, %v870
      %v914 = vpack.c.bf16 %v873, %v873
      %v915 = vpack.c.bf16 %v875, %v875
      %v916 = vpack.c.bf16 %v878, %v878
      %v917 = vpack.c.bf16 %v880, %v880
      %v918 = vpack.c.bf16 %v892, %v892
      %v919 = vpack.c.bf16 %v894, %v894
      %v920 = vpack.c.bf16 %v897, %v897
      %v921 = vpack.c.bf16 %v899, %v899
      %v922 = vpack.c.bf16 %v902, %v902
      %v923 = vpack.c.bf16 %v904, %v904
      %v926 = vunpack.c.l.b16 %v906
      %v927 = vunpack.c.l.b16 %v907
      %v928 = vpack.c.b16 %v927, %v926
      %v931 = vunpack.c.l.b16 %v912
      %v932 = vunpack.c.l.b16 %v913
      %v933 = vpack.c.b16 %v932, %v931
      %vm934 = vcmask 261120
      %v936 = vsel %vm934, %v928, 0
      %v939 = vsel %vm934, %v933, 0
      %941 = vmatpush.bf16.xpose.msra.mxu0 0
      %942 = vmatpush.bf16.xpose.msra.mxu0 0
      %943 = vmatpush.bf16.xpose.msra.mxu0 0
      %944 = vmatpush.bf16.xpose.msra.mxu0 0
      %945 = vmatpush.bf16.xpose.msra.mxu0 0
      %946 = vmatpush.bf16.xpose.msra.mxu0 0
      %947 = vmatpush.bf16.xpose.msra.mxu0 0
      %948 = vmatpush.bf16.xpose.msra.mxu0 %v939
      %949 = vmatmul.bf16.gmra.mxu0 %v936
      %v950 = vpop.f32.mrf.mxu0
      %v951 = vadd.f32 0.0, %v950
      %v952 = vpop.f32.mrf.mxu0
      %v953 = vadd.f32 0.0, %v952
      %954 = vdwg.mxu0
      %v957 = vunpack.c.l.b16 %v908
      %v958 = vunpack.c.l.b16 %v909
      %v959 = vpack.c.b16 %v958, %v957
      %v962 = vunpack.c.l.b16 %v914
      %v963 = vunpack.c.l.b16 %v915
      %v964 = vpack.c.b16 %v963, %v962
      %v966 = vsel %vm934, %v959, 0
      %v969 = vsel %vm934, %v964, 0
      %971 = vmatpush.bf16.xpose.msra.mxu0 0
      %972 = vmatpush.bf16.xpose.msra.mxu0 0
      %973 = vmatpush.bf16.xpose.msra.mxu0 0
      %974 = vmatpush.bf16.xpose.msra.mxu0 0
      %975 = vmatpush.bf16.xpose.msra.mxu0 0
      %976 = vmatpush.bf16.xpose.msra.mxu0 0
      %977 = vmatpush.bf16.xpose.msra.mxu0 0
      %978 = vmatpush.bf16.xpose.msra.mxu0 %v969
      %979 = vmatmul.bf16.gmra.mxu0 %v966
      %v980 = vpop.f32.mrf.mxu0
      %v981 = vadd.f32 0.0, %v980
      %v982 = vpop.f32.mrf.mxu0
      %v983 = vadd.f32 0.0, %v982
      %984 = vdwg.mxu0
      %v987 = vunpack.c.l.b16 %v910
      %v988 = vunpack.c.l.b16 %v911
      %v989 = vpack.c.b16 %v988, %v987
      %v992 = vunpack.c.l.b16 %v916
      %v993 = vunpack.c.l.b16 %v917
      %v994 = vpack.c.b16 %v993, %v992
      %v996 = vsel %vm934, %v989, 0
      %v999 = vsel %vm934, %v994, 0
      %1001 = vmatpush.bf16.xpose.msra.mxu0 0
      %1002 = vmatpush.bf16.xpose.msra.mxu0 0
      %1003 = vmatpush.bf16.xpose.msra.mxu0 0
      %1004 = vmatpush.bf16.xpose.msra.mxu0 0
      %1005 = vmatpush.bf16.xpose.msra.mxu0 0
      %1006 = vmatpush.bf16.xpose.msra.mxu0 0
      %1007 = vmatpush.bf16.xpose.msra.mxu0 0
      %1008 = vmatpush.bf16.xpose.msra.mxu0 %v999
      %1009 = vmatmul.bf16.gmra.mxu0 %v996
      %v1010 = vpop.f32.mrf.mxu0
      %v1011 = vadd.f32 0.0, %v1010
      %v1012 = vpop.f32.mrf.mxu0
      %v1013 = vadd.f32 0.0, %v1012
      %1014 = vdwg.mxu0
      %v1015 = vmul.f32 %v951, 0.17677669
      %v1016 = vmul.f32 %v953, 0.17677669
      %v1017 = vmul.f32 %v981, 0.17677669
      %v1018 = vmul.f32 %v983, 0.17677669
      %v1019 = vmul.f32 %v1011, 0.17677669
      %v1020 = vmul.f32 %v1013, 0.17677669
      %vm1021 = vcmask 130048
      %v1022 = vsel %vm1021, %v1015, -inf
      %1023 = vmax.xlane.f32.xlu0 %v1022
      %v1024 = vpop.xlane.xlu0 %1023
      %v1025 = vsel %vm1021, %v1016, -inf
      %1026 = vmax.xlane.f32.xlu0 %v1025
      %v1027 = vpop.xlane.xlu0 %1026
      %v1028 = vsel %vm1021, %v1017, -inf
      %1029 = vmax.xlane.f32.xlu0 %v1028
      %v1030 = vpop.xlane.xlu0 %1029
      %v1031 = vsel %vm1021, %v1018, -inf
      %1032 = vmax.xlane.f32.xlu0 %v1031
      %v1033 = vpop.xlane.xlu0 %1032
      %v1034 = vsel %vm1021, %v1019, -inf
      %1035 = vmax.xlane.f32.xlu0 %v1034
      %v1036 = vpop.xlane.xlu0 %1035
      %v1037 = vsel %vm1021, %v1020, -inf
      %1038 = vmax.xlane.f32.xlu0 %v1037
      %v1039 = vpop.xlane.xlu0 %1038
      %v1040 = vsub.f32 %v1015, %v1024
      %v1041 = vsub.f32 %v1016, %v1027
      %v1042 = vsub.f32 %v1017, %v1030
      %v1043 = vsub.f32 %v1018, %v1033
      %v1044 = vsub.f32 %v1019, %v1036
      %v1045 = vsub.f32 %v1020, %v1039
      %v1046 = vmul.f32 %v1040, 1.442695
      %v1047 = vpow.pop %v1046
      %v1048 = vmul.f32 %v1041, 1.442695
      %v1049 = vpow.pop %v1048
      %v1050 = vmul.f32 %v1042, 1.442695
      %v1051 = vpow.pop %v1050
      %v1052 = vmul.f32 %v1043, 1.442695
      %v1053 = vpow.pop %v1052
      %v1054 = vmul.f32 %v1044, 1.442695
      %v1055 = vpow.pop %v1054
      %v1056 = vmul.f32 %v1045, 1.442695
      %v1057 = vpow.pop %v1056
      %v1058 = vsel %vm1021, %v1047, 0.0
      %1059 = vadd.xlane.f32.xlu0 %v1058
      %v1060 = vpop.xlane.xlu0 %1059
      %v1061 = vsel %vm1021, %v1049, 0.0
      %1062 = vadd.xlane.f32.xlu0 %v1061
      %v1063 = vpop.xlane.xlu0 %1062
      %v1064 = vsel %vm1021, %v1051, 0.0
      %1065 = vadd.xlane.f32.xlu0 %v1064
      %v1066 = vpop.xlane.xlu0 %1065
      %v1067 = vsel %vm1021, %v1053, 0.0
      %1068 = vadd.xlane.f32.xlu0 %v1067
      %v1069 = vpop.xlane.xlu0 %1068
      %v1070 = vsel %vm1021, %v1055, 0.0
      %1071 = vadd.xlane.f32.xlu0 %v1070
      %v1072 = vpop.xlane.xlu0 %1071
      %v1073 = vsel %vm1021, %v1057, 0.0
      %1074 = vadd.xlane.f32.xlu0 %v1073
      %v1075 = vpop.xlane.xlu0 %1074
      %v1076 = vrcp.pop %v1060
      %v1077 = vmul.f32 %v1060, %v1076
      %v1078 = vsub.f32 1.0, %v1077
      %v1079 = vmul.f32 %v1076, %v1078
      %v1080 = vadd.f32 %v1076, %v1079
      %vm1081 = vweird.f32 %v1060
      %vm1082 = vweird.f32 %v1076
      %vm1083 = vmor %vm1081, %vm1082
      %v1084 = vsel %vm1083, %v1076, %v1080
      %v1085 = vand.u32 2147483647, %v1060
      %vm1086 = vcmp.eq.f32.partialorder %v1085, 8.507059e+37
      %v1087 = vand.u32 %v1060, 2147483648
      %v1088 = vor.u32 1.1754944e-38, %v1087
      %v1089 = vsel %vm1086, %v1088, %v1084
      %v1090 = vmul.f32 %v1047, %v1089
      %v1091 = vrcp.pop %v1063
      %v1092 = vmul.f32 %v1063, %v1091
      %v1093 = vsub.f32 1.0, %v1092
      %v1094 = vmul.f32 %v1091, %v1093
      %v1095 = vadd.f32 %v1091, %v1094
      %vm1096 = vweird.f32 %v1063
      %vm1097 = vweird.f32 %v1091
      %vm1098 = vmor %vm1096, %vm1097
      %v1099 = vsel %vm1098, %v1091, %v1095
      %v1100 = vand.u32 2147483647, %v1063
      %vm1101 = vcmp.eq.f32.partialorder %v1100, 8.507059e+37
      %v1102 = vand.u32 %v1063, 2147483648
      %v1103 = vor.u32 1.1754944e-38, %v1102
      %v1104 = vsel %vm1101, %v1103, %v1099
      %v1105 = vmul.f32 %v1049, %v1104
      %v1106 = vrcp.pop %v1066
      %v1107 = vmul.f32 %v1066, %v1106
      %v1108 = vsub.f32 1.0, %v1107
      %v1109 = vmul.f32 %v1106, %v1108
      %v1110 = vadd.f32 %v1106, %v1109
      %vm1111 = vweird.f32 %v1066
      %vm1112 = vweird.f32 %v1106
      %vm1113 = vmor %vm1111, %vm1112
      %v1114 = vsel %vm1113, %v1106, %v1110
      %v1115 = vand.u32 2147483647, %v1066
      %vm1116 = vcmp.eq.f32.partialorder %v1115, 8.507059e+37
      %v1117 = vand.u32 %v1066, 2147483648
      %v1118 = vor.u32 1.1754944e-38, %v1117
      %v1119 = vsel %vm1116, %v1118, %v1114
      %v1120 = vmul.f32 %v1051, %v1119
      %v1121 = vrcp.pop %v1069
      %v1122 = vmul.f32 %v1069, %v1121
      %v1123 = vsub.f32 1.0, %v1122
      %v1124 = vmul.f32 %v1121, %v1123
      %v1125 = vadd.f32 %v1121, %v1124
      %vm1126 = vweird.f32 %v1069
      %vm1127 = vweird.f32 %v1121
      %vm1128 = vmor %vm1126, %vm1127
      %v1129 = vsel %vm1128, %v1121, %v1125
      %v1130 = vand.u32 2147483647, %v1069
      %vm1131 = vcmp.eq.f32.partialorder %v1130, 8.507059e+37
      %v1132 = vand.u32 %v1069, 2147483648
      %v1133 = vor.u32 1.1754944e-38, %v1132
      %v1134 = vsel %vm1131, %v1133, %v1129
      %v1135 = vmul.f32 %v1053, %v1134
      %v1136 = vrcp.pop %v1072
      %v1137 = vmul.f32 %v1072, %v1136
      %v1138 = vsub.f32 1.0, %v1137
      %v1139 = vmul.f32 %v1136, %v1138
      %v1140 = vadd.f32 %v1136, %v1139
      %vm1141 = vweird.f32 %v1072
      %vm1142 = vweird.f32 %v1136
      %vm1143 = vmor %vm1141, %vm1142
      %v1144 = vsel %vm1143, %v1136, %v1140
      %v1145 = vand.u32 2147483647, %v1072
      %vm1146 = vcmp.eq.f32.partialorder %v1145, 8.507059e+37
      %v1147 = vand.u32 %v1072, 2147483648
      %v1148 = vor.u32 1.1754944e-38, %v1147
      %v1149 = vsel %vm1146, %v1148, %v1144
      %v1150 = vmul.f32 %v1055, %v1149
      %v1151 = vrcp.pop %v1075
      %v1152 = vmul.f32 %v1075, %v1151
      %v1153 = vsub.f32 1.0, %v1152
      %v1154 = vmul.f32 %v1151, %v1153
      %v1155 = vadd.f32 %v1151, %v1154
      %vm1156 = vweird.f32 %v1075
      %vm1157 = vweird.f32 %v1151
      %vm1158 = vmor %vm1156, %vm1157
      %v1159 = vsel %vm1158, %v1151, %v1155
      %v1160 = vand.u32 2147483647, %v1075
      %vm1161 = vcmp.eq.f32.partialorder %v1160, 8.507059e+37
      %v1162 = vand.u32 %v1075, 2147483648
      %v1163 = vor.u32 1.1754944e-38, %v1162
      %v1164 = vsel %vm1161, %v1163, %v1159
      %v1165 = vmul.f32 %v1057, %v1164
      %v1166 = vpack.c.bf16 %v1090, %v1090
      %v1167 = vpack.c.bf16 %v1105, %v1105
      %v1168 = vpack.c.bf16 %v1120, %v1120
      %v1169 = vpack.c.bf16 %v1135, %v1135
      %v1170 = vpack.c.bf16 %v1150, %v1150
      %v1171 = vpack.c.bf16 %v1165, %v1165
      %v1174 = vunpack.c.l.b16 %v1166
      %v1175 = vunpack.c.l.b16 %v1167
      %v1176 = vpack.c.b16 %v1175, %v1174
      %v1179 = vunpack.c.l.b16 %v918
      %v1180 = vunpack.c.l.b16 %v919
      %v1181 = vpack.c.b16 %v1180, %v1179
      %v1184 = vsel %vm1021, %v1176, 0
      %1186 = vmatpush.bf16.msra.mxu0 0
      %1187 = vmatpush.bf16.msra.mxu0 0
      %1188 = vmatpush.bf16.msra.mxu0 0
      %1189 = vmatpush.bf16.msra.mxu0 0
      %1190 = vmatpush.bf16.msra.mxu0 0
      %1191 = vmatpush.bf16.msra.mxu0 0
      %1192 = vmatpush.bf16.msra.mxu0 0
      %1193 = vmatpush.bf16.msra.mxu0 %v1181
      %1194 = vmatmul.bf16.gmra.mxu0 %v1184
      %v1195 = vpop.f32.mrf.mxu0
      %v1196 = vadd.f32 0.0, %v1195
      %v1197 = vpop.f32.mrf.mxu0
      %v1198 = vadd.f32 0.0, %v1197
      %1199 = vdwg.mxu0
      %v1202 = vunpack.c.l.b16 %v1168
      %v1203 = vunpack.c.l.b16 %v1169
      %v1204 = vpack.c.b16 %v1203, %v1202
      %v1207 = vunpack.c.l.b16 %v920
      %v1208 = vunpack.c.l.b16 %v921
      %v1209 = vpack.c.b16 %v1208, %v1207
      %v1212 = vsel %vm1021, %v1204, 0
      %1214 = vmatpush.bf16.msra.mxu0 0
      %1215 = vmatpush.bf16.msra.mxu0 0
      %1216 = vmatpush.bf16.msra.mxu0 0
      %1217 = vmatpush.bf16.msra.mxu0 0
      %1218 = vmatpush.bf16.msra.mxu0 0
      %1219 = vmatpush.bf16.msra.mxu0 0
      %1220 = vmatpush.bf16.msra.mxu0 0
      %1221 = vmatpush.bf16.msra.mxu0 %v1209
      %1222 = vmatmul.bf16.gmra.mxu0 %v1212
      %v1223 = vpop.f32.mrf.mxu0
      %v1224 = vadd.f32 0.0, %v1223
      %v1225 = vpop.f32.mrf.mxu0
      %v1226 = vadd.f32 0.0, %v1225
      %1227 = vdwg.mxu0
      %v1230 = vunpack.c.l.b16 %v1170
      %v1231 = vunpack.c.l.b16 %v1171
      %v1232 = vpack.c.b16 %v1231, %v1230
      %v1235 = vunpack.c.l.b16 %v922
      %v1236 = vunpack.c.l.b16 %v923
      %v1237 = vpack.c.b16 %v1236, %v1235
      %v1240 = vsel %vm1021, %v1232, 0
      %1242 = vmatpush.bf16.msra.mxu0 0
      %1243 = vmatpush.bf16.msra.mxu0 0
      %1244 = vmatpush.bf16.msra.mxu0 0
      %1245 = vmatpush.bf16.msra.mxu0 0
      %1246 = vmatpush.bf16.msra.mxu0 0
      %1247 = vmatpush.bf16.msra.mxu0 0
      %1248 = vmatpush.bf16.msra.mxu0 0
      %1249 = vmatpush.bf16.msra.mxu0 %v1237
      %1250 = vmatmul.bf16.gmra.mxu0 %v1240
      %v1251 = vpop.f32.mrf.mxu0
      %v1252 = vadd.f32 0.0, %v1251
      %v1253 = vpop.f32.mrf.mxu0
      %v1254 = vadd.f32 0.0, %v1253
      %1255 = vdwg.mxu0
      %1256 = vrot.lane.b32.xlu0 %v928, 96
      %v1257 = vpop.permute.xlu0 %1256
      %1258 = vrot.lane.b32.xlu0 %v933, 96
      %v1259 = vpop.permute.xlu0 %1258
      %v1261 = vsel %vm934, %v1257, 0
      %v1264 = vsel %vm934, %v1259, 0
      %1266 = vmatpush.bf16.xpose.msra.mxu0 0
      %1267 = vmatpush.bf16.xpose.msra.mxu0 0
      %1268 = vmatpush.bf16.xpose.msra.mxu0 0
      %1269 = vmatpush.bf16.xpose.msra.mxu0 0
      %1270 = vmatpush.bf16.xpose.msra.mxu0 0
      %1271 = vmatpush.bf16.xpose.msra.mxu0 0
      %1272 = vmatpush.bf16.xpose.msra.mxu0 0
      %1273 = vmatpush.bf16.xpose.msra.mxu0 %v1264
      %1274 = vmatmul.bf16.gmra.mxu0 %v1261
      %v1275 = vpop.f32.mrf.mxu0
      %v1276 = vadd.f32 0.0, %v1275
      %v1277 = vpop.f32.mrf.mxu0
      %v1278 = vadd.f32 0.0, %v1277
      %1279 = vdwg.mxu0
      %1280 = vrot.lane.b32.xlu0 %v959, 96
      %v1281 = vpop.permute.xlu0 %1280
      %1282 = vrot.lane.b32.xlu0 %v964, 96
      %v1283 = vpop.permute.xlu0 %1282
      %v1285 = vsel %vm934, %v1281, 0
      %v1288 = vsel %vm934, %v1283, 0
      %1290 = vmatpush.bf16.xpose.msra.mxu0 0
      %1291 = vmatpush.bf16.xpose.msra.mxu0 0
      %1292 = vmatpush.bf16.xpose.msra.mxu0 0
      %1293 = vmatpush.bf16.xpose.msra.mxu0 0
      %1294 = vmatpush.bf16.xpose.msra.mxu0 0
      %1295 = vmatpush.bf16.xpose.msra.mxu0 0
      %1296 = vmatpush.bf16.xpose.msra.mxu0 0
      %1297 = vmatpush.bf16.xpose.msra.mxu0 %v1288
      %1298 = vmatmul.bf16.gmra.mxu0 %v1285
      %v1299 = vpop.f32.mrf.mxu0
      %v1300 = vadd.f32 0.0, %v1299
      %v1301 = vpop.f32.mrf.mxu0
      %v1302 = vadd.f32 0.0, %v1301
      %1303 = vdwg.mxu0
      %1304 = vrot.lane.b32.xlu0 %v989, 96
      %v1305 = vpop.permute.xlu0 %1304
      %1306 = vrot.lane.b32.xlu0 %v994, 96
      %v1307 = vpop.permute.xlu0 %1306
      %v1309 = vsel %vm934, %v1305, 0
      %v1312 = vsel %vm934, %v1307, 0
      %1314 = vmatpush.bf16.xpose.msra.mxu0 0
      %1315 = vmatpush.bf16.xpose.msra.mxu0 0
      %1316 = vmatpush.bf16.xpose.msra.mxu0 0
      %1317 = vmatpush.bf16.xpose.msra.mxu0 0
      %1318 = vmatpush.bf16.xpose.msra.mxu0 0
      %1319 = vmatpush.bf16.xpose.msra.mxu0 0
      %1320 = vmatpush.bf16.xpose.msra.mxu0 0
      %1321 = vmatpush.bf16.xpose.msra.mxu0 %v1312
      %1322 = vmatmul.bf16.gmra.mxu0 %v1309
      %v1323 = vpop.f32.mrf.mxu0
      %v1324 = vadd.f32 0.0, %v1323
      %v1325 = vpop.f32.mrf.mxu0
      %v1326 = vadd.f32 0.0, %v1325
      %1327 = vdwg.mxu0
      %v1328 = vmul.f32 %v1276, 0.17677669
      %v1329 = vmul.f32 %v1278, 0.17677669
      %v1330 = vmul.f32 %v1300, 0.17677669
      %v1331 = vmul.f32 %v1302, 0.17677669
      %v1332 = vmul.f32 %v1324, 0.17677669
      %v1333 = vmul.f32 %v1326, 0.17677669
      %v1334 = vsel %vm1021, %v1328, -inf
      %1335 = vmax.xlane.f32.xlu0 %v1334
      %v1336 = vpop.xlane.xlu0 %1335
      %v1337 = vsel %vm1021, %v1329, -inf
      %1338 = vmax.xlane.f32.xlu0 %v1337
      %v1339 = vpop.xlane.xlu0 %1338
      %v1340 = vsel %vm1021, %v1330, -inf
      %1341 = vmax.xlane.f32.xlu0 %v1340
      %v1342 = vpop.xlane.xlu0 %1341
      %v1343 = vsel %vm1021, %v1331, -inf
      %1344 = vmax.xlane.f32.xlu0 %v1343
      %v1345 = vpop.xlane.xlu0 %1344
      %v1346 = vsel %vm1021, %v1332, -inf
      %1347 = vmax.xlane.f32.xlu0 %v1346
      %v1348 = vpop.xlane.xlu0 %1347
      %v1349 = vsel %vm1021, %v1333, -inf
      %1350 = vmax.xlane.f32.xlu0 %v1349
      %v1351 = vpop.xlane.xlu0 %1350
      %v1352 = vsub.f32 %v1328, %v1336
      %v1353 = vsub.f32 %v1329, %v1339
      %v1354 = vsub.f32 %v1330, %v1342
      %v1355 = vsub.f32 %v1331, %v1345
      %v1356 = vsub.f32 %v1332, %v1348
      %v1357 = vsub.f32 %v1333, %v1351
      %v1358 = vmul.f32 %v1352, 1.442695
      %v1359 = vpow.pop %v1358
      %v1360 = vmul.f32 %v1353, 1.442695
      %v1361 = vpow.pop %v1360
      %v1362 = vmul.f32 %v1354, 1.442695
      %v1363 = vpow.pop %v1362
      %v1364 = vmul.f32 %v1355, 1.442695
      %v1365 = vpow.pop %v1364
      %v1366 = vmul.f32 %v1356, 1.442695
      %v1367 = vpow.pop %v1366
      %v1368 = vmul.f32 %v1357, 1.442695
      %v1369 = vpow.pop %v1368
      %v1370 = vsel %vm1021, %v1359, 0.0
      %1371 = vadd.xlane.f32.xlu0 %v1370
      %v1372 = vpop.xlane.xlu0 %1371
      %v1373 = vsel %vm1021, %v1361, 0.0
      %1374 = vadd.xlane.f32.xlu0 %v1373
      %v1375 = vpop.xlane.xlu0 %1374
      %v1376 = vsel %vm1021, %v1363, 0.0
      %1377 = vadd.xlane.f32.xlu0 %v1376
      %v1378 = vpop.xlane.xlu0 %1377
      %v1379 = vsel %vm1021, %v1365, 0.0
      %1380 = vadd.xlane.f32.xlu0 %v1379
      %v1381 = vpop.xlane.xlu0 %1380
      %v1382 = vsel %vm1021, %v1367, 0.0
      %1383 = vadd.xlane.f32.xlu0 %v1382
      %v1384 = vpop.xlane.xlu0 %1383
      %v1385 = vsel %vm1021, %v1369, 0.0
      %1386 = vadd.xlane.f32.xlu0 %v1385
      %v1387 = vpop.xlane.xlu0 %1386
      %v1388 = vrcp.pop %v1372
      %v1389 = vmul.f32 %v1372, %v1388
      %v1390 = vsub.f32 1.0, %v1389
      %v1391 = vmul.f32 %v1388, %v1390
      %v1392 = vadd.f32 %v1388, %v1391
      %vm1393 = vweird.f32 %v1372
      %vm1394 = vweird.f32 %v1388
      %vm1395 = vmor %vm1393, %vm1394
      %v1396 = vsel %vm1395, %v1388, %v1392
      %v1397 = vand.u32 2147483647, %v1372
      %vm1398 = vcmp.eq.f32.partialorder %v1397, 8.507059e+37
      %v1399 = vand.u32 %v1372, 2147483648
      %v1400 = vor.u32 1.1754944e-38, %v1399
      %v1401 = vsel %vm1398, %v1400, %v1396
      %v1402 = vmul.f32 %v1359, %v1401
      %v1403 = vrcp.pop %v1375
      %v1404 = vmul.f32 %v1375, %v1403
      %v1405 = vsub.f32 1.0, %v1404
      %v1406 = vmul.f32 %v1403, %v1405
      %v1407 = vadd.f32 %v1403, %v1406
      %vm1408 = vweird.f32 %v1375
      %vm1409 = vweird.f32 %v1403
      %vm1410 = vmor %vm1408, %vm1409
      %v1411 = vsel %vm1410, %v1403, %v1407
      %v1412 = vand.u32 2147483647, %v1375
      %vm1413 = vcmp.eq.f32.partialorder %v1412, 8.507059e+37
      %v1414 = vand.u32 %v1375, 2147483648
      %v1415 = vor.u32 1.1754944e-38, %v1414
      %v1416 = vsel %vm1413, %v1415, %v1411
      %v1417 = vmul.f32 %v1361, %v1416
      %v1418 = vrcp.pop %v1378
      %v1419 = vmul.f32 %v1378, %v1418
      %v1420 = vsub.f32 1.0, %v1419
      %v1421 = vmul.f32 %v1418, %v1420
      %v1422 = vadd.f32 %v1418, %v1421
      %vm1423 = vweird.f32 %v1378
      %vm1424 = vweird.f32 %v1418
      %vm1425 = vmor %vm1423, %vm1424
      %v1426 = vsel %vm1425, %v1418, %v1422
      %v1427 = vand.u32 2147483647, %v1378
      %vm1428 = vcmp.eq.f32.partialorder %v1427, 8.507059e+37
      %v1429 = vand.u32 %v1378, 2147483648
      %v1430 = vor.u32 1.1754944e-38, %v1429
      %v1431 = vsel %vm1428, %v1430, %v1426
      %v1432 = vmul.f32 %v1363, %v1431
      %v1433 = vrcp.pop %v1381
      %v1434 = vmul.f32 %v1381, %v1433
      %v1435 = vsub.f32 1.0, %v1434
      %v1436 = vmul.f32 %v1433, %v1435
      %v1437 = vadd.f32 %v1433, %v1436
      %vm1438 = vweird.f32 %v1381
      %vm1439 = vweird.f32 %v1433
      %vm1440 = vmor %vm1438, %vm1439
      %v1441 = vsel %vm1440, %v1433, %v1437
      %v1442 = vand.u32 2147483647, %v1381
      %vm1443 = vcmp.eq.f32.partialorder %v1442, 8.507059e+37
      %v1444 = vand.u32 %v1381, 2147483648
      %v1445 = vor.u32 1.1754944e-38, %v1444
      %v1446 = vsel %vm1443, %v1445, %v1441
      %v1447 = vmul.f32 %v1365, %v1446
      %v1448 = vrcp.pop %v1384
      %v1449 = vmul.f32 %v1384, %v1448
      %v1450 = vsub.f32 1.0, %v1449
      %v1451 = vmul.f32 %v1448, %v1450
      %v1452 = vadd.f32 %v1448, %v1451
      %vm1453 = vweird.f32 %v1384
      %vm1454 = vweird.f32 %v1448
      %vm1455 = vmor %vm1453, %vm1454
      %v1456 = vsel %vm1455, %v1448, %v1452
      %v1457 = vand.u32 2147483647, %v1384
      %vm1458 = vcmp.eq.f32.partialorder %v1457, 8.507059e+37
      %v1459 = vand.u32 %v1384, 2147483648
      %v1460 = vor.u32 1.1754944e-38, %v1459
      %v1461 = vsel %vm1458, %v1460, %v1456
      %v1462 = vmul.f32 %v1367, %v1461
      %v1463 = vrcp.pop %v1387
      %v1464 = vmul.f32 %v1387, %v1463
      %v1465 = vsub.f32 1.0, %v1464
      %v1466 = vmul.f32 %v1463, %v1465
      %v1467 = vadd.f32 %v1463, %v1466
      %vm1468 = vweird.f32 %v1387
      %vm1469 = vweird.f32 %v1463
      %vm1470 = vmor %vm1468, %vm1469
      %v1471 = vsel %vm1470, %v1463, %v1467
      %v1472 = vand.u32 2147483647, %v1387
      %vm1473 = vcmp.eq.f32.partialorder %v1472, 8.507059e+37
      %v1474 = vand.u32 %v1387, 2147483648
      %v1475 = vor.u32 1.1754944e-38, %v1474
      %v1476 = vsel %vm1473, %v1475, %v1471
      %v1477 = vmul.f32 %v1369, %v1476
      %v1478 = vpack.c.bf16 %v1402, %v1402
      %v1479 = vpack.c.bf16 %v1417, %v1417
      %v1480 = vpack.c.bf16 %v1432, %v1432
      %v1481 = vpack.c.bf16 %v1447, %v1447
      %v1482 = vpack.c.bf16 %v1462, %v1462
      %v1483 = vpack.c.bf16 %v1477, %v1477
      %v1486 = vunpack.c.l.b16 %v1478
      %v1487 = vunpack.c.l.b16 %v1479
      %v1488 = vpack.c.b16 %v1487, %v1486
      %1489 = vrot.lane.b32.xlu0 %v1181, 96
      %v1490 = vpop.permute.xlu0 %1489
      %v1493 = vsel %vm1021, %v1488, 0
      %1495 = vmatpush.bf16.msra.mxu0 0
      %1496 = vmatpush.bf16.msra.mxu0 0
      %1497 = vmatpush.bf16.msra.mxu0 0
      %1498 = vmatpush.bf16.msra.mxu0 0
      %1499 = vmatpush.bf16.msra.mxu0 0
      %1500 = vmatpush.bf16.msra.mxu0 0
      %1501 = vmatpush.bf16.msra.mxu0 0
      %1502 = vmatpush.bf16.msra.mxu0 %v1490
      %1503 = vmatmul.bf16.gmra.mxu0 %v1493
      %v1504 = vpop.f32.mrf.mxu0
      %v1505 = vadd.f32 0.0, %v1504
      %v1506 = vpop.f32.mrf.mxu0
      %v1507 = vadd.f32 0.0, %v1506
      %1508 = vdwg.mxu0
      %v1511 = vunpack.c.l.b16 %v1480
      %v1512 = vunpack.c.l.b16 %v1481
      %v1513 = vpack.c.b16 %v1512, %v1511
      %1514 = vrot.lane.b32.xlu0 %v1209, 96
      %v1515 = vpop.permute.xlu0 %1514
      %v1518 = vsel %vm1021, %v1513, 0
      %1520 = vmatpush.bf16.msra.mxu0 0
      %1521 = vmatpush.bf16.msra.mxu0 0
      %1522 = vmatpush.bf16.msra.mxu0 0
      %1523 = vmatpush.bf16.msra.mxu0 0
      %1524 = vmatpush.bf16.msra.mxu0 0
      %1525 = vmatpush.bf16.msra.mxu0 0
      %1526 = vmatpush.bf16.msra.mxu0 0
      %1527 = vmatpush.bf16.msra.mxu0 %v1515
      %1528 = vmatmul.bf16.gmra.mxu0 %v1518
      %v1529 = vpop.f32.mrf.mxu0
      %v1530 = vadd.f32 0.0, %v1529
      %v1531 = vpop.f32.mrf.mxu0
      %v1532 = vadd.f32 0.0, %v1531
      %1533 = vdwg.mxu0
      %v1536 = vunpack.c.l.b16 %v1482
      %v1537 = vunpack.c.l.b16 %v1483
      %v1538 = vpack.c.b16 %v1537, %v1536
      %1539 = vrot.lane.b32.xlu0 %v1237, 96
      %v1540 = vpop.permute.xlu0 %1539
      %v1543 = vsel %vm1021, %v1538, 0
      %1545 = vmatpush.bf16.msra.mxu0 0
      %1546 = vmatpush.bf16.msra.mxu0 0
      %1547 = vmatpush.bf16.msra.mxu0 0
      %1548 = vmatpush.bf16.msra.mxu0 0
      %1549 = vmatpush.bf16.msra.mxu0 0
      %1550 = vmatpush.bf16.msra.mxu0 0
      %1551 = vmatpush.bf16.msra.mxu0 0
      %1552 = vmatpush.bf16.msra.mxu0 %v1540
      %1553 = vmatmul.bf16.gmra.mxu0 %v1543
      %v1554 = vpop.f32.mrf.mxu0
      %v1555 = vadd.f32 0.0, %v1554
      %v1556 = vpop.f32.mrf.mxu0
      %v1557 = vadd.f32 0.0, %v1556
      %1558 = vdwg.mxu0
      %1559 = vrot.lane.b32.xlu0 %v928, 64
      %v1560 = vpop.permute.xlu0 %1559
      %1561 = vrot.lane.b32.xlu0 %v933, 64
      %v1562 = vpop.permute.xlu0 %1561
      %v1564 = vsel %vm934, %v1560, 0
      %v1567 = vsel %vm934, %v1562, 0
      %1569 = vmatpush.bf16.xpose.msra.mxu0 0
      %1570 = vmatpush.bf16.xpose.msra.mxu0 0
      %1571 = vmatpush.bf16.xpose.msra.mxu0 0
      %1572 = vmatpush.bf16.xpose.msra.mxu0 0
      %1573 = vmatpush.bf16.xpose.msra.mxu0 0
      %1574 = vmatpush.bf16.xpose.msra.mxu0 0
      %1575 = vmatpush.bf16.xpose.msra.mxu0 0
      %1576 = vmatpush.bf16.xpose.msra.mxu0 %v1567
      %1577 = vmatmul.bf16.gmra.mxu0 %v1564
      %v1578 = vpop.f32.mrf.mxu0
      %v1579 = vadd.f32 0.0, %v1578
      %v1580 = vpop.f32.mrf.mxu0
      %v1581 = vadd.f32 0.0, %v1580
      %1582 = vdwg.mxu0
      %1583 = vrot.lane.b32.xlu0 %v959, 64
      %v1584 = vpop.permute.xlu0 %1583
      %1585 = vrot.lane.b32.xlu0 %v964, 64
      %v1586 = vpop.permute.xlu0 %1585
      %v1588 = vsel %vm934, %v1584, 0
      %v1591 = vsel %vm934, %v1586, 0
      %1593 = vmatpush.bf16.xpose.msra.mxu0 0
      %1594 = vmatpush.bf16.xpose.msra.mxu0 0
      %1595 = vmatpush.bf16.xpose.msra.mxu0 0
      %1596 = vmatpush.bf16.xpose.msra.mxu0 0
      %1597 = vmatpush.bf16.xpose.msra.mxu0 0
      %1598 = vmatpush.bf16.xpose.msra.mxu0 0
      %1599 = vmatpush.bf16.xpose.msra.mxu0 0
      %1600 = vmatpush.bf16.xpose.msra.mxu0 %v1591
      %1601 = vmatmul.bf16.gmra.mxu0 %v1588
      %v1602 = vpop.f32.mrf.mxu0
      %v1603 = vadd.f32 0.0, %v1602
      %v1604 = vpop.f32.mrf.mxu0
      %v1605 = vadd.f32 0.0, %v1604
      %1606 = vdwg.mxu0
      %1607 = vrot.lane.b32.xlu0 %v989, 64
      %v1608 = vpop.permute.xlu0 %1607
      %1609 = vrot.lane.b32.xlu0 %v994, 64
      %v1610 = vpop.permute.xlu0 %1609
      %v1612 = vsel %vm934, %v1608, 0
      %v1615 = vsel %vm934, %v1610, 0
      %1617 = vmatpush.bf16.xpose.msra.mxu0 0
      %1618 = vmatpush.bf16.xpose.msra.mxu0 0
      %1619 = vmatpush.bf16.xpose.msra.mxu0 0
      %1620 = vmatpush.bf16.xpose.msra.mxu0 0
      %1621 = vmatpush.bf16.xpose.msra.mxu0 0
      %1622 = vmatpush.bf16.xpose.msra.mxu0 0
      %1623 = vmatpush.bf16.xpose.msra.mxu0 0
      %1624 = vmatpush.bf16.xpose.msra.mxu0 %v1615
      %1625 = vmatmul.bf16.gmra.mxu0 %v1612
      %v1626 = vpop.f32.mrf.mxu0
      %v1627 = vadd.f32 0.0, %v1626
      %v1628 = vpop.f32.mrf.mxu0
      %v1629 = vadd.f32 0.0, %v1628
      %1630 = vdwg.mxu0
      %v1631 = vmul.f32 %v1579, 0.17677669
      %v1632 = vmul.f32 %v1581, 0.17677669
      %v1633 = vmul.f32 %v1603, 0.17677669
      %v1634 = vmul.f32 %v1605, 0.17677669
      %v1635 = vmul.f32 %v1627, 0.17677669
      %v1636 = vmul.f32 %v1629, 0.17677669
      %v1637 = vsel %vm1021, %v1631, -inf
      %1638 = vmax.xlane.f32.xlu0 %v1637
      %v1639 = vpop.xlane.xlu0 %1638
      %v1640 = vsel %vm1021, %v1632, -inf
      %1641 = vmax.xlane.f32.xlu0 %v1640
      %v1642 = vpop.xlane.xlu0 %1641
      %v1643 = vsel %vm1021, %v1633, -inf
      %1644 = vmax.xlane.f32.xlu0 %v1643
      %v1645 = vpop.xlane.xlu0 %1644
      %v1646 = vsel %vm1021, %v1634, -inf
      %1647 = vmax.xlane.f32.xlu0 %v1646
      %v1648 = vpop.xlane.xlu0 %1647
      %v1649 = vsel %vm1021, %v1635, -inf
      %1650 = vmax.xlane.f32.xlu0 %v1649
      %v1651 = vpop.xlane.xlu0 %1650
      %v1652 = vsel %vm1021, %v1636, -inf
      %1653 = vmax.xlane.f32.xlu0 %v1652
      %v1654 = vpop.xlane.xlu0 %1653
      %v1655 = vsub.f32 %v1631, %v1639
      %v1656 = vsub.f32 %v1632, %v1642
      %v1657 = vsub.f32 %v1633, %v1645
      %v1658 = vsub.f32 %v1634, %v1648
      %v1659 = vsub.f32 %v1635, %v1651
      %v1660 = vsub.f32 %v1636, %v1654
      %v1661 = vmul.f32 %v1655, 1.442695
      %v1662 = vpow.pop %v1661
      %v1663 = vmul.f32 %v1656, 1.442695
      %v1664 = vpow.pop %v1663
      %v1665 = vmul.f32 %v1657, 1.442695
      %v1666 = vpow.pop %v1665
      %v1667 = vmul.f32 %v1658, 1.442695
      %v1668 = vpow.pop %v1667
      %v1669 = vmul.f32 %v1659, 1.442695
      %v1670 = vpow.pop %v1669
      %v1671 = vmul.f32 %v1660, 1.442695
      %v1672 = vpow.pop %v1671
      %v1673 = vsel %vm1021, %v1662, 0.0
      %1674 = vadd.xlane.f32.xlu0 %v1673
      %v1675 = vpop.xlane.xlu0 %1674
      %v1676 = vsel %vm1021, %v1664, 0.0
      %1677 = vadd.xlane.f32.xlu0 %v1676
      %v1678 = vpop.xlane.xlu0 %1677
      %v1679 = vsel %vm1021, %v1666, 0.0
      %1680 = vadd.xlane.f32.xlu0 %v1679
      %v1681 = vpop.xlane.xlu0 %1680
      %v1682 = vsel %vm1021, %v1668, 0.0
      %1683 = vadd.xlane.f32.xlu0 %v1682
      %v1684 = vpop.xlane.xlu0 %1683
      %v1685 = vsel %vm1021, %v1670, 0.0
      %1686 = vadd.xlane.f32.xlu0 %v1685
      %v1687 = vpop.xlane.xlu0 %1686
      %v1688 = vsel %vm1021, %v1672, 0.0
      %1689 = vadd.xlane.f32.xlu0 %v1688
      %v1690 = vpop.xlane.xlu0 %1689
      %v1691 = vrcp.pop %v1675
      %v1692 = vmul.f32 %v1675, %v1691
      %v1693 = vsub.f32 1.0, %v1692
      %v1694 = vmul.f32 %v1691, %v1693
      %v1695 = vadd.f32 %v1691, %v1694
      %vm1696 = vweird.f32 %v1675
      %vm1697 = vweird.f32 %v1691
      %vm1698 = vmor %vm1696, %vm1697
      %v1699 = vsel %vm1698, %v1691, %v1695
      %v1700 = vand.u32 2147483647, %v1675
      %vm1701 = vcmp.eq.f32.partialorder %v1700, 8.507059e+37
      %v1702 = vand.u32 %v1675, 2147483648
      %v1703 = vor.u32 1.1754944e-38, %v1702
      %v1704 = vsel %vm1701, %v1703, %v1699
      %v1705 = vmul.f32 %v1662, %v1704
      %v1706 = vrcp.pop %v1678
      %v1707 = vmul.f32 %v1678, %v1706
      %v1708 = vsub.f32 1.0, %v1707
      %v1709 = vmul.f32 %v1706, %v1708
      %v1710 = vadd.f32 %v1706, %v1709
      %vm1711 = vweird.f32 %v1678
      %vm1712 = vweird.f32 %v1706
      %vm1713 = vmor %vm1711, %vm1712
      %v1714 = vsel %vm1713, %v1706, %v1710
      %v1715 = vand.u32 2147483647, %v1678
      %vm1716 = vcmp.eq.f32.partialorder %v1715, 8.507059e+37
      %v1717 = vand.u32 %v1678, 2147483648
      %v1718 = vor.u32 1.1754944e-38, %v1717
      %v1719 = vsel %vm1716, %v1718, %v1714
      %v1720 = vmul.f32 %v1664, %v1719
      %v1721 = vrcp.pop %v1681
      %v1722 = vmul.f32 %v1681, %v1721
      %v1723 = vsub.f32 1.0, %v1722
      %v1724 = vmul.f32 %v1721, %v1723
      %v1725 = vadd.f32 %v1721, %v1724
      %vm1726 = vweird.f32 %v1681
      %vm1727 = vweird.f32 %v1721
      %vm1728 = vmor %vm1726, %vm1727
      %v1729 = vsel %vm1728, %v1721, %v1725
      %v1730 = vand.u32 2147483647, %v1681
      %vm1731 = vcmp.eq.f32.partialorder %v1730, 8.507059e+37
      %v1732 = vand.u32 %v1681, 2147483648
      %v1733 = vor.u32 1.1754944e-38, %v1732
      %v1734 = vsel %vm1731, %v1733, %v1729
      %v1735 = vmul.f32 %v1666, %v1734
      %v1736 = vrcp.pop %v1684
      %v1737 = vmul.f32 %v1684, %v1736
      %v1738 = vsub.f32 1.0, %v1737
      %v1739 = vmul.f32 %v1736, %v1738
      %v1740 = vadd.f32 %v1736, %v1739
      %vm1741 = vweird.f32 %v1684
      %vm1742 = vweird.f32 %v1736
      %vm1743 = vmor %vm1741, %vm1742
      %v1744 = vsel %vm1743, %v1736, %v1740
      %v1745 = vand.u32 2147483647, %v1684
      %vm1746 = vcmp.eq.f32.partialorder %v1745, 8.507059e+37
      %v1747 = vand.u32 %v1684, 2147483648
      %v1748 = vor.u32 1.1754944e-38, %v1747
      %v1749 = vsel %vm1746, %v1748, %v1744
      %v1750 = vmul.f32 %v1668, %v1749
      %v1751 = vrcp.pop %v1687
      %v1752 = vmul.f32 %v1687, %v1751
      %v1753 = vsub.f32 1.0, %v1752
      %v1754 = vmul.f32 %v1751, %v1753
      %v1755 = vadd.f32 %v1751, %v1754
      %vm1756 = vweird.f32 %v1687
      %vm1757 = vweird.f32 %v1751
      %vm1758 = vmor %vm1756, %vm1757
      %v1759 = vsel %vm1758, %v1751, %v1755
      %v1760 = vand.u32 2147483647, %v1687
      %vm1761 = vcmp.eq.f32.partialorder %v1760, 8.507059e+37
      %v1762 = vand.u32 %v1687, 2147483648
      %v1763 = vor.u32 1.1754944e-38, %v1762
      %v1764 = vsel %vm1761, %v1763, %v1759
      %v1765 = vmul.f32 %v1670, %v1764
      %v1766 = vrcp.pop %v1690
      %v1767 = vmul.f32 %v1690, %v1766
      %v1768 = vsub.f32 1.0, %v1767
      %v1769 = vmul.f32 %v1766, %v1768
      %v1770 = vadd.f32 %v1766, %v1769
      %vm1771 = vweird.f32 %v1690
      %vm1772 = vweird.f32 %v1766
      %vm1773 = vmor %vm1771, %vm1772
      %v1774 = vsel %vm1773, %v1766, %v1770
      %v1775 = vand.u32 2147483647, %v1690
      %vm1776 = vcmp.eq.f32.partialorder %v1775, 8.507059e+37
      %v1777 = vand.u32 %v1690, 2147483648
      %v1778 = vor.u32 1.1754944e-38, %v1777
      %v1779 = vsel %vm1776, %v1778, %v1774
      %v1780 = vmul.f32 %v1672, %v1779
      %v1781 = vpack.c.bf16 %v1705, %v1705
      %v1782 = vpack.c.bf16 %v1720, %v1720
      %v1783 = vpack.c.bf16 %v1735, %v1735
      %v1784 = vpack.c.bf16 %v1750, %v1750
      %v1785 = vpack.c.bf16 %v1765, %v1765
      %v1786 = vpack.c.bf16 %v1780, %v1780
      %v1789 = vunpack.c.l.b16 %v1781
      %v1790 = vunpack.c.l.b16 %v1782
      %v1791 = vpack.c.b16 %v1790, %v1789
      %1792 = vrot.lane.b32.xlu0 %v1181, 64
      %v1793 = vpop.permute.xlu0 %1792
      %v1796 = vsel %vm1021, %v1791, 0
      %1798 = vmatpush.bf16.msra.mxu0 0
      %1799 = vmatpush.bf16.msra.mxu0 0
      %1800 = vmatpush.bf16.msra.mxu0 0
      %1801 = vmatpush.bf16.msra.mxu0 0
      %1802 = vmatpush.bf16.msra.mxu0 0
      %1803 = vmatpush.bf16.msra.mxu0 0
      %1804 = vmatpush.bf16.msra.mxu0 0
      %1805 = vmatpush.bf16.msra.mxu0 %v1793
      %1806 = vmatmul.bf16.gmra.mxu0 %v1796
      %v1807 = vpop.f32.mrf.mxu0
      %v1808 = vadd.f32 0.0, %v1807
      %v1809 = vpop.f32.mrf.mxu0
      %v1810 = vadd.f32 0.0, %v1809
      %1811 = vdwg.mxu0
      %v1814 = vunpack.c.l.b16 %v1783
      %v1815 = vunpack.c.l.b16 %v1784
      %v1816 = vpack.c.b16 %v1815, %v1814
      %1817 = vrot.lane.b32.xlu0 %v1209, 64
      %v1818 = vpop.permute.xlu0 %1817
      %v1821 = vsel %vm1021, %v1816, 0
      %1823 = vmatpush.bf16.msra.mxu0 0
      %1824 = vmatpush.bf16.msra.mxu0 0
      %1825 = vmatpush.bf16.msra.mxu0 0
      %1826 = vmatpush.bf16.msra.mxu0 0
      %1827 = vmatpush.bf16.msra.mxu0 0
      %1828 = vmatpush.bf16.msra.mxu0 0
      %1829 = vmatpush.bf16.msra.mxu0 0
      %1830 = vmatpush.bf16.msra.mxu0 %v1818
      %1831 = vmatmul.bf16.gmra.mxu0 %v1821
      %v1832 = vpop.f32.mrf.mxu0
      %v1833 = vadd.f32 0.0, %v1832
      %v1834 = vpop.f32.mrf.mxu0
      %v1835 = vadd.f32 0.0, %v1834
      %1836 = vdwg.mxu0
      %v1839 = vunpack.c.l.b16 %v1785
      %v1840 = vunpack.c.l.b16 %v1786
      %v1841 = vpack.c.b16 %v1840, %v1839
      %1842 = vrot.lane.b32.xlu0 %v1237, 64
      %v1843 = vpop.permute.xlu0 %1842
      %v1846 = vsel %vm1021, %v1841, 0
      %1848 = vmatpush.bf16.msra.mxu0 0
      %1849 = vmatpush.bf16.msra.mxu0 0
      %1850 = vmatpush.bf16.msra.mxu0 0
      %1851 = vmatpush.bf16.msra.mxu0 0
      %1852 = vmatpush.bf16.msra.mxu0 0
      %1853 = vmatpush.bf16.msra.mxu0 0
      %1854 = vmatpush.bf16.msra.mxu0 0
      %1855 = vmatpush.bf16.msra.mxu0 %v1843
      %1856 = vmatmul.bf16.gmra.mxu0 %v1846
      %v1857 = vpop.f32.mrf.mxu0
      %v1858 = vadd.f32 0.0, %v1857
      %v1859 = vpop.f32.mrf.mxu0
      %v1860 = vadd.f32 0.0, %v1859
      %1861 = vdwg.mxu0
      %1862 = vrot.lane.b32.xlu0 %v928, 32
      %v1863 = vpop.permute.xlu0 %1862
      %1864 = vrot.lane.b32.xlu0 %v933, 32
      %v1865 = vpop.permute.xlu0 %1864
      %v1867 = vsel %vm934, %v1863, 0
      %v1870 = vsel %vm934, %v1865, 0
      %1872 = vmatpush.bf16.xpose.msra.mxu0 0
      %1873 = vmatpush.bf16.xpose.msra.mxu0 0
      %1874 = vmatpush.bf16.xpose.msra.mxu0 0
      %1875 = vmatpush.bf16.xpose.msra.mxu0 0
      %1876 = vmatpush.bf16.xpose.msra.mxu0 0
      %1877 = vmatpush.bf16.xpose.msra.mxu0 0
      %1878 = vmatpush.bf16.xpose.msra.mxu0 0
      %1879 = vmatpush.bf16.xpose.msra.mxu0 %v1870
      %1880 = vmatmul.bf16.gmra.mxu0 %v1867
      %v1881 = vpop.f32.mrf.mxu0
      %v1882 = vadd.f32 0.0, %v1881
      %v1883 = vpop.f32.mrf.mxu0
      %v1884 = vadd.f32 0.0, %v1883
      %1885 = vdwg.mxu0
      %1886 = vrot.lane.b32.xlu0 %v959, 32
      %v1887 = vpop.permute.xlu0 %1886
      %1888 = vrot.lane.b32.xlu0 %v964, 32
      %v1889 = vpop.permute.xlu0 %1888
      %v1891 = vsel %vm934, %v1887, 0
      %v1894 = vsel %vm934, %v1889, 0
      %1896 = vmatpush.bf16.xpose.msra.mxu0 0
      %1897 = vmatpush.bf16.xpose.msra.mxu0 0
      %1898 = vmatpush.bf16.xpose.msra.mxu0 0
      %1899 = vmatpush.bf16.xpose.msra.mxu0 0
      %1900 = vmatpush.bf16.xpose.msra.mxu0 0
      %1901 = vmatpush.bf16.xpose.msra.mxu0 0
      %1902 = vmatpush.bf16.xpose.msra.mxu0 0
      %1903 = vmatpush.bf16.xpose.msra.mxu0 %v1894
      %1904 = vmatmul.bf16.gmra.mxu0 %v1891
      %v1905 = vpop.f32.mrf.mxu0
      %v1906 = vadd.f32 0.0, %v1905
      %v1907 = vpop.f32.mrf.mxu0
      %v1908 = vadd.f32 0.0, %v1907
      %1909 = vdwg.mxu0
      %1910 = vrot.lane.b32.xlu0 %v989, 32
      %v1911 = vpop.permute.xlu0 %1910
      %1912 = vrot.lane.b32.xlu0 %v994, 32
      %v1913 = vpop.permute.xlu0 %1912
      %v1915 = vsel %vm934, %v1911, 0
      %v1918 = vsel %vm934, %v1913, 0
      %1920 = vmatpush.bf16.xpose.msra.mxu0 0
      %1921 = vmatpush.bf16.xpose.msra.mxu0 0
      %1922 = vmatpush.bf16.xpose.msra.mxu0 0
      %1923 = vmatpush.bf16.xpose.msra.mxu0 0
      %1924 = vmatpush.bf16.xpose.msra.mxu0 0
      %1925 = vmatpush.bf16.xpose.msra.mxu0 0
      %1926 = vmatpush.bf16.xpose.msra.mxu0 0
      %1927 = vmatpush.bf16.xpose.msra.mxu0 %v1918
      %1928 = vmatmul.bf16.gmra.mxu0 %v1915
      %v1929 = vpop.f32.mrf.mxu0
      %v1930 = vadd.f32 0.0, %v1929
      %v1931 = vpop.f32.mrf.mxu0
      %v1932 = vadd.f32 0.0, %v1931
      %1933 = vdwg.mxu0
      %v1934 = vmul.f32 %v1882, 0.17677669
      %v1935 = vmul.f32 %v1884, 0.17677669
      %v1936 = vmul.f32 %v1906, 0.17677669
      %v1937 = vmul.f32 %v1908, 0.17677669
      %v1938 = vmul.f32 %v1930, 0.17677669
      %v1939 = vmul.f32 %v1932, 0.17677669
      %v1940 = vsel %vm1021, %v1934, -inf
      %1941 = vmax.xlane.f32.xlu0 %v1940
      %v1942 = vpop.xlane.xlu0 %1941
      %v1943 = vsel %vm1021, %v1935, -inf
      %1944 = vmax.xlane.f32.xlu0 %v1943
      %v1945 = vpop.xlane.xlu0 %1944
      %v1946 = vsel %vm1021, %v1936, -inf
      %1947 = vmax.xlane.f32.xlu0 %v1946
      %v1948 = vpop.xlane.xlu0 %1947
      %v1949 = vsel %vm1021, %v1937, -inf
      %1950 = vmax.xlane.f32.xlu0 %v1949
      %v1951 = vpop.xlane.xlu0 %1950
      %v1952 = vsel %vm1021, %v1938, -inf
      %1953 = vmax.xlane.f32.xlu0 %v1952
      %v1954 = vpop.xlane.xlu0 %1953
      %v1955 = vsel %vm1021, %v1939, -inf
      %1956 = vmax.xlane.f32.xlu0 %v1955
      %v1957 = vpop.xlane.xlu0 %1956
      %v1958 = vsub.f32 %v1934, %v1942
      %v1959 = vsub.f32 %v1935, %v1945
      %v1960 = vsub.f32 %v1936, %v1948
      %v1961 = vsub.f32 %v1937, %v1951
      %v1962 = vsub.f32 %v1938, %v1954
      %v1963 = vsub.f32 %v1939, %v1957
      %v1964 = vmul.f32 %v1958, 1.442695
      %v1965 = vpow.pop %v1964
      %v1966 = vmul.f32 %v1959, 1.442695
      %v1967 = vpow.pop %v1966
      %v1968 = vmul.f32 %v1960, 1.442695
      %v1969 = vpow.pop %v1968
      %v1970 = vmul.f32 %v1961, 1.442695
      %v1971 = vpow.pop %v1970
      %v1972 = vmul.f32 %v1962, 1.442695
      %v1973 = vpow.pop %v1972
      %v1974 = vmul.f32 %v1963, 1.442695
      %v1975 = vpow.pop %v1974
      %v1976 = vsel %vm1021, %v1965, 0.0
      %1977 = vadd.xlane.f32.xlu0 %v1976
      %v1978 = vpop.xlane.xlu0 %1977
      %v1979 = vsel %vm1021, %v1967, 0.0
      %1980 = vadd.xlane.f32.xlu0 %v1979
      %v1981 = vpop.xlane.xlu0 %1980
      %v1982 = vsel %vm1021, %v1969, 0.0
      %1983 = vadd.xlane.f32.xlu0 %v1982
      %v1984 = vpop.xlane.xlu0 %1983
      %v1985 = vsel %vm1021, %v1971, 0.0
      %1986 = vadd.xlane.f32.xlu0 %v1985
      %v1987 = vpop.xlane.xlu0 %1986
      %v1988 = vsel %vm1021, %v1973, 0.0
      %1989 = vadd.xlane.f32.xlu0 %v1988
      %v1990 = vpop.xlane.xlu0 %1989
      %v1991 = vsel %vm1021, %v1975, 0.0
      %1992 = vadd.xlane.f32.xlu0 %v1991
      %v1993 = vpop.xlane.xlu0 %1992
      %v1994 = vrcp.pop %v1978
      %v1995 = vmul.f32 %v1978, %v1994
      %v1996 = vsub.f32 1.0, %v1995
      %v1997 = vmul.f32 %v1994, %v1996
      %v1998 = vadd.f32 %v1994, %v1997
      %vm1999 = vweird.f32 %v1978
      %vm2000 = vweird.f32 %v1994
      %vm2001 = vmor %vm1999, %vm2000
      %v2002 = vsel %vm2001, %v1994, %v1998
      %v2003 = vand.u32 2147483647, %v1978
      %vm2004 = vcmp.eq.f32.partialorder %v2003, 8.507059e+37
      %v2005 = vand.u32 %v1978, 2147483648
      %v2006 = vor.u32 1.1754944e-38, %v2005
      %v2007 = vsel %vm2004, %v2006, %v2002
      %v2008 = vmul.f32 %v1965, %v2007
      %v2009 = vrcp.pop %v1981
      %v2010 = vmul.f32 %v1981, %v2009
      %v2011 = vsub.f32 1.0, %v2010
      %v2012 = vmul.f32 %v2009, %v2011
      %v2013 = vadd.f32 %v2009, %v2012
      %vm2014 = vweird.f32 %v1981
      %vm2015 = vweird.f32 %v2009
      %vm2016 = vmor %vm2014, %vm2015
      %v2017 = vsel %vm2016, %v2009, %v2013
      %v2018 = vand.u32 2147483647, %v1981
      %vm2019 = vcmp.eq.f32.partialorder %v2018, 8.507059e+37
      %v2020 = vand.u32 %v1981, 2147483648
      %v2021 = vor.u32 1.1754944e-38, %v2020
      %v2022 = vsel %vm2019, %v2021, %v2017
      %v2023 = vmul.f32 %v1967, %v2022
      %v2024 = vrcp.pop %v1984
      %v2025 = vmul.f32 %v1984, %v2024
      %v2026 = vsub.f32 1.0, %v2025
      %v2027 = vmul.f32 %v2024, %v2026
      %v2028 = vadd.f32 %v2024, %v2027
      %vm2029 = vweird.f32 %v1984
      %vm2030 = vweird.f32 %v2024
      %vm2031 = vmor %vm2029, %vm2030
      %v2032 = vsel %vm2031, %v2024, %v2028
      %v2033 = vand.u32 2147483647, %v1984
      %vm2034 = vcmp.eq.f32.partialorder %v2033, 8.507059e+37
      %v2035 = vand.u32 %v1984, 2147483648
      %v2036 = vor.u32 1.1754944e-38, %v2035
      %v2037 = vsel %vm2034, %v2036, %v2032
      %v2038 = vmul.f32 %v1969, %v2037
      %v2039 = vrcp.pop %v1987
      %v2040 = vmul.f32 %v1987, %v2039
      %v2041 = vsub.f32 1.0, %v2040
      %v2042 = vmul.f32 %v2039, %v2041
      %v2043 = vadd.f32 %v2039, %v2042
      %vm2044 = vweird.f32 %v1987
      %vm2045 = vweird.f32 %v2039
      %vm2046 = vmor %vm2044, %vm2045
      %v2047 = vsel %vm2046, %v2039, %v2043
      %v2048 = vand.u32 2147483647, %v1987
      %vm2049 = vcmp.eq.f32.partialorder %v2048, 8.507059e+37
      %v2050 = vand.u32 %v1987, 2147483648
      %v2051 = vor.u32 1.1754944e-38, %v2050
      %v2052 = vsel %vm2049, %v2051, %v2047
      %v2053 = vmul.f32 %v1971, %v2052
      %v2054 = vrcp.pop %v1990
      %v2055 = vmul.f32 %v1990, %v2054
      %v2056 = vsub.f32 1.0, %v2055
      %v2057 = vmul.f32 %v2054, %v2056
      %v2058 = vadd.f32 %v2054, %v2057
      %vm2059 = vweird.f32 %v1990
      %vm2060 = vweird.f32 %v2054
      %vm2061 = vmor %vm2059, %vm2060
      %v2062 = vsel %vm2061, %v2054, %v2058
      %v2063 = vand.u32 2147483647, %v1990
      %vm2064 = vcmp.eq.f32.partialorder %v2063, 8.507059e+37
      %v2065 = vand.u32 %v1990, 2147483648
      %v2066 = vor.u32 1.1754944e-38, %v2065
      %v2067 = vsel %vm2064, %v2066, %v2062
      %v2068 = vmul.f32 %v1973, %v2067
      %v2069 = vrcp.pop %v1993
      %v2070 = vmul.f32 %v1993, %v2069
      %v2071 = vsub.f32 1.0, %v2070
      %v2072 = vmul.f32 %v2069, %v2071
      %v2073 = vadd.f32 %v2069, %v2072
      %vm2074 = vweird.f32 %v1993
      %vm2075 = vweird.f32 %v2069
      %vm2076 = vmor %vm2074, %vm2075
      %v2077 = vsel %vm2076, %v2069, %v2073
      %v2078 = vand.u32 2147483647, %v1993
      %vm2079 = vcmp.eq.f32.partialorder %v2078, 8.507059e+37
      %v2080 = vand.u32 %v1993, 2147483648
      %v2081 = vor.u32 1.1754944e-38, %v2080
      %v2082 = vsel %vm2079, %v2081, %v2077
      %v2083 = vmul.f32 %v1975, %v2082
      %v2084 = vpack.c.bf16 %v2008, %v2008
      %v2085 = vpack.c.bf16 %v2023, %v2023
      %v2086 = vpack.c.bf16 %v2038, %v2038
      %v2087 = vpack.c.bf16 %v2053, %v2053
      %v2088 = vpack.c.bf16 %v2068, %v2068
      %v2089 = vpack.c.bf16 %v2083, %v2083
      %v2092 = vunpack.c.l.b16 %v2084
      %v2093 = vunpack.c.l.b16 %v2085
      %v2094 = vpack.c.b16 %v2093, %v2092
      %2095 = vrot.lane.b32.xlu0 %v1181, 32
      %v2096 = vpop.permute.xlu0 %2095
      %v2099 = vsel %vm1021, %v2094, 0
      %2101 = vmatpush.bf16.msra.mxu0 0
      %2102 = vmatpush.bf16.msra.mxu0 0
      %2103 = vmatpush.bf16.msra.mxu0 0
      %2104 = vmatpush.bf16.msra.mxu0 0
      %2105 = vmatpush.bf16.msra.mxu0 0
      %2106 = vmatpush.bf16.msra.mxu0 0
      %2107 = vmatpush.bf16.msra.mxu0 0
      %2108 = vmatpush.bf16.msra.mxu0 %v2096
      %2109 = vmatmul.bf16.gmra.mxu0 %v2099
      %v2110 = vpop.f32.mrf.mxu0
      %v2111 = vadd.f32 0.0, %v2110
      %v2112 = vpop.f32.mrf.mxu0
      %v2113 = vadd.f32 0.0, %v2112
      %2114 = vdwg.mxu0
      %v2117 = vunpack.c.l.b16 %v2086
      %v2118 = vunpack.c.l.b16 %v2087
      %v2119 = vpack.c.b16 %v2118, %v2117
      %2120 = vrot.lane.b32.xlu0 %v1209, 32
      %v2121 = vpop.permute.xlu0 %2120
      %v2124 = vsel %vm1021, %v2119, 0
      %2126 = vmatpush.bf16.msra.mxu0 0
      %2127 = vmatpush.bf16.msra.mxu0 0
      %2128 = vmatpush.bf16.msra.mxu0 0
      %2129 = vmatpush.bf16.msra.mxu0 0
      %2130 = vmatpush.bf16.msra.mxu0 0
      %2131 = vmatpush.bf16.msra.mxu0 0
      %2132 = vmatpush.bf16.msra.mxu0 0
      %2133 = vmatpush.bf16.msra.mxu0 %v2121
      %2134 = vmatmul.bf16.gmra.mxu0 %v2124
      %v2135 = vpop.f32.mrf.mxu0
      %v2136 = vadd.f32 0.0, %v2135
      %v2137 = vpop.f32.mrf.mxu0
      %v2138 = vadd.f32 0.0, %v2137
      %2139 = vdwg.mxu0
      %v2142 = vunpack.c.l.b16 %v2088
      %v2143 = vunpack.c.l.b16 %v2089
      %v2144 = vpack.c.b16 %v2143, %v2142
      %2145 = vrot.lane.b32.xlu0 %v1237, 32
      %v2146 = vpop.permute.xlu0 %2145
      %v2149 = vsel %vm1021, %v2144, 0
      %2151 = vmatpush.bf16.msra.mxu0 0
      %2152 = vmatpush.bf16.msra.mxu0 0
      %2153 = vmatpush.bf16.msra.mxu0 0
      %2154 = vmatpush.bf16.msra.mxu0 0
      %2155 = vmatpush.bf16.msra.mxu0 0
      %2156 = vmatpush.bf16.msra.mxu0 0
      %2157 = vmatpush.bf16.msra.mxu0 0
      %2158 = vmatpush.bf16.msra.mxu0 %v2146
      %2159 = vmatmul.bf16.gmra.mxu0 %v2149
      %v2160 = vpop.f32.mrf.mxu0
      %v2161 = vadd.f32 0.0, %v2160
      %v2162 = vpop.f32.mrf.mxu0
      %v2163 = vadd.f32 0.0, %v2162
      %2164 = vdwg.mxu0
      %2171 = vrot.lane.b32.xlu0 %v1505, 32
      %v2172 = vpop.permute.xlu0 %2171
      %2173 = vrot.lane.b32.xlu0 %v1507, 32
      %v2174 = vpop.permute.xlu0 %2173
      %2175 = vrot.lane.b32.xlu0 %v1530, 32
      %v2176 = vpop.permute.xlu0 %2175
      %2177 = vrot.lane.b32.xlu0 %v1532, 32
      %v2178 = vpop.permute.xlu0 %2177
      %2179 = vrot.lane.b32.xlu0 %v1555, 32
      %v2180 = vpop.permute.xlu0 %2179
      %2181 = vrot.lane.b32.xlu0 %v1557, 32
      %v2182 = vpop.permute.xlu0 %2181
      %2195 = vrot.lane.b32.xlu0 %v1808, 64
      %v2196 = vpop.permute.xlu0 %2195
      %2197 = vrot.lane.b32.xlu0 %v1810, 64
      %v2198 = vpop.permute.xlu0 %2197
      %2199 = vrot.lane.b32.xlu0 %v1833, 64
      %v2200 = vpop.permute.xlu0 %2199
      %2201 = vrot.lane.b32.xlu0 %v1835, 64
      %v2202 = vpop.permute.xlu0 %2201
      %2203 = vrot.lane.b32.xlu0 %v1858, 64
      %v2204 = vpop.permute.xlu0 %2203
      %2205 = vrot.lane.b32.xlu0 %v1860, 64
      %v2206 = vpop.permute.xlu0 %2205
      %2219 = vrot.lane.b32.xlu0 %v2111, 96
      %v2220 = vpop.permute.xlu0 %2219
      %2221 = vrot.lane.b32.xlu0 %v2113, 96
      %v2222 = vpop.permute.xlu0 %2221
      %2223 = vrot.lane.b32.xlu0 %v2136, 96
      %v2224 = vpop.permute.xlu0 %2223
      %2225 = vrot.lane.b32.xlu0 %v2138, 96
      %v2226 = vpop.permute.xlu0 %2225
      %2227 = vrot.lane.b32.xlu0 %v2161, 96
      %v2228 = vpop.permute.xlu0 %2227
      %2229 = vrot.lane.b32.xlu0 %v2163, 96
      %v2230 = vpop.permute.xlu0 %2229
      %v2237 = vsel %vm934, %v1196, %v2172
      %v2238 = vsel %vm934, %v1198, %v2174
      %v2239 = vsel %vm934, %v1224, %v2176
      %v2240 = vsel %vm934, %v1226, %v2178
      %v2241 = vsel %vm934, %v1252, %v2180
      %v2242 = vsel %vm934, %v1254, %v2182
      %vm2243 = vcmask 523264
      %v2244 = vsel %vm2243, %v2237, %v2196
      %v2245 = vsel %vm2243, %v2238, %v2198
      %v2246 = vsel %vm2243, %v2239, %v2200
      %v2247 = vsel %vm2243, %v2240, %v2202
      %v2248 = vsel %vm2243, %v2241, %v2204
      %v2249 = vsel %vm2243, %v2242, %v2206
      %vm2250 = vcmask 785408
      %v2251 = vsel %vm2250, %v2244, %v2220
      %v2252 = vsel %vm2250, %v2245, %v2222
      %v2253 = vsel %vm2250, %v2246, %v2224
      %v2254 = vsel %vm2250, %v2247, %v2226
      %v2255 = vsel %vm2250, %v2248, %v2228
      %v2256 = vsel %vm2250, %v2249, %v2230
      %v2257 = vld [vmem:[%s1 + $0xc] sm:$0xf]
      %v2258 = vld [vmem:[%s1 + $0x24] sm:$0xf]
      %v2259 = vld [vmem:[%s1 + $0x3c] sm:$0xf]
      %v2260 = vld [vmem:[%s1 + $0x54] sm:$0xf]
      %v2261 = vld [vmem:[%s1 + $0x6c] sm:$0xf]
      %v2262 = vld [vmem:[%s1 + $0x84] sm:$0xf]
      %v2263 = vld [vmem:[%s1 + $0x9c] sm:$0xf]
      %v2264 = vld [vmem:[%s1 + $0xb4] sm:$0xf]
      %v2265 = vld [vmem:[%s1 + $0xcc] sm:$0xf]
      %v2266 = vld [vmem:[%s1 + $0xe4] sm:$0xf]
      %v2267 = vld [vmem:[%s1 + $0xfc] sm:$0xf]
      %v2268 = vld [vmem:[%s1 + $0x114] sm:$0xf]
      %v2269 = vld [vmem:[%s1 + $0x12c] sm:$0xf]
      %v2270 = vld [vmem:[%s1 + $0x144] sm:$0xf]
      %v2271 = vld [vmem:[%s1 + $0x15c] sm:$0xf]
      %v2272 = vld [vmem:[%s1 + $0x174] sm:$0xf]
      %v2273 = vld [vmem:[%s3 + $0x5] sm:$0x1]
      %v2274 = vpack.c.bf16 %v2252, %v2251
      %v2275 = vpack.c.bf16 %v2254, %v2253
      %v2276 = vpack.c.bf16 %v2256, %v2255
      %v2278 = vperm.slane %v2273, 0
      %v2296 = vunpack.c.l.b16 %v2257
      %v2297 = vunpack.c.l.b16 %v2258
      %v2298 = vunpack.c.l.b16 %v2259
      %v2299 = vunpack.c.l.b16 %v2260
      %v2300 = vunpack.c.l.b16 %v2261
      %v2301 = vunpack.c.l.b16 %v2262
      %v2302 = vunpack.c.l.b16 %v2263
      %v2303 = vunpack.c.l.b16 %v2264
      %v2304 = vunpack.c.l.b16 %v2265
      %v2305 = vunpack.c.l.b16 %v2266
      %v2306 = vunpack.c.l.b16 %v2267
      %v2307 = vunpack.c.l.b16 %v2268
      %v2308 = vunpack.c.l.b16 %v2269
      %v2309 = vunpack.c.l.b16 %v2270
      %v2310 = vunpack.c.l.b16 %v2271
      %v2311 = vunpack.c.l.b16 %v2272
      %v2312 = vpack.c.b16 %v2297, %v2296
      %v2313 = vpack.c.b16 %v2299, %v2298
      %v2314 = vpack.c.b16 %v2301, %v2300
      %v2315 = vpack.c.b16 %v2303, %v2302
      %v2316 = vpack.c.b16 %v2305, %v2304
      %v2317 = vpack.c.b16 %v2307, %v2306
      %v2318 = vpack.c.b16 %v2309, %v2308
      %v2319 = vpack.c.b16 %v2311, %v2310
      %2328 = vmatpush.bf16.msra.mxu0 %v2319
      %2329 = vmatpush.bf16.msra.mxu0 %v2318
      %2330 = vmatpush.bf16.msra.mxu0 %v2317
      %2331 = vmatpush.bf16.msra.mxu0 %v2316
      %2332 = vmatpush.bf16.msra.mxu0 %v2315
      %2333 = vmatpush.bf16.msra.mxu0 %v2314
      %2334 = vmatpush.bf16.msra.mxu0 %v2313
      %2335 = vmatpush.bf16.msra.mxu0 %v2312
      %2336 = vmatmul.bf16.gmra.mxu0 %v2274
      %v2337 = vpop.f32.mrf.mxu0
      %v2338 = vadd.f32 %v2278, %v2337
      %v2339 = vpop.f32.mrf.mxu0
      %v2340 = vadd.f32 %v2278, %v2339
      %2341 = vmatmul.bf16.gmra.mxu0 %v2275
      %v2342 = vpop.f32.mrf.mxu0
      %v2343 = vadd.f32 %v2278, %v2342
      %v2344 = vpop.f32.mrf.mxu0
      %v2345 = vadd.f32 %v2278, %v2344
      %2346 = vmatmul.bf16.gmra.mxu0 %v2276
      %v2347 = vpop.f32.mrf.mxu0
      %v2348 = vadd.f32 %v2278, %v2347
      %v2349 = vpop.f32.mrf.mxu0
      %v2350 = vadd.f32 %v2278, %v2349
      %2351 = vdwg.mxu0
      %v2352 = vadd.f32 %v510, %v2338
      %v2353 = vadd.f32 %v511, %v2340
      %v2354 = vadd.f32 %v512, %v2343
      %v2355 = vadd.f32 %v513, %v2345
      %v2356 = vadd.f32 %v514, %v2348
      %v2357 = vadd.f32 %v515, %v2350
      %v2358 = vld [vmem:[%s3 + $0x6] sm:$0x1]
      %v2359 = vld [vmem:[%s3 + $0x7] sm:$0x1]
      %2360 = vadd.xlane.f32.xlu0 %v2352
      %v2361 = vpop.xlane.xlu0 %2360
      %2362 = vadd.xlane.f32.xlu0 %v2353
      %v2363 = vpop.xlane.xlu0 %2362
      %2364 = vadd.xlane.f32.xlu0 %v2354
      %v2365 = vpop.xlane.xlu0 %2364
      %2366 = vadd.xlane.f32.xlu0 %v2355
      %v2367 = vpop.xlane.xlu0 %2366
      %2368 = vadd.xlane.f32.xlu0 %v2356
      %v2369 = vpop.xlane.xlu0 %2368
      %2370 = vadd.xlane.f32.xlu0 %v2357
      %v2371 = vpop.xlane.xlu0 %2370
      %v2372 = vmul.f32 %v2361, %v536
      %v2373 = vmul.f32 %v2363, %v536
      %v2374 = vmul.f32 %v2365, %v536
      %v2375 = vmul.f32 %v2367, %v536
      %v2376 = vmul.f32 %v2369, %v536
      %v2377 = vmul.f32 %v2371, %v536
      %v2378 = vsub.f32 %v2352, %v2372
      %v2379 = vsub.f32 %v2353, %v2373
      %v2380 = vsub.f32 %v2354, %v2374
      %v2381 = vsub.f32 %v2355, %v2375
      %v2382 = vsub.f32 %v2356, %v2376
      %v2383 = vsub.f32 %v2357, %v2377
      %v2384 = vmul.f32 %v2378, %v2378
      %v2385 = vmul.f32 %v2379, %v2379
      %v2386 = vmul.f32 %v2380, %v2380
      %v2387 = vmul.f32 %v2381, %v2381
      %v2388 = vmul.f32 %v2382, %v2382
      %v2389 = vmul.f32 %v2383, %v2383
      %2390 = vadd.xlane.f32.xlu0 %v2384
      %v2391 = vpop.xlane.xlu0 %2390
      %2392 = vadd.xlane.f32.xlu0 %v2385
      %v2393 = vpop.xlane.xlu0 %2392
      %2394 = vadd.xlane.f32.xlu0 %v2386
      %v2395 = vpop.xlane.xlu0 %2394
      %2396 = vadd.xlane.f32.xlu0 %v2387
      %v2397 = vpop.xlane.xlu0 %2396
      %2398 = vadd.xlane.f32.xlu0 %v2388
      %v2399 = vpop.xlane.xlu0 %2398
      %2400 = vadd.xlane.f32.xlu0 %v2389
      %v2401 = vpop.xlane.xlu0 %2400
      %v2402 = vmul.f32 %v2391, %v536
      %v2403 = vmul.f32 %v2393, %v536
      %v2404 = vmul.f32 %v2395, %v536
      %v2405 = vmul.f32 %v2397, %v536
      %v2406 = vmul.f32 %v2399, %v536
      %v2407 = vmul.f32 %v2401, %v536
      %v2408 = vadd.f32 %v2402, 1e-06
      %v2409 = vadd.f32 %v2403, 1e-06
      %v2410 = vadd.f32 %v2404, 1e-06
      %v2411 = vadd.f32 %v2405, 1e-06
      %v2412 = vadd.f32 %v2406, 1e-06
      %v2413 = vadd.f32 %v2407, 1e-06
      %v2414 = vrsqrt.pop %v2408
      %v2415 = vmul.f32 %v2414, %v2408
      %v2416 = vmul.f32 %v2415, %v2414
      %v2417 = vmul.f32 0.5, %v2416
      %v2418 = vsub.f32 1.5, %v2417
      %v2419 = vmul.f32 %v2414, %v2418
      %vm2420 = vweird.f32 %v2408
      %vm2421 = vweird.f32 %v2414
      %vm2422 = vmor %vm2420, %vm2421
      %v2423 = vsel %vm2422, %v2414, %v2419
      %v2424 = vrsqrt.pop %v2409
      %v2425 = vmul.f32 %v2424, %v2409
      %v2426 = vmul.f32 %v2425, %v2424
      %v2427 = vmul.f32 0.5, %v2426
      %v2428 = vsub.f32 1.5, %v2427
      %v2429 = vmul.f32 %v2424, %v2428
      %vm2430 = vweird.f32 %v2409
      %vm2431 = vweird.f32 %v2424
      %vm2432 = vmor %vm2430, %vm2431
      %v2433 = vsel %vm2432, %v2424, %v2429
      %v2434 = vrsqrt.pop %v2410
      %v2435 = vmul.f32 %v2434, %v2410
      %v2436 = vmul.f32 %v2435, %v2434
      %v2437 = vmul.f32 0.5, %v2436
      %v2438 = vsub.f32 1.5, %v2437
      %v2439 = vmul.f32 %v2434, %v2438
      %vm2440 = vweird.f32 %v2410
      %vm2441 = vweird.f32 %v2434
      %vm2442 = vmor %vm2440, %vm2441
      %v2443 = vsel %vm2442, %v2434, %v2439
      %v2444 = vrsqrt.pop %v2411
      %v2445 = vmul.f32 %v2444, %v2411
      %v2446 = vmul.f32 %v2445, %v2444
      %v2447 = vmul.f32 0.5, %v2446
      %v2448 = vsub.f32 1.5, %v2447
      %v2449 = vmul.f32 %v2444, %v2448
      %vm2450 = vweird.f32 %v2411
      %vm2451 = vweird.f32 %v2444
      %vm2452 = vmor %vm2450, %vm2451
      %v2453 = vsel %vm2452, %v2444, %v2449
      %v2454 = vrsqrt.pop %v2412
      %v2455 = vmul.f32 %v2454, %v2412
      %v2456 = vmul.f32 %v2455, %v2454
      %v2457 = vmul.f32 0.5, %v2456
      %v2458 = vsub.f32 1.5, %v2457
      %v2459 = vmul.f32 %v2454, %v2458
      %vm2460 = vweird.f32 %v2412
      %vm2461 = vweird.f32 %v2454
      %vm2462 = vmor %vm2460, %vm2461
      %v2463 = vsel %vm2462, %v2454, %v2459
      %v2464 = vrsqrt.pop %v2413
      %v2465 = vmul.f32 %v2464, %v2413
      %v2466 = vmul.f32 %v2465, %v2464
      %v2467 = vmul.f32 0.5, %v2466
      %v2468 = vsub.f32 1.5, %v2467
      %v2469 = vmul.f32 %v2464, %v2468
      %vm2470 = vweird.f32 %v2413
      %vm2471 = vweird.f32 %v2464
      %vm2472 = vmor %vm2470, %vm2471
      %v2473 = vsel %vm2472, %v2464, %v2469
      %v2474 = vmul.f32 %v2378, %v2423
      %v2475 = vmul.f32 %v2379, %v2433
      %v2476 = vmul.f32 %v2380, %v2443
      %v2477 = vmul.f32 %v2381, %v2453
      %v2478 = vmul.f32 %v2382, %v2463
      %v2479 = vmul.f32 %v2383, %v2473
      %v2481 = vperm.slane %v2358, 0
      %v2483 = vmul.f32 %v2474, %v2481
      %v2484 = vmul.f32 %v2475, %v2481
      %v2485 = vmul.f32 %v2476, %v2481
      %v2486 = vmul.f32 %v2477, %v2481
      %v2487 = vmul.f32 %v2478, %v2481
      %v2488 = vmul.f32 %v2479, %v2481
      %v2490 = vperm.slane %v2359, 0
      %v2492 = vadd.f32 %v2483, %v2490
      %v2493 = vadd.f32 %v2484, %v2490
      %v2494 = vadd.f32 %v2485, %v2490
      %v2495 = vadd.f32 %v2486, %v2490
      %v2496 = vadd.f32 %v2487, %v2490
      %v2497 = vadd.f32 %v2488, %v2490
      %v2498 = vld [vmem:[%s1 + $0x10] sm:$0xff]
      %v2499 = vld [vmem:[%s1 + $0x28] sm:$0xff]
      %v2500 = vld [vmem:[%s1 + $0x40] sm:$0xff]
      %v2501 = vld [vmem:[%s1 + $0x58] sm:$0xff]
      %v2502 = vld [vmem:[%s1 + $0x70] sm:$0xff]
      %v2503 = vld [vmem:[%s1 + $0x88] sm:$0xff]
      %v2504 = vld [vmem:[%s1 + $0xa0] sm:$0xff]
      %v2505 = vld [vmem:[%s1 + $0xb8] sm:$0xff]
      %v2506 = vld [vmem:[%s1 + $0xd0] sm:$0xff]
      %v2507 = vld [vmem:[%s1 + $0xe8] sm:$0xff]
      %v2508 = vld [vmem:[%s1 + $0x100] sm:$0xff]
      %v2509 = vld [vmem:[%s1 + $0x118] sm:$0xff]
      %v2510 = vld [vmem:[%s1 + $0x130] sm:$0xff]
      %v2511 = vld [vmem:[%s1 + $0x148] sm:$0xff]
      %v2512 = vld [vmem:[%s1 + $0x160] sm:$0xff]
      %v2513 = vld [vmem:[%s1 + $0x178] sm:$0xff]
      %v2514 = vld [vmem:[%s3 + $0x8] sm:$0x3]
      %v2515 = vpack.c.bf16 %v2493, %v2492
      %v2516 = vpack.c.bf16 %v2495, %v2494
      %v2517 = vpack.c.bf16 %v2497, %v2496
      %v2519 = vperm.slane %v2514, 0
      %v2520 = vperm.slane %v2514, 1
      %v2539 = vunpack.c.l.b16 %v2498
      %v2540 = vunpack.c.h.b16 %v2498
      %v2541 = vunpack.c.l.b16 %v2499
      %v2542 = vunpack.c.h.b16 %v2499
      %v2543 = vunpack.c.l.b16 %v2500
      %v2544 = vunpack.c.h.b16 %v2500
      %v2545 = vunpack.c.l.b16 %v2501
      %v2546 = vunpack.c.h.b16 %v2501
      %v2547 = vunpack.c.l.b16 %v2502
      %v2548 = vunpack.c.h.b16 %v2502
      %v2549 = vunpack.c.l.b16 %v2503
      %v2550 = vunpack.c.h.b16 %v2503
      %v2551 = vunpack.c.l.b16 %v2504
      %v2552 = vunpack.c.h.b16 %v2504
      %v2553 = vunpack.c.l.b16 %v2505
      %v2554 = vunpack.c.h.b16 %v2505
      %v2555 = vunpack.c.l.b16 %v2506
      %v2556 = vunpack.c.h.b16 %v2506
      %v2557 = vunpack.c.l.b16 %v2507
      %v2558 = vunpack.c.h.b16 %v2507
      %v2559 = vunpack.c.l.b16 %v2508
      %v2560 = vunpack.c.h.b16 %v2508
      %v2561 = vunpack.c.l.b16 %v2509
      %v2562 = vunpack.c.h.b16 %v2509
      %v2563 = vunpack.c.l.b16 %v2510
      %v2564 = vunpack.c.h.b16 %v2510
      %v2565 = vunpack.c.l.b16 %v2511
      %v2566 = vunpack.c.h.b16 %v2511
      %v2567 = vunpack.c.l.b16 %v2512
      %v2568 = vunpack.c.h.b16 %v2512
      %v2569 = vunpack.c.l.b16 %v2513
      %v2570 = vunpack.c.h.b16 %v2513
      %v2571 = vpack.c.b16 %v2541, %v2539
      %v2572 = vpack.c.b16 %v2542, %v2540
      %v2573 = vpack.c.b16 %v2545, %v2543
      %v2574 = vpack.c.b16 %v2546, %v2544
      %v2575 = vpack.c.b16 %v2549, %v2547
      %v2576 = vpack.c.b16 %v2550, %v2548
      %v2577 = vpack.c.b16 %v2553, %v2551
      %v2578 = vpack.c.b16 %v2554, %v2552
      %v2579 = vpack.c.b16 %v2557, %v2555
      %v2580 = vpack.c.b16 %v2558, %v2556
      %v2581 = vpack.c.b16 %v2561, %v2559
      %v2582 = vpack.c.b16 %v2562, %v2560
      %v2583 = vpack.c.b16 %v2565, %v2563
      %v2584 = vpack.c.b16 %v2566, %v2564
      %v2585 = vpack.c.b16 %v2569, %v2567
      %v2586 = vpack.c.b16 %v2570, %v2568
      %2603 = vmatpush.bf16.msra.mxu0 %v2585
      %2604 = vmatpush.bf16.msra.mxu0 %v2583
      %2605 = vmatpush.bf16.msra.mxu0 %v2581
      %2606 = vmatpush.bf16.msra.mxu0 %v2579
      %2607 = vmatpush.bf16.msra.mxu0 %v2577
      %2608 = vmatpush.bf16.msra.mxu0 %v2575
      %2609 = vmatpush.bf16.msra.mxu0 %v2573
      %2610 = vmatpush.bf16.msra.mxu0 %v2571
      %2611 = vmatmul.bf16.gmra.mxu0 %v2515
      %v2612 = vpop.f32.mrf.mxu0
      %v2613 = vadd.f32 %v2519, %v2612
      %v2614 = vpop.f32.mrf.mxu0
      %v2615 = vadd.f32 %v2519, %v2614
      %2616 = vmatmul.bf16.gmra.mxu0 %v2516
      %v2617 = vpop.f32.mrf.mxu0
      %v2618 = vadd.f32 %v2519, %v2617
      %v2619 = vpop.f32.mrf.mxu0
      %v2620 = vadd.f32 %v2519, %v2619
      %2621 = vmatmul.bf16.gmra.mxu0 %v2517
      %v2622 = vpop.f32.mrf.mxu0
      %v2623 = vadd.f32 %v2519, %v2622
      %v2624 = vpop.f32.mrf.mxu0
      %v2625 = vadd.f32 %v2519, %v2624
      %2626 = vdwg.mxu0
      %2627 = vmatpush.bf16.msra.mxu0 %v2586
      %2628 = vmatpush.bf16.msra.mxu0 %v2584
      %2629 = vmatpush.bf16.msra.mxu0 %v2582
      %2630 = vmatpush.bf16.msra.mxu0 %v2580
      %2631 = vmatpush.bf16.msra.mxu0 %v2578
      %2632 = vmatpush.bf16.msra.mxu0 %v2576
      %2633 = vmatpush.bf16.msra.mxu0 %v2574
      %2634 = vmatpush.bf16.msra.mxu0 %v2572
      %2635 = vmatmul.bf16.gmra.mxu0 %v2515
      %v2636 = vpop.f32.mrf.mxu0
      %v2637 = vadd.f32 %v2520, %v2636
      %v2638 = vpop.f32.mrf.mxu0
      %v2639 = vadd.f32 %v2520, %v2638
      %2640 = vmatmul.bf16.gmra.mxu0 %v2516
      %v2641 = vpop.f32.mrf.mxu0
      %v2642 = vadd.f32 %v2520, %v2641
      %v2643 = vpop.f32.mrf.mxu0
      %v2644 = vadd.f32 %v2520, %v2643
      %2645 = vmatmul.bf16.gmra.mxu0 %v2517
      %v2646 = vpop.f32.mrf.mxu0
      %v2647 = vadd.f32 %v2520, %v2646
      %v2648 = vpop.f32.mrf.mxu0
      %v2649 = vadd.f32 %v2520, %v2648
      %2650 = vdwg.mxu0
      %v2651 = vmul.f32 %v2613, 0.5
      %v2652 = vmul.f32 %v2637, 0.5
      %v2653 = vmul.f32 %v2615, 0.5
      %v2654 = vmul.f32 %v2639, 0.5
      %v2655 = vmul.f32 %v2618, 0.5
      %v2656 = vmul.f32 %v2642, 0.5
      %v2657 = vmul.f32 %v2620, 0.5
      %v2658 = vmul.f32 %v2644, 0.5
      %v2659 = vmul.f32 %v2623, 0.5
      %v2660 = vmul.f32 %v2647, 0.5
      %v2661 = vmul.f32 %v2625, 0.5
      %v2662 = vmul.f32 %v2649, 0.5
      %v2663 = vmul.f32 %v2613, 0.70710677
      %v2664 = vmul.f32 %v2637, 0.70710677
      %v2665 = vmul.f32 %v2615, 0.70710677
      %v2666 = vmul.f32 %v2639, 0.70710677
      %v2667 = vmul.f32 %v2618, 0.70710677
      %v2668 = vmul.f32 %v2642, 0.70710677
      %v2669 = vmul.f32 %v2620, 0.70710677
      %v2670 = vmul.f32 %v2644, 0.70710677
      %v2671 = vmul.f32 %v2623, 0.70710677
      %v2672 = vmul.f32 %v2647, 0.70710677
      %v2673 = vmul.f32 %v2625, 0.70710677
      %v2674 = vmul.f32 %v2649, 0.70710677
      %v2675 = vmul.f32 %v2663, %v2663
      %v2676 = vmin.f32 16.0, %v2675
      %v2677 = vmul.f32 %v2676, 2.1237322e-06
      %v2678 = vadd.f32 %v2677, 0.00028619796
      %v2679 = vmul.f32 %v2676, %v2678
      %v2680 = vadd.f32 %v2679, 0.0036580483
      %v2681 = vmul.f32 %v2676, %v2680
      %v2682 = vadd.f32 %v2681, 0.05243302
      %v2683 = vmul.f32 %v2676, %v2682
      %v2684 = vadd.f32 %v2683, 0.18741608
      %v2685 = vmul.f32 %v2676, %v2684
      %v2686 = vadd.f32 %v2685, 1.1283791
      %v2687 = vmul.f32 %v2663, %v2686
      %v2688 = vmul.f32 %v2676, 3.8918573e-05
      %v2689 = vadd.f32 %v2688, 0.001143296
      %v2690 = vmul.f32 %v2676, %v2689
      %v2691 = vadd.f32 %v2690, 0.014752088
      %v2692 = vmul.f32 %v2676, %v2691
      %v2693 = vadd.f32 %v2692, 0.112945676
      %v2694 = vmul.f32 %v2676, %v2693
      %v2695 = vadd.f32 %v2694, 0.4994258
      %v2696 = vmul.f32 %v2676, %v2695
      %v2697 = vadd.f32 %v2696, 1.0
      %v2698 = vrcp.pop %v2697
      %v2699 = vmul.f32 %v2697, %v2698
      %v2700 = vsub.f32 1.0, %v2699
      %v2701 = vmul.f32 %v2698, %v2700
      %v2702 = vadd.f32 %v2698, %v2701
      %vm2703 = vweird.f32 %v2697
      %vm2704 = vweird.f32 %v2698
      %vm2705 = vmor %vm2703, %vm2704
      %v2706 = vsel %vm2705, %v2698, %v2702
      %v2707 = vand.u32 2147483647, %v2697
      %vm2708 = vcmp.eq.f32.partialorder %v2707, 8.507059e+37
      %v2709 = vand.u32 %v2697, 2147483648
      %v2710 = vor.u32 1.1754944e-38, %v2709
      %v2711 = vsel %vm2708, %v2710, %v2706
      %v2712 = vmul.f32 %v2687, %v2711
      %v2713 = vmin.f32 %v2712, 1.0
      %v2714 = vmax.f32 %v2713, -1.0
      %v2715 = vmul.f32 %v2664, %v2664
      %v2716 = vmin.f32 16.0, %v2715
      %v2717 = vmul.f32 %v2716, 2.1237322e-06
      %v2718 = vadd.f32 %v2717, 0.00028619796
      %v2719 = vmul.f32 %v2716, %v2718
      %v2720 = vadd.f32 %v2719, 0.0036580483
      %v2721 = vmul.f32 %v2716, %v2720
      %v2722 = vadd.f32 %v2721, 0.05243302
      %v2723 = vmul.f32 %v2716, %v2722
      %v2724 = vadd.f32 %v2723, 0.18741608
      %v2725 = vmul.f32 %v2716, %v2724
      %v2726 = vadd.f32 %v2725, 1.1283791
      %v2727 = vmul.f32 %v2664, %v2726
      %v2728 = vmul.f32 %v2716, 3.8918573e-05
      %v2729 = vadd.f32 %v2728, 0.001143296
      %v2730 = vmul.f32 %v2716, %v2729
      %v2731 = vadd.f32 %v2730, 0.014752088
      %v2732 = vmul.f32 %v2716, %v2731
      %v2733 = vadd.f32 %v2732, 0.112945676
      %v2734 = vmul.f32 %v2716, %v2733
      %v2735 = vadd.f32 %v2734, 0.4994258
      %v2736 = vmul.f32 %v2716, %v2735
      %v2737 = vadd.f32 %v2736, 1.0
      %v2738 = vrcp.pop %v2737
      %v2739 = vmul.f32 %v2737, %v2738
      %v2740 = vsub.f32 1.0, %v2739
      %v2741 = vmul.f32 %v2738, %v2740
      %v2742 = vadd.f32 %v2738, %v2741
      %vm2743 = vweird.f32 %v2737
      %vm2744 = vweird.f32 %v2738
      %vm2745 = vmor %vm2743, %vm2744
      %v2746 = vsel %vm2745, %v2738, %v2742
      %v2747 = vand.u32 2147483647, %v2737
      %vm2748 = vcmp.eq.f32.partialorder %v2747, 8.507059e+37
      %v2749 = vand.u32 %v2737, 2147483648
      %v2750 = vor.u32 1.1754944e-38, %v2749
      %v2751 = vsel %vm2748, %v2750, %v2746
      %v2752 = vmul.f32 %v2727, %v2751
      %v2753 = vmin.f32 %v2752, 1.0
      %v2754 = vmax.f32 %v2753, -1.0
      %v2755 = vmul.f32 %v2665, %v2665
      %v2756 = vmin.f32 16.0, %v2755
      %v2757 = vmul.f32 %v2756, 2.1237322e-06
      %v2758 = vadd.f32 %v2757, 0.00028619796
      %v2759 = vmul.f32 %v2756, %v2758
      %v2760 = vadd.f32 %v2759, 0.0036580483
      %v2761 = vmul.f32 %v2756, %v2760
      %v2762 = vadd.f32 %v2761, 0.05243302
      %v2763 = vmul.f32 %v2756, %v2762
      %v2764 = vadd.f32 %v2763, 0.18741608
      %v2765 = vmul.f32 %v2756, %v2764
      %v2766 = vadd.f32 %v2765, 1.1283791
      %v2767 = vmul.f32 %v2665, %v2766
      %v2768 = vmul.f32 %v2756, 3.8918573e-05
      %v2769 = vadd.f32 %v2768, 0.001143296
      %v2770 = vmul.f32 %v2756, %v2769
      %v2771 = vadd.f32 %v2770, 0.014752088
      %v2772 = vmul.f32 %v2756, %v2771
      %v2773 = vadd.f32 %v2772, 0.112945676
      %v2774 = vmul.f32 %v2756, %v2773
      %v2775 = vadd.f32 %v2774, 0.4994258
      %v2776 = vmul.f32 %v2756, %v2775
      %v2777 = vadd.f32 %v2776, 1.0
      %v2778 = vrcp.pop %v2777
      %v2779 = vmul.f32 %v2777, %v2778
      %v2780 = vsub.f32 1.0, %v2779
      %v2781 = vmul.f32 %v2778, %v2780
      %v2782 = vadd.f32 %v2778, %v2781
      %vm2783 = vweird.f32 %v2777
      %vm2784 = vweird.f32 %v2778
      %vm2785 = vmor %vm2783, %vm2784
      %v2786 = vsel %vm2785, %v2778, %v2782
      %v2787 = vand.u32 2147483647, %v2777
      %vm2788 = vcmp.eq.f32.partialorder %v2787, 8.507059e+37
      %v2789 = vand.u32 %v2777, 2147483648
      %v2790 = vor.u32 1.1754944e-38, %v2789
      %v2791 = vsel %vm2788, %v2790, %v2786
      %v2792 = vmul.f32 %v2767, %v2791
      %v2793 = vmin.f32 %v2792, 1.0
      %v2794 = vmax.f32 %v2793, -1.0
      %v2795 = vmul.f32 %v2666, %v2666
      %v2796 = vmin.f32 16.0, %v2795
      %v2797 = vmul.f32 %v2796, 2.1237322e-06
      %v2798 = vadd.f32 %v2797, 0.00028619796
      %v2799 = vmul.f32 %v2796, %v2798
      %v2800 = vadd.f32 %v2799, 0.0036580483
      %v2801 = vmul.f32 %v2796, %v2800
      %v2802 = vadd.f32 %v2801, 0.05243302
      %v2803 = vmul.f32 %v2796, %v2802
      %v2804 = vadd.f32 %v2803, 0.18741608
      %v2805 = vmul.f32 %v2796, %v2804
      %v2806 = vadd.f32 %v2805, 1.1283791
      %v2807 = vmul.f32 %v2666, %v2806
      %v2808 = vmul.f32 %v2796, 3.8918573e-05
      %v2809 = vadd.f32 %v2808, 0.001143296
      %v2810 = vmul.f32 %v2796, %v2809
      %v2811 = vadd.f32 %v2810, 0.014752088
      %v2812 = vmul.f32 %v2796, %v2811
      %v2813 = vadd.f32 %v2812, 0.112945676
      %v2814 = vmul.f32 %v2796, %v2813
      %v2815 = vadd.f32 %v2814, 0.4994258
      %v2816 = vmul.f32 %v2796, %v2815
      %v2817 = vadd.f32 %v2816, 1.0
      %v2818 = vrcp.pop %v2817
      %v2819 = vmul.f32 %v2817, %v2818
      %v2820 = vsub.f32 1.0, %v2819
      %v2821 = vmul.f32 %v2818, %v2820
      %v2822 = vadd.f32 %v2818, %v2821
      %vm2823 = vweird.f32 %v2817
      %vm2824 = vweird.f32 %v2818
      %vm2825 = vmor %vm2823, %vm2824
      %v2826 = vsel %vm2825, %v2818, %v2822
      %v2827 = vand.u32 2147483647, %v2817
      %vm2828 = vcmp.eq.f32.partialorder %v2827, 8.507059e+37
      %v2829 = vand.u32 %v2817, 2147483648
      %v2830 = vor.u32 1.1754944e-38, %v2829
      %v2831 = vsel %vm2828, %v2830, %v2826
      %v2832 = vmul.f32 %v2807, %v2831
      %v2833 = vmin.f32 %v2832, 1.0
      %v2834 = vmax.f32 %v2833, -1.0
      %v2835 = vmul.f32 %v2667, %v2667
      %v2836 = vmin.f32 16.0, %v2835
      %v2837 = vmul.f32 %v2836, 2.1237322e-06
      %v2838 = vadd.f32 %v2837, 0.00028619796
      %v2839 = vmul.f32 %v2836, %v2838
      %v2840 = vadd.f32 %v2839, 0.0036580483
      %v2841 = vmul.f32 %v2836, %v2840
      %v2842 = vadd.f32 %v2841, 0.05243302
      %v2843 = vmul.f32 %v2836, %v2842
      %v2844 = vadd.f32 %v2843, 0.18741608
      %v2845 = vmul.f32 %v2836, %v2844
      %v2846 = vadd.f32 %v2845, 1.1283791
      %v2847 = vmul.f32 %v2667, %v2846
      %v2848 = vmul.f32 %v2836, 3.8918573e-05
      %v2849 = vadd.f32 %v2848, 0.001143296
      %v2850 = vmul.f32 %v2836, %v2849
      %v2851 = vadd.f32 %v2850, 0.014752088
      %v2852 = vmul.f32 %v2836, %v2851
      %v2853 = vadd.f32 %v2852, 0.112945676
      %v2854 = vmul.f32 %v2836, %v2853
      %v2855 = vadd.f32 %v2854, 0.4994258
      %v2856 = vmul.f32 %v2836, %v2855
      %v2857 = vadd.f32 %v2856, 1.0
      %v2858 = vrcp.pop %v2857
      %v2859 = vmul.f32 %v2857, %v2858
      %v2860 = vsub.f32 1.0, %v2859
      %v2861 = vmul.f32 %v2858, %v2860
      %v2862 = vadd.f32 %v2858, %v2861
      %vm2863 = vweird.f32 %v2857
      %vm2864 = vweird.f32 %v2858
      %vm2865 = vmor %vm2863, %vm2864
      %v2866 = vsel %vm2865, %v2858, %v2862
      %v2867 = vand.u32 2147483647, %v2857
      %vm2868 = vcmp.eq.f32.partialorder %v2867, 8.507059e+37
      %v2869 = vand.u32 %v2857, 2147483648
      %v2870 = vor.u32 1.1754944e-38, %v2869
      %v2871 = vsel %vm2868, %v2870, %v2866
      %v2872 = vmul.f32 %v2847, %v2871
      %v2873 = vmin.f32 %v2872, 1.0
      %v2874 = vmax.f32 %v2873, -1.0
      %v2875 = vmul.f32 %v2668, %v2668
      %v2876 = vmin.f32 16.0, %v2875
      %v2877 = vmul.f32 %v2876, 2.1237322e-06
      %v2878 = vadd.f32 %v2877, 0.00028619796
      %v2879 = vmul.f32 %v2876, %v2878
      %v2880 = vadd.f32 %v2879, 0.0036580483
      %v2881 = vmul.f32 %v2876, %v2880
      %v2882 = vadd.f32 %v2881, 0.05243302
      %v2883 = vmul.f32 %v2876, %v2882
      %v2884 = vadd.f32 %v2883, 0.18741608
      %v2885 = vmul.f32 %v2876, %v2884
      %v2886 = vadd.f32 %v2885, 1.1283791
      %v2887 = vmul.f32 %v2668, %v2886
      %v2888 = vmul.f32 %v2876, 3.8918573e-05
      %v2889 = vadd.f32 %v2888, 0.001143296
      %v2890 = vmul.f32 %v2876, %v2889
      %v2891 = vadd.f32 %v2890, 0.014752088
      %v2892 = vmul.f32 %v2876, %v2891
      %v2893 = vadd.f32 %v2892, 0.112945676
      %v2894 = vmul.f32 %v2876, %v2893
      %v2895 = vadd.f32 %v2894, 0.4994258
      %v2896 = vmul.f32 %v2876, %v2895
      %v2897 = vadd.f32 %v2896, 1.0
      %v2898 = vrcp.pop %v2897
      %v2899 = vmul.f32 %v2897, %v2898
      %v2900 = vsub.f32 1.0, %v2899
      %v2901 = vmul.f32 %v2898, %v2900
      %v2902 = vadd.f32 %v2898, %v2901
      %vm2903 = vweird.f32 %v2897
      %vm2904 = vweird.f32 %v2898
      %vm2905 = vmor %vm2903, %vm2904
      %v2906 = vsel %vm2905, %v2898, %v2902
      %v2907 = vand.u32 2147483647, %v2897
      %vm2908 = vcmp.eq.f32.partialorder %v2907, 8.507059e+37
      %v2909 = vand.u32 %v2897, 2147483648
      %v2910 = vor.u32 1.1754944e-38, %v2909
      %v2911 = vsel %vm2908, %v2910, %v2906
      %v2912 = vmul.f32 %v2887, %v2911
      %v2913 = vmin.f32 %v2912, 1.0
      %v2914 = vmax.f32 %v2913, -1.0
      %v2915 = vmul.f32 %v2669, %v2669
      %v2916 = vmin.f32 16.0, %v2915
      %v2917 = vmul.f32 %v2916, 2.1237322e-06
      %v2918 = vadd.f32 %v2917, 0.00028619796
      %v2919 = vmul.f32 %v2916, %v2918
      %v2920 = vadd.f32 %v2919, 0.0036580483
      %v2921 = vmul.f32 %v2916, %v2920
      %v2922 = vadd.f32 %v2921, 0.05243302
      %v2923 = vmul.f32 %v2916, %v2922
      %v2924 = vadd.f32 %v2923, 0.18741608
      %v2925 = vmul.f32 %v2916, %v2924
      %v2926 = vadd.f32 %v2925, 1.1283791
      %v2927 = vmul.f32 %v2669, %v2926
      %v2928 = vmul.f32 %v2916, 3.8918573e-05
      %v2929 = vadd.f32 %v2928, 0.001143296
      %v2930 = vmul.f32 %v2916, %v2929
      %v2931 = vadd.f32 %v2930, 0.014752088
      %v2932 = vmul.f32 %v2916, %v2931
      %v2933 = vadd.f32 %v2932, 0.112945676
      %v2934 = vmul.f32 %v2916, %v2933
      %v2935 = vadd.f32 %v2934, 0.4994258
      %v2936 = vmul.f32 %v2916, %v2935
      %v2937 = vadd.f32 %v2936, 1.0
      %v2938 = vrcp.pop %v2937
      %v2939 = vmul.f32 %v2937, %v2938
      %v2940 = vsub.f32 1.0, %v2939
      %v2941 = vmul.f32 %v2938, %v2940
      %v2942 = vadd.f32 %v2938, %v2941
      %vm2943 = vweird.f32 %v2937
      %vm2944 = vweird.f32 %v2938
      %vm2945 = vmor %vm2943, %vm2944
      %v2946 = vsel %vm2945, %v2938, %v2942
      %v2947 = vand.u32 2147483647, %v2937
      %vm2948 = vcmp.eq.f32.partialorder %v2947, 8.507059e+37
      %v2949 = vand.u32 %v2937, 2147483648
      %v2950 = vor.u32 1.1754944e-38, %v2949
      %v2951 = vsel %vm2948, %v2950, %v2946
      %v2952 = vmul.f32 %v2927, %v2951
      %v2953 = vmin.f32 %v2952, 1.0
      %v2954 = vmax.f32 %v2953, -1.0
      %v2955 = vmul.f32 %v2670, %v2670
      %v2956 = vmin.f32 16.0, %v2955
      %v2957 = vmul.f32 %v2956, 2.1237322e-06
      %v2958 = vadd.f32 %v2957, 0.00028619796
      %v2959 = vmul.f32 %v2956, %v2958
      %v2960 = vadd.f32 %v2959, 0.0036580483
      %v2961 = vmul.f32 %v2956, %v2960
      %v2962 = vadd.f32 %v2961, 0.05243302
      %v2963 = vmul.f32 %v2956, %v2962
      %v2964 = vadd.f32 %v2963, 0.18741608
      %v2965 = vmul.f32 %v2956, %v2964
      %v2966 = vadd.f32 %v2965, 1.1283791
      %v2967 = vmul.f32 %v2670, %v2966
      %v2968 = vmul.f32 %v2956, 3.8918573e-05
      %v2969 = vadd.f32 %v2968, 0.001143296
      %v2970 = vmul.f32 %v2956, %v2969
      %v2971 = vadd.f32 %v2970, 0.014752088
      %v2972 = vmul.f32 %v2956, %v2971
      %v2973 = vadd.f32 %v2972, 0.112945676
      %v2974 = vmul.f32 %v2956, %v2973
      %v2975 = vadd.f32 %v2974, 0.4994258
      %v2976 = vmul.f32 %v2956, %v2975
      %v2977 = vadd.f32 %v2976, 1.0
      %v2978 = vrcp.pop %v2977
      %v2979 = vmul.f32 %v2977, %v2978
      %v2980 = vsub.f32 1.0, %v2979
      %v2981 = vmul.f32 %v2978, %v2980
      %v2982 = vadd.f32 %v2978, %v2981
      %vm2983 = vweird.f32 %v2977
      %vm2984 = vweird.f32 %v2978
      %vm2985 = vmor %vm2983, %vm2984
      %v2986 = vsel %vm2985, %v2978, %v2982
      %v2987 = vand.u32 2147483647, %v2977
      %vm2988 = vcmp.eq.f32.partialorder %v2987, 8.507059e+37
      %v2989 = vand.u32 %v2977, 2147483648
      %v2990 = vor.u32 1.1754944e-38, %v2989
      %v2991 = vsel %vm2988, %v2990, %v2986
      %v2992 = vmul.f32 %v2967, %v2991
      %v2993 = vmin.f32 %v2992, 1.0
      %v2994 = vmax.f32 %v2993, -1.0
      %v2995 = vmul.f32 %v2671, %v2671
      %v2996 = vmin.f32 16.0, %v2995
      %v2997 = vmul.f32 %v2996, 2.1237322e-06
      %v2998 = vadd.f32 %v2997, 0.00028619796
      %v2999 = vmul.f32 %v2996, %v2998
      %v3000 = vadd.f32 %v2999, 0.0036580483
      %v3001 = vmul.f32 %v2996, %v3000
      %v3002 = vadd.f32 %v3001, 0.05243302
      %v3003 = vmul.f32 %v2996, %v3002
      %v3004 = vadd.f32 %v3003, 0.18741608
      %v3005 = vmul.f32 %v2996, %v3004
      %v3006 = vadd.f32 %v3005, 1.1283791
      %v3007 = vmul.f32 %v2671, %v3006
      %v3008 = vmul.f32 %v2996, 3.8918573e-05
      %v3009 = vadd.f32 %v3008, 0.001143296
      %v3010 = vmul.f32 %v2996, %v3009
      %v3011 = vadd.f32 %v3010, 0.014752088
      %v3012 = vmul.f32 %v2996, %v3011
      %v3013 = vadd.f32 %v3012, 0.112945676
      %v3014 = vmul.f32 %v2996, %v3013
      %v3015 = vadd.f32 %v3014, 0.4994258
      %v3016 = vmul.f32 %v2996, %v3015
      %v3017 = vadd.f32 %v3016, 1.0
      %v3018 = vrcp.pop %v3017
      %v3019 = vmul.f32 %v3017, %v3018
      %v3020 = vsub.f32 1.0, %v3019
      %v3021 = vmul.f32 %v3018, %v3020
      %v3022 = vadd.f32 %v3018, %v3021
      %vm3023 = vweird.f32 %v3017
      %vm3024 = vweird.f32 %v3018
      %vm3025 = vmor %vm3023, %vm3024
      %v3026 = vsel %vm3025, %v3018, %v3022
      %v3027 = vand.u32 2147483647, %v3017
      %vm3028 = vcmp.eq.f32.partialorder %v3027, 8.507059e+37
      %v3029 = vand.u32 %v3017, 2147483648
      %v3030 = vor.u32 1.1754944e-38, %v3029
      %v3031 = vsel %vm3028, %v3030, %v3026
      %v3032 = vmul.f32 %v3007, %v3031
      %v3033 = vmin.f32 %v3032, 1.0
      %v3034 = vmax.f32 %v3033, -1.0
      %v3035 = vmul.f32 %v2672, %v2672
      %v3036 = vmin.f32 16.0, %v3035
      %v3037 = vmul.f32 %v3036, 2.1237322e-06
      %v3038 = vadd.f32 %v3037, 0.00028619796
      %v3039 = vmul.f32 %v3036, %v3038
      %v3040 = vadd.f32 %v3039, 0.0036580483
      %v3041 = vmul.f32 %v3036, %v3040
      %v3042 = vadd.f32 %v3041, 0.05243302
      %v3043 = vmul.f32 %v3036, %v3042
      %v3044 = vadd.f32 %v3043, 0.18741608
      %v3045 = vmul.f32 %v3036, %v3044
      %v3046 = vadd.f32 %v3045, 1.1283791
      %v3047 = vmul.f32 %v2672, %v3046
      %v3048 = vmul.f32 %v3036, 3.8918573e-05
      %v3049 = vadd.f32 %v3048, 0.001143296
      %v3050 = vmul.f32 %v3036, %v3049
      %v3051 = vadd.f32 %v3050, 0.014752088
      %v3052 = vmul.f32 %v3036, %v3051
      %v3053 = vadd.f32 %v3052, 0.112945676
      %v3054 = vmul.f32 %v3036, %v3053
      %v3055 = vadd.f32 %v3054, 0.4994258
      %v3056 = vmul.f32 %v3036, %v3055
      %v3057 = vadd.f32 %v3056, 1.0
      %v3058 = vrcp.pop %v3057
      %v3059 = vmul.f32 %v3057, %v3058
      %v3060 = vsub.f32 1.0, %v3059
      %v3061 = vmul.f32 %v3058, %v3060
      %v3062 = vadd.f32 %v3058, %v3061
      %vm3063 = vweird.f32 %v3057
      %vm3064 = vweird.f32 %v3058
      %vm3065 = vmor %vm3063, %vm3064
      %v3066 = vsel %vm3065, %v3058, %v3062
      %v3067 = vand.u32 2147483647, %v3057
      %vm3068 = vcmp.eq.f32.partialorder %v3067, 8.507059e+37
      %v3069 = vand.u32 %v3057, 2147483648
      %v3070 = vor.u32 1.1754944e-38, %v3069
      %v3071 = vsel %vm3068, %v3070, %v3066
      %v3072 = vmul.f32 %v3047, %v3071
      %v3073 = vmin.f32 %v3072, 1.0
      %v3074 = vmax.f32 %v3073, -1.0
      %v3075 = vmul.f32 %v2673, %v2673
      %v3076 = vmin.f32 16.0, %v3075
      %v3077 = vmul.f32 %v3076, 2.1237322e-06
      %v3078 = vadd.f32 %v3077, 0.00028619796
      %v3079 = vmul.f32 %v3076, %v3078
      %v3080 = vadd.f32 %v3079, 0.0036580483
      %v3081 = vmul.f32 %v3076, %v3080
      %v3082 = vadd.f32 %v3081, 0.05243302
      %v3083 = vmul.f32 %v3076, %v3082
      %v3084 = vadd.f32 %v3083, 0.18741608
      %v3085 = vmul.f32 %v3076, %v3084
      %v3086 = vadd.f32 %v3085, 1.1283791
      %v3087 = vmul.f32 %v2673, %v3086
      %v3088 = vmul.f32 %v3076, 3.8918573e-05
      %v3089 = vadd.f32 %v3088, 0.001143296
      %v3090 = vmul.f32 %v3076, %v3089
      %v3091 = vadd.f32 %v3090, 0.014752088
      %v3092 = vmul.f32 %v3076, %v3091
      %v3093 = vadd.f32 %v3092, 0.112945676
      %v3094 = vmul.f32 %v3076, %v3093
      %v3095 = vadd.f32 %v3094, 0.4994258
      %v3096 = vmul.f32 %v3076, %v3095
      %v3097 = vadd.f32 %v3096, 1.0
      %v3098 = vrcp.pop %v3097
      %v3099 = vmul.f32 %v3097, %v3098
      %v3100 = vsub.f32 1.0, %v3099
      %v3101 = vmul.f32 %v3098, %v3100
      %v3102 = vadd.f32 %v3098, %v3101
      %vm3103 = vweird.f32 %v3097
      %vm3104 = vweird.f32 %v3098
      %vm3105 = vmor %vm3103, %vm3104
      %v3106 = vsel %vm3105, %v3098, %v3102
      %v3107 = vand.u32 2147483647, %v3097
      %vm3108 = vcmp.eq.f32.partialorder %v3107, 8.507059e+37
      %v3109 = vand.u32 %v3097, 2147483648
      %v3110 = vor.u32 1.1754944e-38, %v3109
      %v3111 = vsel %vm3108, %v3110, %v3106
      %v3112 = vmul.f32 %v3087, %v3111
      %v3113 = vmin.f32 %v3112, 1.0
      %v3114 = vmax.f32 %v3113, -1.0
      %v3115 = vmul.f32 %v2674, %v2674
      %v3116 = vmin.f32 16.0, %v3115
      %v3117 = vmul.f32 %v3116, 2.1237322e-06
      %v3118 = vadd.f32 %v3117, 0.00028619796
      %v3119 = vmul.f32 %v3116, %v3118
      %v3120 = vadd.f32 %v3119, 0.0036580483
      %v3121 = vmul.f32 %v3116, %v3120
      %v3122 = vadd.f32 %v3121, 0.05243302
      %v3123 = vmul.f32 %v3116, %v3122
      %v3124 = vadd.f32 %v3123, 0.18741608
      %v3125 = vmul.f32 %v3116, %v3124
      %v3126 = vadd.f32 %v3125, 1.1283791
      %v3127 = vmul.f32 %v2674, %v3126
      %v3128 = vmul.f32 %v3116, 3.8918573e-05
      %v3129 = vadd.f32 %v3128, 0.001143296
      %v3130 = vmul.f32 %v3116, %v3129
      %v3131 = vadd.f32 %v3130, 0.014752088
      %v3132 = vmul.f32 %v3116, %v3131
      %v3133 = vadd.f32 %v3132, 0.112945676
      %v3134 = vmul.f32 %v3116, %v3133
      %v3135 = vadd.f32 %v3134, 0.4994258
      %v3136 = vmul.f32 %v3116, %v3135
      %v3137 = vadd.f32 %v3136, 1.0
      %v3138 = vrcp.pop %v3137
      %v3139 = vmul.f32 %v3137, %v3138
      %v3140 = vsub.f32 1.0, %v3139
      %v3141 = vmul.f32 %v3138, %v3140
      %v3142 = vadd.f32 %v3138, %v3141
      %vm3143 = vweird.f32 %v3137
      %vm3144 = vweird.f32 %v3138
      %vm3145 = vmor %vm3143, %vm3144
      %v3146 = vsel %vm3145, %v3138, %v3142
      %v3147 = vand.u32 2147483647, %v3137
      %vm3148 = vcmp.eq.f32.partialorder %v3147, 8.507059e+37
      %v3149 = vand.u32 %v3137, 2147483648
      %v3150 = vor.u32 1.1754944e-38, %v3149
      %v3151 = vsel %vm3148, %v3150, %v3146
      %v3152 = vmul.f32 %v3127, %v3151
      %v3153 = vmin.f32 %v3152, 1.0
      %v3154 = vmax.f32 %v3153, -1.0
      %v3155 = vadd.f32 %v2714, 1.0
      %v3156 = vadd.f32 %v2754, 1.0
      %v3157 = vadd.f32 %v2794, 1.0
      %v3158 = vadd.f32 %v2834, 1.0
      %v3159 = vadd.f32 %v2874, 1.0
      %v3160 = vadd.f32 %v2914, 1.0
      %v3161 = vadd.f32 %v2954, 1.0
      %v3162 = vadd.f32 %v2994, 1.0
      %v3163 = vadd.f32 %v3034, 1.0
      %v3164 = vadd.f32 %v3074, 1.0
      %v3165 = vadd.f32 %v3114, 1.0
      %v3166 = vadd.f32 %v3154, 1.0
      %v3167 = vmul.f32 %v2651, %v3155
      %v3168 = vmul.f32 %v2652, %v3156
      %v3169 = vmul.f32 %v2653, %v3157
      %v3170 = vmul.f32 %v2654, %v3158
      %v3171 = vmul.f32 %v2655, %v3159
      %v3172 = vmul.f32 %v2656, %v3160
      %v3173 = vmul.f32 %v2657, %v3161
      %v3174 = vmul.f32 %v2658, %v3162
      %v3175 = vmul.f32 %v2659, %v3163
      %v3176 = vmul.f32 %v2660, %v3164
      %v3177 = vmul.f32 %v2661, %v3165
      %v3178 = vmul.f32 %v2662, %v3166
      %v3179 = vld [vmem:[%s2] sm:$0xf]
      %v3180 = vld [vmem:[%s2 + $0x4] sm:$0xf]
      %v3181 = vld [vmem:[%s2 + $0x8] sm:$0xf]
      %v3182 = vld [vmem:[%s2 + $0xc] sm:$0xf]
      %v3183 = vld [vmem:[%s2 + $0x10] sm:$0xf]
      %v3184 = vld [vmem:[%s2 + $0x14] sm:$0xf]
      %v3185 = vld [vmem:[%s2 + $0x18] sm:$0xf]
      %v3186 = vld [vmem:[%s2 + $0x1c] sm:$0xf]
      %v3187 = vld [vmem:[%s2 + $0x20] sm:$0xf]
      %v3188 = vld [vmem:[%s2 + $0x24] sm:$0xf]
      %v3189 = vld [vmem:[%s2 + $0x28] sm:$0xf]
      %v3190 = vld [vmem:[%s2 + $0x2c] sm:$0xf]
      %v3191 = vld [vmem:[%s2 + $0x30] sm:$0xf]
      %v3192 = vld [vmem:[%s2 + $0x34] sm:$0xf]
      %v3193 = vld [vmem:[%s2 + $0x38] sm:$0xf]
      %v3194 = vld [vmem:[%s2 + $0x3c] sm:$0xf]
      %v3195 = vld [vmem:[%s2 + $0x40] sm:$0xf]
      %v3196 = vld [vmem:[%s2 + $0x44] sm:$0xf]
      %v3197 = vld [vmem:[%s2 + $0x48] sm:$0xf]
      %v3198 = vld [vmem:[%s2 + $0x4c] sm:$0xf]
      %v3199 = vld [vmem:[%s2 + $0x50] sm:$0xf]
      %v3200 = vld [vmem:[%s2 + $0x54] sm:$0xf]
      %v3201 = vld [vmem:[%s2 + $0x58] sm:$0xf]
      %v3202 = vld [vmem:[%s2 + $0x5c] sm:$0xf]
      %v3203 = vld [vmem:[%s2 + $0x60] sm:$0xf]
      %v3204 = vld [vmem:[%s2 + $0x64] sm:$0xf]
      %v3205 = vld [vmem:[%s2 + $0x68] sm:$0xf]
      %v3206 = vld [vmem:[%s2 + $0x6c] sm:$0xf]
      %v3207 = vld [vmem:[%s2 + $0x70] sm:$0xf]
      %v3208 = vld [vmem:[%s2 + $0x74] sm:$0xf]
      %v3209 = vld [vmem:[%s2 + $0x78] sm:$0xf]
      %v3210 = vld [vmem:[%s2 + $0x7c] sm:$0xf]
      %v3211 = vld [vmem:[%s3 + $0xa] sm:$0x1]
      %v3212 = vpack.c.bf16 %v3169, %v3167
      %v3213 = vpack.c.bf16 %v3170, %v3168
      %v3214 = vpack.c.bf16 %v3173, %v3171
      %v3215 = vpack.c.bf16 %v3174, %v3172
      %v3216 = vpack.c.bf16 %v3177, %v3175
      %v3217 = vpack.c.bf16 %v3178, %v3176
      %v3219 = vperm.slane %v3211, 0
      %v3253 = vunpack.c.l.b16 %v3179
      %v3254 = vunpack.c.l.b16 %v3180
      %v3255 = vunpack.c.l.b16 %v3181
      %v3256 = vunpack.c.l.b16 %v3182
      %v3257 = vunpack.c.l.b16 %v3183
      %v3258 = vunpack.c.l.b16 %v3184
      %v3259 = vunpack.c.l.b16 %v3185
      %v3260 = vunpack.c.l.b16 %v3186
      %v3261 = vunpack.c.l.b16 %v3187
      %v3262 = vunpack.c.l.b16 %v3188
      %v3263 = vunpack.c.l.b16 %v3189
      %v3264 = vunpack.c.l.b16 %v3190
      %v3265 = vunpack.c.l.b16 %v3191
      %v3266 = vunpack.c.l.b16 %v3192
      %v3267 = vunpack.c.l.b16 %v3193
      %v3268 = vunpack.c.l.b16 %v3194
      %v3269 = vunpack.c.l.b16 %v3195
      %v3270 = vunpack.c.l.b16 %v3196
      %v3271 = vunpack.c.l.b16 %v3197
      %v3272 = vunpack.c.l.b16 %v3198
      %v3273 = vunpack.c.l.b16 %v3199
      %v3274 = vunpack.c.l.b16 %v3200
      %v3275 = vunpack.c.l.b16 %v3201
      %v3276 = vunpack.c.l.b16 %v3202
      %v3277 = vunpack.c.l.b16 %v3203
      %v3278 = vunpack.c.l.b16 %v3204
      %v3279 = vunpack.c.l.b16 %v3205
      %v3280 = vunpack.c.l.b16 %v3206
      %v3281 = vunpack.c.l.b16 %v3207
      %v3282 = vunpack.c.l.b16 %v3208
      %v3283 = vunpack.c.l.b16 %v3209
      %v3284 = vunpack.c.l.b16 %v3210
      %v3285 = vpack.c.b16 %v3254, %v3253
      %v3286 = vpack.c.b16 %v3256, %v3255
      %v3287 = vpack.c.b16 %v3258, %v3257
      %v3288 = vpack.c.b16 %v3260, %v3259
      %v3289 = vpack.c.b16 %v3262, %v3261
      %v3290 = vpack.c.b16 %v3264, %v3263
      %v3291 = vpack.c.b16 %v3266, %v3265
      %v3292 = vpack.c.b16 %v3268, %v3267
      %v3293 = vpack.c.b16 %v3270, %v3269
      %v3294 = vpack.c.b16 %v3272, %v3271
      %v3295 = vpack.c.b16 %v3274, %v3273
      %v3296 = vpack.c.b16 %v3276, %v3275
      %v3297 = vpack.c.b16 %v3278, %v3277
      %v3298 = vpack.c.b16 %v3280, %v3279
      %v3299 = vpack.c.b16 %v3282, %v3281
      %v3300 = vpack.c.b16 %v3284, %v3283
      %3317 = vmatpush.bf16.msra.mxu0 %v3292
      %3318 = vmatpush.bf16.msra.mxu0 %v3291
      %3319 = vmatpush.bf16.msra.mxu0 %v3290
      %3320 = vmatpush.bf16.msra.mxu0 %v3289
      %3321 = vmatpush.bf16.msra.mxu0 %v3288
      %3322 = vmatpush.bf16.msra.mxu0 %v3287
      %3323 = vmatpush.bf16.msra.mxu0 %v3286
      %3324 = vmatpush.bf16.msra.mxu0 %v3285
      %3325 = vmatmul.bf16.gmra.mxu0 %v3212
      %v3326 = vpop.f32.mrf.mxu0
      %v3327 = vadd.f32 %v3219, %v3326
      %v3328 = vpop.f32.mrf.mxu0
      %v3329 = vadd.f32 %v3219, %v3328
      %3330 = vmatmul.bf16.gmra.mxu0 %v3214
      %v3331 = vpop.f32.mrf.mxu0
      %v3332 = vadd.f32 %v3219, %v3331
      %v3333 = vpop.f32.mrf.mxu0
      %v3334 = vadd.f32 %v3219, %v3333
      %3335 = vmatmul.bf16.gmra.mxu0 %v3216
      %v3336 = vpop.f32.mrf.mxu0
      %v3337 = vadd.f32 %v3219, %v3336
      %v3338 = vpop.f32.mrf.mxu0
      %v3339 = vadd.f32 %v3219, %v3338
      %3340 = vdwg.mxu0
      %3341 = vmatpush.bf16.msra.mxu0 %v3300
      %3342 = vmatpush.bf16.msra.mxu0 %v3299
      %3343 = vmatpush.bf16.msra.mxu0 %v3298
      %3344 = vmatpush.bf16.msra.mxu0 %v3297
      %3345 = vmatpush.bf16.msra.mxu0 %v3296
      %3346 = vmatpush.bf16.msra.mxu0 %v3295
      %3347 = vmatpush.bf16.msra.mxu0 %v3294
      %3348 = vmatpush.bf16.msra.mxu0 %v3293
      %3349 = vmatmul.bf16.gmra.mxu0 %v3213
      %v3350 = vpop.f32.mrf.mxu0
      %v3351 = vadd.f32 %v3327, %v3350
      %v3352 = vpop.f32.mrf.mxu0
      %v3353 = vadd.f32 %v3329, %v3352
      %3354 = vmatmul.bf16.gmra.mxu0 %v3215
      %v3355 = vpop.f32.mrf.mxu0
      %v3356 = vadd.f32 %v3332, %v3355
      %v3357 = vpop.f32.mrf.mxu0
      %v3358 = vadd.f32 %v3334, %v3357
      %3359 = vmatmul.bf16.gmra.mxu0 %v3217
      %v3360 = vpop.f32.mrf.mxu0
      %v3361 = vadd.f32 %v3337, %v3360
      %v3362 = vpop.f32.mrf.mxu0
      %v3363 = vadd.f32 %v3339, %v3362
      %3364 = vdwg.mxu0
      %v3365 = vadd.f32 %v2352, %v3351
      %v3366 = vadd.f32 %v2353, %v3353
      %v3367 = vadd.f32 %v2354, %v3356
      %v3368 = vadd.f32 %v2355, %v3358
      %v3369 = vadd.f32 %v2356, %v3361
      %v3370 = vadd.f32 %v2357, %v3363
      %s3371 = scalar_lea.vmem %s3, 11
      %v3372 = vld [vmem:[%s3371] sm:$0x1]
      %v3373 = vld [vmem:[%s3371 + $0x1] sm:$0x1]
      %3374 = vadd.xlane.f32.xlu0 %v3365
      %v3375 = vpop.xlane.xlu0 %3374
      %3376 = vadd.xlane.f32.xlu0 %v3366
      %v3377 = vpop.xlane.xlu0 %3376
      %3378 = vadd.xlane.f32.xlu0 %v3367
      %v3379 = vpop.xlane.xlu0 %3378
      %3380 = vadd.xlane.f32.xlu0 %v3368
      %v3381 = vpop.xlane.xlu0 %3380
      %3382 = vadd.xlane.f32.xlu0 %v3369
      %v3383 = vpop.xlane.xlu0 %3382
      %3384 = vadd.xlane.f32.xlu0 %v3370
      %v3385 = vpop.xlane.xlu0 %3384
      %v3386 = vmul.f32 %v3375, %v536
      %v3387 = vmul.f32 %v3377, %v536
      %v3388 = vmul.f32 %v3379, %v536
      %v3389 = vmul.f32 %v3381, %v536
      %v3390 = vmul.f32 %v3383, %v536
      %v3391 = vmul.f32 %v3385, %v536
      %v3392 = vsub.f32 %v3365, %v3386
      %v3393 = vsub.f32 %v3366, %v3387
      %v3394 = vsub.f32 %v3367, %v3388
      %v3395 = vsub.f32 %v3368, %v3389
      %v3396 = vsub.f32 %v3369, %v3390
      %v3397 = vsub.f32 %v3370, %v3391
      %v3398 = vmul.f32 %v3392, %v3392
      %v3399 = vmul.f32 %v3393, %v3393
      %v3400 = vmul.f32 %v3394, %v3394
      %v3401 = vmul.f32 %v3395, %v3395
      %v3402 = vmul.f32 %v3396, %v3396
      %v3403 = vmul.f32 %v3397, %v3397
      %3404 = vadd.xlane.f32.xlu0 %v3398
      %v3405 = vpop.xlane.xlu0 %3404
      %3406 = vadd.xlane.f32.xlu0 %v3399
      %v3407 = vpop.xlane.xlu0 %3406
      %3408 = vadd.xlane.f32.xlu0 %v3400
      %v3409 = vpop.xlane.xlu0 %3408
      %3410 = vadd.xlane.f32.xlu0 %v3401
      %v3411 = vpop.xlane.xlu0 %3410
      %3412 = vadd.xlane.f32.xlu0 %v3402
      %v3413 = vpop.xlane.xlu0 %3412
      %3414 = vadd.xlane.f32.xlu0 %v3403
      %v3415 = vpop.xlane.xlu0 %3414
      %v3416 = vmul.f32 %v3405, %v536
      %v3417 = vmul.f32 %v3407, %v536
      %v3418 = vmul.f32 %v3409, %v536
      %v3419 = vmul.f32 %v3411, %v536
      %v3420 = vmul.f32 %v3413, %v536
      %v3421 = vmul.f32 %v3415, %v536
      %v3422 = vadd.f32 %v3416, 1e-06
      %v3423 = vadd.f32 %v3417, 1e-06
      %v3424 = vadd.f32 %v3418, 1e-06
      %v3425 = vadd.f32 %v3419, 1e-06
      %v3426 = vadd.f32 %v3420, 1e-06
      %v3427 = vadd.f32 %v3421, 1e-06
      %v3428 = vrsqrt.pop %v3422
      %v3429 = vmul.f32 %v3428, %v3422
      %v3430 = vmul.f32 %v3429, %v3428
      %v3431 = vmul.f32 0.5, %v3430
      %v3432 = vsub.f32 1.5, %v3431
      %v3433 = vmul.f32 %v3428, %v3432
      %vm3434 = vweird.f32 %v3422
      %vm3435 = vweird.f32 %v3428
      %vm3436 = vmor %vm3434, %vm3435
      %v3437 = vsel %vm3436, %v3428, %v3433
      %v3438 = vrsqrt.pop %v3423
      %v3439 = vmul.f32 %v3438, %v3423
      %v3440 = vmul.f32 %v3439, %v3438
      %v3441 = vmul.f32 0.5, %v3440
      %v3442 = vsub.f32 1.5, %v3441
      %v3443 = vmul.f32 %v3438, %v3442
      %vm3444 = vweird.f32 %v3423
      %vm3445 = vweird.f32 %v3438
      %vm3446 = vmor %vm3444, %vm3445
      %v3447 = vsel %vm3446, %v3438, %v3443
      %v3448 = vrsqrt.pop %v3424
      %v3449 = vmul.f32 %v3448, %v3424
      %v3450 = vmul.f32 %v3449, %v3448
      %v3451 = vmul.f32 0.5, %v3450
      %v3452 = vsub.f32 1.5, %v3451
      %v3453 = vmul.f32 %v3448, %v3452
      %vm3454 = vweird.f32 %v3424
      %vm3455 = vweird.f32 %v3448
      %vm3456 = vmor %vm3454, %vm3455
      %v3457 = vsel %vm3456, %v3448, %v3453
      %v3458 = vrsqrt.pop %v3425
      %v3459 = vmul.f32 %v3458, %v3425
      %v3460 = vmul.f32 %v3459, %v3458
      %v3461 = vmul.f32 0.5, %v3460
      %v3462 = vsub.f32 1.5, %v3461
      %v3463 = vmul.f32 %v3458, %v3462
      %vm3464 = vweird.f32 %v3425
      %vm3465 = vweird.f32 %v3458
      %vm3466 = vmor %vm3464, %vm3465
      %v3467 = vsel %vm3466, %v3458, %v3463
      %v3468 = vrsqrt.pop %v3426
      %v3469 = vmul.f32 %v3468, %v3426
      %v3470 = vmul.f32 %v3469, %v3468
      %v3471 = vmul.f32 0.5, %v3470
      %v3472 = vsub.f32 1.5, %v3471
      %v3473 = vmul.f32 %v3468, %v3472
      %vm3474 = vweird.f32 %v3426
      %vm3475 = vweird.f32 %v3468
      %vm3476 = vmor %vm3474, %vm3475
      %v3477 = vsel %vm3476, %v3468, %v3473
      %v3478 = vrsqrt.pop %v3427
      %v3479 = vmul.f32 %v3478, %v3427
      %v3480 = vmul.f32 %v3479, %v3478
      %v3481 = vmul.f32 0.5, %v3480
      %v3482 = vsub.f32 1.5, %v3481
      %v3483 = vmul.f32 %v3478, %v3482
      %vm3484 = vweird.f32 %v3427
      %vm3485 = vweird.f32 %v3478
      %vm3486 = vmor %vm3484, %vm3485
      %v3487 = vsel %vm3486, %v3478, %v3483
      %v3488 = vmul.f32 %v3392, %v3437
      %v3489 = vmul.f32 %v3393, %v3447
      %v3490 = vmul.f32 %v3394, %v3457
      %v3491 = vmul.f32 %v3395, %v3467
      %v3492 = vmul.f32 %v3396, %v3477
      %v3493 = vmul.f32 %v3397, %v3487
      %v3495 = vperm.slane %v3372, 0
      %v3497 = vmul.f32 %v3488, %v3495
      %v3498 = vmul.f32 %v3489, %v3495
      %v3499 = vmul.f32 %v3490, %v3495
      %v3500 = vmul.f32 %v3491, %v3495
      %v3501 = vmul.f32 %v3492, %v3495
      %v3502 = vmul.f32 %v3493, %v3495
      %v3504 = vperm.slane %v3373, 0
      %v3506 = vadd.f32 %v3497, %v3504
      %v3507 = vadd.f32 %v3498, %v3504
      %v3508 = vadd.f32 %v3499, %v3504
      %v3509 = vadd.f32 %v3500, %v3504
      %v3510 = vadd.f32 %v3501, %v3504
      %v3511 = vadd.f32 %v3502, %v3504
      %s3512 = scalar_lea.vmem %s1, 384
      %v3513 = vld [vmem:[%s3512] sm:$0xff]
      %v3514 = vld [vmem:[%s3512 + $0x8] sm:$0xf]
      %v3515 = vld [vmem:[%s3512 + $0x18] sm:$0xff]
      %v3516 = vld [vmem:[%s3512 + $0x20] sm:$0xf]
      %v3517 = vld [vmem:[%s3512 + $0x30] sm:$0xff]
      %v3518 = vld [vmem:[%s3512 + $0x38] sm:$0xf]
      %v3519 = vld [vmem:[%s3512 + $0x48] sm:$0xff]
      %v3520 = vld [vmem:[%s3512 + $0x50] sm:$0xf]
      %v3521 = vld [vmem:[%s3512 + $0x60] sm:$0xff]
      %v3522 = vld [vmem:[%s3512 + $0x68] sm:$0xf]
      %v3523 = vld [vmem:[%s3512 + $0x78] sm:$0xff]
      %v3524 = vld [vmem:[%s3512 + $0x80] sm:$0xf]
      %v3525 = vld [vmem:[%s3512 + $0x90] sm:$0xff]
      %v3526 = vld [vmem:[%s3512 + $0x98] sm:$0xf]
      %v3527 = vld [vmem:[%s3512 + $0xa8] sm:$0xff]
      %v3528 = vld [vmem:[%s3512 + $0xb0] sm:$0xf]
      %v3529 = vld [vmem:[%s3512 + $0xc0] sm:$0xff]
      %v3530 = vld [vmem:[%s3512 + $0xc8] sm:$0xf]
      %v3531 = vld [vmem:[%s3512 + $0xd8] sm:$0xff]
      %v3532 = vld [vmem:[%s3512 + $0xe0] sm:$0xf]
      %v3533 = vld [vmem:[%s3512 + $0xf0] sm:$0xff]
      %v3534 = vld [vmem:[%s3512 + $0xf8] sm:$0xf]
      %v3535 = vld [vmem:[%s3512 + $0x108] sm:$0xff]
      %v3536 = vld [vmem:[%s3512 + $0x110] sm:$0xf]
      %v3537 = vld [vmem:[%s3512 + $0x120] sm:$0xff]
      %v3538 = vld [vmem:[%s3512 + $0x128] sm:$0xf]
      %v3539 = vld [vmem:[%s3512 + $0x138] sm:$0xff]
      %v3540 = vld [vmem:[%s3512 + $0x140] sm:$0xf]
      %v3541 = vld [vmem:[%s3512 + $0x150] sm:$0xff]
      %v3542 = vld [vmem:[%s3512 + $0x158] sm:$0xf]
      %v3543 = vld [vmem:[%s3512 + $0x168] sm:$0xff]
      %v3544 = vld [vmem:[%s3512 + $0x170] sm:$0xf]
      %v3545 = vld [vmem:[%s3371 + $0x2] sm:$0x7]
      %v3546 = vpack.c.bf16 %v3507, %v3506
      %v3547 = vpack.c.bf16 %v3509, %v3508
      %v3548 = vpack.c.bf16 %v3511, %v3510
      %v3550 = vperm.slane %v3545, 0
      %v3551 = vperm.slane %v3545, 1
      %v3552 = vperm.slane %v3545, 2
      %v3588 = vunpack.c.l.b16 %v3513
      %v3589 = vunpack.c.h.b16 %v3513
      %v3590 = vunpack.c.l.b16 %v3514
      %v3591 = vunpack.c.l.b16 %v3515
      %v3592 = vunpack.c.h.b16 %v3515
      %v3593 = vunpack.c.l.b16 %v3516
      %v3594 = vunpack.c.l.b16 %v3517
      %v3595 = vunpack.c.h.b16 %v3517
      %v3596 = vunpack.c.l.b16 %v3518
      %v3597 = vunpack.c.l.b16 %v3519
      %v3598 = vunpack.c.h.b16 %v3519
      %v3599 = vunpack.c.l.b16 %v3520
      %v3600 = vunpack.c.l.b16 %v3521
      %v3601 = vunpack.c.h.b16 %v3521
      %v3602 = vunpack.c.l.b16 %v3522
      %v3603 = vunpack.c.l.b16 %v3523
      %v3604 = vunpack.c.h.b16 %v3523
      %v3605 = vunpack.c.l.b16 %v3524
      %v3606 = vunpack.c.l.b16 %v3525
      %v3607 = vunpack.c.h.b16 %v3525
      %v3608 = vunpack.c.l.b16 %v3526
      %v3609 = vunpack.c.l.b16 %v3527
      %v3610 = vunpack.c.h.b16 %v3527
      %v3611 = vunpack.c.l.b16 %v3528
      %v3612 = vunpack.c.l.b16 %v3529
      %v3613 = vunpack.c.h.b16 %v3529
      %v3614 = vunpack.c.l.b16 %v3530
      %v3615 = vunpack.c.l.b16 %v3531
      %v3616 = vunpack.c.h.b16 %v3531
      %v3617 = vunpack.c.l.b16 %v3532
      %v3618 = vunpack.c.l.b16 %v3533
      %v3619 = vunpack.c.h.b16 %v3533
      %v3620 = vunpack.c.l.b16 %v3534
      %v3621 = vunpack.c.l.b16 %v3535
      %v3622 = vunpack.c.h.b16 %v3535
      %v3623 = vunpack.c.l.b16 %v3536
      %v3624 = vunpack.c.l.b16 %v3537
      %v3625 = vunpack.c.h.b16 %v3537
      %v3626 = vunpack.c.l.b16 %v3538
      %v3627 = vunpack.c.l.b16 %v3539
      %v3628 = vunpack.c.h.b16 %v3539
      %v3629 = vunpack.c.l.b16 %v3540
      %v3630 = vunpack.c.l.b16 %v3541
      %v3631 = vunpack.c.h.b16 %v3541
      %v3632 = vunpack.c.l.b16 %v3542
      %v3633 = vunpack.c.l.b16 %v3543
      %v3634 = vunpack.c.h.b16 %v3543
      %v3635 = vunpack.c.l.b16 %v3544
      %v3636 = vpack.c.b16 %v3591, %v3588
      %v3637 = vpack.c.b16 %v3592, %v3589
      %v3638 = vpack.c.b16 %v3593, %v3590
      %v3639 = vpack.c.b16 %v3597, %v3594
      %v3640 = vpack.c.b16 %v3598, %v3595
      %v3641 = vpack.c.b16 %v3599, %v3596
      %v3642 = vpack.c.b16 %v3603, %v3600
      %v3643 = vpack.c.b16 %v3604, %v3601
      %v3644 = vpack.c.b16 %v3605, %v3602
      %v3645 = vpack.c.b16 %v3609, %v3606
      %v3646 = vpack.c.b16 %v3610, %v3607
      %v3647 = vpack.c.b16 %v3611, %v3608
      %v3648 = vpack.c.b16 %v3615, %v3612
      %v3649 = vpack.c.b16 %v3616, %v3613
      %v3650 = vpack.c.b16 %v3617, %v3614
      %v3651 = vpack.c.b16 %v3621, %v3618
      %v3652 = vpack.c.b16 %v3622, %v3619
      %v3653 = vpack.c.b16 %v3623, %v3620
      %v3654 = vpack.c.b16 %v3627, %v3624
      %v3655 = vpack.c.b16 %v3628, %v3625
      %v3656 = vpack.c.b16 %v3629, %v3626
      %v3657 = vpack.c.b16 %v3633, %v3630
      %v3658 = vpack.c.b16 %v3634, %v3631
      %v3659 = vpack.c.b16 %v3635, %v3632
      %3684 = vmatpush.bf16.msra.mxu0 %v3657
      %3685 = vmatpush.bf16.msra.mxu0 %v3654
      %3686 = vmatpush.bf16.msra.mxu0 %v3651
      %3687 = vmatpush.bf16.msra.mxu0 %v3648
      %3688 = vmatpush.bf16.msra.mxu0 %v3645
      %3689 = vmatpush.bf16.msra.mxu0 %v3642
      %3690 = vmatpush.bf16.msra.mxu0 %v3639
      %3691 = vmatpush.bf16.msra.mxu0 %v3636
      %3692 = vmatmul.bf16.gmra.mxu0 %v3546
      %v3693 = vpop.f32.mrf.mxu0
      %v3694 = vadd.f32 %v3550, %v3693
      %v3695 = vpop.f32.mrf.mxu0
      %v3696 = vadd.f32 %v3550, %v3695
      %3697 = vmatmul.bf16.gmra.mxu0 %v3547
      %v3698 = vpop.f32.mrf.mxu0
      %v3699 = vadd.f32 %v3550, %v3698
      %v3700 = vpop.f32.mrf.mxu0
      %v3701 = vadd.f32 %v3550, %v3700
      %3702 = vmatmul.bf16.gmra.mxu0 %v3548
      %v3703 = vpop.f32.mrf.mxu0
      %v3704 = vadd.f32 %v3550, %v3703
      %v3705 = vpop.f32.mrf.mxu0
      %v3706 = vadd.f32 %v3550, %v3705
      %3707 = vdwg.mxu0
      %3708 = vmatpush.bf16.msra.mxu0 %v3658
      %3709 = vmatpush.bf16.msra.mxu0 %v3655
      %3710 = vmatpush.bf16.msra.mxu0 %v3652
      %3711 = vmatpush.bf16.msra.mxu0 %v3649
      %3712 = vmatpush.bf16.msra.mxu0 %v3646
      %3713 = vmatpush.bf16.msra.mxu0 %v3643
      %3714 = vmatpush.bf16.msra.mxu0 %v3640
      %3715 = vmatpush.bf16.msra.mxu0 %v3637
      %3716 = vmatmul.bf16.gmra.mxu0 %v3546
      %v3717 = vpop.f32.mrf.mxu0
      %v3718 = vadd.f32 %v3551, %v3717
      %v3719 = vpop.f32.mrf.mxu0
      %v3720 = vadd.f32 %v3551, %v3719
      %3721 = vmatmul.bf16.gmra.mxu0 %v3547
      %v3722 = vpop.f32.mrf.mxu0
      %v3723 = vadd.f32 %v3551, %v3722
      %v3724 = vpop.f32.mrf.mxu0
      %v3725 = vadd.f32 %v3551, %v3724
      %3726 = vmatmul.bf16.gmra.mxu0 %v3548
      %v3727 = vpop.f32.mrf.mxu0
      %v3728 = vadd.f32 %v3551, %v3727
      %v3729 = vpop.f32.mrf.mxu0
      %v3730 = vadd.f32 %v3551, %v3729
      %3731 = vdwg.mxu0
      %3732 = vmatpush.bf16.msra.mxu0 %v3659
      %3733 = vmatpush.bf16.msra.mxu0 %v3656
      %3734 = vmatpush.bf16.msra.mxu0 %v3653
      %3735 = vmatpush.bf16.msra.mxu0 %v3650
      %3736 = vmatpush.bf16.msra.mxu0 %v3647
      %3737 = vmatpush.bf16.msra.mxu0 %v3644
      %3738 = vmatpush.bf16.msra.mxu0 %v3641
      %3739 = vmatpush.bf16.msra.mxu0 %v3638
      %3740 = vmatmul.bf16.gmra.mxu0 %v3546
      %v3741 = vpop.f32.mrf.mxu0
      %v3742 = vadd.f32 %v3552, %v3741
      %v3743 = vpop.f32.mrf.mxu0
      %v3744 = vadd.f32 %v3552, %v3743
      %3745 = vmatmul.bf16.gmra.mxu0 %v3547
      %v3746 = vpop.f32.mrf.mxu0
      %v3747 = vadd.f32 %v3552, %v3746
      %v3748 = vpop.f32.mrf.mxu0
      %v3749 = vadd.f32 %v3552, %v3748
      %3750 = vmatmul.bf16.gmra.mxu0 %v3548
      %v3751 = vpop.f32.mrf.mxu0
      %v3752 = vadd.f32 %v3552, %v3751
      %v3753 = vpop.f32.mrf.mxu0
      %v3754 = vadd.f32 %v3552, %v3753
      %3755 = vdwg.mxu0
      %v3756 = vpack.c.bf16 %v3694, %v3694
      %v3757 = vpack.c.bf16 %v3696, %v3696
      %v3758 = vpack.c.bf16 %v3699, %v3699
      %v3759 = vpack.c.bf16 %v3701, %v3701
      %v3760 = vpack.c.bf16 %v3704, %v3704
      %v3761 = vpack.c.bf16 %v3706, %v3706
      %v3762 = vpack.c.bf16 %v3718, %v3718
      %v3763 = vpack.c.bf16 %v3720, %v3720
      %v3764 = vpack.c.bf16 %v3723, %v3723
      %v3765 = vpack.c.bf16 %v3725, %v3725
      %v3766 = vpack.c.bf16 %v3728, %v3728
      %v3767 = vpack.c.bf16 %v3730, %v3730
      %v3768 = vpack.c.bf16 %v3742, %v3742
      %v3769 = vpack.c.bf16 %v3744, %v3744
      %v3770 = vpack.c.bf16 %v3747, %v3747
      %v3771 = vpack.c.bf16 %v3749, %v3749
      %v3772 = vpack.c.bf16 %v3752, %v3752
      %v3773 = vpack.c.bf16 %v3754, %v3754
      %v3776 = vunpack.c.l.b16 %v3756
      %v3777 = vunpack.c.l.b16 %v3757
      %v3778 = vpack.c.b16 %v3777, %v3776
      %v3781 = vunpack.c.l.b16 %v3762
      %v3782 = vunpack.c.l.b16 %v3763
      %v3783 = vpack.c.b16 %v3782, %v3781
      %v3785 = vsel %vm934, %v3778, 0
      %v3788 = vsel %vm934, %v3783, 0
      %3790 = vmatpush.bf16.xpose.msra.mxu0 0
      %3791 = vmatpush.bf16.xpose.msra.mxu0 0
      %3792 = vmatpush.bf16.xpose.msra.mxu0 0
      %3793 = vmatpush.bf16.xpose.msra.mxu0 0
      %3794 = vmatpush.bf16.xpose.msra.mxu0 0
      %3795 = vmatpush.bf16.xpose.msra.mxu0 0
      %3796 = vmatpush.bf16.xpose.msra.mxu0 0
      %3797 = vmatpush.bf16.xpose.msra.mxu0 %v3788
      %3798 = vmatmul.bf16.gmra.mxu0 %v3785
      %v3799 = vpop.f32.mrf.mxu0
      %v3800 = vadd.f32 0.0, %v3799
      %v3801 = vpop.f32.mrf.mxu0
      %v3802 = vadd.f32 0.0, %v3801
      %3803 = vdwg.mxu0
      %v3806 = vunpack.c.l.b16 %v3758
      %v3807 = vunpack.c.l.b16 %v3759
      %v3808 = vpack.c.b16 %v3807, %v3806
      %v3811 = vunpack.c.l.b16 %v3764
      %v3812 = vunpack.c.l.b16 %v3765
      %v3813 = vpack.c.b16 %v3812, %v3811
      %v3815 = vsel %vm934, %v3808, 0
      %v3818 = vsel %vm934, %v3813, 0
      %3820 = vmatpush.bf16.xpose.msra.mxu0 0
      %3821 = vmatpush.bf16.xpose.msra.mxu0 0
      %3822 = vmatpush.bf16.xpose.msra.mxu0 0
      %3823 = vmatpush.bf16.xpose.msra.mxu0 0
      %3824 = vmatpush.bf16.xpose.msra.mxu0 0
      %3825 = vmatpush.bf16.xpose.msra.mxu0 0
      %3826 = vmatpush.bf16.xpose.msra.mxu0 0
      %3827 = vmatpush.bf16.xpose.msra.mxu0 %v3818
      %3828 = vmatmul.bf16.gmra.mxu0 %v3815
      %v3829 = vpop.f32.mrf.mxu0
      %v3830 = vadd.f32 0.0, %v3829
      %v3831 = vpop.f32.mrf.mxu0
      %v3832 = vadd.f32 0.0, %v3831
      %3833 = vdwg.mxu0
      %v3836 = vunpack.c.l.b16 %v3760
      %v3837 = vunpack.c.l.b16 %v3761
      %v3838 = vpack.c.b16 %v3837, %v3836
      %v3841 = vunpack.c.l.b16 %v3766
      %v3842 = vunpack.c.l.b16 %v3767
      %v3843 = vpack.c.b16 %v3842, %v3841
      %v3845 = vsel %vm934, %v3838, 0
      %v3848 = vsel %vm934, %v3843, 0
      %3850 = vmatpush.bf16.xpose.msra.mxu0 0
      %3851 = vmatpush.bf16.xpose.msra.mxu0 0
      %3852 = vmatpush.bf16.xpose.msra.mxu0 0
      %3853 = vmatpush.bf16.xpose.msra.mxu0 0
      %3854 = vmatpush.bf16.xpose.msra.mxu0 0
      %3855 = vmatpush.bf16.xpose.msra.mxu0 0
      %3856 = vmatpush.bf16.xpose.msra.mxu0 0
      %3857 = vmatpush.bf16.xpose.msra.mxu0 %v3848
      %3858 = vmatmul.bf16.gmra.mxu0 %v3845
      %v3859 = vpop.f32.mrf.mxu0
      %v3860 = vadd.f32 0.0, %v3859
      %v3861 = vpop.f32.mrf.mxu0
      %v3862 = vadd.f32 0.0, %v3861
      %3863 = vdwg.mxu0
      %v3864 = vmul.f32 %v3800, 0.17677669
      %v3865 = vmul.f32 %v3802, 0.17677669
      %v3866 = vmul.f32 %v3830, 0.17677669
      %v3867 = vmul.f32 %v3832, 0.17677669
      %v3868 = vmul.f32 %v3860, 0.17677669
      %v3869 = vmul.f32 %v3862, 0.17677669
      %v3870 = vsel %vm1021, %v3864, -inf
      %3871 = vmax.xlane.f32.xlu0 %v3870
      %v3872 = vpop.xlane.xlu0 %3871
      %v3873 = vsel %vm1021, %v3865, -inf
      %3874 = vmax.xlane.f32.xlu0 %v3873
      %v3875 = vpop.xlane.xlu0 %3874
      %v3876 = vsel %vm1021, %v3866, -inf
      %3877 = vmax.xlane.f32.xlu0 %v3876
      %v3878 = vpop.xlane.xlu0 %3877
      %v3879 = vsel %vm1021, %v3867, -inf
      %3880 = vmax.xlane.f32.xlu0 %v3879
      %v3881 = vpop.xlane.xlu0 %3880
      %v3882 = vsel %vm1021, %v3868, -inf
      %3883 = vmax.xlane.f32.xlu0 %v3882
      %v3884 = vpop.xlane.xlu0 %3883
      %v3885 = vsel %vm1021, %v3869, -inf
      %3886 = vmax.xlane.f32.xlu0 %v3885
      %v3887 = vpop.xlane.xlu0 %3886
      %v3888 = vsub.f32 %v3864, %v3872
      %v3889 = vsub.f32 %v3865, %v3875
      %v3890 = vsub.f32 %v3866, %v3878
      %v3891 = vsub.f32 %v3867, %v3881
      %v3892 = vsub.f32 %v3868, %v3884
      %v3893 = vsub.f32 %v3869, %v3887
      %v3894 = vmul.f32 %v3888, 1.442695
      %v3895 = vpow.pop %v3894
      %v3896 = vmul.f32 %v3889, 1.442695
      %v3897 = vpow.pop %v3896
      %v3898 = vmul.f32 %v3890, 1.442695
      %v3899 = vpow.pop %v3898
      %v3900 = vmul.f32 %v3891, 1.442695
      %v3901 = vpow.pop %v3900
      %v3902 = vmul.f32 %v3892, 1.442695
      %v3903 = vpow.pop %v3902
      %v3904 = vmul.f32 %v3893, 1.442695
      %v3905 = vpow.pop %v3904
      %v3906 = vsel %vm1021, %v3895, 0.0
      %3907 = vadd.xlane.f32.xlu0 %v3906
      %v3908 = vpop.xlane.xlu0 %3907
      %v3909 = vsel %vm1021, %v3897, 0.0
      %3910 = vadd.xlane.f32.xlu0 %v3909
      %v3911 = vpop.xlane.xlu0 %3910
      %v3912 = vsel %vm1021, %v3899, 0.0
      %3913 = vadd.xlane.f32.xlu0 %v3912
      %v3914 = vpop.xlane.xlu0 %3913
      %v3915 = vsel %vm1021, %v3901, 0.0
      %3916 = vadd.xlane.f32.xlu0 %v3915
      %v3917 = vpop.xlane.xlu0 %3916
      %v3918 = vsel %vm1021, %v3903, 0.0
      %3919 = vadd.xlane.f32.xlu0 %v3918
      %v3920 = vpop.xlane.xlu0 %3919
      %v3921 = vsel %vm1021, %v3905, 0.0
      %3922 = vadd.xlane.f32.xlu0 %v3921
      %v3923 = vpop.xlane.xlu0 %3922
      %v3924 = vrcp.pop %v3908
      %v3925 = vmul.f32 %v3908, %v3924
      %v3926 = vsub.f32 1.0, %v3925
      %v3927 = vmul.f32 %v3924, %v3926
      %v3928 = vadd.f32 %v3924, %v3927
      %vm3929 = vweird.f32 %v3908
      %vm3930 = vweird.f32 %v3924
      %vm3931 = vmor %vm3929, %vm3930
      %v3932 = vsel %vm3931, %v3924, %v3928
      %v3933 = vand.u32 2147483647, %v3908
      %vm3934 = vcmp.eq.f32.partialorder %v3933, 8.507059e+37
      %v3935 = vand.u32 %v3908, 2147483648
      %v3936 = vor.u32 1.1754944e-38, %v3935
      %v3937 = vsel %vm3934, %v3936, %v3932
      %v3938 = vmul.f32 %v3895, %v3937
      %v3939 = vrcp.pop %v3911
      %v3940 = vmul.f32 %v3911, %v3939
      %v3941 = vsub.f32 1.0, %v3940
      %v3942 = vmul.f32 %v3939, %v3941
      %v3943 = vadd.f32 %v3939, %v3942
      %vm3944 = vweird.f32 %v3911
      %vm3945 = vweird.f32 %v3939
      %vm3946 = vmor %vm3944, %vm3945
      %v3947 = vsel %vm3946, %v3939, %v3943
      %v3948 = vand.u32 2147483647, %v3911
      %vm3949 = vcmp.eq.f32.partialorder %v3948, 8.507059e+37
      %v3950 = vand.u32 %v3911, 2147483648
      %v3951 = vor.u32 1.1754944e-38, %v3950
      %v3952 = vsel %vm3949, %v3951, %v3947
      %v3953 = vmul.f32 %v3897, %v3952
      %v3954 = vrcp.pop %v3914
      %v3955 = vmul.f32 %v3914, %v3954
      %v3956 = vsub.f32 1.0, %v3955
      %v3957 = vmul.f32 %v3954, %v3956
      %v3958 = vadd.f32 %v3954, %v3957
      %vm3959 = vweird.f32 %v3914
      %vm3960 = vweird.f32 %v3954
      %vm3961 = vmor %vm3959, %vm3960
      %v3962 = vsel %vm3961, %v3954, %v3958
      %v3963 = vand.u32 2147483647, %v3914
      %vm3964 = vcmp.eq.f32.partialorder %v3963, 8.507059e+37
      %v3965 = vand.u32 %v3914, 2147483648
      %v3966 = vor.u32 1.1754944e-38, %v3965
      %v3967 = vsel %vm3964, %v3966, %v3962
      %v3968 = vmul.f32 %v3899, %v3967
      %v3969 = vrcp.pop %v3917
      %v3970 = vmul.f32 %v3917, %v3969
      %v3971 = vsub.f32 1.0, %v3970
      %v3972 = vmul.f32 %v3969, %v3971
      %v3973 = vadd.f32 %v3969, %v3972
      %vm3974 = vweird.f32 %v3917
      %vm3975 = vweird.f32 %v3969
      %vm3976 = vmor %vm3974, %vm3975
      %v3977 = vsel %vm3976, %v3969, %v3973
      %v3978 = vand.u32 2147483647, %v3917
      %vm3979 = vcmp.eq.f32.partialorder %v3978, 8.507059e+37
      %v3980 = vand.u32 %v3917, 2147483648
      %v3981 = vor.u32 1.1754944e-38, %v3980
      %v3982 = vsel %vm3979, %v3981, %v3977
      %v3983 = vmul.f32 %v3901, %v3982
      %v3984 = vrcp.pop %v3920
      %v3985 = vmul.f32 %v3920, %v3984
      %v3986 = vsub.f32 1.0, %v3985
      %v3987 = vmul.f32 %v3984, %v3986
      %v3988 = vadd.f32 %v3984, %v3987
      %vm3989 = vweird.f32 %v3920
      %vm3990 = vweird.f32 %v3984
      %vm3991 = vmor %vm3989, %vm3990
      %v3992 = vsel %vm3991, %v3984, %v3988
      %v3993 = vand.u32 2147483647, %v3920
      %vm3994 = vcmp.eq.f32.partialorder %v3993, 8.507059e+37
      %v3995 = vand.u32 %v3920, 2147483648
      %v3996 = vor.u32 1.1754944e-38, %v3995
      %v3997 = vsel %vm3994, %v3996, %v3992
      %v3998 = vmul.f32 %v3903, %v3997
      %v3999 = vrcp.pop %v3923
      %v4000 = vmul.f32 %v3923, %v3999
      %v4001 = vsub.f32 1.0, %v4000
      %v4002 = vmul.f32 %v3999, %v4001
      %v4003 = vadd.f32 %v3999, %v4002
      %vm4004 = vweird.f32 %v3923
      %vm4005 = vweird.f32 %v3999
      %vm4006 = vmor %vm4004, %vm4005
      %v4007 = vsel %vm4006, %v3999, %v4003
      %v4008 = vand.u32 2147483647, %v3923
      %vm4009 = vcmp.eq.f32.partialorder %v4008, 8.507059e+37
      %v4010 = vand.u32 %v3923, 2147483648
      %v4011 = vor.u32 1.1754944e-38, %v4010
      %v4012 = vsel %vm4009, %v4011, %v4007
      %v4013 = vmul.f32 %v3905, %v4012
      %v4014 = vpack.c.bf16 %v3938, %v3938
      %v4015 = vpack.c.bf16 %v3953, %v3953
      %v4016 = vpack.c.bf16 %v3968, %v3968
      %v4017 = vpack.c.bf16 %v3983, %v3983
      %v4018 = vpack.c.bf16 %v3998, %v3998
      %v4019 = vpack.c.bf16 %v4013, %v4013
      %v4022 = vunpack.c.l.b16 %v4014
      %v4023 = vunpack.c.l.b16 %v4015
      %v4024 = vpack.c.b16 %v4023, %v4022
      %v4027 = vunpack.c.l.b16 %v3768
      %v4028 = vunpack.c.l.b16 %v3769
      %v4029 = vpack.c.b16 %v4028, %v4027
      %v4032 = vsel %vm1021, %v4024, 0
      %4034 = vmatpush.bf16.msra.mxu0 0
      %4035 = vmatpush.bf16.msra.mxu0 0
      %4036 = vmatpush.bf16.msra.mxu0 0
      %4037 = vmatpush.bf16.msra.mxu0 0
      %4038 = vmatpush.bf16.msra.mxu0 0
      %4039 = vmatpush.bf16.msra.mxu0 0
      %4040 = vmatpush.bf16.msra.mxu0 0
      %4041 = vmatpush.bf16.msra.mxu0 %v4029
      %4042 = vmatmul.bf16.gmra.mxu0 %v4032
      %v4043 = vpop.f32.mrf.mxu0
      %v4044 = vadd.f32 0.0, %v4043
      %v4045 = vpop.f32.mrf.mxu0
      %v4046 = vadd.f32 0.0, %v4045
      %4047 = vdwg.mxu0
      %v4050 = vunpack.c.l.b16 %v4016
      %v4051 = vunpack.c.l.b16 %v4017
      %v4052 = vpack.c.b16 %v4051, %v4050
      %v4055 = vunpack.c.l.b16 %v3770
      %v4056 = vunpack.c.l.b16 %v3771
      %v4057 = vpack.c.b16 %v4056, %v4055
      %v4060 = vsel %vm1021, %v4052, 0
      %4062 = vmatpush.bf16.msra.mxu0 0
      %4063 = vmatpush.bf16.msra.mxu0 0
      %4064 = vmatpush.bf16.msra.mxu0 0
      %4065 = vmatpush.bf16.msra.mxu0 0
      %4066 = vmatpush.bf16.msra.mxu0 0
      %4067 = vmatpush.bf16.msra.mxu0 0
      %4068 = vmatpush.bf16.msra.mxu0 0
      %4069 = vmatpush.bf16.msra.mxu0 %v4057
      %4070 = vmatmul.bf16.gmra.mxu0 %v4060
      %v4071 = vpop.f32.mrf.mxu0
      %v4072 = vadd.f32 0.0, %v4071
      %v4073 = vpop.f32.mrf.mxu0
      %v4074 = vadd.f32 0.0, %v4073
      %4075 = vdwg.mxu0
      %v4078 = vunpack.c.l.b16 %v4018
      %v4079 = vunpack.c.l.b16 %v4019
      %v4080 = vpack.c.b16 %v4079, %v4078
      %v4083 = vunpack.c.l.b16 %v3772
      %v4084 = vunpack.c.l.b16 %v3773
      %v4085 = vpack.c.b16 %v4084, %v4083
      %v4088 = vsel %vm1021, %v4080, 0
      %4090 = vmatpush.bf16.msra.mxu0 0
      %4091 = vmatpush.bf16.msra.mxu0 0
      %4092 = vmatpush.bf16.msra.mxu0 0
      %4093 = vmatpush.bf16.msra.mxu0 0
      %4094 = vmatpush.bf16.msra.mxu0 0
      %4095 = vmatpush.bf16.msra.mxu0 0
      %4096 = vmatpush.bf16.msra.mxu0 0
      %4097 = vmatpush.bf16.msra.mxu0 %v4085
      %4098 = vmatmul.bf16.gmra.mxu0 %v4088
      %v4099 = vpop.f32.mrf.mxu0
      %v4100 = vadd.f32 0.0, %v4099
      %v4101 = vpop.f32.mrf.mxu0
      %v4102 = vadd.f32 0.0, %v4101
      %4103 = vdwg.mxu0
      %4104 = vrot.lane.b32.xlu0 %v3778, 96
      %v4105 = vpop.permute.xlu0 %4104
      %4106 = vrot.lane.b32.xlu0 %v3783, 96
      %v4107 = vpop.permute.xlu0 %4106
      %v4109 = vsel %vm934, %v4105, 0
      %v4112 = vsel %vm934, %v4107, 0
      %4114 = vmatpush.bf16.xpose.msra.mxu0 0
      %4115 = vmatpush.bf16.xpose.msra.mxu0 0
      %4116 = vmatpush.bf16.xpose.msra.mxu0 0
      %4117 = vmatpush.bf16.xpose.msra.mxu0 0
      %4118 = vmatpush.bf16.xpose.msra.mxu0 0
      %4119 = vmatpush.bf16.xpose.msra.mxu0 0
      %4120 = vmatpush.bf16.xpose.msra.mxu0 0
      %4121 = vmatpush.bf16.xpose.msra.mxu0 %v4112
      %4122 = vmatmul.bf16.gmra.mxu0 %v4109
      %v4123 = vpop.f32.mrf.mxu0
      %v4124 = vadd.f32 0.0, %v4123
      %v4125 = vpop.f32.mrf.mxu0
      %v4126 = vadd.f32 0.0, %v4125
      %4127 = vdwg.mxu0
      %4128 = vrot.lane.b32.xlu0 %v3808, 96
      %v4129 = vpop.permute.xlu0 %4128
      %4130 = vrot.lane.b32.xlu0 %v3813, 96
      %v4131 = vpop.permute.xlu0 %4130
      %v4133 = vsel %vm934, %v4129, 0
      %v4136 = vsel %vm934, %v4131, 0
      %4138 = vmatpush.bf16.xpose.msra.mxu0 0
      %4139 = vmatpush.bf16.xpose.msra.mxu0 0
      %4140 = vmatpush.bf16.xpose.msra.mxu0 0
      %4141 = vmatpush.bf16.xpose.msra.mxu0 0
      %4142 = vmatpush.bf16.xpose.msra.mxu0 0
      %4143 = vmatpush.bf16.xpose.msra.mxu0 0
      %4144 = vmatpush.bf16.xpose.msra.mxu0 0
      %4145 = vmatpush.bf16.xpose.msra.mxu0 %v4136
      %4146 = vmatmul.bf16.gmra.mxu0 %v4133
      %v4147 = vpop.f32.mrf.mxu0
      %v4148 = vadd.f32 0.0, %v4147
      %v4149 = vpop.f32.mrf.mxu0
      %v4150 = vadd.f32 0.0, %v4149
      %4151 = vdwg.mxu0
      %4152 = vrot.lane.b32.xlu0 %v3838, 96
      %v4153 = vpop.permute.xlu0 %4152
      %4154 = vrot.lane.b32.xlu0 %v3843, 96
      %v4155 = vpop.permute.xlu0 %4154
      %v4157 = vsel %vm934, %v4153, 0
      %v4160 = vsel %vm934, %v4155, 0
      %4162 = vmatpush.bf16.xpose.msra.mxu0 0
      %4163 = vmatpush.bf16.xpose.msra.mxu0 0
      %4164 = vmatpush.bf16.xpose.msra.mxu0 0
      %4165 = vmatpush.bf16.xpose.msra.mxu0 0
      %4166 = vmatpush.bf16.xpose.msra.mxu0 0
      %4167 = vmatpush.bf16.xpose.msra.mxu0 0
      %4168 = vmatpush.bf16.xpose.msra.mxu0 0
      %4169 = vmatpush.bf16.xpose.msra.mxu0 %v4160
      %4170 = vmatmul.bf16.gmra.mxu0 %v4157
      %v4171 = vpop.f32.mrf.mxu0
      %v4172 = vadd.f32 0.0, %v4171
      %v4173 = vpop.f32.mrf.mxu0
      %v4174 = vadd.f32 0.0, %v4173
      %4175 = vdwg.mxu0
      %v4176 = vmul.f32 %v4124, 0.17677669
      %v4177 = vmul.f32 %v4126, 0.17677669
      %v4178 = vmul.f32 %v4148, 0.17677669
      %v4179 = vmul.f32 %v4150, 0.17677669
      %v4180 = vmul.f32 %v4172, 0.17677669
      %v4181 = vmul.f32 %v4174, 0.17677669
      %v4182 = vsel %vm1021, %v4176, -inf
      %4183 = vmax.xlane.f32.xlu0 %v4182
      %v4184 = vpop.xlane.xlu0 %4183
      %v4185 = vsel %vm1021, %v4177, -inf
      %4186 = vmax.xlane.f32.xlu0 %v4185
      %v4187 = vpop.xlane.xlu0 %4186
      %v4188 = vsel %vm1021, %v4178, -inf
      %4189 = vmax.xlane.f32.xlu0 %v4188
      %v4190 = vpop.xlane.xlu0 %4189
      %v4191 = vsel %vm1021, %v4179, -inf
      %4192 = vmax.xlane.f32.xlu0 %v4191
      %v4193 = vpop.xlane.xlu0 %4192
      %v4194 = vsel %vm1021, %v4180, -inf
      %4195 = vmax.xlane.f32.xlu0 %v4194
      %v4196 = vpop.xlane.xlu0 %4195
      %v4197 = vsel %vm1021, %v4181, -inf
      %4198 = vmax.xlane.f32.xlu0 %v4197
      %v4199 = vpop.xlane.xlu0 %4198
      %v4200 = vsub.f32 %v4176, %v4184
      %v4201 = vsub.f32 %v4177, %v4187
      %v4202 = vsub.f32 %v4178, %v4190
      %v4203 = vsub.f32 %v4179, %v4193
      %v4204 = vsub.f32 %v4180, %v4196
      %v4205 = vsub.f32 %v4181, %v4199
      %v4206 = vmul.f32 %v4200, 1.442695
      %v4207 = vpow.pop %v4206
      %v4208 = vmul.f32 %v4201, 1.442695
      %v4209 = vpow.pop %v4208
      %v4210 = vmul.f32 %v4202, 1.442695
      %v4211 = vpow.pop %v4210
      %v4212 = vmul.f32 %v4203, 1.442695
      %v4213 = vpow.pop %v4212
      %v4214 = vmul.f32 %v4204, 1.442695
      %v4215 = vpow.pop %v4214
      %v4216 = vmul.f32 %v4205, 1.442695
      %v4217 = vpow.pop %v4216
      %v4218 = vsel %vm1021, %v4207, 0.0
      %4219 = vadd.xlane.f32.xlu0 %v4218
      %v4220 = vpop.xlane.xlu0 %4219
      %v4221 = vsel %vm1021, %v4209, 0.0
      %4222 = vadd.xlane.f32.xlu0 %v4221
      %v4223 = vpop.xlane.xlu0 %4222
      %v4224 = vsel %vm1021, %v4211, 0.0
      %4225 = vadd.xlane.f32.xlu0 %v4224
      %v4226 = vpop.xlane.xlu0 %4225
      %v4227 = vsel %vm1021, %v4213, 0.0
      %4228 = vadd.xlane.f32.xlu0 %v4227
      %v4229 = vpop.xlane.xlu0 %4228
      %v4230 = vsel %vm1021, %v4215, 0.0
      %4231 = vadd.xlane.f32.xlu0 %v4230
      %v4232 = vpop.xlane.xlu0 %4231
      %v4233 = vsel %vm1021, %v4217, 0.0
      %4234 = vadd.xlane.f32.xlu0 %v4233
      %v4235 = vpop.xlane.xlu0 %4234
      %v4236 = vrcp.pop %v4220
      %v4237 = vmul.f32 %v4220, %v4236
      %v4238 = vsub.f32 1.0, %v4237
      %v4239 = vmul.f32 %v4236, %v4238
      %v4240 = vadd.f32 %v4236, %v4239
      %vm4241 = vweird.f32 %v4220
      %vm4242 = vweird.f32 %v4236
      %vm4243 = vmor %vm4241, %vm4242
      %v4244 = vsel %vm4243, %v4236, %v4240
      %v4245 = vand.u32 2147483647, %v4220
      %vm4246 = vcmp.eq.f32.partialorder %v4245, 8.507059e+37
      %v4247 = vand.u32 %v4220, 2147483648
      %v4248 = vor.u32 1.1754944e-38, %v4247
      %v4249 = vsel %vm4246, %v4248, %v4244
      %v4250 = vmul.f32 %v4207, %v4249
      %v4251 = vrcp.pop %v4223
      %v4252 = vmul.f32 %v4223, %v4251
      %v4253 = vsub.f32 1.0, %v4252
      %v4254 = vmul.f32 %v4251, %v4253
      %v4255 = vadd.f32 %v4251, %v4254
      %vm4256 = vweird.f32 %v4223
      %vm4257 = vweird.f32 %v4251
      %vm4258 = vmor %vm4256, %vm4257
      %v4259 = vsel %vm4258, %v4251, %v4255
      %v4260 = vand.u32 2147483647, %v4223
      %vm4261 = vcmp.eq.f32.partialorder %v4260, 8.507059e+37
      %v4262 = vand.u32 %v4223, 2147483648
      %v4263 = vor.u32 1.1754944e-38, %v4262
      %v4264 = vsel %vm4261, %v4263, %v4259
      %v4265 = vmul.f32 %v4209, %v4264
      %v4266 = vrcp.pop %v4226
      %v4267 = vmul.f32 %v4226, %v4266
      %v4268 = vsub.f32 1.0, %v4267
      %v4269 = vmul.f32 %v4266, %v4268
      %v4270 = vadd.f32 %v4266, %v4269
      %vm4271 = vweird.f32 %v4226
      %vm4272 = vweird.f32 %v4266
      %vm4273 = vmor %vm4271, %vm4272
      %v4274 = vsel %vm4273, %v4266, %v4270
      %v4275 = vand.u32 2147483647, %v4226
      %vm4276 = vcmp.eq.f32.partialorder %v4275, 8.507059e+37
      %v4277 = vand.u32 %v4226, 2147483648
      %v4278 = vor.u32 1.1754944e-38, %v4277
      %v4279 = vsel %vm4276, %v4278, %v4274
      %v4280 = vmul.f32 %v4211, %v4279
      %v4281 = vrcp.pop %v4229
      %v4282 = vmul.f32 %v4229, %v4281
      %v4283 = vsub.f32 1.0, %v4282
      %v4284 = vmul.f32 %v4281, %v4283
      %v4285 = vadd.f32 %v4281, %v4284
      %vm4286 = vweird.f32 %v4229
      %vm4287 = vweird.f32 %v4281
      %vm4288 = vmor %vm4286, %vm4287
      %v4289 = vsel %vm4288, %v4281, %v4285
      %v4290 = vand.u32 2147483647, %v4229
      %vm4291 = vcmp.eq.f32.partialorder %v4290, 8.507059e+37
      %v4292 = vand.u32 %v4229, 2147483648
      %v4293 = vor.u32 1.1754944e-38, %v4292
      %v4294 = vsel %vm4291, %v4293, %v4289
      %v4295 = vmul.f32 %v4213, %v4294
      %v4296 = vrcp.pop %v4232
      %v4297 = vmul.f32 %v4232, %v4296
      %v4298 = vsub.f32 1.0, %v4297
      %v4299 = vmul.f32 %v4296, %v4298
      %v4300 = vadd.f32 %v4296, %v4299
      %vm4301 = vweird.f32 %v4232
      %vm4302 = vweird.f32 %v4296
      %vm4303 = vmor %vm4301, %vm4302
      %v4304 = vsel %vm4303, %v4296, %v4300
      %v4305 = vand.u32 2147483647, %v4232
      %vm4306 = vcmp.eq.f32.partialorder %v4305, 8.507059e+37
      %v4307 = vand.u32 %v4232, 2147483648
      %v4308 = vor.u32 1.1754944e-38, %v4307
      %v4309 = vsel %vm4306, %v4308, %v4304
      %v4310 = vmul.f32 %v4215, %v4309
      %v4311 = vrcp.pop %v4235
      %v4312 = vmul.f32 %v4235, %v4311
      %v4313 = vsub.f32 1.0, %v4312
      %v4314 = vmul.f32 %v4311, %v4313
      %v4315 = vadd.f32 %v4311, %v4314
      %vm4316 = vweird.f32 %v4235
      %vm4317 = vweird.f32 %v4311
      %vm4318 = vmor %vm4316, %vm4317
      %v4319 = vsel %vm4318, %v4311, %v4315
      %v4320 = vand.u32 2147483647, %v4235
      %vm4321 = vcmp.eq.f32.partialorder %v4320, 8.507059e+37
      %v4322 = vand.u32 %v4235, 2147483648
      %v4323 = vor.u32 1.1754944e-38, %v4322
      %v4324 = vsel %vm4321, %v4323, %v4319
      %v4325 = vmul.f32 %v4217, %v4324
      %v4326 = vpack.c.bf16 %v4250, %v4250
      %v4327 = vpack.c.bf16 %v4265, %v4265
      %v4328 = vpack.c.bf16 %v4280, %v4280
      %v4329 = vpack.c.bf16 %v4295, %v4295
      %v4330 = vpack.c.bf16 %v4310, %v4310
      %v4331 = vpack.c.bf16 %v4325, %v4325
      %v4334 = vunpack.c.l.b16 %v4326
      %v4335 = vunpack.c.l.b16 %v4327
      %v4336 = vpack.c.b16 %v4335, %v4334
      %4337 = vrot.lane.b32.xlu0 %v4029, 96
      %v4338 = vpop.permute.xlu0 %4337
      %v4341 = vsel %vm1021, %v4336, 0
      %4343 = vmatpush.bf16.msra.mxu0 0
      %4344 = vmatpush.bf16.msra.mxu0 0
      %4345 = vmatpush.bf16.msra.mxu0 0
      %4346 = vmatpush.bf16.msra.mxu0 0
      %4347 = vmatpush.bf16.msra.mxu0 0
      %4348 = vmatpush.bf16.msra.mxu0 0
      %4349 = vmatpush.bf16.msra.mxu0 0
      %4350 = vmatpush.bf16.msra.mxu0 %v4338
      %4351 = vmatmul.bf16.gmra.mxu0 %v4341
      %v4352 = vpop.f32.mrf.mxu0
      %v4353 = vadd.f32 0.0, %v4352
      %v4354 = vpop.f32.mrf.mxu0
      %v4355 = vadd.f32 0.0, %v4354
      %4356 = vdwg.mxu0
      %v4359 = vunpack.c.l.b16 %v4328
      %v4360 = vunpack.c.l.b16 %v4329
      %v4361 = vpack.c.b16 %v4360, %v4359
      %4362 = vrot.lane.b32.xlu0 %v4057, 96
      %v4363 = vpop.permute.xlu0 %4362
      %v4366 = vsel %vm1021, %v4361, 0
      %4368 = vmatpush.bf16.msra.mxu0 0
      %4369 = vmatpush.bf16.msra.mxu0 0
      %4370 = vmatpush.bf16.msra.mxu0 0
      %4371 = vmatpush.bf16.msra.mxu0 0
      %4372 = vmatpush.bf16.msra.mxu0 0
      %4373 = vmatpush.bf16.msra.mxu0 0
      %4374 = vmatpush.bf16.msra.mxu0 0
      %4375 = vmatpush.bf16.msra.mxu0 %v4363
      %4376 = vmatmul.bf16.gmra.mxu0 %v4366
      %v4377 = vpop.f32.mrf.mxu0
      %v4378 = vadd.f32 0.0, %v4377
      %v4379 = vpop.f32.mrf.mxu0
      %v4380 = vadd.f32 0.0, %v4379
      %4381 = vdwg.mxu0
      %v4384 = vunpack.c.l.b16 %v4330
      %v4385 = vunpack.c.l.b16 %v4331
      %v4386 = vpack.c.b16 %v4385, %v4384
      %4387 = vrot.lane.b32.xlu0 %v4085, 96
      %v4388 = vpop.permute.xlu0 %4387
      %v4391 = vsel %vm1021, %v4386, 0
      %4393 = vmatpush.bf16.msra.mxu0 0
      %4394 = vmatpush.bf16.msra.mxu0 0
      %4395 = vmatpush.bf16.msra.mxu0 0
      %4396 = vmatpush.bf16.msra.mxu0 0
      %4397 = vmatpush.bf16.msra.mxu0 0
      %4398 = vmatpush.bf16.msra.mxu0 0
      %4399 = vmatpush.bf16.msra.mxu0 0
      %4400 = vmatpush.bf16.msra.mxu0 %v4388
      %4401 = vmatmul.bf16.gmra.mxu0 %v4391
      %v4402 = vpop.f32.mrf.mxu0
      %v4403 = vadd.f32 0.0, %v4402
      %v4404 = vpop.f32.mrf.mxu0
      %v4405 = vadd.f32 0.0, %v4404
      %4406 = vdwg.mxu0
      %4407 = vrot.lane.b32.xlu0 %v3778, 64
      %v4408 = vpop.permute.xlu0 %4407
      %4409 = vrot.lane.b32.xlu0 %v3783, 64
      %v4410 = vpop.permute.xlu0 %4409
      %v4412 = vsel %vm934, %v4408, 0
      %v4415 = vsel %vm934, %v4410, 0
      %4417 = vmatpush.bf16.xpose.msra.mxu0 0
      %4418 = vmatpush.bf16.xpose.msra.mxu0 0
      %4419 = vmatpush.bf16.xpose.msra.mxu0 0
      %4420 = vmatpush.bf16.xpose.msra.mxu0 0
      %4421 = vmatpush.bf16.xpose.msra.mxu0 0
      %4422 = vmatpush.bf16.xpose.msra.mxu0 0
      %4423 = vmatpush.bf16.xpose.msra.mxu0 0
      %4424 = vmatpush.bf16.xpose.msra.mxu0 %v4415
      %4425 = vmatmul.bf16.gmra.mxu0 %v4412
      %v4426 = vpop.f32.mrf.mxu0
      %v4427 = vadd.f32 0.0, %v4426
      %v4428 = vpop.f32.mrf.mxu0
      %v4429 = vadd.f32 0.0, %v4428
      %4430 = vdwg.mxu0
      %4431 = vrot.lane.b32.xlu0 %v3808, 64
      %v4432 = vpop.permute.xlu0 %4431
      %4433 = vrot.lane.b32.xlu0 %v3813, 64
      %v4434 = vpop.permute.xlu0 %4433
      %v4436 = vsel %vm934, %v4432, 0
      %v4439 = vsel %vm934, %v4434, 0
      %4441 = vmatpush.bf16.xpose.msra.mxu0 0
      %4442 = vmatpush.bf16.xpose.msra.mxu0 0
      %4443 = vmatpush.bf16.xpose.msra.mxu0 0
      %4444 = vmatpush.bf16.xpose.msra.mxu0 0
      %4445 = vmatpush.bf16.xpose.msra.mxu0 0
      %4446 = vmatpush.bf16.xpose.msra.mxu0 0
      %4447 = vmatpush.bf16.xpose.msra.mxu0 0
      %4448 = vmatpush.bf16.xpose.msra.mxu0 %v4439
      %4449 = vmatmul.bf16.gmra.mxu0 %v4436
      %v4450 = vpop.f32.mrf.mxu0
      %v4451 = vadd.f32 0.0, %v4450
      %v4452 = vpop.f32.mrf.mxu0
      %v4453 = vadd.f32 0.0, %v4452
      %4454 = vdwg.mxu0
      %4455 = vrot.lane.b32.xlu0 %v3838, 64
      %v4456 = vpop.permute.xlu0 %4455
      %4457 = vrot.lane.b32.xlu0 %v3843, 64
      %v4458 = vpop.permute.xlu0 %4457
      %v4460 = vsel %vm934, %v4456, 0
      %v4463 = vsel %vm934, %v4458, 0
      %4465 = vmatpush.bf16.xpose.msra.mxu0 0
      %4466 = vmatpush.bf16.xpose.msra.mxu0 0
      %4467 = vmatpush.bf16.xpose.msra.mxu0 0
      %4468 = vmatpush.bf16.xpose.msra.mxu0 0
      %4469 = vmatpush.bf16.xpose.msra.mxu0 0
      %4470 = vmatpush.bf16.xpose.msra.mxu0 0
      %4471 = vmatpush.bf16.xpose.msra.mxu0 0
      %4472 = vmatpush.bf16.xpose.msra.mxu0 %v4463
      %4473 = vmatmul.bf16.gmra.mxu0 %v4460
      %v4474 = vpop.f32.mrf.mxu0
      %v4475 = vadd.f32 0.0, %v4474
      %v4476 = vpop.f32.mrf.mxu0
      %v4477 = vadd.f32 0.0, %v4476
      %4478 = vdwg.mxu0
      %v4479 = vmul.f32 %v4427, 0.17677669
      %v4480 = vmul.f32 %v4429, 0.17677669
      %v4481 = vmul.f32 %v4451, 0.17677669
      %v4482 = vmul.f32 %v4453, 0.17677669
      %v4483 = vmul.f32 %v4475, 0.17677669
      %v4484 = vmul.f32 %v4477, 0.17677669
      %v4485 = vsel %vm1021, %v4479, -inf
      %4486 = vmax.xlane.f32.xlu0 %v4485
      %v4487 = vpop.xlane.xlu0 %4486
      %v4488 = vsel %vm1021, %v4480, -inf
      %4489 = vmax.xlane.f32.xlu0 %v4488
      %v4490 = vpop.xlane.xlu0 %4489
      %v4491 = vsel %vm1021, %v4481, -inf
      %4492 = vmax.xlane.f32.xlu0 %v4491
      %v4493 = vpop.xlane.xlu0 %4492
      %v4494 = vsel %vm1021, %v4482, -inf
      %4495 = vmax.xlane.f32.xlu0 %v4494
      %v4496 = vpop.xlane.xlu0 %4495
      %v4497 = vsel %vm1021, %v4483, -inf
      %4498 = vmax.xlane.f32.xlu0 %v4497
      %v4499 = vpop.xlane.xlu0 %4498
      %v4500 = vsel %vm1021, %v4484, -inf
      %4501 = vmax.xlane.f32.xlu0 %v4500
      %v4502 = vpop.xlane.xlu0 %4501
      %v4503 = vsub.f32 %v4479, %v4487
      %v4504 = vsub.f32 %v4480, %v4490
      %v4505 = vsub.f32 %v4481, %v4493
      %v4506 = vsub.f32 %v4482, %v4496
      %v4507 = vsub.f32 %v4483, %v4499
      %v4508 = vsub.f32 %v4484, %v4502
      %v4509 = vmul.f32 %v4503, 1.442695
      %v4510 = vpow.pop %v4509
      %v4511 = vmul.f32 %v4504, 1.442695
      %v4512 = vpow.pop %v4511
      %v4513 = vmul.f32 %v4505, 1.442695
      %v4514 = vpow.pop %v4513
      %v4515 = vmul.f32 %v4506, 1.442695
      %v4516 = vpow.pop %v4515
      %v4517 = vmul.f32 %v4507, 1.442695
      %v4518 = vpow.pop %v4517
      %v4519 = vmul.f32 %v4508, 1.442695
      %v4520 = vpow.pop %v4519
      %v4521 = vsel %vm1021, %v4510, 0.0
      %4522 = vadd.xlane.f32.xlu0 %v4521
      %v4523 = vpop.xlane.xlu0 %4522
      %v4524 = vsel %vm1021, %v4512, 0.0
      %4525 = vadd.xlane.f32.xlu0 %v4524
      %v4526 = vpop.xlane.xlu0 %4525
      %v4527 = vsel %vm1021, %v4514, 0.0
      %4528 = vadd.xlane.f32.xlu0 %v4527
      %v4529 = vpop.xlane.xlu0 %4528
      %v4530 = vsel %vm1021, %v4516, 0.0
      %4531 = vadd.xlane.f32.xlu0 %v4530
      %v4532 = vpop.xlane.xlu0 %4531
      %v4533 = vsel %vm1021, %v4518, 0.0
      %4534 = vadd.xlane.f32.xlu0 %v4533
      %v4535 = vpop.xlane.xlu0 %4534
      %v4536 = vsel %vm1021, %v4520, 0.0
      %4537 = vadd.xlane.f32.xlu0 %v4536
      %v4538 = vpop.xlane.xlu0 %4537
      %v4539 = vrcp.pop %v4523
      %v4540 = vmul.f32 %v4523, %v4539
      %v4541 = vsub.f32 1.0, %v4540
      %v4542 = vmul.f32 %v4539, %v4541
      %v4543 = vadd.f32 %v4539, %v4542
      %vm4544 = vweird.f32 %v4523
      %vm4545 = vweird.f32 %v4539
      %vm4546 = vmor %vm4544, %vm4545
      %v4547 = vsel %vm4546, %v4539, %v4543
      %v4548 = vand.u32 2147483647, %v4523
      %vm4549 = vcmp.eq.f32.partialorder %v4548, 8.507059e+37
      %v4550 = vand.u32 %v4523, 2147483648
      %v4551 = vor.u32 1.1754944e-38, %v4550
      %v4552 = vsel %vm4549, %v4551, %v4547
      %v4553 = vmul.f32 %v4510, %v4552
      %v4554 = vrcp.pop %v4526
      %v4555 = vmul.f32 %v4526, %v4554
      %v4556 = vsub.f32 1.0, %v4555
      %v4557 = vmul.f32 %v4554, %v4556
      %v4558 = vadd.f32 %v4554, %v4557
      %vm4559 = vweird.f32 %v4526
      %vm4560 = vweird.f32 %v4554
      %vm4561 = vmor %vm4559, %vm4560
      %v4562 = vsel %vm4561, %v4554, %v4558
      %v4563 = vand.u32 2147483647, %v4526
      %vm4564 = vcmp.eq.f32.partialorder %v4563, 8.507059e+37
      %v4565 = vand.u32 %v4526, 2147483648
      %v4566 = vor.u32 1.1754944e-38, %v4565
      %v4567 = vsel %vm4564, %v4566, %v4562
      %v4568 = vmul.f32 %v4512, %v4567
      %v4569 = vrcp.pop %v4529
      %v4570 = vmul.f32 %v4529, %v4569
      %v4571 = vsub.f32 1.0, %v4570
      %v4572 = vmul.f32 %v4569, %v4571
      %v4573 = vadd.f32 %v4569, %v4572
      %vm4574 = vweird.f32 %v4529
      %vm4575 = vweird.f32 %v4569
      %vm4576 = vmor %vm4574, %vm4575
      %v4577 = vsel %vm4576, %v4569, %v4573
      %v4578 = vand.u32 2147483647, %v4529
      %vm4579 = vcmp.eq.f32.partialorder %v4578, 8.507059e+37
      %v4580 = vand.u32 %v4529, 2147483648
      %v4581 = vor.u32 1.1754944e-38, %v4580
      %v4582 = vsel %vm4579, %v4581, %v4577
      %v4583 = vmul.f32 %v4514, %v4582
      %v4584 = vrcp.pop %v4532
      %v4585 = vmul.f32 %v4532, %v4584
      %v4586 = vsub.f32 1.0, %v4585
      %v4587 = vmul.f32 %v4584, %v4586
      %v4588 = vadd.f32 %v4584, %v4587
      %vm4589 = vweird.f32 %v4532
      %vm4590 = vweird.f32 %v4584
      %vm4591 = vmor %vm4589, %vm4590
      %v4592 = vsel %vm4591, %v4584, %v4588
      %v4593 = vand.u32 2147483647, %v4532
      %vm4594 = vcmp.eq.f32.partialorder %v4593, 8.507059e+37
      %v4595 = vand.u32 %v4532, 2147483648
      %v4596 = vor.u32 1.1754944e-38, %v4595
      %v4597 = vsel %vm4594, %v4596, %v4592
      %v4598 = vmul.f32 %v4516, %v4597
      %v4599 = vrcp.pop %v4535
      %v4600 = vmul.f32 %v4535, %v4599
      %v4601 = vsub.f32 1.0, %v4600
      %v4602 = vmul.f32 %v4599, %v4601
      %v4603 = vadd.f32 %v4599, %v4602
      %vm4604 = vweird.f32 %v4535
      %vm4605 = vweird.f32 %v4599
      %vm4606 = vmor %vm4604, %vm4605
      %v4607 = vsel %vm4606, %v4599, %v4603
      %v4608 = vand.u32 2147483647, %v4535
      %vm4609 = vcmp.eq.f32.partialorder %v4608, 8.507059e+37
      %v4610 = vand.u32 %v4535, 2147483648
      %v4611 = vor.u32 1.1754944e-38, %v4610
      %v4612 = vsel %vm4609, %v4611, %v4607
      %v4613 = vmul.f32 %v4518, %v4612
      %v4614 = vrcp.pop %v4538
      %v4615 = vmul.f32 %v4538, %v4614
      %v4616 = vsub.f32 1.0, %v4615
      %v4617 = vmul.f32 %v4614, %v4616
      %v4618 = vadd.f32 %v4614, %v4617
      %vm4619 = vweird.f32 %v4538
      %vm4620 = vweird.f32 %v4614
      %vm4621 = vmor %vm4619, %vm4620
      %v4622 = vsel %vm4621, %v4614, %v4618
      %v4623 = vand.u32 2147483647, %v4538
      %vm4624 = vcmp.eq.f32.partialorder %v4623, 8.507059e+37
      %v4625 = vand.u32 %v4538, 2147483648
      %v4626 = vor.u32 1.1754944e-38, %v4625
      %v4627 = vsel %vm4624, %v4626, %v4622
      %v4628 = vmul.f32 %v4520, %v4627
      %v4629 = vpack.c.bf16 %v4553, %v4553
      %v4630 = vpack.c.bf16 %v4568, %v4568
      %v4631 = vpack.c.bf16 %v4583, %v4583
      %v4632 = vpack.c.bf16 %v4598, %v4598
      %v4633 = vpack.c.bf16 %v4613, %v4613
      %v4634 = vpack.c.bf16 %v4628, %v4628
      %v4637 = vunpack.c.l.b16 %v4629
      %v4638 = vunpack.c.l.b16 %v4630
      %v4639 = vpack.c.b16 %v4638, %v4637
      %4640 = vrot.lane.b32.xlu0 %v4029, 64
      %v4641 = vpop.permute.xlu0 %4640
      %v4644 = vsel %vm1021, %v4639, 0
      %4646 = vmatpush.bf16.msra.mxu0 0
      %4647 = vmatpush.bf16.msra.mxu0 0
      %4648 = vmatpush.bf16.msra.mxu0 0
      %4649 = vmatpush.bf16.msra.mxu0 0
      %4650 = vmatpush.bf16.msra.mxu0 0
      %4651 = vmatpush.bf16.msra.mxu0 0
      %4652 = vmatpush.bf16.msra.mxu0 0
      %4653 = vmatpush.bf16.msra.mxu0 %v4641
      %4654 = vmatmul.bf16.gmra.mxu0 %v4644
      %v4655 = vpop.f32.mrf.mxu0
      %v4656 = vadd.f32 0.0, %v4655
      %v4657 = vpop.f32.mrf.mxu0
      %v4658 = vadd.f32 0.0, %v4657
      %4659 = vdwg.mxu0
      %v4662 = vunpack.c.l.b16 %v4631
      %v4663 = vunpack.c.l.b16 %v4632
      %v4664 = vpack.c.b16 %v4663, %v4662
      %4665 = vrot.lane.b32.xlu0 %v4057, 64
      %v4666 = vpop.permute.xlu0 %4665
      %v4669 = vsel %vm1021, %v4664, 0
      %4671 = vmatpush.bf16.msra.mxu0 0
      %4672 = vmatpush.bf16.msra.mxu0 0
      %4673 = vmatpush.bf16.msra.mxu0 0
      %4674 = vmatpush.bf16.msra.mxu0 0
      %4675 = vmatpush.bf16.msra.mxu0 0
      %4676 = vmatpush.bf16.msra.mxu0 0
      %4677 = vmatpush.bf16.msra.mxu0 0
      %4678 = vmatpush.bf16.msra.mxu0 %v4666
      %4679 = vmatmul.bf16.gmra.mxu0 %v4669
      %v4680 = vpop.f32.mrf.mxu0
      %v4681 = vadd.f32 0.0, %v4680
      %v4682 = vpop.f32.mrf.mxu0
      %v4683 = vadd.f32 0.0, %v4682
      %4684 = vdwg.mxu0
      %v4687 = vunpack.c.l.b16 %v4633
      %v4688 = vunpack.c.l.b16 %v4634
      %v4689 = vpack.c.b16 %v4688, %v4687
      %4690 = vrot.lane.b32.xlu0 %v4085, 64
      %v4691 = vpop.permute.xlu0 %4690
      %v4694 = vsel %vm1021, %v4689, 0
      %4696 = vmatpush.bf16.msra.mxu0 0
      %4697 = vmatpush.bf16.msra.mxu0 0
      %4698 = vmatpush.bf16.msra.mxu0 0
      %4699 = vmatpush.bf16.msra.mxu0 0
      %4700 = vmatpush.bf16.msra.mxu0 0
      %4701 = vmatpush.bf16.msra.mxu0 0
      %4702 = vmatpush.bf16.msra.mxu0 0
      %4703 = vmatpush.bf16.msra.mxu0 %v4691
      %4704 = vmatmul.bf16.gmra.mxu0 %v4694
      %v4705 = vpop.f32.mrf.mxu0
      %v4706 = vadd.f32 0.0, %v4705
      %v4707 = vpop.f32.mrf.mxu0
      %v4708 = vadd.f32 0.0, %v4707
      %4709 = vdwg.mxu0
      %4710 = vrot.lane.b32.xlu0 %v3778, 32
      %v4711 = vpop.permute.xlu0 %4710
      %4712 = vrot.lane.b32.xlu0 %v3783, 32
      %v4713 = vpop.permute.xlu0 %4712
      %v4715 = vsel %vm934, %v4711, 0
      %v4718 = vsel %vm934, %v4713, 0
      %4720 = vmatpush.bf16.xpose.msra.mxu0 0
      %4721 = vmatpush.bf16.xpose.msra.mxu0 0
      %4722 = vmatpush.bf16.xpose.msra.mxu0 0
      %4723 = vmatpush.bf16.xpose.msra.mxu0 0
      %4724 = vmatpush.bf16.xpose.msra.mxu0 0
      %4725 = vmatpush.bf16.xpose.msra.mxu0 0
      %4726 = vmatpush.bf16.xpose.msra.mxu0 0
      %4727 = vmatpush.bf16.xpose.msra.mxu0 %v4718
      %4728 = vmatmul.bf16.gmra.mxu0 %v4715
      %v4729 = vpop.f32.mrf.mxu0
      %v4730 = vadd.f32 0.0, %v4729
      %v4731 = vpop.f32.mrf.mxu0
      %v4732 = vadd.f32 0.0, %v4731
      %4733 = vdwg.mxu0
      %4734 = vrot.lane.b32.xlu0 %v3808, 32
      %v4735 = vpop.permute.xlu0 %4734
      %4736 = vrot.lane.b32.xlu0 %v3813, 32
      %v4737 = vpop.permute.xlu0 %4736
      %v4739 = vsel %vm934, %v4735, 0
      %v4742 = vsel %vm934, %v4737, 0
      %4744 = vmatpush.bf16.xpose.msra.mxu0 0
      %4745 = vmatpush.bf16.xpose.msra.mxu0 0
      %4746 = vmatpush.bf16.xpose.msra.mxu0 0
      %4747 = vmatpush.bf16.xpose.msra.mxu0 0
      %4748 = vmatpush.bf16.xpose.msra.mxu0 0
      %4749 = vmatpush.bf16.xpose.msra.mxu0 0
      %4750 = vmatpush.bf16.xpose.msra.mxu0 0
      %4751 = vmatpush.bf16.xpose.msra.mxu0 %v4742
      %4752 = vmatmul.bf16.gmra.mxu0 %v4739
      %v4753 = vpop.f32.mrf.mxu0
      %v4754 = vadd.f32 0.0, %v4753
      %v4755 = vpop.f32.mrf.mxu0
      %v4756 = vadd.f32 0.0, %v4755
      %4757 = vdwg.mxu0
      %4758 = vrot.lane.b32.xlu0 %v3838, 32
      %v4759 = vpop.permute.xlu0 %4758
      %4760 = vrot.lane.b32.xlu0 %v3843, 32
      %v4761 = vpop.permute.xlu0 %4760
      %v4763 = vsel %vm934, %v4759, 0
      %v4766 = vsel %vm934, %v4761, 0
      %4768 = vmatpush.bf16.xpose.msra.mxu0 0
      %4769 = vmatpush.bf16.xpose.msra.mxu0 0
      %4770 = vmatpush.bf16.xpose.msra.mxu0 0
      %4771 = vmatpush.bf16.xpose.msra.mxu0 0
      %4772 = vmatpush.bf16.xpose.msra.mxu0 0
      %4773 = vmatpush.bf16.xpose.msra.mxu0 0
      %4774 = vmatpush.bf16.xpose.msra.mxu0 0
      %4775 = vmatpush.bf16.xpose.msra.mxu0 %v4766
      %4776 = vmatmul.bf16.gmra.mxu0 %v4763
      %v4777 = vpop.f32.mrf.mxu0
      %v4778 = vadd.f32 0.0, %v4777
      %v4779 = vpop.f32.mrf.mxu0
      %v4780 = vadd.f32 0.0, %v4779
      %4781 = vdwg.mxu0
      %v4782 = vmul.f32 %v4730, 0.17677669
      %v4783 = vmul.f32 %v4732, 0.17677669
      %v4784 = vmul.f32 %v4754, 0.17677669
      %v4785 = vmul.f32 %v4756, 0.17677669
      %v4786 = vmul.f32 %v4778, 0.17677669
      %v4787 = vmul.f32 %v4780, 0.17677669
      %v4788 = vsel %vm1021, %v4782, -inf
      %4789 = vmax.xlane.f32.xlu0 %v4788
      %v4790 = vpop.xlane.xlu0 %4789
      %v4791 = vsel %vm1021, %v4783, -inf
      %4792 = vmax.xlane.f32.xlu0 %v4791
      %v4793 = vpop.xlane.xlu0 %4792
      %v4794 = vsel %vm1021, %v4784, -inf
      %4795 = vmax.xlane.f32.xlu0 %v4794
      %v4796 = vpop.xlane.xlu0 %4795
      %v4797 = vsel %vm1021, %v4785, -inf
      %4798 = vmax.xlane.f32.xlu0 %v4797
      %v4799 = vpop.xlane.xlu0 %4798
      %v4800 = vsel %vm1021, %v4786, -inf
      %4801 = vmax.xlane.f32.xlu0 %v4800
      %v4802 = vpop.xlane.xlu0 %4801
      %v4803 = vsel %vm1021, %v4787, -inf
      %4804 = vmax.xlane.f32.xlu0 %v4803
      %v4805 = vpop.xlane.xlu0 %4804
      %v4806 = vsub.f32 %v4782, %v4790
      %v4807 = vsub.f32 %v4783, %v4793
      %v4808 = vsub.f32 %v4784, %v4796
      %v4809 = vsub.f32 %v4785, %v4799
      %v4810 = vsub.f32 %v4786, %v4802
      %v4811 = vsub.f32 %v4787, %v4805
      %v4812 = vmul.f32 %v4806, 1.442695
      %v4813 = vpow.pop %v4812
      %v4814 = vmul.f32 %v4807, 1.442695
      %v4815 = vpow.pop %v4814
      %v4816 = vmul.f32 %v4808, 1.442695
      %v4817 = vpow.pop %v4816
      %v4818 = vmul.f32 %v4809, 1.442695
      %v4819 = vpow.pop %v4818
      %v4820 = vmul.f32 %v4810, 1.442695
      %v4821 = vpow.pop %v4820
      %v4822 = vmul.f32 %v4811, 1.442695
      %v4823 = vpow.pop %v4822
      %v4824 = vsel %vm1021, %v4813, 0.0
      %4825 = vadd.xlane.f32.xlu0 %v4824
      %v4826 = vpop.xlane.xlu0 %4825
      %v4827 = vsel %vm1021, %v4815, 0.0
      %4828 = vadd.xlane.f32.xlu0 %v4827
      %v4829 = vpop.xlane.xlu0 %4828
      %v4830 = vsel %vm1021, %v4817, 0.0
      %4831 = vadd.xlane.f32.xlu0 %v4830
      %v4832 = vpop.xlane.xlu0 %4831
      %v4833 = vsel %vm1021, %v4819, 0.0
      %4834 = vadd.xlane.f32.xlu0 %v4833
      %v4835 = vpop.xlane.xlu0 %4834
      %v4836 = vsel %vm1021, %v4821, 0.0
      %4837 = vadd.xlane.f32.xlu0 %v4836
      %v4838 = vpop.xlane.xlu0 %4837
      %v4839 = vsel %vm1021, %v4823, 0.0
      %4840 = vadd.xlane.f32.xlu0 %v4839
      %v4841 = vpop.xlane.xlu0 %4840
      %v4842 = vrcp.pop %v4826
      %v4843 = vmul.f32 %v4826, %v4842
      %v4844 = vsub.f32 1.0, %v4843
      %v4845 = vmul.f32 %v4842, %v4844
      %v4846 = vadd.f32 %v4842, %v4845
      %vm4847 = vweird.f32 %v4826
      %vm4848 = vweird.f32 %v4842
      %vm4849 = vmor %vm4847, %vm4848
      %v4850 = vsel %vm4849, %v4842, %v4846
      %v4851 = vand.u32 2147483647, %v4826
      %vm4852 = vcmp.eq.f32.partialorder %v4851, 8.507059e+37
      %v4853 = vand.u32 %v4826, 2147483648
      %v4854 = vor.u32 1.1754944e-38, %v4853
      %v4855 = vsel %vm4852, %v4854, %v4850
      %v4856 = vmul.f32 %v4813, %v4855
      %v4857 = vrcp.pop %v4829
      %v4858 = vmul.f32 %v4829, %v4857
      %v4859 = vsub.f32 1.0, %v4858
      %v4860 = vmul.f32 %v4857, %v4859
      %v4861 = vadd.f32 %v4857, %v4860
      %vm4862 = vweird.f32 %v4829
      %vm4863 = vweird.f32 %v4857
      %vm4864 = vmor %vm4862, %vm4863
      %v4865 = vsel %vm4864, %v4857, %v4861
      %v4866 = vand.u32 2147483647, %v4829
      %vm4867 = vcmp.eq.f32.partialorder %v4866, 8.507059e+37
      %v4868 = vand.u32 %v4829, 2147483648
      %v4869 = vor.u32 1.1754944e-38, %v4868
      %v4870 = vsel %vm4867, %v4869, %v4865
      %v4871 = vmul.f32 %v4815, %v4870
      %v4872 = vrcp.pop %v4832
      %v4873 = vmul.f32 %v4832, %v4872
      %v4874 = vsub.f32 1.0, %v4873
      %v4875 = vmul.f32 %v4872, %v4874
      %v4876 = vadd.f32 %v4872, %v4875
      %vm4877 = vweird.f32 %v4832
      %vm4878 = vweird.f32 %v4872
      %vm4879 = vmor %vm4877, %vm4878
      %v4880 = vsel %vm4879, %v4872, %v4876
      %v4881 = vand.u32 2147483647, %v4832
      %vm4882 = vcmp.eq.f32.partialorder %v4881, 8.507059e+37
      %v4883 = vand.u32 %v4832, 2147483648
      %v4884 = vor.u32 1.1754944e-38, %v4883
      %v4885 = vsel %vm4882, %v4884, %v4880
      %v4886 = vmul.f32 %v4817, %v4885
      %v4887 = vrcp.pop %v4835
      %v4888 = vmul.f32 %v4835, %v4887
      %v4889 = vsub.f32 1.0, %v4888
      %v4890 = vmul.f32 %v4887, %v4889
      %v4891 = vadd.f32 %v4887, %v4890
      %vm4892 = vweird.f32 %v4835
      %vm4893 = vweird.f32 %v4887
      %vm4894 = vmor %vm4892, %vm4893
      %v4895 = vsel %vm4894, %v4887, %v4891
      %v4896 = vand.u32 2147483647, %v4835
      %vm4897 = vcmp.eq.f32.partialorder %v4896, 8.507059e+37
      %v4898 = vand.u32 %v4835, 2147483648
      %v4899 = vor.u32 1.1754944e-38, %v4898
      %v4900 = vsel %vm4897, %v4899, %v4895
      %v4901 = vmul.f32 %v4819, %v4900
      %v4902 = vrcp.pop %v4838
      %v4903 = vmul.f32 %v4838, %v4902
      %v4904 = vsub.f32 1.0, %v4903
      %v4905 = vmul.f32 %v4902, %v4904
      %v4906 = vadd.f32 %v4902, %v4905
      %vm4907 = vweird.f32 %v4838
      %vm4908 = vweird.f32 %v4902
      %vm4909 = vmor %vm4907, %vm4908
      %v4910 = vsel %vm4909, %v4902, %v4906
      %v4911 = vand.u32 2147483647, %v4838
      %vm4912 = vcmp.eq.f32.partialorder %v4911, 8.507059e+37
      %v4913 = vand.u32 %v4838, 2147483648
      %v4914 = vor.u32 1.1754944e-38, %v4913
      %v4915 = vsel %vm4912, %v4914, %v4910
      %v4916 = vmul.f32 %v4821, %v4915
      %v4917 = vrcp.pop %v4841
      %v4918 = vmul.f32 %v4841, %v4917
      %v4919 = vsub.f32 1.0, %v4918
      %v4920 = vmul.f32 %v4917, %v4919
      %v4921 = vadd.f32 %v4917, %v4920
      %vm4922 = vweird.f32 %v4841
      %vm4923 = vweird.f32 %v4917
      %vm4924 = vmor %vm4922, %vm4923
      %v4925 = vsel %vm4924, %v4917, %v4921
      %v4926 = vand.u32 2147483647, %v4841
      %vm4927 = vcmp.eq.f32.partialorder %v4926, 8.507059e+37
      %v4928 = vand.u32 %v4841, 2147483648
      %v4929 = vor.u32 1.1754944e-38, %v4928
      %v4930 = vsel %vm4927, %v4929, %v4925
      %v4931 = vmul.f32 %v4823, %v4930
      %v4932 = vpack.c.bf16 %v4856, %v4856
      %v4933 = vpack.c.bf16 %v4871, %v4871
      %v4934 = vpack.c.bf16 %v4886, %v4886
      %v4935 = vpack.c.bf16 %v4901, %v4901
      %v4936 = vpack.c.bf16 %v4916, %v4916
      %v4937 = vpack.c.bf16 %v4931, %v4931
      %v4940 = vunpack.c.l.b16 %v4932
      %v4941 = vunpack.c.l.b16 %v4933
      %v4942 = vpack.c.b16 %v4941, %v4940
      %4943 = vrot.lane.b32.xlu0 %v4029, 32
      %v4944 = vpop.permute.xlu0 %4943
      %v4947 = vsel %vm1021, %v4942, 0
      %4949 = vmatpush.bf16.msra.mxu0 0
      %4950 = vmatpush.bf16.msra.mxu0 0
      %4951 = vmatpush.bf16.msra.mxu0 0
      %4952 = vmatpush.bf16.msra.mxu0 0
      %4953 = vmatpush.bf16.msra.mxu0 0
      %4954 = vmatpush.bf16.msra.mxu0 0
      %4955 = vmatpush.bf16.msra.mxu0 0
      %4956 = vmatpush.bf16.msra.mxu0 %v4944
      %4957 = vmatmul.bf16.gmra.mxu0 %v4947
      %v4958 = vpop.f32.mrf.mxu0
      %v4959 = vadd.f32 0.0, %v4958
      %v4960 = vpop.f32.mrf.mxu0
      %v4961 = vadd.f32 0.0, %v4960
      %4962 = vdwg.mxu0
      %v4965 = vunpack.c.l.b16 %v4934
      %v4966 = vunpack.c.l.b16 %v4935
      %v4967 = vpack.c.b16 %v4966, %v4965
      %4968 = vrot.lane.b32.xlu0 %v4057, 32
      %v4969 = vpop.permute.xlu0 %4968
      %v4972 = vsel %vm1021, %v4967, 0
      %4974 = vmatpush.bf16.msra.mxu0 0
      %4975 = vmatpush.bf16.msra.mxu0 0
      %4976 = vmatpush.bf16.msra.mxu0 0
      %4977 = vmatpush.bf16.msra.mxu0 0
      %4978 = vmatpush.bf16.msra.mxu0 0
      %4979 = vmatpush.bf16.msra.mxu0 0
      %4980 = vmatpush.bf16.msra.mxu0 0
      %4981 = vmatpush.bf16.msra.mxu0 %v4969
      %4982 = vmatmul.bf16.gmra.mxu0 %v4972
      %v4983 = vpop.f32.mrf.mxu0
      %v4984 = vadd.f32 0.0, %v4983
      %v4985 = vpop.f32.mrf.mxu0
      %v4986 = vadd.f32 0.0, %v4985
      %4987 = vdwg.mxu0
      %v4990 = vunpack.c.l.b16 %v4936
      %v4991 = vunpack.c.l.b16 %v4937
      %v4992 = vpack.c.b16 %v4991, %v4990
      %4993 = vrot.lane.b32.xlu0 %v4085, 32
      %v4994 = vpop.permute.xlu0 %4993
      %v4997 = vsel %vm1021, %v4992, 0
      %4999 = vmatpush.bf16.msra.mxu0 0
      %5000 = vmatpush.bf16.msra.mxu0 0
      %5001 = vmatpush.bf16.msra.mxu0 0
      %5002 = vmatpush.bf16.msra.mxu0 0
      %5003 = vmatpush.bf16.msra.mxu0 0
      %5004 = vmatpush.bf16.msra.mxu0 0
      %5005 = vmatpush.bf16.msra.mxu0 0
      %5006 = vmatpush.bf16.msra.mxu0 %v4994
      %5007 = vmatmul.bf16.gmra.mxu0 %v4997
      %v5008 = vpop.f32.mrf.mxu0
      %v5009 = vadd.f32 0.0, %v5008
      %v5010 = vpop.f32.mrf.mxu0
      %v5011 = vadd.f32 0.0, %v5010
      %5012 = vdwg.mxu0
      %5019 = vrot.lane.b32.xlu0 %v4353, 32
      %v5020 = vpop.permute.xlu0 %5019
      %5021 = vrot.lane.b32.xlu0 %v4355, 32
      %v5022 = vpop.permute.xlu0 %5021
      %5023 = vrot.lane.b32.xlu0 %v4378, 32
      %v5024 = vpop.permute.xlu0 %5023
      %5025 = vrot.lane.b32.xlu0 %v4380, 32
      %v5026 = vpop.permute.xlu0 %5025
      %5027 = vrot.lane.b32.xlu0 %v4403, 32
      %v5028 = vpop.permute.xlu0 %5027
      %5029 = vrot.lane.b32.xlu0 %v4405, 32
      %v5030 = vpop.permute.xlu0 %5029
      %5043 = vrot.lane.b32.xlu0 %v4656, 64
      %v5044 = vpop.permute.xlu0 %5043
      %5045 = vrot.lane.b32.xlu0 %v4658, 64
      %v5046 = vpop.permute.xlu0 %5045
      %5047 = vrot.lane.b32.xlu0 %v4681, 64
      %v5048 = vpop.permute.xlu0 %5047
      %5049 = vrot.lane.b32.xlu0 %v4683, 64
      %v5050 = vpop.permute.xlu0 %5049
      %5051 = vrot.lane.b32.xlu0 %v4706, 64
      %v5052 = vpop.permute.xlu0 %5051
      %5053 = vrot.lane.b32.xlu0 %v4708, 64
      %v5054 = vpop.permute.xlu0 %5053
      %5067 = vrot.lane.b32.xlu0 %v4959, 96
      %v5068 = vpop.permute.xlu0 %5067
      %5069 = vrot.lane.b32.xlu0 %v4961, 96
      %v5070 = vpop.permute.xlu0 %5069
      %5071 = vrot.lane.b32.xlu0 %v4984, 96
      %v5072 = vpop.permute.xlu0 %5071
      %5073 = vrot.lane.b32.xlu0 %v4986, 96
      %v5074 = vpop.permute.xlu0 %5073
      %5075 = vrot.lane.b32.xlu0 %v5009, 96
      %v5076 = vpop.permute.xlu0 %5075
      %5077 = vrot.lane.b32.xlu0 %v5011, 96
      %v5078 = vpop.permute.xlu0 %5077
      %v5085 = vsel %vm934, %v4044, %v5020
      %v5086 = vsel %vm934, %v4046, %v5022
      %v5087 = vsel %vm934, %v4072, %v5024
      %v5088 = vsel %vm934, %v4074, %v5026
      %v5089 = vsel %vm934, %v4100, %v5028
      %v5090 = vsel %vm934, %v4102, %v5030
      %v5091 = vsel %vm2243, %v5085, %v5044
      %v5092 = vsel %vm2243, %v5086, %v5046
      %v5093 = vsel %vm2243, %v5087, %v5048
      %v5094 = vsel %vm2243, %v5088, %v5050
      %v5095 = vsel %vm2243, %v5089, %v5052
      %v5096 = vsel %vm2243, %v5090, %v5054
      %v5097 = vsel %vm2250, %v5091, %v5068
      %v5098 = vsel %vm2250, %v5092, %v5070
      %v5099 = vsel %vm2250, %v5093, %v5072
      %v5100 = vsel %vm2250, %v5094, %v5074
      %v5101 = vsel %vm2250, %v5095, %v5076
      %v5102 = vsel %vm2250, %v5096, %v5078
      %v5103 = vld [vmem:[%s3512 + $0xc] sm:$0xf]
      %v5104 = vld [vmem:[%s3512 + $0x24] sm:$0xf]
      %v5105 = vld [vmem:[%s3512 + $0x3c] sm:$0xf]
      %v5106 = vld [vmem:[%s3512 + $0x54] sm:$0xf]
      %v5107 = vld [vmem:[%s3512 + $0x6c] sm:$0xf]
      %v5108 = vld [vmem:[%s3512 + $0x84] sm:$0xf]
      %v5109 = vld [vmem:[%s3512 + $0x9c] sm:$0xf]
      %v5110 = vld [vmem:[%s3512 + $0xb4] sm:$0xf]
      %v5111 = vld [vmem:[%s3512 + $0xcc] sm:$0xf]
      %v5112 = vld [vmem:[%s3512 + $0xe4] sm:$0xf]
      %v5113 = vld [vmem:[%s3512 + $0xfc] sm:$0xf]
      %v5114 = vld [vmem:[%s3512 + $0x114] sm:$0xf]
      %v5115 = vld [vmem:[%s3512 + $0x12c] sm:$0xf]
      %v5116 = vld [vmem:[%s3512 + $0x144] sm:$0xf]
      %v5117 = vld [vmem:[%s3512 + $0x15c] sm:$0xf]
      %v5118 = vld [vmem:[%s3512 + $0x174] sm:$0xf]
      %v5119 = vld [vmem:[%s3371 + $0x5] sm:$0x1]
      %v5120 = vpack.c.bf16 %v5098, %v5097
      %v5121 = vpack.c.bf16 %v5100, %v5099
      %v5122 = vpack.c.bf16 %v5102, %v5101
      %v5124 = vperm.slane %v5119, 0
      %v5142 = vunpack.c.l.b16 %v5103
      %v5143 = vunpack.c.l.b16 %v5104
      %v5144 = vunpack.c.l.b16 %v5105
      %v5145 = vunpack.c.l.b16 %v5106
      %v5146 = vunpack.c.l.b16 %v5107
      %v5147 = vunpack.c.l.b16 %v5108
      %v5148 = vunpack.c.l.b16 %v5109
      %v5149 = vunpack.c.l.b16 %v5110
      %v5150 = vunpack.c.l.b16 %v5111
      %v5151 = vunpack.c.l.b16 %v5112
      %v5152 = vunpack.c.l.b16 %v5113
      %v5153 = vunpack.c.l.b16 %v5114
      %v5154 = vunpack.c.l.b16 %v5115
      %v5155 = vunpack.c.l.b16 %v5116
      %v5156 = vunpack.c.l.b16 %v5117
      %v5157 = vunpack.c.l.b16 %v5118
      %v5158 = vpack.c.b16 %v5143, %v5142
      %v5159 = vpack.c.b16 %v5145, %v5144
      %v5160 = vpack.c.b16 %v5147, %v5146
      %v5161 = vpack.c.b16 %v5149, %v5148
      %v5162 = vpack.c.b16 %v5151, %v5150
      %v5163 = vpack.c.b16 %v5153, %v5152
      %v5164 = vpack.c.b16 %v5155, %v5154
      %v5165 = vpack.c.b16 %v5157, %v5156
      %5174 = vmatpush.bf16.msra.mxu0 %v5165
      %5175 = vmatpush.bf16.msra.mxu0 %v5164
      %5176 = vmatpush.bf16.msra.mxu0 %v5163
      %5177 = vmatpush.bf16.msra.mxu0 %v5162
      %5178 = vmatpush.bf16.msra.mxu0 %v5161
      %5179 = vmatpush.bf16.msra.mxu0 %v5160
      %5180 = vmatpush.bf16.msra.mxu0 %v5159
      %5181 = vmatpush.bf16.msra.mxu0 %v5158
      %5182 = vmatmul.bf16.gmra.mxu0 %v5120
      %v5183 = vpop.f32.mrf.mxu0
      %v5184 = vadd.f32 %v5124, %v5183
      %v5185 = vpop.f32.mrf.mxu0
      %v5186 = vadd.f32 %v5124, %v5185
      %5187 = vmatmul.bf16.gmra.mxu0 %v5121
      %v5188 = vpop.f32.mrf.mxu0
      %v5189 = vadd.f32 %v5124, %v5188
      %v5190 = vpop.f32.mrf.mxu0
      %v5191 = vadd.f32 %v5124, %v5190
      %5192 = vmatmul.bf16.gmra.mxu0 %v5122
      %v5193 = vpop.f32.mrf.mxu0
      %v5194 = vadd.f32 %v5124, %v5193
      %v5195 = vpop.f32.mrf.mxu0
      %v5196 = vadd.f32 %v5124, %v5195
      %5197 = vdwg.mxu0
      %v5198 = vadd.f32 %v3365, %v5184
      %v5199 = vadd.f32 %v3366, %v5186
      %v5200 = vadd.f32 %v3367, %v5189
      %v5201 = vadd.f32 %v3368, %v5191
      %v5202 = vadd.f32 %v3369, %v5194
      %v5203 = vadd.f32 %v3370, %v5196
      %v5204 = vld [vmem:[%s3371 + $0x6] sm:$0x1]
      %v5205 = vld [vmem:[%s3371 + $0x7] sm:$0x1]
      %5206 = vadd.xlane.f32.xlu0 %v5198
      %v5207 = vpop.xlane.xlu0 %5206
      %5208 = vadd.xlane.f32.xlu0 %v5199
      %v5209 = vpop.xlane.xlu0 %5208
      %5210 = vadd.xlane.f32.xlu0 %v5200
      %v5211 = vpop.xlane.xlu0 %5210
      %5212 = vadd.xlane.f32.xlu0 %v5201
      %v5213 = vpop.xlane.xlu0 %5212
      %5214 = vadd.xlane.f32.xlu0 %v5202
      %v5215 = vpop.xlane.xlu0 %5214
      %5216 = vadd.xlane.f32.xlu0 %v5203
      %v5217 = vpop.xlane.xlu0 %5216
      %v5218 = vmul.f32 %v5207, %v536
      %v5219 = vmul.f32 %v5209, %v536
      %v5220 = vmul.f32 %v5211, %v536
      %v5221 = vmul.f32 %v5213, %v536
      %v5222 = vmul.f32 %v5215, %v536
      %v5223 = vmul.f32 %v5217, %v536
      %v5224 = vsub.f32 %v5198, %v5218
      %v5225 = vsub.f32 %v5199, %v5219
      %v5226 = vsub.f32 %v5200, %v5220
      %v5227 = vsub.f32 %v5201, %v5221
      %v5228 = vsub.f32 %v5202, %v5222
      %v5229 = vsub.f32 %v5203, %v5223
      %v5230 = vmul.f32 %v5224, %v5224
      %v5231 = vmul.f32 %v5225, %v5225
      %v5232 = vmul.f32 %v5226, %v5226
      %v5233 = vmul.f32 %v5227, %v5227
      %v5234 = vmul.f32 %v5228, %v5228
      %v5235 = vmul.f32 %v5229, %v5229
      %5236 = vadd.xlane.f32.xlu0 %v5230
      %v5237 = vpop.xlane.xlu0 %5236
      %5238 = vadd.xlane.f32.xlu0 %v5231
      %v5239 = vpop.xlane.xlu0 %5238
      %5240 = vadd.xlane.f32.xlu0 %v5232
      %v5241 = vpop.xlane.xlu0 %5240
      %5242 = vadd.xlane.f32.xlu0 %v5233
      %v5243 = vpop.xlane.xlu0 %5242
      %5244 = vadd.xlane.f32.xlu0 %v5234
      %v5245 = vpop.xlane.xlu0 %5244
      %5246 = vadd.xlane.f32.xlu0 %v5235
      %v5247 = vpop.xlane.xlu0 %5246
      %v5248 = vmul.f32 %v5237, %v536
      %v5249 = vmul.f32 %v5239, %v536
      %v5250 = vmul.f32 %v5241, %v536
      %v5251 = vmul.f32 %v5243, %v536
      %v5252 = vmul.f32 %v5245, %v536
      %v5253 = vmul.f32 %v5247, %v536
      %v5254 = vadd.f32 %v5248, 1e-06
      %v5255 = vadd.f32 %v5249, 1e-06
      %v5256 = vadd.f32 %v5250, 1e-06
      %v5257 = vadd.f32 %v5251, 1e-06
      %v5258 = vadd.f32 %v5252, 1e-06
      %v5259 = vadd.f32 %v5253, 1e-06
      %v5260 = vrsqrt.pop %v5254
      %v5261 = vmul.f32 %v5260, %v5254
      %v5262 = vmul.f32 %v5261, %v5260
      %v5263 = vmul.f32 0.5, %v5262
      %v5264 = vsub.f32 1.5, %v5263
      %v5265 = vmul.f32 %v5260, %v5264
      %vm5266 = vweird.f32 %v5254
      %vm5267 = vweird.f32 %v5260
      %vm5268 = vmor %vm5266, %vm5267
      %v5269 = vsel %vm5268, %v5260, %v5265
      %v5270 = vrsqrt.pop %v5255
      %v5271 = vmul.f32 %v5270, %v5255
      %v5272 = vmul.f32 %v5271, %v5270
      %v5273 = vmul.f32 0.5, %v5272
      %v5274 = vsub.f32 1.5, %v5273
      %v5275 = vmul.f32 %v5270, %v5274
      %vm5276 = vweird.f32 %v5255
      %vm5277 = vweird.f32 %v5270
      %vm5278 = vmor %vm5276, %vm5277
      %v5279 = vsel %vm5278, %v5270, %v5275
      %v5280 = vrsqrt.pop %v5256
      %v5281 = vmul.f32 %v5280, %v5256
      %v5282 = vmul.f32 %v5281, %v5280
      %v5283 = vmul.f32 0.5, %v5282
      %v5284 = vsub.f32 1.5, %v5283
      %v5285 = vmul.f32 %v5280, %v5284
      %vm5286 = vweird.f32 %v5256
      %vm5287 = vweird.f32 %v5280
      %vm5288 = vmor %vm5286, %vm5287
      %v5289 = vsel %vm5288, %v5280, %v5285
      %v5290 = vrsqrt.pop %v5257
      %v5291 = vmul.f32 %v5290, %v5257
      %v5292 = vmul.f32 %v5291, %v5290
      %v5293 = vmul.f32 0.5, %v5292
      %v5294 = vsub.f32 1.5, %v5293
      %v5295 = vmul.f32 %v5290, %v5294
      %vm5296 = vweird.f32 %v5257
      %vm5297 = vweird.f32 %v5290
      %vm5298 = vmor %vm5296, %vm5297
      %v5299 = vsel %vm5298, %v5290, %v5295
      %v5300 = vrsqrt.pop %v5258
      %v5301 = vmul.f32 %v5300, %v5258
      %v5302 = vmul.f32 %v5301, %v5300
      %v5303 = vmul.f32 0.5, %v5302
      %v5304 = vsub.f32 1.5, %v5303
      %v5305 = vmul.f32 %v5300, %v5304
      %vm5306 = vweird.f32 %v5258
      %vm5307 = vweird.f32 %v5300
      %vm5308 = vmor %vm5306, %vm5307
      %v5309 = vsel %vm5308, %v5300, %v5305
      %v5310 = vrsqrt.pop %v5259
      %v5311 = vmul.f32 %v5310, %v5259
      %v5312 = vmul.f32 %v5311, %v5310
      %v5313 = vmul.f32 0.5, %v5312
      %v5314 = vsub.f32 1.5, %v5313
      %v5315 = vmul.f32 %v5310, %v5314
      %vm5316 = vweird.f32 %v5259
      %vm5317 = vweird.f32 %v5310
      %vm5318 = vmor %vm5316, %vm5317
      %v5319 = vsel %vm5318, %v5310, %v5315
      %v5320 = vmul.f32 %v5224, %v5269
      %v5321 = vmul.f32 %v5225, %v5279
      %v5322 = vmul.f32 %v5226, %v5289
      %v5323 = vmul.f32 %v5227, %v5299
      %v5324 = vmul.f32 %v5228, %v5309
      %v5325 = vmul.f32 %v5229, %v5319
      %v5327 = vperm.slane %v5204, 0
      %v5329 = vmul.f32 %v5320, %v5327
      %v5330 = vmul.f32 %v5321, %v5327
      %v5331 = vmul.f32 %v5322, %v5327
      %v5332 = vmul.f32 %v5323, %v5327
      %v5333 = vmul.f32 %v5324, %v5327
      %v5334 = vmul.f32 %v5325, %v5327
      %v5336 = vperm.slane %v5205, 0
      %v5338 = vadd.f32 %v5329, %v5336
      %v5339 = vadd.f32 %v5330, %v5336
      %v5340 = vadd.f32 %v5331, %v5336
      %v5341 = vadd.f32 %v5332, %v5336
      %v5342 = vadd.f32 %v5333, %v5336
      %v5343 = vadd.f32 %v5334, %v5336
      %v5344 = vld [vmem:[%s3512 + $0x10] sm:$0xff]
      %v5345 = vld [vmem:[%s3512 + $0x28] sm:$0xff]
      %v5346 = vld [vmem:[%s3512 + $0x40] sm:$0xff]
      %v5347 = vld [vmem:[%s3512 + $0x58] sm:$0xff]
      %v5348 = vld [vmem:[%s3512 + $0x70] sm:$0xff]
      %v5349 = vld [vmem:[%s3512 + $0x88] sm:$0xff]
      %v5350 = vld [vmem:[%s3512 + $0xa0] sm:$0xff]
      %v5351 = vld [vmem:[%s3512 + $0xb8] sm:$0xff]
      %v5352 = vld [vmem:[%s3512 + $0xd0] sm:$0xff]
      %v5353 = vld [vmem:[%s3512 + $0xe8] sm:$0xff]
      %v5354 = vld [vmem:[%s3512 + $0x100] sm:$0xff]
      %v5355 = vld [vmem:[%s3512 + $0x118] sm:$0xff]
      %v5356 = vld [vmem:[%s3512 + $0x130] sm:$0xff]
      %v5357 = vld [vmem:[%s3512 + $0x148] sm:$0xff]
      %v5358 = vld [vmem:[%s3512 + $0x160] sm:$0xff]
      %v5359 = vld [vmem:[%s3512 + $0x178] sm:$0xff]
      %v5360 = vld [vmem:[%s3371 + $0x8] sm:$0x3]
      %v5361 = vpack.c.bf16 %v5339, %v5338
      %v5362 = vpack.c.bf16 %v5341, %v5340
      %v5363 = vpack.c.bf16 %v5343, %v5342
      %v5365 = vperm.slane %v5360, 0
      %v5366 = vperm.slane %v5360, 1
      %v5385 = vunpack.c.l.b16 %v5344
      %v5386 = vunpack.c.h.b16 %v5344
      %v5387 = vunpack.c.l.b16 %v5345
      %v5388 = vunpack.c.h.b16 %v5345
      %v5389 = vunpack.c.l.b16 %v5346
      %v5390 = vunpack.c.h.b16 %v5346
      %v5391 = vunpack.c.l.b16 %v5347
      %v5392 = vunpack.c.h.b16 %v5347
      %v5393 = vunpack.c.l.b16 %v5348
      %v5394 = vunpack.c.h.b16 %v5348
      %v5395 = vunpack.c.l.b16 %v5349
      %v5396 = vunpack.c.h.b16 %v5349
      %v5397 = vunpack.c.l.b16 %v5350
      %v5398 = vunpack.c.h.b16 %v5350
      %v5399 = vunpack.c.l.b16 %v5351
      %v5400 = vunpack.c.h.b16 %v5351
      %v5401 = vunpack.c.l.b16 %v5352
      %v5402 = vunpack.c.h.b16 %v5352
      %v5403 = vunpack.c.l.b16 %v5353
      %v5404 = vunpack.c.h.b16 %v5353
      %v5405 = vunpack.c.l.b16 %v5354
      %v5406 = vunpack.c.h.b16 %v5354
      %v5407 = vunpack.c.l.b16 %v5355
      %v5408 = vunpack.c.h.b16 %v5355
      %v5409 = vunpack.c.l.b16 %v5356
      %v5410 = vunpack.c.h.b16 %v5356
      %v5411 = vunpack.c.l.b16 %v5357
      %v5412 = vunpack.c.h.b16 %v5357
      %v5413 = vunpack.c.l.b16 %v5358
      %v5414 = vunpack.c.h.b16 %v5358
      %v5415 = vunpack.c.l.b16 %v5359
      %v5416 = vunpack.c.h.b16 %v5359
      %v5417 = vpack.c.b16 %v5387, %v5385
      %v5418 = vpack.c.b16 %v5388, %v5386
      %v5419 = vpack.c.b16 %v5391, %v5389
      %v5420 = vpack.c.b16 %v5392, %v5390
      %v5421 = vpack.c.b16 %v5395, %v5393
      %v5422 = vpack.c.b16 %v5396, %v5394
      %v5423 = vpack.c.b16 %v5399, %v5397
      %v5424 = vpack.c.b16 %v5400, %v5398
      %v5425 = vpack.c.b16 %v5403, %v5401
      %v5426 = vpack.c.b16 %v5404, %v5402
      %v5427 = vpack.c.b16 %v5407, %v5405
      %v5428 = vpack.c.b16 %v5408, %v5406
      %v5429 = vpack.c.b16 %v5411, %v5409
      %v5430 = vpack.c.b16 %v5412, %v5410
      %v5431 = vpack.c.b16 %v5415, %v5413
      %v5432 = vpack.c.b16 %v5416, %v5414
      %5449 = vmatpush.bf16.msra.mxu0 %v5431
      %5450 = vmatpush.bf16.msra.mxu0 %v5429
      %5451 = vmatpush.bf16.msra.mxu0 %v5427
      %5452 = vmatpush.bf16.msra.mxu0 %v5425
      %5453 = vmatpush.bf16.msra.mxu0 %v5423
      %5454 = vmatpush.bf16.msra.mxu0 %v5421
      %5455 = vmatpush.bf16.msra.mxu0 %v5419
      %5456 = vmatpush.bf16.msra.mxu0 %v5417
      %5457 = vmatmul.bf16.gmra.mxu0 %v5361
      %v5458 = vpop.f32.mrf.mxu0
      %v5459 = vadd.f32 %v5365, %v5458
      %v5460 = vpop.f32.mrf.mxu0
      %v5461 = vadd.f32 %v5365, %v5460
      %5462 = vmatmul.bf16.gmra.mxu0 %v5362
      %v5463 = vpop.f32.mrf.mxu0
      %v5464 = vadd.f32 %v5365, %v5463
      %v5465 = vpop.f32.mrf.mxu0
      %v5466 = vadd.f32 %v5365, %v5465
      %5467 = vmatmul.bf16.gmra.mxu0 %v5363
      %v5468 = vpop.f32.mrf.mxu0
      %v5469 = vadd.f32 %v5365, %v5468
      %v5470 = vpop.f32.mrf.mxu0
      %v5471 = vadd.f32 %v5365, %v5470
      %5472 = vdwg.mxu0
      %5473 = vmatpush.bf16.msra.mxu0 %v5432
      %5474 = vmatpush.bf16.msra.mxu0 %v5430
      %5475 = vmatpush.bf16.msra.mxu0 %v5428
      %5476 = vmatpush.bf16.msra.mxu0 %v5426
      %5477 = vmatpush.bf16.msra.mxu0 %v5424
      %5478 = vmatpush.bf16.msra.mxu0 %v5422
      %5479 = vmatpush.bf16.msra.mxu0 %v5420
      %5480 = vmatpush.bf16.msra.mxu0 %v5418
      %5481 = vmatmul.bf16.gmra.mxu0 %v5361
      %v5482 = vpop.f32.mrf.mxu0
      %v5483 = vadd.f32 %v5366, %v5482
      %v5484 = vpop.f32.mrf.mxu0
      %v5485 = vadd.f32 %v5366, %v5484
      %5486 = vmatmul.bf16.gmra.mxu0 %v5362
      %v5487 = vpop.f32.mrf.mxu0
      %v5488 = vadd.f32 %v5366, %v5487
      %v5489 = vpop.f32.mrf.mxu0
      %v5490 = vadd.f32 %v5366, %v5489
      %5491 = vmatmul.bf16.gmra.mxu0 %v5363
      %v5492 = vpop.f32.mrf.mxu0
      %v5493 = vadd.f32 %v5366, %v5492
      %v5494 = vpop.f32.mrf.mxu0
      %v5495 = vadd.f32 %v5366, %v5494
      %5496 = vdwg.mxu0
      %v5497 = vmul.f32 %v5459, 0.5
      %v5498 = vmul.f32 %v5483, 0.5
      %v5499 = vmul.f32 %v5461, 0.5
      %v5500 = vmul.f32 %v5485, 0.5
      %v5501 = vmul.f32 %v5464, 0.5
      %v5502 = vmul.f32 %v5488, 0.5
      %v5503 = vmul.f32 %v5466, 0.5
      %v5504 = vmul.f32 %v5490, 0.5
      %v5505 = vmul.f32 %v5469, 0.5
      %v5506 = vmul.f32 %v5493, 0.5
      %v5507 = vmul.f32 %v5471, 0.5
      %v5508 = vmul.f32 %v5495, 0.5
      %v5509 = vmul.f32 %v5459, 0.70710677
      %v5510 = vmul.f32 %v5483, 0.70710677
      %v5511 = vmul.f32 %v5461, 0.70710677
      %v5512 = vmul.f32 %v5485, 0.70710677
      %v5513 = vmul.f32 %v5464, 0.70710677
      %v5514 = vmul.f32 %v5488, 0.70710677
      %v5515 = vmul.f32 %v5466, 0.70710677
      %v5516 = vmul.f32 %v5490, 0.70710677
      %v5517 = vmul.f32 %v5469, 0.70710677
      %v5518 = vmul.f32 %v5493, 0.70710677
      %v5519 = vmul.f32 %v5471, 0.70710677
      %v5520 = vmul.f32 %v5495, 0.70710677
      %v5521 = vmul.f32 %v5509, %v5509
      %v5522 = vmin.f32 16.0, %v5521
      %v5523 = vmul.f32 %v5522, 2.1237322e-06
      %v5524 = vadd.f32 %v5523, 0.00028619796
      %v5525 = vmul.f32 %v5522, %v5524
      %v5526 = vadd.f32 %v5525, 0.0036580483
      %v5527 = vmul.f32 %v5522, %v5526
      %v5528 = vadd.f32 %v5527, 0.05243302
      %v5529 = vmul.f32 %v5522, %v5528
      %v5530 = vadd.f32 %v5529, 0.18741608
      %v5531 = vmul.f32 %v5522, %v5530
      %v5532 = vadd.f32 %v5531, 1.1283791
      %v5533 = vmul.f32 %v5509, %v5532
      %v5534 = vmul.f32 %v5522, 3.8918573e-05
      %v5535 = vadd.f32 %v5534, 0.001143296
      %v5536 = vmul.f32 %v5522, %v5535
      %v5537 = vadd.f32 %v5536, 0.014752088
      %v5538 = vmul.f32 %v5522, %v5537
      %v5539 = vadd.f32 %v5538, 0.112945676
      %v5540 = vmul.f32 %v5522, %v5539
      %v5541 = vadd.f32 %v5540, 0.4994258
      %v5542 = vmul.f32 %v5522, %v5541
      %v5543 = vadd.f32 %v5542, 1.0
      %v5544 = vrcp.pop %v5543
      %v5545 = vmul.f32 %v5543, %v5544
      %v5546 = vsub.f32 1.0, %v5545
      %v5547 = vmul.f32 %v5544, %v5546
      %v5548 = vadd.f32 %v5544, %v5547
      %vm5549 = vweird.f32 %v5543
      %vm5550 = vweird.f32 %v5544
      %vm5551 = vmor %vm5549, %vm5550
      %v5552 = vsel %vm5551, %v5544, %v5548
      %v5553 = vand.u32 2147483647, %v5543
      %vm5554 = vcmp.eq.f32.partialorder %v5553, 8.507059e+37
      %v5555 = vand.u32 %v5543, 2147483648
      %v5556 = vor.u32 1.1754944e-38, %v5555
      %v5557 = vsel %vm5554, %v5556, %v5552
      %v5558 = vmul.f32 %v5533, %v5557
      %v5559 = vmin.f32 %v5558, 1.0
      %v5560 = vmax.f32 %v5559, -1.0
      %v5561 = vmul.f32 %v5510, %v5510
      %v5562 = vmin.f32 16.0, %v5561
      %v5563 = vmul.f32 %v5562, 2.1237322e-06
      %v5564 = vadd.f32 %v5563, 0.00028619796
      %v5565 = vmul.f32 %v5562, %v5564
      %v5566 = vadd.f32 %v5565, 0.0036580483
      %v5567 = vmul.f32 %v5562, %v5566
      %v5568 = vadd.f32 %v5567, 0.05243302
      %v5569 = vmul.f32 %v5562, %v5568
      %v5570 = vadd.f32 %v5569, 0.18741608
      %v5571 = vmul.f32 %v5562, %v5570
      %v5572 = vadd.f32 %v5571, 1.1283791
      %v5573 = vmul.f32 %v5510, %v5572
      %v5574 = vmul.f32 %v5562, 3.8918573e-05
      %v5575 = vadd.f32 %v5574, 0.001143296
      %v5576 = vmul.f32 %v5562, %v5575
      %v5577 = vadd.f32 %v5576, 0.014752088
      %v5578 = vmul.f32 %v5562, %v5577
      %v5579 = vadd.f32 %v5578, 0.112945676
      %v5580 = vmul.f32 %v5562, %v5579
      %v5581 = vadd.f32 %v5580, 0.4994258
      %v5582 = vmul.f32 %v5562, %v5581
      %v5583 = vadd.f32 %v5582, 1.0
      %v5584 = vrcp.pop %v5583
      %v5585 = vmul.f32 %v5583, %v5584
      %v5586 = vsub.f32 1.0, %v5585
      %v5587 = vmul.f32 %v5584, %v5586
      %v5588 = vadd.f32 %v5584, %v5587
      %vm5589 = vweird.f32 %v5583
      %vm5590 = vweird.f32 %v5584
      %vm5591 = vmor %vm5589, %vm5590
      %v5592 = vsel %vm5591, %v5584, %v5588
      %v5593 = vand.u32 2147483647, %v5583
      %vm5594 = vcmp.eq.f32.partialorder %v5593, 8.507059e+37
      %v5595 = vand.u32 %v5583, 2147483648
      %v5596 = vor.u32 1.1754944e-38, %v5595
      %v5597 = vsel %vm5594, %v5596, %v5592
      %v5598 = vmul.f32 %v5573, %v5597
      %v5599 = vmin.f32 %v5598, 1.0
      %v5600 = vmax.f32 %v5599, -1.0
      %v5601 = vmul.f32 %v5511, %v5511
      %v5602 = vmin.f32 16.0, %v5601
      %v5603 = vmul.f32 %v5602, 2.1237322e-06
      %v5604 = vadd.f32 %v5603, 0.00028619796
      %v5605 = vmul.f32 %v5602, %v5604
      %v5606 = vadd.f32 %v5605, 0.0036580483
      %v5607 = vmul.f32 %v5602, %v5606
      %v5608 = vadd.f32 %v5607, 0.05243302
      %v5609 = vmul.f32 %v5602, %v5608
      %v5610 = vadd.f32 %v5609, 0.18741608
      %v5611 = vmul.f32 %v5602, %v5610
      %v5612 = vadd.f32 %v5611, 1.1283791
      %v5613 = vmul.f32 %v5511, %v5612
      %v5614 = vmul.f32 %v5602, 3.8918573e-05
      %v5615 = vadd.f32 %v5614, 0.001143296
      %v5616 = vmul.f32 %v5602, %v5615
      %v5617 = vadd.f32 %v5616, 0.014752088
      %v5618 = vmul.f32 %v5602, %v5617
      %v5619 = vadd.f32 %v5618, 0.112945676
      %v5620 = vmul.f32 %v5602, %v5619
      %v5621 = vadd.f32 %v5620, 0.4994258
      %v5622 = vmul.f32 %v5602, %v5621
      %v5623 = vadd.f32 %v5622, 1.0
      %v5624 = vrcp.pop %v5623
      %v5625 = vmul.f32 %v5623, %v5624
      %v5626 = vsub.f32 1.0, %v5625
      %v5627 = vmul.f32 %v5624, %v5626
      %v5628 = vadd.f32 %v5624, %v5627
      %vm5629 = vweird.f32 %v5623
      %vm5630 = vweird.f32 %v5624
      %vm5631 = vmor %vm5629, %vm5630
      %v5632 = vsel %vm5631, %v5624, %v5628
      %v5633 = vand.u32 2147483647, %v5623
      %vm5634 = vcmp.eq.f32.partialorder %v5633, 8.507059e+37
      %v5635 = vand.u32 %v5623, 2147483648
      %v5636 = vor.u32 1.1754944e-38, %v5635
      %v5637 = vsel %vm5634, %v5636, %v5632
      %v5638 = vmul.f32 %v5613, %v5637
      %v5639 = vmin.f32 %v5638, 1.0
      %v5640 = vmax.f32 %v5639, -1.0
      %v5641 = vmul.f32 %v5512, %v5512
      %v5642 = vmin.f32 16.0, %v5641
      %v5643 = vmul.f32 %v5642, 2.1237322e-06
      %v5644 = vadd.f32 %v5643, 0.00028619796
      %v5645 = vmul.f32 %v5642, %v5644
      %v5646 = vadd.f32 %v5645, 0.0036580483
      %v5647 = vmul.f32 %v5642, %v5646
      %v5648 = vadd.f32 %v5647, 0.05243302
      %v5649 = vmul.f32 %v5642, %v5648
      %v5650 = vadd.f32 %v5649, 0.18741608
      %v5651 = vmul.f32 %v5642, %v5650
      %v5652 = vadd.f32 %v5651, 1.1283791
      %v5653 = vmul.f32 %v5512, %v5652
      %v5654 = vmul.f32 %v5642, 3.8918573e-05
      %v5655 = vadd.f32 %v5654, 0.001143296
      %v5656 = vmul.f32 %v5642, %v5655
      %v5657 = vadd.f32 %v5656, 0.014752088
      %v5658 = vmul.f32 %v5642, %v5657
      %v5659 = vadd.f32 %v5658, 0.112945676
      %v5660 = vmul.f32 %v5642, %v5659
      %v5661 = vadd.f32 %v5660, 0.4994258
      %v5662 = vmul.f32 %v5642, %v5661
      %v5663 = vadd.f32 %v5662, 1.0
      %v5664 = vrcp.pop %v5663
      %v5665 = vmul.f32 %v5663, %v5664
      %v5666 = vsub.f32 1.0, %v5665
      %v5667 = vmul.f32 %v5664, %v5666
      %v5668 = vadd.f32 %v5664, %v5667
      %vm5669 = vweird.f32 %v5663
      %vm5670 = vweird.f32 %v5664
      %vm5671 = vmor %vm5669, %vm5670
      %v5672 = vsel %vm5671, %v5664, %v5668
      %v5673 = vand.u32 2147483647, %v5663
      %vm5674 = vcmp.eq.f32.partialorder %v5673, 8.507059e+37
      %v5675 = vand.u32 %v5663, 2147483648
      %v5676 = vor.u32 1.1754944e-38, %v5675
      %v5677 = vsel %vm5674, %v5676, %v5672
      %v5678 = vmul.f32 %v5653, %v5677
      %v5679 = vmin.f32 %v5678, 1.0
      %v5680 = vmax.f32 %v5679, -1.0
      %v5681 = vmul.f32 %v5513, %v5513
      %v5682 = vmin.f32 16.0, %v5681
      %v5683 = vmul.f32 %v5682, 2.1237322e-06
      %v5684 = vadd.f32 %v5683, 0.00028619796
      %v5685 = vmul.f32 %v5682, %v5684
      %v5686 = vadd.f32 %v5685, 0.0036580483
      %v5687 = vmul.f32 %v5682, %v5686
      %v5688 = vadd.f32 %v5687, 0.05243302
      %v5689 = vmul.f32 %v5682, %v5688
      %v5690 = vadd.f32 %v5689, 0.18741608
      %v5691 = vmul.f32 %v5682, %v5690
      %v5692 = vadd.f32 %v5691, 1.1283791
      %v5693 = vmul.f32 %v5513, %v5692
      %v5694 = vmul.f32 %v5682, 3.8918573e-05
      %v5695 = vadd.f32 %v5694, 0.001143296
      %v5696 = vmul.f32 %v5682, %v5695
      %v5697 = vadd.f32 %v5696, 0.014752088
      %v5698 = vmul.f32 %v5682, %v5697
      %v5699 = vadd.f32 %v5698, 0.112945676
      %v5700 = vmul.f32 %v5682, %v5699
      %v5701 = vadd.f32 %v5700, 0.4994258
      %v5702 = vmul.f32 %v5682, %v5701
      %v5703 = vadd.f32 %v5702, 1.0
      %v5704 = vrcp.pop %v5703
      %v5705 = vmul.f32 %v5703, %v5704
      %v5706 = vsub.f32 1.0, %v5705
      %v5707 = vmul.f32 %v5704, %v5706
      %v5708 = vadd.f32 %v5704, %v5707
      %vm5709 = vweird.f32 %v5703
      %vm5710 = vweird.f32 %v5704
      %vm5711 = vmor %vm5709, %vm5710
      %v5712 = vsel %vm5711, %v5704, %v5708
      %v5713 = vand.u32 2147483647, %v5703
      %vm5714 = vcmp.eq.f32.partialorder %v5713, 8.507059e+37
      %v5715 = vand.u32 %v5703, 2147483648
      %v5716 = vor.u32 1.1754944e-38, %v5715
      %v5717 = vsel %vm5714, %v5716, %v5712
      %v5718 = vmul.f32 %v5693, %v5717
      %v5719 = vmin.f32 %v5718, 1.0
      %v5720 = vmax.f32 %v5719, -1.0
      %v5721 = vmul.f32 %v5514, %v5514
      %v5722 = vmin.f32 16.0, %v5721
      %v5723 = vmul.f32 %v5722, 2.1237322e-06
      %v5724 = vadd.f32 %v5723, 0.00028619796
      %v5725 = vmul.f32 %v5722, %v5724
      %v5726 = vadd.f32 %v5725, 0.0036580483
      %v5727 = vmul.f32 %v5722, %v5726
      %v5728 = vadd.f32 %v5727, 0.05243302
      %v5729 = vmul.f32 %v5722, %v5728
      %v5730 = vadd.f32 %v5729, 0.18741608
      %v5731 = vmul.f32 %v5722, %v5730
      %v5732 = vadd.f32 %v5731, 1.1283791
      %v5733 = vmul.f32 %v5514, %v5732
      %v5734 = vmul.f32 %v5722, 3.8918573e-05
      %v5735 = vadd.f32 %v5734, 0.001143296
      %v5736 = vmul.f32 %v5722, %v5735
      %v5737 = vadd.f32 %v5736, 0.014752088
      %v5738 = vmul.f32 %v5722, %v5737
      %v5739 = vadd.f32 %v5738, 0.112945676
      %v5740 = vmul.f32 %v5722, %v5739
      %v5741 = vadd.f32 %v5740, 0.4994258
      %v5742 = vmul.f32 %v5722, %v5741
      %v5743 = vadd.f32 %v5742, 1.0
      %v5744 = vrcp.pop %v5743
      %v5745 = vmul.f32 %v5743, %v5744
      %v5746 = vsub.f32 1.0, %v5745
      %v5747 = vmul.f32 %v5744, %v5746
      %v5748 = vadd.f32 %v5744, %v5747
      %vm5749 = vweird.f32 %v5743
      %vm5750 = vweird.f32 %v5744
      %vm5751 = vmor %vm5749, %vm5750
      %v5752 = vsel %vm5751, %v5744, %v5748
      %v5753 = vand.u32 2147483647, %v5743
      %vm5754 = vcmp.eq.f32.partialorder %v5753, 8.507059e+37
      %v5755 = vand.u32 %v5743, 2147483648
      %v5756 = vor.u32 1.1754944e-38, %v5755
      %v5757 = vsel %vm5754, %v5756, %v5752
      %v5758 = vmul.f32 %v5733, %v5757
      %v5759 = vmin.f32 %v5758, 1.0
      %v5760 = vmax.f32 %v5759, -1.0
      %v5761 = vmul.f32 %v5515, %v5515
      %v5762 = vmin.f32 16.0, %v5761
      %v5763 = vmul.f32 %v5762, 2.1237322e-06
      %v5764 = vadd.f32 %v5763, 0.00028619796
      %v5765 = vmul.f32 %v5762, %v5764
      %v5766 = vadd.f32 %v5765, 0.0036580483
      %v5767 = vmul.f32 %v5762, %v5766
      %v5768 = vadd.f32 %v5767, 0.05243302
      %v5769 = vmul.f32 %v5762, %v5768
      %v5770 = vadd.f32 %v5769, 0.18741608
      %v5771 = vmul.f32 %v5762, %v5770
      %v5772 = vadd.f32 %v5771, 1.1283791
      %v5773 = vmul.f32 %v5515, %v5772
      %v5774 = vmul.f32 %v5762, 3.8918573e-05
      %v5775 = vadd.f32 %v5774, 0.001143296
      %v5776 = vmul.f32 %v5762, %v5775
      %v5777 = vadd.f32 %v5776, 0.014752088
      %v5778 = vmul.f32 %v5762, %v5777
      %v5779 = vadd.f32 %v5778, 0.112945676
      %v5780 = vmul.f32 %v5762, %v5779
      %v5781 = vadd.f32 %v5780, 0.4994258
      %v5782 = vmul.f32 %v5762, %v5781
      %v5783 = vadd.f32 %v5782, 1.0
      %v5784 = vrcp.pop %v5783
      %v5785 = vmul.f32 %v5783, %v5784
      %v5786 = vsub.f32 1.0, %v5785
      %v5787 = vmul.f32 %v5784, %v5786
      %v5788 = vadd.f32 %v5784, %v5787
      %vm5789 = vweird.f32 %v5783
      %vm5790 = vweird.f32 %v5784
      %vm5791 = vmor %vm5789, %vm5790
      %v5792 = vsel %vm5791, %v5784, %v5788
      %v5793 = vand.u32 2147483647, %v5783
      %vm5794 = vcmp.eq.f32.partialorder %v5793, 8.507059e+37
      %v5795 = vand.u32 %v5783, 2147483648
      %v5796 = vor.u32 1.1754944e-38, %v5795
      %v5797 = vsel %vm5794, %v5796, %v5792
      %v5798 = vmul.f32 %v5773, %v5797
      %v5799 = vmin.f32 %v5798, 1.0
      %v5800 = vmax.f32 %v5799, -1.0
      %v5801 = vmul.f32 %v5516, %v5516
      %v5802 = vmin.f32 16.0, %v5801
      %v5803 = vmul.f32 %v5802, 2.1237322e-06
      %v5804 = vadd.f32 %v5803, 0.00028619796
      %v5805 = vmul.f32 %v5802, %v5804
      %v5806 = vadd.f32 %v5805, 0.0036580483
      %v5807 = vmul.f32 %v5802, %v5806
      %v5808 = vadd.f32 %v5807, 0.05243302
      %v5809 = vmul.f32 %v5802, %v5808
      %v5810 = vadd.f32 %v5809, 0.18741608
      %v5811 = vmul.f32 %v5802, %v5810
      %v5812 = vadd.f32 %v5811, 1.1283791
      %v5813 = vmul.f32 %v5516, %v5812
      %v5814 = vmul.f32 %v5802, 3.8918573e-05
      %v5815 = vadd.f32 %v5814, 0.001143296
      %v5816 = vmul.f32 %v5802, %v5815
      %v5817 = vadd.f32 %v5816, 0.014752088
      %v5818 = vmul.f32 %v5802, %v5817
      %v5819 = vadd.f32 %v5818, 0.112945676
      %v5820 = vmul.f32 %v5802, %v5819
      %v5821 = vadd.f32 %v5820, 0.4994258
      %v5822 = vmul.f32 %v5802, %v5821
      %v5823 = vadd.f32 %v5822, 1.0
      %v5824 = vrcp.pop %v5823
      %v5825 = vmul.f32 %v5823, %v5824
      %v5826 = vsub.f32 1.0, %v5825
      %v5827 = vmul.f32 %v5824, %v5826
      %v5828 = vadd.f32 %v5824, %v5827
      %vm5829 = vweird.f32 %v5823
      %vm5830 = vweird.f32 %v5824
      %vm5831 = vmor %vm5829, %vm5830
      %v5832 = vsel %vm5831, %v5824, %v5828
      %v5833 = vand.u32 2147483647, %v5823
      %vm5834 = vcmp.eq.f32.partialorder %v5833, 8.507059e+37
      %v5835 = vand.u32 %v5823, 2147483648
      %v5836 = vor.u32 1.1754944e-38, %v5835
      %v5837 = vsel %vm5834, %v5836, %v5832
      %v5838 = vmul.f32 %v5813, %v5837
      %v5839 = vmin.f32 %v5838, 1.0
      %v5840 = vmax.f32 %v5839, -1.0
      %v5841 = vmul.f32 %v5517, %v5517
      %v5842 = vmin.f32 16.0, %v5841
      %v5843 = vmul.f32 %v5842, 2.1237322e-06
      %v5844 = vadd.f32 %v5843, 0.00028619796
      %v5845 = vmul.f32 %v5842, %v5844
      %v5846 = vadd.f32 %v5845, 0.0036580483
      %v5847 = vmul.f32 %v5842, %v5846
      %v5848 = vadd.f32 %v5847, 0.05243302
      %v5849 = vmul.f32 %v5842, %v5848
      %v5850 = vadd.f32 %v5849, 0.18741608
      %v5851 = vmul.f32 %v5842, %v5850
      %v5852 = vadd.f32 %v5851, 1.1283791
      %v5853 = vmul.f32 %v5517, %v5852
      %v5854 = vmul.f32 %v5842, 3.8918573e-05
      %v5855 = vadd.f32 %v5854, 0.001143296
      %v5856 = vmul.f32 %v5842, %v5855
      %v5857 = vadd.f32 %v5856, 0.014752088
      %v5858 = vmul.f32 %v5842, %v5857
      %v5859 = vadd.f32 %v5858, 0.112945676
      %v5860 = vmul.f32 %v5842, %v5859
      %v5861 = vadd.f32 %v5860, 0.4994258
      %v5862 = vmul.f32 %v5842, %v5861
      %v5863 = vadd.f32 %v5862, 1.0
      %v5864 = vrcp.pop %v5863
      %v5865 = vmul.f32 %v5863, %v5864
      %v5866 = vsub.f32 1.0, %v5865
      %v5867 = vmul.f32 %v5864, %v5866
      %v5868 = vadd.f32 %v5864, %v5867
      %vm5869 = vweird.f32 %v5863
      %vm5870 = vweird.f32 %v5864
      %vm5871 = vmor %vm5869, %vm5870
      %v5872 = vsel %vm5871, %v5864, %v5868
      %v5873 = vand.u32 2147483647, %v5863
      %vm5874 = vcmp.eq.f32.partialorder %v5873, 8.507059e+37
      %v5875 = vand.u32 %v5863, 2147483648
      %v5876 = vor.u32 1.1754944e-38, %v5875
      %v5877 = vsel %vm5874, %v5876, %v5872
      %v5878 = vmul.f32 %v5853, %v5877
      %v5879 = vmin.f32 %v5878, 1.0
      %v5880 = vmax.f32 %v5879, -1.0
      %v5881 = vmul.f32 %v5518, %v5518
      %v5882 = vmin.f32 16.0, %v5881
      %v5883 = vmul.f32 %v5882, 2.1237322e-06
      %v5884 = vadd.f32 %v5883, 0.00028619796
      %v5885 = vmul.f32 %v5882, %v5884
      %v5886 = vadd.f32 %v5885, 0.0036580483
      %v5887 = vmul.f32 %v5882, %v5886
      %v5888 = vadd.f32 %v5887, 0.05243302
      %v5889 = vmul.f32 %v5882, %v5888
      %v5890 = vadd.f32 %v5889, 0.18741608
      %v5891 = vmul.f32 %v5882, %v5890
      %v5892 = vadd.f32 %v5891, 1.1283791
      %v5893 = vmul.f32 %v5518, %v5892
      %v5894 = vmul.f32 %v5882, 3.8918573e-05
      %v5895 = vadd.f32 %v5894, 0.001143296
      %v5896 = vmul.f32 %v5882, %v5895
      %v5897 = vadd.f32 %v5896, 0.014752088
      %v5898 = vmul.f32 %v5882, %v5897
      %v5899 = vadd.f32 %v5898, 0.112945676
      %v5900 = vmul.f32 %v5882, %v5899
      %v5901 = vadd.f32 %v5900, 0.4994258
      %v5902 = vmul.f32 %v5882, %v5901
      %v5903 = vadd.f32 %v5902, 1.0
      %v5904 = vrcp.pop %v5903
      %v5905 = vmul.f32 %v5903, %v5904
      %v5906 = vsub.f32 1.0, %v5905
      %v5907 = vmul.f32 %v5904, %v5906
      %v5908 = vadd.f32 %v5904, %v5907
      %vm5909 = vweird.f32 %v5903
      %vm5910 = vweird.f32 %v5904
      %vm5911 = vmor %vm5909, %vm5910
      %v5912 = vsel %vm5911, %v5904, %v5908
      %v5913 = vand.u32 2147483647, %v5903
      %vm5914 = vcmp.eq.f32.partialorder %v5913, 8.507059e+37
      %v5915 = vand.u32 %v5903, 2147483648
      %v5916 = vor.u32 1.1754944e-38, %v5915
      %v5917 = vsel %vm5914, %v5916, %v5912
      %v5918 = vmul.f32 %v5893, %v5917
      %v5919 = vmin.f32 %v5918, 1.0
      %v5920 = vmax.f32 %v5919, -1.0
      %v5921 = vmul.f32 %v5519, %v5519
      %v5922 = vmin.f32 16.0, %v5921
      %v5923 = vmul.f32 %v5922, 2.1237322e-06
      %v5924 = vadd.f32 %v5923, 0.00028619796
      %v5925 = vmul.f32 %v5922, %v5924
      %v5926 = vadd.f32 %v5925, 0.0036580483
      %v5927 = vmul.f32 %v5922, %v5926
      %v5928 = vadd.f32 %v5927, 0.05243302
      %v5929 = vmul.f32 %v5922, %v5928
      %v5930 = vadd.f32 %v5929, 0.18741608
      %v5931 = vmul.f32 %v5922, %v5930
      %v5932 = vadd.f32 %v5931, 1.1283791
      %v5933 = vmul.f32 %v5519, %v5932
      %v5934 = vmul.f32 %v5922, 3.8918573e-05
      %v5935 = vadd.f32 %v5934, 0.001143296
      %v5936 = vmul.f32 %v5922, %v5935
      %v5937 = vadd.f32 %v5936, 0.014752088
      %v5938 = vmul.f32 %v5922, %v5937
      %v5939 = vadd.f32 %v5938, 0.112945676
      %v5940 = vmul.f32 %v5922, %v5939
      %v5941 = vadd.f32 %v5940, 0.4994258
      %v5942 = vmul.f32 %v5922, %v5941
      %v5943 = vadd.f32 %v5942, 1.0
      %v5944 = vrcp.pop %v5943
      %v5945 = vmul.f32 %v5943, %v5944
      %v5946 = vsub.f32 1.0, %v5945
      %v5947 = vmul.f32 %v5944, %v5946
      %v5948 = vadd.f32 %v5944, %v5947
      %vm5949 = vweird.f32 %v5943
      %vm5950 = vweird.f32 %v5944
      %vm5951 = vmor %vm5949, %vm5950
      %v5952 = vsel %vm5951, %v5944, %v5948
      %v5953 = vand.u32 2147483647, %v5943
      %vm5954 = vcmp.eq.f32.partialorder %v5953, 8.507059e+37
      %v5955 = vand.u32 %v5943, 2147483648
      %v5956 = vor.u32 1.1754944e-38, %v5955
      %v5957 = vsel %vm5954, %v5956, %v5952
      %v5958 = vmul.f32 %v5933, %v5957
      %v5959 = vmin.f32 %v5958, 1.0
      %v5960 = vmax.f32 %v5959, -1.0
      %v5961 = vmul.f32 %v5520, %v5520
      %v5962 = vmin.f32 16.0, %v5961
      %v5963 = vmul.f32 %v5962, 2.1237322e-06
      %v5964 = vadd.f32 %v5963, 0.00028619796
      %v5965 = vmul.f32 %v5962, %v5964
      %v5966 = vadd.f32 %v5965, 0.0036580483
      %v5967 = vmul.f32 %v5962, %v5966
      %v5968 = vadd.f32 %v5967, 0.05243302
      %v5969 = vmul.f32 %v5962, %v5968
      %v5970 = vadd.f32 %v5969, 0.18741608
      %v5971 = vmul.f32 %v5962, %v5970
      %v5972 = vadd.f32 %v5971, 1.1283791
      %v5973 = vmul.f32 %v5520, %v5972
      %v5974 = vmul.f32 %v5962, 3.8918573e-05
      %v5975 = vadd.f32 %v5974, 0.001143296
      %v5976 = vmul.f32 %v5962, %v5975
      %v5977 = vadd.f32 %v5976, 0.014752088
      %v5978 = vmul.f32 %v5962, %v5977
      %v5979 = vadd.f32 %v5978, 0.112945676
      %v5980 = vmul.f32 %v5962, %v5979
      %v5981 = vadd.f32 %v5980, 0.4994258
      %v5982 = vmul.f32 %v5962, %v5981
      %v5983 = vadd.f32 %v5982, 1.0
      %v5984 = vrcp.pop %v5983
      %v5985 = vmul.f32 %v5983, %v5984
      %v5986 = vsub.f32 1.0, %v5985
      %v5987 = vmul.f32 %v5984, %v5986
      %v5988 = vadd.f32 %v5984, %v5987
      %vm5989 = vweird.f32 %v5983
      %vm5990 = vweird.f32 %v5984
      %vm5991 = vmor %vm5989, %vm5990
      %v5992 = vsel %vm5991, %v5984, %v5988
      %v5993 = vand.u32 2147483647, %v5983
      %vm5994 = vcmp.eq.f32.partialorder %v5993, 8.507059e+37
      %v5995 = vand.u32 %v5983, 2147483648
      %v5996 = vor.u32 1.1754944e-38, %v5995
      %v5997 = vsel %vm5994, %v5996, %v5992
      %v5998 = vmul.f32 %v5973, %v5997
      %v5999 = vmin.f32 %v5998, 1.0
      %v6000 = vmax.f32 %v5999, -1.0
      %v6001 = vadd.f32 %v5560, 1.0
      %v6002 = vadd.f32 %v5600, 1.0
      %v6003 = vadd.f32 %v5640, 1.0
      %v6004 = vadd.f32 %v5680, 1.0
      %v6005 = vadd.f32 %v5720, 1.0
      %v6006 = vadd.f32 %v5760, 1.0
      %v6007 = vadd.f32 %v5800, 1.0
      %v6008 = vadd.f32 %v5840, 1.0
      %v6009 = vadd.f32 %v5880, 1.0
      %v6010 = vadd.f32 %v5920, 1.0
      %v6011 = vadd.f32 %v5960, 1.0
      %v6012 = vadd.f32 %v6000, 1.0
      %v6013 = vmul.f32 %v5497, %v6001
      %v6014 = vmul.f32 %v5498, %v6002
      %v6015 = vmul.f32 %v5499, %v6003
      %v6016 = vmul.f32 %v5500, %v6004
      %v6017 = vmul.f32 %v5501, %v6005
      %v6018 = vmul.f32 %v5502, %v6006
      %v6019 = vmul.f32 %v5503, %v6007
      %v6020 = vmul.f32 %v5504, %v6008
      %v6021 = vmul.f32 %v5505, %v6009
      %v6022 = vmul.f32 %v5506, %v6010
      %v6023 = vmul.f32 %v5507, %v6011
      %v6024 = vmul.f32 %v5508, %v6012
      %s6025 = scalar_lea.vmem %s2, 128
      %v6026 = vld [vmem:[%s6025] sm:$0xf]
      %v6027 = vld [vmem:[%s6025 + $0x4] sm:$0xf]
      %v6028 = vld [vmem:[%s6025 + $0x8] sm:$0xf]
      %v6029 = vld [vmem:[%s6025 + $0xc] sm:$0xf]
      %v6030 = vld [vmem:[%s6025 + $0x10] sm:$0xf]
      %v6031 = vld [vmem:[%s6025 + $0x14] sm:$0xf]
      %v6032 = vld [vmem:[%s6025 + $0x18] sm:$0xf]
      %v6033 = vld [vmem:[%s6025 + $0x1c] sm:$0xf]
      %v6034 = vld [vmem:[%s6025 + $0x20] sm:$0xf]
      %v6035 = vld [vmem:[%s6025 + $0x24] sm:$0xf]
      %v6036 = vld [vmem:[%s6025 + $0x28] sm:$0xf]
      %v6037 = vld [vmem:[%s6025 + $0x2c] sm:$0xf]
      %v6038 = vld [vmem:[%s6025 + $0x30] sm:$0xf]
      %v6039 = vld [vmem:[%s6025 + $0x34] sm:$0xf]
      %v6040 = vld [vmem:[%s6025 + $0x38] sm:$0xf]
      %v6041 = vld [vmem:[%s6025 + $0x3c] sm:$0xf]
      %v6042 = vld [vmem:[%s6025 + $0x40] sm:$0xf]
      %v6043 = vld [vmem:[%s6025 + $0x44] sm:$0xf]
      %v6044 = vld [vmem:[%s6025 + $0x48] sm:$0xf]
      %v6045 = vld [vmem:[%s6025 + $0x4c] sm:$0xf]
      %v6046 = vld [vmem:[%s6025 + $0x50] sm:$0xf]
      %v6047 = vld [vmem:[%s6025 + $0x54] sm:$0xf]
      %v6048 = vld [vmem:[%s6025 + $0x58] sm:$0xf]
      %v6049 = vld [vmem:[%s6025 + $0x5c] sm:$0xf]
      %v6050 = vld [vmem:[%s6025 + $0x60] sm:$0xf]
      %v6051 = vld [vmem:[%s6025 + $0x64] sm:$0xf]
      %v6052 = vld [vmem:[%s6025 + $0x68] sm:$0xf]
      %v6053 = vld [vmem:[%s6025 + $0x6c] sm:$0xf]
      %v6054 = vld [vmem:[%s6025 + $0x70] sm:$0xf]
      %v6055 = vld [vmem:[%s6025 + $0x74] sm:$0xf]
      %v6056 = vld [vmem:[%s6025 + $0x78] sm:$0xf]
      %v6057 = vld [vmem:[%s6025 + $0x7c] sm:$0xf]
      %v6058 = vld [vmem:[%s3371 + $0xa] sm:$0x1]
      %v6059 = vpack.c.bf16 %v6015, %v6013
      %v6060 = vpack.c.bf16 %v6016, %v6014
      %v6061 = vpack.c.bf16 %v6019, %v6017
      %v6062 = vpack.c.bf16 %v6020, %v6018
      %v6063 = vpack.c.bf16 %v6023, %v6021
      %v6064 = vpack.c.bf16 %v6024, %v6022
      %v6066 = vperm.slane %v6058, 0
      %v6100 = vunpack.c.l.b16 %v6026
      %v6101 = vunpack.c.l.b16 %v6027
      %v6102 = vunpack.c.l.b16 %v6028
      %v6103 = vunpack.c.l.b16 %v6029
      %v6104 = vunpack.c.l.b16 %v6030
      %v6105 = vunpack.c.l.b16 %v6031
      %v6106 = vunpack.c.l.b16 %v6032
      %v6107 = vunpack.c.l.b16 %v6033
      %v6108 = vunpack.c.l.b16 %v6034
      %v6109 = vunpack.c.l.b16 %v6035
      %v6110 = vunpack.c.l.b16 %v6036
      %v6111 = vunpack.c.l.b16 %v6037
      %v6112 = vunpack.c.l.b16 %v6038
      %v6113 = vunpack.c.l.b16 %v6039
      %v6114 = vunpack.c.l.b16 %v6040
      %v6115 = vunpack.c.l.b16 %v6041
      %v6116 = vunpack.c.l.b16 %v6042
      %v6117 = vunpack.c.l.b16 %v6043
      %v6118 = vunpack.c.l.b16 %v6044
      %v6119 = vunpack.c.l.b16 %v6045
      %v6120 = vunpack.c.l.b16 %v6046
      %v6121 = vunpack.c.l.b16 %v6047
      %v6122 = vunpack.c.l.b16 %v6048
      %v6123 = vunpack.c.l.b16 %v6049
      %v6124 = vunpack.c.l.b16 %v6050
      %v6125 = vunpack.c.l.b16 %v6051
      %v6126 = vunpack.c.l.b16 %v6052
      %v6127 = vunpack.c.l.b16 %v6053
      %v6128 = vunpack.c.l.b16 %v6054
      %v6129 = vunpack.c.l.b16 %v6055
      %v6130 = vunpack.c.l.b16 %v6056
      %v6131 = vunpack.c.l.b16 %v6057
      %v6132 = vpack.c.b16 %v6101, %v6100
      %v6133 = vpack.c.b16 %v6103, %v6102
      %v6134 = vpack.c.b16 %v6105, %v6104
      %v6135 = vpack.c.b16 %v6107, %v6106
      %v6136 = vpack.c.b16 %v6109, %v6108
      %v6137 = vpack.c.b16 %v6111, %v6110
      %v6138 = vpack.c.b16 %v6113, %v6112
      %v6139 = vpack.c.b16 %v6115, %v6114
      %v6140 = vpack.c.b16 %v6117, %v6116
      %v6141 = vpack.c.b16 %v6119, %v6118
      %v6142 = vpack.c.b16 %v6121, %v6120
      %v6143 = vpack.c.b16 %v6123, %v6122
      %v6144 = vpack.c.b16 %v6125, %v6124
      %v6145 = vpack.c.b16 %v6127, %v6126
      %v6146 = vpack.c.b16 %v6129, %v6128
      %v6147 = vpack.c.b16 %v6131, %v6130
      %6164 = vmatpush.bf16.msra.mxu0 %v6139
      %6165 = vmatpush.bf16.msra.mxu0 %v6138
      %6166 = vmatpush.bf16.msra.mxu0 %v6137
      %6167 = vmatpush.bf16.msra.mxu0 %v6136
      %6168 = vmatpush.bf16.msra.mxu0 %v6135
      %6169 = vmatpush.bf16.msra.mxu0 %v6134
      %6170 = vmatpush.bf16.msra.mxu0 %v6133
      %6171 = vmatpush.bf16.msra.mxu0 %v6132
      %6172 = vmatmul.bf16.gmra.mxu0 %v6059
      %v6173 = vpop.f32.mrf.mxu0
      %v6174 = vadd.f32 %v6066, %v6173
      %v6175 = vpop.f32.mrf.mxu0
      %v6176 = vadd.f32 %v6066, %v6175
      %6177 = vmatmul.bf16.gmra.mxu0 %v6061
      %v6178 = vpop.f32.mrf.mxu0
      %v6179 = vadd.f32 %v6066, %v6178
      %v6180 = vpop.f32.mrf.mxu0
      %v6181 = vadd.f32 %v6066, %v6180
      %6182 = vmatmul.bf16.gmra.mxu0 %v6063
      %v6183 = vpop.f32.mrf.mxu0
      %v6184 = vadd.f32 %v6066, %v6183
      %v6185 = vpop.f32.mrf.mxu0
      %v6186 = vadd.f32 %v6066, %v6185
      %6187 = vdwg.mxu0
      %6188 = vmatpush.bf16.msra.mxu0 %v6147
      %6189 = vmatpush.bf16.msra.mxu0 %v6146
      %6190 = vmatpush.bf16.msra.mxu0 %v6145
      %6191 = vmatpush.bf16.msra.mxu0 %v6144
      %6192 = vmatpush.bf16.msra.mxu0 %v6143
      %6193 = vmatpush.bf16.msra.mxu0 %v6142
      %6194 = vmatpush.bf16.msra.mxu0 %v6141
      %6195 = vmatpush.bf16.msra.mxu0 %v6140
      %6196 = vmatmul.bf16.gmra.mxu0 %v6060
      %v6197 = vpop.f32.mrf.mxu0
      %v6198 = vadd.f32 %v6174, %v6197
      %v6199 = vpop.f32.mrf.mxu0
      %v6200 = vadd.f32 %v6176, %v6199
      %6201 = vmatmul.bf16.gmra.mxu0 %v6062
      %v6202 = vpop.f32.mrf.mxu0
      %v6203 = vadd.f32 %v6179, %v6202
      %v6204 = vpop.f32.mrf.mxu0
      %v6205 = vadd.f32 %v6181, %v6204
      %6206 = vmatmul.bf16.gmra.mxu0 %v6064
      %v6207 = vpop.f32.mrf.mxu0
      %v6208 = vadd.f32 %v6184, %v6207
      %v6209 = vpop.f32.mrf.mxu0
      %v6210 = vadd.f32 %v6186, %v6209
      %6211 = vdwg.mxu0
      %v6212 = vadd.f32 %v5198, %v6198
      %v6213 = vadd.f32 %v5199, %v6200
      %v6214 = vadd.f32 %v5200, %v6203
      %v6215 = vadd.f32 %v5201, %v6205
      %v6216 = vadd.f32 %v5202, %v6208
      %v6217 = vadd.f32 %v5203, %v6210
      %v6218 = vld [vmem:[%s6 + $0x1] sm:$0x1]
      %v6219 = vld [vmem:[%s6 + $0x2] sm:$0x1]
      %6220 = vadd.xlane.f32.xlu0 %v6212
      %v6221 = vpop.xlane.xlu0 %6220
      %6222 = vadd.xlane.f32.xlu0 %v6213
      %v6223 = vpop.xlane.xlu0 %6222
      %6224 = vadd.xlane.f32.xlu0 %v6214
      %v6225 = vpop.xlane.xlu0 %6224
      %6226 = vadd.xlane.f32.xlu0 %v6215
      %v6227 = vpop.xlane.xlu0 %6226
      %6228 = vadd.xlane.f32.xlu0 %v6216
      %v6229 = vpop.xlane.xlu0 %6228
      %6230 = vadd.xlane.f32.xlu0 %v6217
      %v6231 = vpop.xlane.xlu0 %6230
      %v6232 = vmul.f32 %v6221, %v536
      %v6233 = vmul.f32 %v6223, %v536
      %v6234 = vmul.f32 %v6225, %v536
      %v6235 = vmul.f32 %v6227, %v536
      %v6236 = vmul.f32 %v6229, %v536
      %v6237 = vmul.f32 %v6231, %v536
      %v6238 = vsub.f32 %v6212, %v6232
      %v6239 = vsub.f32 %v6213, %v6233
      %v6240 = vsub.f32 %v6214, %v6234
      %v6241 = vsub.f32 %v6215, %v6235
      %v6242 = vsub.f32 %v6216, %v6236
      %v6243 = vsub.f32 %v6217, %v6237
      %v6244 = vmul.f32 %v6238, %v6238
      %v6245 = vmul.f32 %v6239, %v6239
      %v6246 = vmul.f32 %v6240, %v6240
      %v6247 = vmul.f32 %v6241, %v6241
      %v6248 = vmul.f32 %v6242, %v6242
      %v6249 = vmul.f32 %v6243, %v6243
      %6250 = vadd.xlane.f32.xlu0 %v6244
      %v6251 = vpop.xlane.xlu0 %6250
      %6252 = vadd.xlane.f32.xlu0 %v6245
      %v6253 = vpop.xlane.xlu0 %6252
      %6254 = vadd.xlane.f32.xlu0 %v6246
      %v6255 = vpop.xlane.xlu0 %6254
      %6256 = vadd.xlane.f32.xlu0 %v6247
      %v6257 = vpop.xlane.xlu0 %6256
      %6258 = vadd.xlane.f32.xlu0 %v6248
      %v6259 = vpop.xlane.xlu0 %6258
      %6260 = vadd.xlane.f32.xlu0 %v6249
      %v6261 = vpop.xlane.xlu0 %6260
      %v6262 = vmul.f32 %v6251, %v536
      %v6263 = vmul.f32 %v6253, %v536
      %v6264 = vmul.f32 %v6255, %v536
      %v6265 = vmul.f32 %v6257, %v536
      %v6266 = vmul.f32 %v6259, %v536
      %v6267 = vmul.f32 %v6261, %v536
      %v6268 = vadd.f32 %v6262, 1e-06
      %v6269 = vadd.f32 %v6263, 1e-06
      %v6270 = vadd.f32 %v6264, 1e-06
      %v6271 = vadd.f32 %v6265, 1e-06
      %v6272 = vadd.f32 %v6266, 1e-06
      %v6273 = vadd.f32 %v6267, 1e-06
      %v6274 = vrsqrt.pop %v6268
      %v6275 = vmul.f32 %v6274, %v6268
      %v6276 = vmul.f32 %v6275, %v6274
      %v6277 = vmul.f32 0.5, %v6276
      %v6278 = vsub.f32 1.5, %v6277
      %v6279 = vmul.f32 %v6274, %v6278
      %vm6280 = vweird.f32 %v6268
      %vm6281 = vweird.f32 %v6274
      %vm6282 = vmor %vm6280, %vm6281
      %v6283 = vsel %vm6282, %v6274, %v6279
      %v6284 = vrsqrt.pop %v6269
      %v6285 = vmul.f32 %v6284, %v6269
      %v6286 = vmul.f32 %v6285, %v6284
      %v6287 = vmul.f32 0.5, %v6286
      %v6288 = vsub.f32 1.5, %v6287
      %v6289 = vmul.f32 %v6284, %v6288
      %vm6290 = vweird.f32 %v6269
      %vm6291 = vweird.f32 %v6284
      %vm6292 = vmor %vm6290, %vm6291
      %v6293 = vsel %vm6292, %v6284, %v6289
      %v6294 = vrsqrt.pop %v6270
      %v6295 = vmul.f32 %v6294, %v6270
      %v6296 = vmul.f32 %v6295, %v6294
      %v6297 = vmul.f32 0.5, %v6296
      %v6298 = vsub.f32 1.5, %v6297
      %v6299 = vmul.f32 %v6294, %v6298
      %vm6300 = vweird.f32 %v6270
      %vm6301 = vweird.f32 %v6294
      %vm6302 = vmor %vm6300, %vm6301
      %v6303 = vsel %vm6302, %v6294, %v6299
      %v6304 = vrsqrt.pop %v6271
      %v6305 = vmul.f32 %v6304, %v6271
      %v6306 = vmul.f32 %v6305, %v6304
      %v6307 = vmul.f32 0.5, %v6306
      %v6308 = vsub.f32 1.5, %v6307
      %v6309 = vmul.f32 %v6304, %v6308
      %vm6310 = vweird.f32 %v6271
      %vm6311 = vweird.f32 %v6304
      %vm6312 = vmor %vm6310, %vm6311
      %v6313 = vsel %vm6312, %v6304, %v6309
      %v6314 = vrsqrt.pop %v6272
      %v6315 = vmul.f32 %v6314, %v6272
      %v6316 = vmul.f32 %v6315, %v6314
      %v6317 = vmul.f32 0.5, %v6316
      %v6318 = vsub.f32 1.5, %v6317
      %v6319 = vmul.f32 %v6314, %v6318
      %vm6320 = vweird.f32 %v6272
      %vm6321 = vweird.f32 %v6314
      %vm6322 = vmor %vm6320, %vm6321
      %v6323 = vsel %vm6322, %v6314, %v6319
      %v6324 = vrsqrt.pop %v6273
      %v6325 = vmul.f32 %v6324, %v6273
      %v6326 = vmul.f32 %v6325, %v6324
      %v6327 = vmul.f32 0.5, %v6326
      %v6328 = vsub.f32 1.5, %v6327
      %v6329 = vmul.f32 %v6324, %v6328
      %vm6330 = vweird.f32 %v6273
      %vm6331 = vweird.f32 %v6324
      %vm6332 = vmor %vm6330, %vm6331
      %v6333 = vsel %vm6332, %v6324, %v6329
      %v6334 = vmul.f32 %v6238, %v6283
      %v6335 = vmul.f32 %v6239, %v6293
      %v6336 = vmul.f32 %v6240, %v6303
      %v6337 = vmul.f32 %v6241, %v6313
      %v6338 = vmul.f32 %v6242, %v6323
      %v6339 = vmul.f32 %v6243, %v6333
      %v6341 = vperm.slane %v6218, 0
      %v6343 = vmul.f32 %v6334, %v6341
      %v6344 = vmul.f32 %v6335, %v6341
      %v6345 = vmul.f32 %v6336, %v6341
      %v6346 = vmul.f32 %v6337, %v6341
      %v6347 = vmul.f32 %v6338, %v6341
      %v6348 = vmul.f32 %v6339, %v6341
      %v6350 = vperm.slane %v6219, 0
      %v6352 = vadd.f32 %v6343, %v6350
      %v6353 = vadd.f32 %v6344, %v6350
      %v6354 = vadd.f32 %v6345, %v6350
      %v6355 = vadd.f32 %v6346, %v6350
      %v6356 = vadd.f32 %v6347, %v6350
      %v6357 = vadd.f32 %v6348, %v6350
      %v6358 = vld [vmem:[%s6 + $0x3] sm:$0x1]
      %v6359 = vld [vmem:[%s4] sm:$0xf]
      %v6360 = vld [vmem:[%s4 + $0x18] sm:$0xf]
      %v6361 = vld [vmem:[%s4 + $0x30] sm:$0xf]
      %v6362 = vld [vmem:[%s4 + $0x48] sm:$0xf]
      %v6363 = vld [vmem:[%s4 + $0x60] sm:$0xf]
      %v6364 = vld [vmem:[%s4 + $0x78] sm:$0xf]
      %v6365 = vld [vmem:[%s4 + $0x90] sm:$0xf]
      %v6366 = vld [vmem:[%s4 + $0xa8] sm:$0xf]
      %v6367 = vld [vmem:[%s4 + $0xc0] sm:$0xf]
      %v6368 = vld [vmem:[%s4 + $0xd8] sm:$0xf]
      %v6369 = vld [vmem:[%s4 + $0xf0] sm:$0xf]
      %v6370 = vld [vmem:[%s4 + $0x108] sm:$0xf]
      %v6371 = vld [vmem:[%s4 + $0x120] sm:$0xf]
      %v6372 = vld [vmem:[%s4 + $0x138] sm:$0xf]
      %v6373 = vld [vmem:[%s4 + $0x150] sm:$0xf]
      %v6374 = vld [vmem:[%s4 + $0x168] sm:$0xf]
      %v6375 = vld [vmem:[%s6 + $0x4] sm:$0x1]
      %v6376 = vpack.c.bf16 %v6358, %v6358
      %v6393 = vunpack.c.l.b16 %v6359
      %v6394 = vunpack.c.l.b16 %v6360
      %v6395 = vunpack.c.l.b16 %v6361
      %v6396 = vunpack.c.l.b16 %v6362
      %v6397 = vunpack.c.l.b16 %v6363
      %v6398 = vunpack.c.l.b16 %v6364
      %v6399 = vunpack.c.l.b16 %v6365
      %v6400 = vunpack.c.l.b16 %v6366
      %v6401 = vunpack.c.l.b16 %v6367
      %v6402 = vunpack.c.l.b16 %v6368
      %v6403 = vunpack.c.l.b16 %v6369
      %v6404 = vunpack.c.l.b16 %v6370
      %v6405 = vunpack.c.l.b16 %v6371
      %v6406 = vunpack.c.l.b16 %v6372
      %v6407 = vunpack.c.l.b16 %v6373
      %v6408 = vunpack.c.l.b16 %v6374
      %v6409 = vpack.c.b16 %v6394, %v6393
      %v6410 = vpack.c.b16 %v6396, %v6395
      %v6411 = vpack.c.b16 %v6398, %v6397
      %v6412 = vpack.c.b16 %v6400, %v6399
      %v6413 = vpack.c.b16 %v6402, %v6401
      %v6414 = vpack.c.b16 %v6404, %v6403
      %v6415 = vpack.c.b16 %v6406, %v6405
      %v6416 = vpack.c.b16 %v6408, %v6407
      %6425 = vmatpush.bf16.msra.mxu0 %v6416
      %6426 = vmatpush.bf16.msra.mxu0 %v6415
      %6427 = vmatpush.bf16.msra.mxu0 %v6414
      %6428 = vmatpush.bf16.msra.mxu0 %v6413
      %6429 = vmatpush.bf16.msra.mxu0 %v6412
      %6430 = vmatpush.bf16.msra.mxu0 %v6411
      %6431 = vmatpush.bf16.msra.mxu0 %v6410
      %6432 = vmatpush.bf16.msra.mxu0 %v6409
      %6433 = vmatmul.bf16.gmra.mxu0 %v6376
      %v6434 = vpop.f32.mrf.mxu0
      %v6435 = vadd.f32 %v6375, %v6434
      %v6436 = vpop.f32.mrf.mxu0
      %6437 = vdwg.mxu0
      %v6438 = vperm.slane %v6435, 0
      %v6439 = vld [vmem:[%s4 + $0x4] sm:$0xff]
      %v6440 = vld [vmem:[%s4 + $0x1c] sm:$0xff]
      %v6441 = vld [vmem:[%s4 + $0x34] sm:$0xff]
      %v6442 = vld [vmem:[%s4 + $0x4c] sm:$0xff]
      %v6443 = vld [vmem:[%s4 + $0x64] sm:$0xff]
      %v6444 = vld [vmem:[%s4 + $0x7c] sm:$0xff]
      %v6445 = vld [vmem:[%s4 + $0x94] sm:$0xff]
      %v6446 = vld [vmem:[%s4 + $0xac] sm:$0xff]
      %v6447 = vld [vmem:[%s4 + $0xc4] sm:$0xff]
      %v6448 = vld [vmem:[%s4 + $0xdc] sm:$0xff]
      %v6449 = vld [vmem:[%s4 + $0xf4] sm:$0xff]
      %v6450 = vld [vmem:[%s4 + $0x10c] sm:$0xff]
      %v6451 = vld [vmem:[%s4 + $0x124] sm:$0xff]
      %v6452 = vld [vmem:[%s4 + $0x13c] sm:$0xff]
      %v6453 = vld [vmem:[%s4 + $0x154] sm:$0xff]
      %v6454 = vld [vmem:[%s4 + $0x16c] sm:$0xff]
      %v6455 = vld [vmem:[%s6 + $0x5] sm:$0x3]
      %v6456 = vpack.c.bf16 %v6353, %v6352
      %v6457 = vpack.c.bf16 %v6355, %v6354
      %v6458 = vpack.c.bf16 %v6357, %v6356
      %v6460 = vperm.slane %v6455, 0
      %v6461 = vperm.slane %v6455, 1
      %v6480 = vunpack.c.l.b16 %v6439
      %v6481 = vunpack.c.h.b16 %v6439
      %v6482 = vunpack.c.l.b16 %v6440
      %v6483 = vunpack.c.h.b16 %v6440
      %v6484 = vunpack.c.l.b16 %v6441
      %v6485 = vunpack.c.h.b16 %v6441
      %v6486 = vunpack.c.l.b16 %v6442
      %v6487 = vunpack.c.h.b16 %v6442
      %v6488 = vunpack.c.l.b16 %v6443
      %v6489 = vunpack.c.h.b16 %v6443
      %v6490 = vunpack.c.l.b16 %v6444
      %v6491 = vunpack.c.h.b16 %v6444
      %v6492 = vunpack.c.l.b16 %v6445
      %v6493 = vunpack.c.h.b16 %v6445
      %v6494 = vunpack.c.l.b16 %v6446
      %v6495 = vunpack.c.h.b16 %v6446
      %v6496 = vunpack.c.l.b16 %v6447
      %v6497 = vunpack.c.h.b16 %v6447
      %v6498 = vunpack.c.l.b16 %v6448
      %v6499 = vunpack.c.h.b16 %v6448
      %v6500 = vunpack.c.l.b16 %v6449
      %v6501 = vunpack.c.h.b16 %v6449
      %v6502 = vunpack.c.l.b16 %v6450
      %v6503 = vunpack.c.h.b16 %v6450
      %v6504 = vunpack.c.l.b16 %v6451
      %v6505 = vunpack.c.h.b16 %v6451
      %v6506 = vunpack.c.l.b16 %v6452
      %v6507 = vunpack.c.h.b16 %v6452
      %v6508 = vunpack.c.l.b16 %v6453
      %v6509 = vunpack.c.h.b16 %v6453
      %v6510 = vunpack.c.l.b16 %v6454
      %v6511 = vunpack.c.h.b16 %v6454
      %v6512 = vpack.c.b16 %v6482, %v6480
      %v6513 = vpack.c.b16 %v6483, %v6481
      %v6514 = vpack.c.b16 %v6486, %v6484
      %v6515 = vpack.c.b16 %v6487, %v6485
      %v6516 = vpack.c.b16 %v6490, %v6488
      %v6517 = vpack.c.b16 %v6491, %v6489
      %v6518 = vpack.c.b16 %v6494, %v6492
      %v6519 = vpack.c.b16 %v6495, %v6493
      %v6520 = vpack.c.b16 %v6498, %v6496
      %v6521 = vpack.c.b16 %v6499, %v6497
      %v6522 = vpack.c.b16 %v6502, %v6500
      %v6523 = vpack.c.b16 %v6503, %v6501
      %v6524 = vpack.c.b16 %v6506, %v6504
      %v6525 = vpack.c.b16 %v6507, %v6505
      %v6526 = vpack.c.b16 %v6510, %v6508
      %v6527 = vpack.c.b16 %v6511, %v6509
      %6544 = vmatpush.bf16.msra.mxu0 %v6526
      %6545 = vmatpush.bf16.msra.mxu0 %v6524
      %6546 = vmatpush.bf16.msra.mxu0 %v6522
      %6547 = vmatpush.bf16.msra.mxu0 %v6520
      %6548 = vmatpush.bf16.msra.mxu0 %v6518
      %6549 = vmatpush.bf16.msra.mxu0 %v6516
      %6550 = vmatpush.bf16.msra.mxu0 %v6514
      %6551 = vmatpush.bf16.msra.mxu0 %v6512
      %6552 = vmatmul.bf16.gmra.mxu0 %v6456
      %v6553 = vpop.f32.mrf.mxu0
      %v6554 = vadd.f32 %v6460, %v6553
      %v6555 = vpop.f32.mrf.mxu0
      %v6556 = vadd.f32 %v6460, %v6555
      %6557 = vmatmul.bf16.gmra.mxu0 %v6457
      %v6558 = vpop.f32.mrf.mxu0
      %v6559 = vadd.f32 %v6460, %v6558
      %v6560 = vpop.f32.mrf.mxu0
      %v6561 = vadd.f32 %v6460, %v6560
      %6562 = vmatmul.bf16.gmra.mxu0 %v6458
      %v6563 = vpop.f32.mrf.mxu0
      %v6564 = vadd.f32 %v6460, %v6563
      %v6565 = vpop.f32.mrf.mxu0
      %v6566 = vadd.f32 %v6460, %v6565
      %6567 = vdwg.mxu0
      %6568 = vmatpush.bf16.msra.mxu0 %v6527
      %6569 = vmatpush.bf16.msra.mxu0 %v6525
      %6570 = vmatpush.bf16.msra.mxu0 %v6523
      %6571 = vmatpush.bf16.msra.mxu0 %v6521
      %6572 = vmatpush.bf16.msra.mxu0 %v6519
      %6573 = vmatpush.bf16.msra.mxu0 %v6517
      %6574 = vmatpush.bf16.msra.mxu0 %v6515
      %6575 = vmatpush.bf16.msra.mxu0 %v6513
      %6576 = vmatmul.bf16.gmra.mxu0 %v6456
      %v6577 = vpop.f32.mrf.mxu0
      %v6578 = vadd.f32 %v6461, %v6577
      %v6579 = vpop.f32.mrf.mxu0
      %v6580 = vadd.f32 %v6461, %v6579
      %6581 = vmatmul.bf16.gmra.mxu0 %v6457
      %v6582 = vpop.f32.mrf.mxu0
      %v6583 = vadd.f32 %v6461, %v6582
      %v6584 = vpop.f32.mrf.mxu0
      %v6585 = vadd.f32 %v6461, %v6584
      %6586 = vmatmul.bf16.gmra.mxu0 %v6458
      %v6587 = vpop.f32.mrf.mxu0
      %v6588 = vadd.f32 %v6461, %v6587
      %v6589 = vpop.f32.mrf.mxu0
      %v6590 = vadd.f32 %v6461, %v6589
      %6591 = vdwg.mxu0
      %v6593 = vrot.slane %v6438, 1
      %v6594 = vrot.slane %v6438, 2
      %v6597 = vpack.c.bf16 %v6438, %v6438
      %v6598 = vpack.c.bf16 %v6593, %v6593
      %v6599 = vpack.c.bf16 %v6594, %v6594
      %v6600 = vpack.c.bf16 %v6554, %v6554
      %v6601 = vpack.c.bf16 %v6556, %v6556
      %v6602 = vpack.c.bf16 %v6559, %v6559
      %v6603 = vpack.c.bf16 %v6561, %v6561
      %v6604 = vpack.c.bf16 %v6564, %v6564
      %v6605 = vpack.c.bf16 %v6566, %v6566
      %v6606 = vpack.c.bf16 %v6578, %v6578
      %v6607 = vpack.c.bf16 %v6580, %v6580
      %v6608 = vpack.c.bf16 %v6583, %v6583
      %v6609 = vpack.c.bf16 %v6585, %v6585
      %v6610 = vpack.c.bf16 %v6588, %v6588
      %v6611 = vpack.c.bf16 %v6590, %v6590
      %v6614 = vunpack.c.l.b16 %v6600
      %v6615 = vunpack.c.l.b16 %v6601
      %v6616 = vpack.c.b16 %v6615, %v6614
      %v6618 = vsel %vm934, %v6597, 0
      %v6621 = vsel %vm934, %v6616, 0
      %6623 = vmatpush.bf16.xpose.msra.mxu0 0
      %6624 = vmatpush.bf16.xpose.msra.mxu0 0
      %6625 = vmatpush.bf16.xpose.msra.mxu0 0
      %6626 = vmatpush.bf16.xpose.msra.mxu0 0
      %6627 = vmatpush.bf16.xpose.msra.mxu0 0
      %6628 = vmatpush.bf16.xpose.msra.mxu0 0
      %6629 = vmatpush.bf16.xpose.msra.mxu0 0
      %6630 = vmatpush.bf16.xpose.msra.mxu0 %v6621
      %6631 = vmatmul.bf16.gmra.mxu0 %v6618
      %v6632 = vpop.f32.mrf.mxu0
      %v6633 = vadd.f32 0.0, %v6632
      %v6634 = vpop.f32.mrf.mxu0
      %6635 = vdwg.mxu0
      %v6638 = vunpack.c.l.b16 %v6602
      %v6639 = vunpack.c.l.b16 %v6603
      %v6640 = vpack.c.b16 %v6639, %v6638
      %v6642 = vsel %vm934, %v6598, 0
      %v6645 = vsel %vm934, %v6640, 0
      %6647 = vmatpush.bf16.xpose.msra.mxu0 0
      %6648 = vmatpush.bf16.xpose.msra.mxu0 0
      %6649 = vmatpush.bf16.xpose.msra.mxu0 0
      %6650 = vmatpush.bf16.xpose.msra.mxu0 0
      %6651 = vmatpush.bf16.xpose.msra.mxu0 0
      %6652 = vmatpush.bf16.xpose.msra.mxu0 0
      %6653 = vmatpush.bf16.xpose.msra.mxu0 0
      %6654 = vmatpush.bf16.xpose.msra.mxu0 %v6645
      %6655 = vmatmul.bf16.gmra.mxu0 %v6642
      %v6656 = vpop.f32.mrf.mxu0
      %v6657 = vadd.f32 0.0, %v6656
      %v6658 = vpop.f32.mrf.mxu0
      %6659 = vdwg.mxu0
      %v6662 = vunpack.c.l.b16 %v6604
      %v6663 = vunpack.c.l.b16 %v6605
      %v6664 = vpack.c.b16 %v6663, %v6662
      %v6666 = vsel %vm934, %v6599, 0
      %v6669 = vsel %vm934, %v6664, 0
      %6671 = vmatpush.bf16.xpose.msra.mxu0 0
      %6672 = vmatpush.bf16.xpose.msra.mxu0 0
      %6673 = vmatpush.bf16.xpose.msra.mxu0 0
      %6674 = vmatpush.bf16.xpose.msra.mxu0 0
      %6675 = vmatpush.bf16.xpose.msra.mxu0 0
      %6676 = vmatpush.bf16.xpose.msra.mxu0 0
      %6677 = vmatpush.bf16.xpose.msra.mxu0 0
      %6678 = vmatpush.bf16.xpose.msra.mxu0 %v6669
      %6679 = vmatmul.bf16.gmra.mxu0 %v6666
      %v6680 = vpop.f32.mrf.mxu0
      %v6681 = vadd.f32 0.0, %v6680
      %v6682 = vpop.f32.mrf.mxu0
      %6683 = vdwg.mxu0
      %v6684 = vmul.f32 %v6633, 0.17677669
      %v6685 = vmul.f32 %v6657, 0.17677669
      %v6686 = vmul.f32 %v6681, 0.17677669
      %vm6687 = vcmask 122880
      %v6688 = vsel %vm6687, %v6684, -inf
      %6689 = vmax.xlane.f32.xlu0 %v6688
      %v6690 = vpop.xlane.xlu0 %6689
      %v6691 = vsel %vm6687, %v6685, -inf
      %6692 = vmax.xlane.f32.xlu0 %v6691
      %v6693 = vpop.xlane.xlu0 %6692
      %v6694 = vsel %vm6687, %v6686, -inf
      %6695 = vmax.xlane.f32.xlu0 %v6694
      %v6696 = vpop.xlane.xlu0 %6695
      %v6697 = vsub.f32 %v6684, %v6690
      %v6698 = vsub.f32 %v6685, %v6693
      %v6699 = vsub.f32 %v6686, %v6696
      %v6700 = vmul.f32 %v6697, 1.442695
      %v6701 = vpow.pop %v6700
      %v6702 = vmul.f32 %v6698, 1.442695
      %v6703 = vpow.pop %v6702
      %v6704 = vmul.f32 %v6699, 1.442695
      %v6705 = vpow.pop %v6704
      %v6706 = vsel %vm6687, %v6701, 0.0
      %6707 = vadd.xlane.f32.xlu0 %v6706
      %v6708 = vpop.xlane.xlu0 %6707
      %v6709 = vsel %vm6687, %v6703, 0.0
      %6710 = vadd.xlane.f32.xlu0 %v6709
      %v6711 = vpop.xlane.xlu0 %6710
      %v6712 = vsel %vm6687, %v6705, 0.0
      %6713 = vadd.xlane.f32.xlu0 %v6712
      %v6714 = vpop.xlane.xlu0 %6713
      %v6715 = vrcp.pop %v6708
      %v6716 = vmul.f32 %v6708, %v6715
      %v6717 = vsub.f32 1.0, %v6716
      %v6718 = vmul.f32 %v6715, %v6717
      %v6719 = vadd.f32 %v6715, %v6718
      %vm6720 = vweird.f32 %v6708
      %vm6721 = vweird.f32 %v6715
      %vm6722 = vmor %vm6720, %vm6721
      %v6723 = vsel %vm6722, %v6715, %v6719
      %v6724 = vand.u32 2147483647, %v6708
      %vm6725 = vcmp.eq.f32.partialorder %v6724, 8.507059e+37
      %v6726 = vand.u32 %v6708, 2147483648
      %v6727 = vor.u32 1.1754944e-38, %v6726
      %v6728 = vsel %vm6725, %v6727, %v6723
      %v6729 = vmul.f32 %v6701, %v6728
      %v6730 = vrcp.pop %v6711
      %v6731 = vmul.f32 %v6711, %v6730
      %v6732 = vsub.f32 1.0, %v6731
      %v6733 = vmul.f32 %v6730, %v6732
      %v6734 = vadd.f32 %v6730, %v6733
      %vm6735 = vweird.f32 %v6711
      %vm6736 = vweird.f32 %v6730
      %vm6737 = vmor %vm6735, %vm6736
      %v6738 = vsel %vm6737, %v6730, %v6734
      %v6739 = vand.u32 2147483647, %v6711
      %vm6740 = vcmp.eq.f32.partialorder %v6739, 8.507059e+37
      %v6741 = vand.u32 %v6711, 2147483648
      %v6742 = vor.u32 1.1754944e-38, %v6741
      %v6743 = vsel %vm6740, %v6742, %v6738
      %v6744 = vmul.f32 %v6703, %v6743
      %v6745 = vrcp.pop %v6714
      %v6746 = vmul.f32 %v6714, %v6745
      %v6747 = vsub.f32 1.0, %v6746
      %v6748 = vmul.f32 %v6745, %v6747
      %v6749 = vadd.f32 %v6745, %v6748
      %vm6750 = vweird.f32 %v6714
      %vm6751 = vweird.f32 %v6745
      %vm6752 = vmor %vm6750, %vm6751
      %v6753 = vsel %vm6752, %v6745, %v6749
      %v6754 = vand.u32 2147483647, %v6714
      %vm6755 = vcmp.eq.f32.partialorder %v6754, 8.507059e+37
      %v6756 = vand.u32 %v6714, 2147483648
      %v6757 = vor.u32 1.1754944e-38, %v6756
      %v6758 = vsel %vm6755, %v6757, %v6753
      %v6759 = vmul.f32 %v6705, %v6758
      %v6760 = vpack.c.bf16 %v6729, %v6729
      %v6761 = vpack.c.bf16 %v6744, %v6744
      %v6762 = vpack.c.bf16 %v6759, %v6759
      %v6765 = vunpack.c.l.b16 %v6606
      %v6766 = vunpack.c.l.b16 %v6607
      %v6767 = vpack.c.b16 %v6766, %v6765
      %v6770 = vsel %vm1021, %v6760, 0
      %6772 = vmatpush.bf16.msra.mxu0 0
      %6773 = vmatpush.bf16.msra.mxu0 0
      %6774 = vmatpush.bf16.msra.mxu0 0
      %6775 = vmatpush.bf16.msra.mxu0 0
      %6776 = vmatpush.bf16.msra.mxu0 0
      %6777 = vmatpush.bf16.msra.mxu0 0
      %6778 = vmatpush.bf16.msra.mxu0 0
      %6779 = vmatpush.bf16.msra.mxu0 %v6767
      %6780 = vmatmul.bf16.gmra.mxu0 %v6770
      %v6781 = vpop.f32.mrf.mxu0
      %v6782 = vadd.f32 0.0, %v6781
      %v6783 = vpop.f32.mrf.mxu0
      %6784 = vdwg.mxu0
      %v6787 = vunpack.c.l.b16 %v6608
      %v6788 = vunpack.c.l.b16 %v6609
      %v6789 = vpack.c.b16 %v6788, %v6787
      %v6792 = vsel %vm1021, %v6761, 0
      %6794 = vmatpush.bf16.msra.mxu0 0
      %6795 = vmatpush.bf16.msra.mxu0 0
      %6796 = vmatpush.bf16.msra.mxu0 0
      %6797 = vmatpush.bf16.msra.mxu0 0
      %6798 = vmatpush.bf16.msra.mxu0 0
      %6799 = vmatpush.bf16.msra.mxu0 0
      %6800 = vmatpush.bf16.msra.mxu0 0
      %6801 = vmatpush.bf16.msra.mxu0 %v6789
      %6802 = vmatmul.bf16.gmra.mxu0 %v6792
      %v6803 = vpop.f32.mrf.mxu0
      %v6804 = vadd.f32 0.0, %v6803
      %v6805 = vpop.f32.mrf.mxu0
      %6806 = vdwg.mxu0
      %v6809 = vunpack.c.l.b16 %v6610
      %v6810 = vunpack.c.l.b16 %v6611
      %v6811 = vpack.c.b16 %v6810, %v6809
      %v6814 = vsel %vm1021, %v6762, 0
      %6816 = vmatpush.bf16.msra.mxu0 0
      %6817 = vmatpush.bf16.msra.mxu0 0
      %6818 = vmatpush.bf16.msra.mxu0 0
      %6819 = vmatpush.bf16.msra.mxu0 0
      %6820 = vmatpush.bf16.msra.mxu0 0
      %6821 = vmatpush.bf16.msra.mxu0 0
      %6822 = vmatpush.bf16.msra.mxu0 0
      %6823 = vmatpush.bf16.msra.mxu0 %v6811
      %6824 = vmatmul.bf16.gmra.mxu0 %v6814
      %v6825 = vpop.f32.mrf.mxu0
      %v6826 = vadd.f32 0.0, %v6825
      %v6827 = vpop.f32.mrf.mxu0
      %6828 = vdwg.mxu0
      %v6830 = vunpack.c.l.b16 %v6597
      %v6831 = vpack.c.b16 %v6830, %v6830
      %6832 = vrot.lane.b32.xlu0 %v6831, 96
      %v6833 = vpop.permute.xlu0 %6832
      %6834 = vrot.lane.b32.xlu0 %v6616, 96
      %v6835 = vpop.permute.xlu0 %6834
      %v6837 = vsel %vm934, %v6833, 0
      %v6840 = vsel %vm934, %v6835, 0
      %6842 = vmatpush.bf16.xpose.msra.mxu0 0
      %6843 = vmatpush.bf16.xpose.msra.mxu0 0
      %6844 = vmatpush.bf16.xpose.msra.mxu0 0
      %6845 = vmatpush.bf16.xpose.msra.mxu0 0
      %6846 = vmatpush.bf16.xpose.msra.mxu0 0
      %6847 = vmatpush.bf16.xpose.msra.mxu0 0
      %6848 = vmatpush.bf16.xpose.msra.mxu0 0
      %6849 = vmatpush.bf16.xpose.msra.mxu0 %v6840
      %6850 = vmatmul.bf16.gmra.mxu0 %v6837
      %v6851 = vpop.f32.mrf.mxu0
      %v6852 = vadd.f32 0.0, %v6851
      %v6853 = vpop.f32.mrf.mxu0
      %6854 = vdwg.mxu0
      %v6856 = vunpack.c.l.b16 %v6598
      %v6857 = vpack.c.b16 %v6856, %v6856
      %6858 = vrot.lane.b32.xlu0 %v6857, 96
      %v6859 = vpop.permute.xlu0 %6858
      %6860 = vrot.lane.b32.xlu0 %v6640, 96
      %v6861 = vpop.permute.xlu0 %6860
      %v6863 = vsel %vm934, %v6859, 0
      %v6866 = vsel %vm934, %v6861, 0
      %6868 = vmatpush.bf16.xpose.msra.mxu0 0
      %6869 = vmatpush.bf16.xpose.msra.mxu0 0
      %6870 = vmatpush.bf16.xpose.msra.mxu0 0
      %6871 = vmatpush.bf16.xpose.msra.mxu0 0
      %6872 = vmatpush.bf16.xpose.msra.mxu0 0
      %6873 = vmatpush.bf16.xpose.msra.mxu0 0
      %6874 = vmatpush.bf16.xpose.msra.mxu0 0
      %6875 = vmatpush.bf16.xpose.msra.mxu0 %v6866
      %6876 = vmatmul.bf16.gmra.mxu0 %v6863
      %v6877 = vpop.f32.mrf.mxu0
      %v6878 = vadd.f32 0.0, %v6877
      %v6879 = vpop.f32.mrf.mxu0
      %6880 = vdwg.mxu0
      %v6882 = vunpack.c.l.b16 %v6599
      %v6883 = vpack.c.b16 %v6882, %v6882
      %6884 = vrot.lane.b32.xlu0 %v6883, 96
      %v6885 = vpop.permute.xlu0 %6884
      %6886 = vrot.lane.b32.xlu0 %v6664, 96
      %v6887 = vpop.permute.xlu0 %6886
      %v6889 = vsel %vm934, %v6885, 0
      %v6892 = vsel %vm934, %v6887, 0
      %6894 = vmatpush.bf16.xpose.msra.mxu0 0
      %6895 = vmatpush.bf16.xpose.msra.mxu0 0
      %6896 = vmatpush.bf16.xpose.msra.mxu0 0
      %6897 = vmatpush.bf16.xpose.msra.mxu0 0
      %6898 = vmatpush.bf16.xpose.msra.mxu0 0
      %6899 = vmatpush.bf16.xpose.msra.mxu0 0
      %6900 = vmatpush.bf16.xpose.msra.mxu0 0
      %6901 = vmatpush.bf16.xpose.msra.mxu0 %v6892
      %6902 = vmatmul.bf16.gmra.mxu0 %v6889
      %v6903 = vpop.f32.mrf.mxu0
      %v6904 = vadd.f32 0.0, %v6903
      %v6905 = vpop.f32.mrf.mxu0
      %6906 = vdwg.mxu0
      %v6907 = vmul.f32 %v6852, 0.17677669
      %v6908 = vmul.f32 %v6878, 0.17677669
      %v6909 = vmul.f32 %v6904, 0.17677669
      %v6910 = vsel %vm6687, %v6907, -inf
      %6911 = vmax.xlane.f32.xlu0 %v6910
      %v6912 = vpop.xlane.xlu0 %6911
      %v6913 = vsel %vm6687, %v6908, -inf
      %6914 = vmax.xlane.f32.xlu0 %v6913
      %v6915 = vpop.xlane.xlu0 %6914
      %v6916 = vsel %vm6687, %v6909, -inf
      %6917 = vmax.xlane.f32.xlu0 %v6916
      %v6918 = vpop.xlane.xlu0 %6917
      %v6919 = vsub.f32 %v6907, %v6912
      %v6920 = vsub.f32 %v6908, %v6915
      %v6921 = vsub.f32 %v6909, %v6918
      %v6922 = vmul.f32 %v6919, 1.442695
      %v6923 = vpow.pop %v6922
      %v6924 = vmul.f32 %v6920, 1.442695
      %v6925 = vpow.pop %v6924
      %v6926 = vmul.f32 %v6921, 1.442695
      %v6927 = vpow.pop %v6926
      %v6928 = vsel %vm6687, %v6923, 0.0
      %6929 = vadd.xlane.f32.xlu0 %v6928
      %v6930 = vpop.xlane.xlu0 %6929
      %v6931 = vsel %vm6687, %v6925, 0.0
      %6932 = vadd.xlane.f32.xlu0 %v6931
      %v6933 = vpop.xlane.xlu0 %6932
      %v6934 = vsel %vm6687, %v6927, 0.0
      %6935 = vadd.xlane.f32.xlu0 %v6934
      %v6936 = vpop.xlane.xlu0 %6935
      %v6937 = vrcp.pop %v6930
      %v6938 = vmul.f32 %v6930, %v6937
      %v6939 = vsub.f32 1.0, %v6938
      %v6940 = vmul.f32 %v6937, %v6939
      %v6941 = vadd.f32 %v6937, %v6940
      %vm6942 = vweird.f32 %v6930
      %vm6943 = vweird.f32 %v6937
      %vm6944 = vmor %vm6942, %vm6943
      %v6945 = vsel %vm6944, %v6937, %v6941
      %v6946 = vand.u32 2147483647, %v6930
      %vm6947 = vcmp.eq.f32.partialorder %v6946, 8.507059e+37
      %v6948 = vand.u32 %v6930, 2147483648
      %v6949 = vor.u32 1.1754944e-38, %v6948
      %v6950 = vsel %vm6947, %v6949, %v6945
      %v6951 = vmul.f32 %v6923, %v6950
      %v6952 = vrcp.pop %v6933
      %v6953 = vmul.f32 %v6933, %v6952
      %v6954 = vsub.f32 1.0, %v6953
      %v6955 = vmul.f32 %v6952, %v6954
      %v6956 = vadd.f32 %v6952, %v6955
      %vm6957 = vweird.f32 %v6933
      %vm6958 = vweird.f32 %v6952
      %vm6959 = vmor %vm6957, %vm6958
      %v6960 = vsel %vm6959, %v6952, %v6956
      %v6961 = vand.u32 2147483647, %v6933
      %vm6962 = vcmp.eq.f32.partialorder %v6961, 8.507059e+37
      %v6963 = vand.u32 %v6933, 2147483648
      %v6964 = vor.u32 1.1754944e-38, %v6963
      %v6965 = vsel %vm6962, %v6964, %v6960
      %v6966 = vmul.f32 %v6925, %v6965
      %v6967 = vrcp.pop %v6936
      %v6968 = vmul.f32 %v6936, %v6967
      %v6969 = vsub.f32 1.0, %v6968
      %v6970 = vmul.f32 %v6967, %v6969
      %v6971 = vadd.f32 %v6967, %v6970
      %vm6972 = vweird.f32 %v6936
      %vm6973 = vweird.f32 %v6967
      %vm6974 = vmor %vm6972, %vm6973
      %v6975 = vsel %vm6974, %v6967, %v6971
      %v6976 = vand.u32 2147483647, %v6936
      %vm6977 = vcmp.eq.f32.partialorder %v6976, 8.507059e+37
      %v6978 = vand.u32 %v6936, 2147483648
      %v6979 = vor.u32 1.1754944e-38, %v6978
      %v6980 = vsel %vm6977, %v6979, %v6975
      %v6981 = vmul.f32 %v6927, %v6980
      %v6982 = vpack.c.bf16 %v6951, %v6951
      %v6983 = vpack.c.bf16 %v6966, %v6966
      %v6984 = vpack.c.bf16 %v6981, %v6981
      %6985 = vrot.lane.b32.xlu0 %v6767, 96
      %v6986 = vpop.permute.xlu0 %6985
      %v6989 = vsel %vm1021, %v6982, 0
      %6991 = vmatpush.bf16.msra.mxu0 0
      %6992 = vmatpush.bf16.msra.mxu0 0
      %6993 = vmatpush.bf16.msra.mxu0 0
      %6994 = vmatpush.bf16.msra.mxu0 0
      %6995 = vmatpush.bf16.msra.mxu0 0
      %6996 = vmatpush.bf16.msra.mxu0 0
      %6997 = vmatpush.bf16.msra.mxu0 0
      %6998 = vmatpush.bf16.msra.mxu0 %v6986
      %6999 = vmatmul.bf16.gmra.mxu0 %v6989
      %v7000 = vpop.f32.mrf.mxu0
      %v7001 = vadd.f32 0.0, %v7000
      %v7002 = vpop.f32.mrf.mxu0
      %7003 = vdwg.mxu0
      %7004 = vrot.lane.b32.xlu0 %v6789, 96
      %v7005 = vpop.permute.xlu0 %7004
      %v7008 = vsel %vm1021, %v6983, 0
      %7010 = vmatpush.bf16.msra.mxu0 0
      %7011 = vmatpush.bf16.msra.mxu0 0
      %7012 = vmatpush.bf16.msra.mxu0 0
      %7013 = vmatpush.bf16.msra.mxu0 0
      %7014 = vmatpush.bf16.msra.mxu0 0
      %7015 = vmatpush.bf16.msra.mxu0 0
      %7016 = vmatpush.bf16.msra.mxu0 0
      %7017 = vmatpush.bf16.msra.mxu0 %v7005
      %7018 = vmatmul.bf16.gmra.mxu0 %v7008
      %v7019 = vpop.f32.mrf.mxu0
      %v7020 = vadd.f32 0.0, %v7019
      %v7021 = vpop.f32.mrf.mxu0
      %7022 = vdwg.mxu0
      %7023 = vrot.lane.b32.xlu0 %v6811, 96
      %v7024 = vpop.permute.xlu0 %7023
      %v7027 = vsel %vm1021, %v6984, 0
      %7029 = vmatpush.bf16.msra.mxu0 0
      %7030 = vmatpush.bf16.msra.mxu0 0
      %7031 = vmatpush.bf16.msra.mxu0 0
      %7032 = vmatpush.bf16.msra.mxu0 0
      %7033 = vmatpush.bf16.msra.mxu0 0
      %7034 = vmatpush.bf16.msra.mxu0 0
      %7035 = vmatpush.bf16.msra.mxu0 0
      %7036 = vmatpush.bf16.msra.mxu0 %v7024
      %7037 = vmatmul.bf16.gmra.mxu0 %v7027
      %v7038 = vpop.f32.mrf.mxu0
      %v7039 = vadd.f32 0.0, %v7038
      %v7040 = vpop.f32.mrf.mxu0
      %7041 = vdwg.mxu0
      %7042 = vrot.lane.b32.xlu0 %v6831, 64
      %v7043 = vpop.permute.xlu0 %7042
      %7044 = vrot.lane.b32.xlu0 %v6616, 64
      %v7045 = vpop.permute.xlu0 %7044
      %v7047 = vsel %vm934, %v7043, 0
      %v7050 = vsel %vm934, %v7045, 0
      %7052 = vmatpush.bf16.xpose.msra.mxu0 0
      %7053 = vmatpush.bf16.xpose.msra.mxu0 0
      %7054 = vmatpush.bf16.xpose.msra.mxu0 0
      %7055 = vmatpush.bf16.xpose.msra.mxu0 0
      %7056 = vmatpush.bf16.xpose.msra.mxu0 0
      %7057 = vmatpush.bf16.xpose.msra.mxu0 0
      %7058 = vmatpush.bf16.xpose.msra.mxu0 0
      %7059 = vmatpush.bf16.xpose.msra.mxu0 %v7050
      %7060 = vmatmul.bf16.gmra.mxu0 %v7047
      %v7061 = vpop.f32.mrf.mxu0
      %v7062 = vadd.f32 0.0, %v7061
      %v7063 = vpop.f32.mrf.mxu0
      %7064 = vdwg.mxu0
      %7065 = vrot.lane.b32.xlu0 %v6857, 64
      %v7066 = vpop.permute.xlu0 %7065
      %7067 = vrot.lane.b32.xlu0 %v6640, 64
      %v7068 = vpop.permute.xlu0 %7067
      %v7070 = vsel %vm934, %v7066, 0
      %v7073 = vsel %vm934, %v7068, 0
      %7075 = vmatpush.bf16.xpose.msra.mxu0 0
      %7076 = vmatpush.bf16.xpose.msra.mxu0 0
      %7077 = vmatpush.bf16.xpose.msra.mxu0 0
      %7078 = vmatpush.bf16.xpose.msra.mxu0 0
      %7079 = vmatpush.bf16.xpose.msra.mxu0 0
      %7080 = vmatpush.bf16.xpose.msra.mxu0 0
      %7081 = vmatpush.bf16.xpose.msra.mxu0 0
      %7082 = vmatpush.bf16.xpose.msra.mxu0 %v7073
      %7083 = vmatmul.bf16.gmra.mxu0 %v7070
      %v7084 = vpop.f32.mrf.mxu0
      %v7085 = vadd.f32 0.0, %v7084
      %v7086 = vpop.f32.mrf.mxu0
      %7087 = vdwg.mxu0
      %7088 = vrot.lane.b32.xlu0 %v6883, 64
      %v7089 = vpop.permute.xlu0 %7088
      %7090 = vrot.lane.b32.xlu0 %v6664, 64
      %v7091 = vpop.permute.xlu0 %7090
      %v7093 = vsel %vm934, %v7089, 0
      %v7096 = vsel %vm934, %v7091, 0
      %7098 = vmatpush.bf16.xpose.msra.mxu0 0
      %7099 = vmatpush.bf16.xpose.msra.mxu0 0
      %7100 = vmatpush.bf16.xpose.msra.mxu0 0
      %7101 = vmatpush.bf16.xpose.msra.mxu0 0
      %7102 = vmatpush.bf16.xpose.msra.mxu0 0
      %7103 = vmatpush.bf16.xpose.msra.mxu0 0
      %7104 = vmatpush.bf16.xpose.msra.mxu0 0
      %7105 = vmatpush.bf16.xpose.msra.mxu0 %v7096
      %7106 = vmatmul.bf16.gmra.mxu0 %v7093
      %v7107 = vpop.f32.mrf.mxu0
      %v7108 = vadd.f32 0.0, %v7107
      %v7109 = vpop.f32.mrf.mxu0
      %7110 = vdwg.mxu0
      %v7111 = vmul.f32 %v7062, 0.17677669
      %v7112 = vmul.f32 %v7085, 0.17677669
      %v7113 = vmul.f32 %v7108, 0.17677669
      %v7114 = vsel %vm6687, %v7111, -inf
      %7115 = vmax.xlane.f32.xlu0 %v7114
      %v7116 = vpop.xlane.xlu0 %7115
      %v7117 = vsel %vm6687, %v7112, -inf
      %7118 = vmax.xlane.f32.xlu0 %v7117
      %v7119 = vpop.xlane.xlu0 %7118
      %v7120 = vsel %vm6687, %v7113, -inf
      %7121 = vmax.xlane.f32.xlu0 %v7120
      %v7122 = vpop.xlane.xlu0 %7121
      %v7123 = vsub.f32 %v7111, %v7116
      %v7124 = vsub.f32 %v7112, %v7119
      %v7125 = vsub.f32 %v7113, %v7122
      %v7126 = vmul.f32 %v7123, 1.442695
      %v7127 = vpow.pop %v7126
      %v7128 = vmul.f32 %v7124, 1.442695
      %v7129 = vpow.pop %v7128
      %v7130 = vmul.f32 %v7125, 1.442695
      %v7131 = vpow.pop %v7130
      %v7132 = vsel %vm6687, %v7127, 0.0
      %7133 = vadd.xlane.f32.xlu0 %v7132
      %v7134 = vpop.xlane.xlu0 %7133
      %v7135 = vsel %vm6687, %v7129, 0.0
      %7136 = vadd.xlane.f32.xlu0 %v7135
      %v7137 = vpop.xlane.xlu0 %7136
      %v7138 = vsel %vm6687, %v7131, 0.0
      %7139 = vadd.xlane.f32.xlu0 %v7138
      %v7140 = vpop.xlane.xlu0 %7139
      %v7141 = vrcp.pop %v7134
      %v7142 = vmul.f32 %v7134, %v7141
      %v7143 = vsub.f32 1.0, %v7142
      %v7144 = vmul.f32 %v7141, %v7143
      %v7145 = vadd.f32 %v7141, %v7144
      %vm7146 = vweird.f32 %v7134
      %vm7147 = vweird.f32 %v7141
      %vm7148 = vmor %vm7146, %vm7147
      %v7149 = vsel %vm7148, %v7141, %v7145
      %v7150 = vand.u32 2147483647, %v7134
      %vm7151 = vcmp.eq.f32.partialorder %v7150, 8.507059e+37
      %v7152 = vand.u32 %v7134, 2147483648
      %v7153 = vor.u32 1.1754944e-38, %v7152
      %v7154 = vsel %vm7151, %v7153, %v7149
      %v7155 = vmul.f32 %v7127, %v7154
      %v7156 = vrcp.pop %v7137
      %v7157 = vmul.f32 %v7137, %v7156
      %v7158 = vsub.f32 1.0, %v7157
      %v7159 = vmul.f32 %v7156, %v7158
      %v7160 = vadd.f32 %v7156, %v7159
      %vm7161 = vweird.f32 %v7137
      %vm7162 = vweird.f32 %v7156
      %vm7163 = vmor %vm7161, %vm7162
      %v7164 = vsel %vm7163, %v7156, %v7160
      %v7165 = vand.u32 2147483647, %v7137
      %vm7166 = vcmp.eq.f32.partialorder %v7165, 8.507059e+37
      %v7167 = vand.u32 %v7137, 2147483648
      %v7168 = vor.u32 1.1754944e-38, %v7167
      %v7169 = vsel %vm7166, %v7168, %v7164
      %v7170 = vmul.f32 %v7129, %v7169
      %v7171 = vrcp.pop %v7140
      %v7172 = vmul.f32 %v7140, %v7171
      %v7173 = vsub.f32 1.0, %v7172
      %v7174 = vmul.f32 %v7171, %v7173
      %v7175 = vadd.f32 %v7171, %v7174
      %vm7176 = vweird.f32 %v7140
      %vm7177 = vweird.f32 %v7171
      %vm7178 = vmor %vm7176, %vm7177
      %v7179 = vsel %vm7178, %v7171, %v7175
      %v7180 = vand.u32 2147483647, %v7140
      %vm7181 = vcmp.eq.f32.partialorder %v7180, 8.507059e+37
      %v7182 = vand.u32 %v7140, 2147483648
      %v7183 = vor.u32 1.1754944e-38, %v7182
      %v7184 = vsel %vm7181, %v7183, %v7179
      %v7185 = vmul.f32 %v7131, %v7184
      %v7186 = vpack.c.bf16 %v7155, %v7155
      %v7187 = vpack.c.bf16 %v7170, %v7170
      %v7188 = vpack.c.bf16 %v7185, %v7185
      %7189 = vrot.lane.b32.xlu0 %v6767, 64
      %v7190 = vpop.permute.xlu0 %7189
      %v7193 = vsel %vm1021, %v7186, 0
      %7195 = vmatpush.bf16.msra.mxu0 0
      %7196 = vmatpush.bf16.msra.mxu0 0
      %7197 = vmatpush.bf16.msra.mxu0 0
      %7198 = vmatpush.bf16.msra.mxu0 0
      %7199 = vmatpush.bf16.msra.mxu0 0
      %7200 = vmatpush.bf16.msra.mxu0 0
      %7201 = vmatpush.bf16.msra.mxu0 0
      %7202 = vmatpush.bf16.msra.mxu0 %v7190
      %7203 = vmatmul.bf16.gmra.mxu0 %v7193
      %v7204 = vpop.f32.mrf.mxu0
      %v7205 = vadd.f32 0.0, %v7204
      %v7206 = vpop.f32.mrf.mxu0
      %7207 = vdwg.mxu0
      %7208 = vrot.lane.b32.xlu0 %v6789, 64
      %v7209 = vpop.permute.xlu0 %7208
      %v7212 = vsel %vm1021, %v7187, 0
      %7214 = vmatpush.bf16.msra.mxu0 0
      %7215 = vmatpush.bf16.msra.mxu0 0
      %7216 = vmatpush.bf16.msra.mxu0 0
      %7217 = vmatpush.bf16.msra.mxu0 0
      %7218 = vmatpush.bf16.msra.mxu0 0
      %7219 = vmatpush.bf16.msra.mxu0 0
      %7220 = vmatpush.bf16.msra.mxu0 0
      %7221 = vmatpush.bf16.msra.mxu0 %v7209
      %7222 = vmatmul.bf16.gmra.mxu0 %v7212
      %v7223 = vpop.f32.mrf.mxu0
      %v7224 = vadd.f32 0.0, %v7223
      %v7225 = vpop.f32.mrf.mxu0
      %7226 = vdwg.mxu0
      %7227 = vrot.lane.b32.xlu0 %v6811, 64
      %v7228 = vpop.permute.xlu0 %7227
      %v7231 = vsel %vm1021, %v7188, 0
      %7233 = vmatpush.bf16.msra.mxu0 0
      %7234 = vmatpush.bf16.msra.mxu0 0
      %7235 = vmatpush.bf16.msra.mxu0 0
      %7236 = vmatpush.bf16.msra.mxu0 0
      %7237 = vmatpush.bf16.msra.mxu0 0
      %7238 = vmatpush.bf16.msra.mxu0 0
      %7239 = vmatpush.bf16.msra.mxu0 0
      %7240 = vmatpush.bf16.msra.mxu0 %v7228
      %7241 = vmatmul.bf16.gmra.mxu0 %v7231
      %v7242 = vpop.f32.mrf.mxu0
      %v7243 = vadd.f32 0.0, %v7242
      %v7244 = vpop.f32.mrf.mxu0
      %7245 = vdwg.mxu0
      %7246 = vrot.lane.b32.xlu0 %v6831, 32
      %v7247 = vpop.permute.xlu0 %7246
      %7248 = vrot.lane.b32.xlu0 %v6616, 32
      %v7249 = vpop.permute.xlu0 %7248
      %v7251 = vsel %vm934, %v7247, 0
      %v7254 = vsel %vm934, %v7249, 0
      %7256 = vmatpush.bf16.xpose.msra.mxu0 0
      %7257 = vmatpush.bf16.xpose.msra.mxu0 0
      %7258 = vmatpush.bf16.xpose.msra.mxu0 0
      %7259 = vmatpush.bf16.xpose.msra.mxu0 0
      %7260 = vmatpush.bf16.xpose.msra.mxu0 0
      %7261 = vmatpush.bf16.xpose.msra.mxu0 0
      %7262 = vmatpush.bf16.xpose.msra.mxu0 0
      %7263 = vmatpush.bf16.xpose.msra.mxu0 %v7254
      %7264 = vmatmul.bf16.gmra.mxu0 %v7251
      %v7265 = vpop.f32.mrf.mxu0
      %v7266 = vadd.f32 0.0, %v7265
      %v7267 = vpop.f32.mrf.mxu0
      %7268 = vdwg.mxu0
      %7269 = vrot.lane.b32.xlu0 %v6857, 32
      %v7270 = vpop.permute.xlu0 %7269
      %7271 = vrot.lane.b32.xlu0 %v6640, 32
      %v7272 = vpop.permute.xlu0 %7271
      %v7274 = vsel %vm934, %v7270, 0
      %v7277 = vsel %vm934, %v7272, 0
      %7279 = vmatpush.bf16.xpose.msra.mxu0 0
      %7280 = vmatpush.bf16.xpose.msra.mxu0 0
      %7281 = vmatpush.bf16.xpose.msra.mxu0 0
      %7282 = vmatpush.bf16.xpose.msra.mxu0 0
      %7283 = vmatpush.bf16.xpose.msra.mxu0 0
      %7284 = vmatpush.bf16.xpose.msra.mxu0 0
      %7285 = vmatpush.bf16.xpose.msra.mxu0 0
      %7286 = vmatpush.bf16.xpose.msra.mxu0 %v7277
      %7287 = vmatmul.bf16.gmra.mxu0 %v7274
      %v7288 = vpop.f32.mrf.mxu0
      %v7289 = vadd.f32 0.0, %v7288
      %v7290 = vpop.f32.mrf.mxu0
      %7291 = vdwg.mxu0
      %7292 = vrot.lane.b32.xlu0 %v6883, 32
      %v7293 = vpop.permute.xlu0 %7292
      %7294 = vrot.lane.b32.xlu0 %v6664, 32
      %v7295 = vpop.permute.xlu0 %7294
      %v7297 = vsel %vm934, %v7293, 0
      %v7300 = vsel %vm934, %v7295, 0
      %7302 = vmatpush.bf16.xpose.msra.mxu0 0
      %7303 = vmatpush.bf16.xpose.msra.mxu0 0
      %7304 = vmatpush.bf16.xpose.msra.mxu0 0
      %7305 = vmatpush.bf16.xpose.msra.mxu0 0
      %7306 = vmatpush.bf16.xpose.msra.mxu0 0
      %7307 = vmatpush.bf16.xpose.msra.mxu0 0
      %7308 = vmatpush.bf16.xpose.msra.mxu0 0
      %7309 = vmatpush.bf16.xpose.msra.mxu0 %v7300
      %7310 = vmatmul.bf16.gmra.mxu0 %v7297
      %v7311 = vpop.f32.mrf.mxu0
      %v7312 = vadd.f32 0.0, %v7311
      %v7313 = vpop.f32.mrf.mxu0
      %7314 = vdwg.mxu0
      %v7315 = vmul.f32 %v7266, 0.17677669
      %v7316 = vmul.f32 %v7289, 0.17677669
      %v7317 = vmul.f32 %v7312, 0.17677669
      %v7318 = vsel %vm6687, %v7315, -inf
      %7319 = vmax.xlane.f32.xlu0 %v7318
      %v7320 = vpop.xlane.xlu0 %7319
      %v7321 = vsel %vm6687, %v7316, -inf
      %7322 = vmax.xlane.f32.xlu0 %v7321
      %v7323 = vpop.xlane.xlu0 %7322
      %v7324 = vsel %vm6687, %v7317, -inf
      %7325 = vmax.xlane.f32.xlu0 %v7324
      %v7326 = vpop.xlane.xlu0 %7325
      %v7327 = vsub.f32 %v7315, %v7320
      %v7328 = vsub.f32 %v7316, %v7323
      %v7329 = vsub.f32 %v7317, %v7326
      %v7330 = vmul.f32 %v7327, 1.442695
      %v7331 = vpow.pop %v7330
      %v7332 = vmul.f32 %v7328, 1.442695
      %v7333 = vpow.pop %v7332
      %v7334 = vmul.f32 %v7329, 1.442695
      %v7335 = vpow.pop %v7334
      %v7336 = vsel %vm6687, %v7331, 0.0
      %7337 = vadd.xlane.f32.xlu0 %v7336
      %v7338 = vpop.xlane.xlu0 %7337
      %v7339 = vsel %vm6687, %v7333, 0.0
      %7340 = vadd.xlane.f32.xlu0 %v7339
      %v7341 = vpop.xlane.xlu0 %7340
      %v7342 = vsel %vm6687, %v7335, 0.0
      %7343 = vadd.xlane.f32.xlu0 %v7342
      %v7344 = vpop.xlane.xlu0 %7343
      %v7345 = vrcp.pop %v7338
      %v7346 = vmul.f32 %v7338, %v7345
      %v7347 = vsub.f32 1.0, %v7346
      %v7348 = vmul.f32 %v7345, %v7347
      %v7349 = vadd.f32 %v7345, %v7348
      %vm7350 = vweird.f32 %v7338
      %vm7351 = vweird.f32 %v7345
      %vm7352 = vmor %vm7350, %vm7351
      %v7353 = vsel %vm7352, %v7345, %v7349
      %v7354 = vand.u32 2147483647, %v7338
      %vm7355 = vcmp.eq.f32.partialorder %v7354, 8.507059e+37
      %v7356 = vand.u32 %v7338, 2147483648
      %v7357 = vor.u32 1.1754944e-38, %v7356
      %v7358 = vsel %vm7355, %v7357, %v7353
      %v7359 = vmul.f32 %v7331, %v7358
      %v7360 = vrcp.pop %v7341
      %v7361 = vmul.f32 %v7341, %v7360
      %v7362 = vsub.f32 1.0, %v7361
      %v7363 = vmul.f32 %v7360, %v7362
      %v7364 = vadd.f32 %v7360, %v7363
      %vm7365 = vweird.f32 %v7341
      %vm7366 = vweird.f32 %v7360
      %vm7367 = vmor %vm7365, %vm7366
      %v7368 = vsel %vm7367, %v7360, %v7364
      %v7369 = vand.u32 2147483647, %v7341
      %vm7370 = vcmp.eq.f32.partialorder %v7369, 8.507059e+37
      %v7371 = vand.u32 %v7341, 2147483648
      %v7372 = vor.u32 1.1754944e-38, %v7371
      %v7373 = vsel %vm7370, %v7372, %v7368
      %v7374 = vmul.f32 %v7333, %v7373
      %v7375 = vrcp.pop %v7344
      %v7376 = vmul.f32 %v7344, %v7375
      %v7377 = vsub.f32 1.0, %v7376
      %v7378 = vmul.f32 %v7375, %v7377
      %v7379 = vadd.f32 %v7375, %v7378
      %vm7380 = vweird.f32 %v7344
      %vm7381 = vweird.f32 %v7375
      %vm7382 = vmor %vm7380, %vm7381
      %v7383 = vsel %vm7382, %v7375, %v7379
      %v7384 = vand.u32 2147483647, %v7344
      %vm7385 = vcmp.eq.f32.partialorder %v7384, 8.507059e+37
      %v7386 = vand.u32 %v7344, 2147483648
      %v7387 = vor.u32 1.1754944e-38, %v7386
      %v7388 = vsel %vm7385, %v7387, %v7383
      %v7389 = vmul.f32 %v7335, %v7388
      %v7390 = vpack.c.bf16 %v7359, %v7359
      %v7391 = vpack.c.bf16 %v7374, %v7374
      %v7392 = vpack.c.bf16 %v7389, %v7389
      %7393 = vrot.lane.b32.xlu0 %v6767, 32
      %v7394 = vpop.permute.xlu0 %7393
      %v7397 = vsel %vm1021, %v7390, 0
      %7399 = vmatpush.bf16.msra.mxu0 0
      %7400 = vmatpush.bf16.msra.mxu0 0
      %7401 = vmatpush.bf16.msra.mxu0 0
      %7402 = vmatpush.bf16.msra.mxu0 0
      %7403 = vmatpush.bf16.msra.mxu0 0
      %7404 = vmatpush.bf16.msra.mxu0 0
      %7405 = vmatpush.bf16.msra.mxu0 0
      %7406 = vmatpush.bf16.msra.mxu0 %v7394
      %7407 = vmatmul.bf16.gmra.mxu0 %v7397
      %v7408 = vpop.f32.mrf.mxu0
      %v7409 = vadd.f32 0.0, %v7408
      %v7410 = vpop.f32.mrf.mxu0
      %7411 = vdwg.mxu0
      %7412 = vrot.lane.b32.xlu0 %v6789, 32
      %v7413 = vpop.permute.xlu0 %7412
      %v7416 = vsel %vm1021, %v7391, 0
      %7418 = vmatpush.bf16.msra.mxu0 0
      %7419 = vmatpush.bf16.msra.mxu0 0
      %7420 = vmatpush.bf16.msra.mxu0 0
      %7421 = vmatpush.bf16.msra.mxu0 0
      %7422 = vmatpush.bf16.msra.mxu0 0
      %7423 = vmatpush.bf16.msra.mxu0 0
      %7424 = vmatpush.bf16.msra.mxu0 0
      %7425 = vmatpush.bf16.msra.mxu0 %v7413
      %7426 = vmatmul.bf16.gmra.mxu0 %v7416
      %v7427 = vpop.f32.mrf.mxu0
      %v7428 = vadd.f32 0.0, %v7427
      %v7429 = vpop.f32.mrf.mxu0
      %7430 = vdwg.mxu0
      %7431 = vrot.lane.b32.xlu0 %v6811, 32
      %v7432 = vpop.permute.xlu0 %7431
      %v7435 = vsel %vm1021, %v7392, 0
      %7437 = vmatpush.bf16.msra.mxu0 0
      %7438 = vmatpush.bf16.msra.mxu0 0
      %7439 = vmatpush.bf16.msra.mxu0 0
      %7440 = vmatpush.bf16.msra.mxu0 0
      %7441 = vmatpush.bf16.msra.mxu0 0
      %7442 = vmatpush.bf16.msra.mxu0 0
      %7443 = vmatpush.bf16.msra.mxu0 0
      %7444 = vmatpush.bf16.msra.mxu0 %v7432
      %7445 = vmatmul.bf16.gmra.mxu0 %v7435
      %v7446 = vpop.f32.mrf.mxu0
      %v7447 = vadd.f32 0.0, %v7446
      %v7448 = vpop.f32.mrf.mxu0
      %7449 = vdwg.mxu0
      %7453 = vrot.lane.b32.xlu0 %v7001, 32
      %v7454 = vpop.permute.xlu0 %7453
      %7455 = vrot.lane.b32.xlu0 %v7020, 32
      %v7456 = vpop.permute.xlu0 %7455
      %7457 = vrot.lane.b32.xlu0 %v7039, 32
      %v7458 = vpop.permute.xlu0 %7457
      %7465 = vrot.lane.b32.xlu0 %v7205, 64
      %v7466 = vpop.permute.xlu0 %7465
      %7467 = vrot.lane.b32.xlu0 %v7224, 64
      %v7468 = vpop.permute.xlu0 %7467
      %7469 = vrot.lane.b32.xlu0 %v7243, 64
      %v7470 = vpop.permute.xlu0 %7469
      %7477 = vrot.lane.b32.xlu0 %v7409, 96
      %v7478 = vpop.permute.xlu0 %7477
      %7479 = vrot.lane.b32.xlu0 %v7428, 96
      %v7480 = vpop.permute.xlu0 %7479
      %7481 = vrot.lane.b32.xlu0 %v7447, 96
      %v7482 = vpop.permute.xlu0 %7481
      %v7486 = vsel %vm934, %v6782, %v7454
      %v7487 = vsel %vm934, %v6804, %v7456
      %v7488 = vsel %vm934, %v6826, %v7458
      %v7489 = vsel %vm2243, %v7486, %v7466
      %v7490 = vsel %vm2243, %v7487, %v7468
      %v7491 = vsel %vm2243, %v7488, %v7470
      %v7492 = vsel %vm2250, %v7489, %v7478
      %v7493 = vsel %vm2250, %v7490, %v7480
      %v7494 = vsel %vm2250, %v7491, %v7482
      %v7495 = vld [vmem:[%s4 + $0xc] sm:$0xf]
      %v7496 = vld [vmem:[%s4 + $0x24] sm:$0xf]
      %v7497 = vld [vmem:[%s4 + $0x3c] sm:$0xf]
      %v7498 = vld [vmem:[%s4 + $0x54] sm:$0xf]
      %v7499 = vld [vmem:[%s4 + $0x6c] sm:$0xf]
      %v7500 = vld [vmem:[%s4 + $0x84] sm:$0xf]
      %v7501 = vld [vmem:[%s4 + $0x9c] sm:$0xf]
      %v7502 = vld [vmem:[%s4 + $0xb4] sm:$0xf]
      %v7503 = vld [vmem:[%s4 + $0xcc] sm:$0xf]
      %v7504 = vld [vmem:[%s4 + $0xe4] sm:$0xf]
      %v7505 = vld [vmem:[%s4 + $0xfc] sm:$0xf]
      %v7506 = vld [vmem:[%s4 + $0x114] sm:$0xf]
      %v7507 = vld [vmem:[%s4 + $0x12c] sm:$0xf]
      %v7508 = vld [vmem:[%s4 + $0x144] sm:$0xf]
      %v7509 = vld [vmem:[%s4 + $0x15c] sm:$0xf]
      %v7510 = vld [vmem:[%s4 + $0x174] sm:$0xf]
      %v7511 = vld [vmem:[%s6 + $0x7] sm:$0x1]
      %v7512 = vpack.c.bf16 %v7492, %v7492
      %v7513 = vpack.c.bf16 %v7493, %v7493
      %v7514 = vpack.c.bf16 %v7494, %v7494
      %v7516 = vperm.slane %v7511, 0
      %v7521 = vunpack.c.l.b16 %v7512
      %v7522 = vunpack.c.l.b16 %v7513
      %v7523 = vunpack.c.l.b16 %v7514
      %v7524 = vrot.slane %v7522, 7
      %vm7525 = vcmask 1041409
      %v7526 = vsel %vm7525, %v7524, %v7521
      %v7527 = vrot.slane %v7523, 6
      %vm7528 = vcmask 1042434
      %v7529 = vsel %vm7528, %v7527, %v7526
      %v7530 = vpack.c.b16 %v7529, %v7529
      %v7548 = vunpack.c.l.b16 %v7495
      %v7549 = vunpack.c.l.b16 %v7496
      %v7550 = vunpack.c.l.b16 %v7497
      %v7551 = vunpack.c.l.b16 %v7498
      %v7552 = vunpack.c.l.b16 %v7499
      %v7553 = vunpack.c.l.b16 %v7500
      %v7554 = vunpack.c.l.b16 %v7501
      %v7555 = vunpack.c.l.b16 %v7502
      %v7556 = vunpack.c.l.b16 %v7503
      %v7557 = vunpack.c.l.b16 %v7504
      %v7558 = vunpack.c.l.b16 %v7505
      %v7559 = vunpack.c.l.b16 %v7506
      %v7560 = vunpack.c.l.b16 %v7507
      %v7561 = vunpack.c.l.b16 %v7508
      %v7562 = vunpack.c.l.b16 %v7509
      %v7563 = vunpack.c.l.b16 %v7510
      %v7564 = vpack.c.b16 %v7549, %v7548
      %v7565 = vpack.c.b16 %v7551, %v7550
      %v7566 = vpack.c.b16 %v7553, %v7552
      %v7567 = vpack.c.b16 %v7555, %v7554
      %v7568 = vpack.c.b16 %v7557, %v7556
      %v7569 = vpack.c.b16 %v7559, %v7558
      %v7570 = vpack.c.b16 %v7561, %v7560
      %v7571 = vpack.c.b16 %v7563, %v7562
      %7580 = vmatpush.bf16.msra.mxu0 %v7571
      %7581 = vmatpush.bf16.msra.mxu0 %v7570
      %7582 = vmatpush.bf16.msra.mxu0 %v7569
      %7583 = vmatpush.bf16.msra.mxu0 %v7568
      %7584 = vmatpush.bf16.msra.mxu0 %v7567
      %7585 = vmatpush.bf16.msra.mxu0 %v7566
      %7586 = vmatpush.bf16.msra.mxu0 %v7565
      %7587 = vmatpush.bf16.msra.mxu0 %v7564
      %7588 = vmatmul.bf16.gmra.mxu0 %v7530
      %v7589 = vpop.f32.mrf.mxu0
      %v7590 = vadd.f32 %v7516, %v7589
      %v7591 = vpop.f32.mrf.mxu0
      %7592 = vdwg.mxu0
      %v7593 = vld [vmem:[%s6 + $0x8] sm:$0x1]
      %v7594 = vld [vmem:[%s6 + $0x9] sm:$0x1]
      %vm7595 = vcmask 1042432
      %v7596 = vsel %vm7595, %v7590, 0.0
      %7597 = vadd.xlane.f32.xlu0 %v7596
      %v7598 = vpop.xlane.xlu0 %7597
      %v7599 = vmul.f32 %v7598, %v536
      %v7600 = vsub.f32 %v7590, %v7599
      %v7601 = vmul.f32 %v7600, %v7600
      %v7602 = vsel %vm7595, %v7601, 0.0
      %7603 = vadd.xlane.f32.xlu0 %v7602
      %v7604 = vpop.xlane.xlu0 %7603
      %v7605 = vmul.f32 %v7604, %v536
      %v7606 = vadd.f32 %v7605, 1e-06
      %v7607 = vrsqrt.pop %v7606
      %v7608 = vmul.f32 %v7607, %v7606
      %v7609 = vmul.f32 %v7608, %v7607
      %v7610 = vmul.f32 0.5, %v7609
      %v7611 = vsub.f32 1.5, %v7610
      %v7612 = vmul.f32 %v7607, %v7611
      %vm7613 = vweird.f32 %v7606
      %vm7614 = vweird.f32 %v7607
      %vm7615 = vmor %vm7613, %vm7614
      %v7616 = vsel %vm7615, %v7607, %v7612
      %v7617 = vmul.f32 %v7600, %v7616
      %v7619 = vperm.slane %v7593, 0
      %v7621 = vmul.f32 %v7617, %v7619
      %v7623 = vperm.slane %v7594, 0
      %v7625 = vadd.f32 %v7621, %v7623
      %v7626 = vld [vmem:[%s4 + $0x10] sm:$0xff]
      %v7627 = vld [vmem:[%s4 + $0x28] sm:$0xff]
      %v7628 = vld [vmem:[%s4 + $0x40] sm:$0xff]
      %v7629 = vld [vmem:[%s4 + $0x58] sm:$0xff]
      %v7630 = vld [vmem:[%s4 + $0x70] sm:$0xff]
      %v7631 = vld [vmem:[%s4 + $0x88] sm:$0xff]
      %v7632 = vld [vmem:[%s4 + $0xa0] sm:$0xff]
      %v7633 = vld [vmem:[%s4 + $0xb8] sm:$0xff]
      %v7634 = vld [vmem:[%s4 + $0xd0] sm:$0xff]
      %v7635 = vld [vmem:[%s4 + $0xe8] sm:$0xff]
      %v7636 = vld [vmem:[%s4 + $0x100] sm:$0xff]
      %v7637 = vld [vmem:[%s4 + $0x118] sm:$0xff]
      %v7638 = vld [vmem:[%s4 + $0x130] sm:$0xff]
      %v7639 = vld [vmem:[%s4 + $0x148] sm:$0xff]
      %v7640 = vld [vmem:[%s4 + $0x160] sm:$0xff]
      %v7641 = vld [vmem:[%s4 + $0x178] sm:$0xff]
      %v7642 = vld [vmem:[%s6 + $0xa] sm:$0x3]
      %v7643 = vpack.c.bf16 %v7625, %v7625
      %v7645 = vperm.slane %v7642, 0
      %v7646 = vperm.slane %v7642, 1
      %v7665 = vunpack.c.l.b16 %v7626
      %v7666 = vunpack.c.h.b16 %v7626
      %v7667 = vunpack.c.l.b16 %v7627
      %v7668 = vunpack.c.h.b16 %v7627
      %v7669 = vunpack.c.l.b16 %v7628
      %v7670 = vunpack.c.h.b16 %v7628
      %v7671 = vunpack.c.l.b16 %v7629
      %v7672 = vunpack.c.h.b16 %v7629
      %v7673 = vunpack.c.l.b16 %v7630
      %v7674 = vunpack.c.h.b16 %v7630
      %v7675 = vunpack.c.l.b16 %v7631
      %v7676 = vunpack.c.h.b16 %v7631
      %v7677 = vunpack.c.l.b16 %v7632
      %v7678 = vunpack.c.h.b16 %v7632
      %v7679 = vunpack.c.l.b16 %v7633
      %v7680 = vunpack.c.h.b16 %v7633
      %v7681 = vunpack.c.l.b16 %v7634
      %v7682 = vunpack.c.h.b16 %v7634
      %v7683 = vunpack.c.l.b16 %v7635
      %v7684 = vunpack.c.h.b16 %v7635
      %v7685 = vunpack.c.l.b16 %v7636
      %v7686 = vunpack.c.h.b16 %v7636
      %v7687 = vunpack.c.l.b16 %v7637
      %v7688 = vunpack.c.h.b16 %v7637
      %v7689 = vunpack.c.l.b16 %v7638
      %v7690 = vunpack.c.h.b16 %v7638
      %v7691 = vunpack.c.l.b16 %v7639
      %v7692 = vunpack.c.h.b16 %v7639
      %v7693 = vunpack.c.l.b16 %v7640
      %v7694 = vunpack.c.h.b16 %v7640
      %v7695 = vunpack.c.l.b16 %v7641
      %v7696 = vunpack.c.h.b16 %v7641
      %v7697 = vpack.c.b16 %v7667, %v7665
      %v7698 = vpack.c.b16 %v7668, %v7666
      %v7699 = vpack.c.b16 %v7671, %v7669
      %v7700 = vpack.c.b16 %v7672, %v7670
      %v7701 = vpack.c.b16 %v7675, %v7673
      %v7702 = vpack.c.b16 %v7676, %v7674
      %v7703 = vpack.c.b16 %v7679, %v7677
      %v7704 = vpack.c.b16 %v7680, %v7678
      %v7705 = vpack.c.b16 %v7683, %v7681
      %v7706 = vpack.c.b16 %v7684, %v7682
      %v7707 = vpack.c.b16 %v7687, %v7685
      %v7708 = vpack.c.b16 %v7688, %v7686
      %v7709 = vpack.c.b16 %v7691, %v7689
      %v7710 = vpack.c.b16 %v7692, %v7690
      %v7711 = vpack.c.b16 %v7695, %v7693
      %v7712 = vpack.c.b16 %v7696, %v7694
      %7729 = vmatpush.bf16.msra.mxu0 %v7711
      %7730 = vmatpush.bf16.msra.mxu0 %v7709
      %7731 = vmatpush.bf16.msra.mxu0 %v7707
      %7732 = vmatpush.bf16.msra.mxu0 %v7705
      %7733 = vmatpush.bf16.msra.mxu0 %v7703
      %7734 = vmatpush.bf16.msra.mxu0 %v7701
      %7735 = vmatpush.bf16.msra.mxu0 %v7699
      %7736 = vmatpush.bf16.msra.mxu0 %v7697
      %7737 = vmatmul.bf16.gmra.mxu0 %v7643
      %v7738 = vpop.f32.mrf.mxu0
      %v7739 = vadd.f32 %v7645, %v7738
      %v7740 = vpop.f32.mrf.mxu0
      %7741 = vdwg.mxu0
      %7742 = vmatpush.bf16.msra.mxu0 %v7712
      %7743 = vmatpush.bf16.msra.mxu0 %v7710
      %7744 = vmatpush.bf16.msra.mxu0 %v7708
      %7745 = vmatpush.bf16.msra.mxu0 %v7706
      %7746 = vmatpush.bf16.msra.mxu0 %v7704
      %7747 = vmatpush.bf16.msra.mxu0 %v7702
      %7748 = vmatpush.bf16.msra.mxu0 %v7700
      %7749 = vmatpush.bf16.msra.mxu0 %v7698
      %7750 = vmatmul.bf16.gmra.mxu0 %v7643
      %v7751 = vpop.f32.mrf.mxu0
      %v7752 = vadd.f32 %v7646, %v7751
      %v7753 = vpop.f32.mrf.mxu0
      %7754 = vdwg.mxu0
      %v7755 = vmul.f32 %v7739, 0.5
      %v7756 = vmul.f32 %v7752, 0.5
      %v7757 = vmul.f32 %v7739, 0.70710677
      %v7758 = vmul.f32 %v7752, 0.70710677
      %v7759 = vmul.f32 %v7757, %v7757
      %v7760 = vmin.f32 16.0, %v7759
      %v7761 = vmul.f32 %v7760, 2.1237322e-06
      %v7762 = vadd.f32 %v7761, 0.00028619796
      %v7763 = vmul.f32 %v7760, %v7762
      %v7764 = vadd.f32 %v7763, 0.0036580483
      %v7765 = vmul.f32 %v7760, %v7764
      %v7766 = vadd.f32 %v7765, 0.05243302
      %v7767 = vmul.f32 %v7760, %v7766
      %v7768 = vadd.f32 %v7767, 0.18741608
      %v7769 = vmul.f32 %v7760, %v7768
      %v7770 = vadd.f32 %v7769, 1.1283791
      %v7771 = vmul.f32 %v7757, %v7770
      %v7772 = vmul.f32 %v7760, 3.8918573e-05
      %v7773 = vadd.f32 %v7772, 0.001143296
      %v7774 = vmul.f32 %v7760, %v7773
      %v7775 = vadd.f32 %v7774, 0.014752088
      %v7776 = vmul.f32 %v7760, %v7775
      %v7777 = vadd.f32 %v7776, 0.112945676
      %v7778 = vmul.f32 %v7760, %v7777
      %v7779 = vadd.f32 %v7778, 0.4994258
      %v7780 = vmul.f32 %v7760, %v7779
      %v7781 = vadd.f32 %v7780, 1.0
      %v7782 = vrcp.pop %v7781
      %v7783 = vmul.f32 %v7781, %v7782
      %v7784 = vsub.f32 1.0, %v7783
      %v7785 = vmul.f32 %v7782, %v7784
      %v7786 = vadd.f32 %v7782, %v7785
      %vm7787 = vweird.f32 %v7781
      %vm7788 = vweird.f32 %v7782
      %vm7789 = vmor %vm7787, %vm7788
      %v7790 = vsel %vm7789, %v7782, %v7786
      %v7791 = vand.u32 2147483647, %v7781
      %vm7792 = vcmp.eq.f32.partialorder %v7791, 8.507059e+37
      %v7793 = vand.u32 %v7781, 2147483648
      %v7794 = vor.u32 1.1754944e-38, %v7793
      %v7795 = vsel %vm7792, %v7794, %v7790
      %v7796 = vmul.f32 %v7771, %v7795
      %v7797 = vmin.f32 %v7796, 1.0
      %v7798 = vmax.f32 %v7797, -1.0
      %v7799 = vmul.f32 %v7758, %v7758
      %v7800 = vmin.f32 16.0, %v7799
      %v7801 = vmul.f32 %v7800, 2.1237322e-06
      %v7802 = vadd.f32 %v7801, 0.00028619796
      %v7803 = vmul.f32 %v7800, %v7802
      %v7804 = vadd.f32 %v7803, 0.0036580483
      %v7805 = vmul.f32 %v7800, %v7804
      %v7806 = vadd.f32 %v7805, 0.05243302
      %v7807 = vmul.f32 %v7800, %v7806
      %v7808 = vadd.f32 %v7807, 0.18741608
      %v7809 = vmul.f32 %v7800, %v7808
      %v7810 = vadd.f32 %v7809, 1.1283791
      %v7811 = vmul.f32 %v7758, %v7810
      %v7812 = vmul.f32 %v7800, 3.8918573e-05
      %v7813 = vadd.f32 %v7812, 0.001143296
      %v7814 = vmul.f32 %v7800, %v7813
      %v7815 = vadd.f32 %v7814, 0.014752088
      %v7816 = vmul.f32 %v7800, %v7815
      %v7817 = vadd.f32 %v7816, 0.112945676
      %v7818 = vmul.f32 %v7800, %v7817
      %v7819 = vadd.f32 %v7818, 0.4994258
      %v7820 = vmul.f32 %v7800, %v7819
      %v7821 = vadd.f32 %v7820, 1.0
      %v7822 = vrcp.pop %v7821
      %v7823 = vmul.f32 %v7821, %v7822
      %v7824 = vsub.f32 1.0, %v7823
      %v7825 = vmul.f32 %v7822, %v7824
      %v7826 = vadd.f32 %v7822, %v7825
      %vm7827 = vweird.f32 %v7821
      %vm7828 = vweird.f32 %v7822
      %vm7829 = vmor %vm7827, %vm7828
      %v7830 = vsel %vm7829, %v7822, %v7826
      %v7831 = vand.u32 2147483647, %v7821
      %vm7832 = vcmp.eq.f32.partialorder %v7831, 8.507059e+37
      %v7833 = vand.u32 %v7821, 2147483648
      %v7834 = vor.u32 1.1754944e-38, %v7833
      %v7835 = vsel %vm7832, %v7834, %v7830
      %v7836 = vmul.f32 %v7811, %v7835
      %v7837 = vmin.f32 %v7836, 1.0
      %v7838 = vmax.f32 %v7837, -1.0
      %v7839 = vadd.f32 %v7798, 1.0
      %v7840 = vadd.f32 %v7838, 1.0
      %v7841 = vmul.f32 %v7755, %v7839
      %v7842 = vmul.f32 %v7756, %v7840
      %v7843 = vld [vmem:[%s5 + $0x4] sm:$0xf]
      %v7844 = vld [vmem:[%s5 + $0xc] sm:$0xf]
      %v7845 = vld [vmem:[%s5 + $0x14] sm:$0xf]
      %v7846 = vld [vmem:[%s5 + $0x1c] sm:$0xf]
      %v7847 = vld [vmem:[%s5 + $0x24] sm:$0xf]
      %v7848 = vld [vmem:[%s5 + $0x2c] sm:$0xf]
      %v7849 = vld [vmem:[%s5 + $0x34] sm:$0xf]
      %v7850 = vld [vmem:[%s5 + $0x3c] sm:$0xf]
      %v7851 = vld [vmem:[%s5 + $0x44] sm:$0xf]
      %v7852 = vld [vmem:[%s5 + $0x4c] sm:$0xf]
      %v7853 = vld [vmem:[%s5 + $0x54] sm:$0xf]
      %v7854 = vld [vmem:[%s5 + $0x5c] sm:$0xf]
      %v7855 = vld [vmem:[%s5 + $0x64] sm:$0xf]
      %v7856 = vld [vmem:[%s5 + $0x6c] sm:$0xf]
      %v7857 = vld [vmem:[%s5 + $0x74] sm:$0xf]
      %v7858 = vld [vmem:[%s5 + $0x7c] sm:$0xf]
      %v7859 = vld [vmem:[%s5 + $0x84] sm:$0xf]
      %v7860 = vld [vmem:[%s5 + $0x8c] sm:$0xf]
      %v7861 = vld [vmem:[%s5 + $0x94] sm:$0xf]
      %v7862 = vld [vmem:[%s5 + $0x9c] sm:$0xf]
      %v7863 = vld [vmem:[%s5 + $0xa4] sm:$0xf]
      %v7864 = vld [vmem:[%s5 + $0xac] sm:$0xf]
      %v7865 = vld [vmem:[%s5 + $0xb4] sm:$0xf]
      %v7866 = vld [vmem:[%s5 + $0xbc] sm:$0xf]
      %v7867 = vld [vmem:[%s5 + $0xc4] sm:$0xf]
      %v7868 = vld [vmem:[%s5 + $0xcc] sm:$0xf]
      %v7869 = vld [vmem:[%s5 + $0xd4] sm:$0xf]
      %v7870 = vld [vmem:[%s5 + $0xdc] sm:$0xf]
      %v7871 = vld [vmem:[%s5 + $0xe4] sm:$0xf]
      %v7872 = vld [vmem:[%s5 + $0xec] sm:$0xf]
      %v7873 = vld [vmem:[%s5 + $0xf4] sm:$0xf]
      %v7874 = vld [vmem:[%s5 + $0xfc] sm:$0xf]
      %v7875 = vld [vmem:[%s6 + $0xc] sm:$0x1]
      %v7876 = vpack.c.bf16 %v7841, %v7841
      %v7877 = vpack.c.bf16 %v7842, %v7842
      %v7879 = vperm.slane %v7875, 0
      %v7913 = vunpack.c.l.b16 %v7843
      %v7914 = vunpack.c.l.b16 %v7844
      %v7915 = vunpack.c.l.b16 %v7845
      %v7916 = vunpack.c.l.b16 %v7846
      %v7917 = vunpack.c.l.b16 %v7847
      %v7918 = vunpack.c.l.b16 %v7848
      %v7919 = vunpack.c.l.b16 %v7849
      %v7920 = vunpack.c.l.b16 %v7850
      %v7921 = vunpack.c.l.b16 %v7851
      %v7922 = vunpack.c.l.b16 %v7852
      %v7923 = vunpack.c.l.b16 %v7853
      %v7924 = vunpack.c.l.b16 %v7854
      %v7925 = vunpack.c.l.b16 %v7855
      %v7926 = vunpack.c.l.b16 %v7856
      %v7927 = vunpack.c.l.b16 %v7857
      %v7928 = vunpack.c.l.b16 %v7858
      %v7929 = vunpack.c.l.b16 %v7859
      %v7930 = vunpack.c.l.b16 %v7860
      %v7931 = vunpack.c.l.b16 %v7861
      %v7932 = vunpack.c.l.b16 %v7862
      %v7933 = vunpack.c.l.b16 %v7863
      %v7934 = vunpack.c.l.b16 %v7864
      %v7935 = vunpack.c.l.b16 %v7865
      %v7936 = vunpack.c.l.b16 %v7866
      %v7937 = vunpack.c.l.b16 %v7867
      %v7938 = vunpack.c.l.b16 %v7868
      %v7939 = vunpack.c.l.b16 %v7869
      %v7940 = vunpack.c.l.b16 %v7870
      %v7941 = vunpack.c.l.b16 %v7871
      %v7942 = vunpack.c.l.b16 %v7872
      %v7943 = vunpack.c.l.b16 %v7873
      %v7944 = vunpack.c.l.b16 %v7874
      %v7945 = vpack.c.b16 %v7914, %v7913
      %v7946 = vpack.c.b16 %v7916, %v7915
      %v7947 = vpack.c.b16 %v7918, %v7917
      %v7948 = vpack.c.b16 %v7920, %v7919
      %v7949 = vpack.c.b16 %v7922, %v7921
      %v7950 = vpack.c.b16 %v7924, %v7923
      %v7951 = vpack.c.b16 %v7926, %v7925
      %v7952 = vpack.c.b16 %v7928, %v7927
      %v7953 = vpack.c.b16 %v7930, %v7929
      %v7954 = vpack.c.b16 %v7932, %v7931
      %v7955 = vpack.c.b16 %v7934, %v7933
      %v7956 = vpack.c.b16 %v7936, %v7935
      %v7957 = vpack.c.b16 %v7938, %v7937
      %v7958 = vpack.c.b16 %v7940, %v7939
      %v7959 = vpack.c.b16 %v7942, %v7941
      %v7960 = vpack.c.b16 %v7944, %v7943
      %7977 = vmatpush.bf16.msra.mxu0 %v7952
      %7978 = vmatpush.bf16.msra.mxu0 %v7951
      %7979 = vmatpush.bf16.msra.mxu0 %v7950
      %7980 = vmatpush.bf16.msra.mxu0 %v7949
      %7981 = vmatpush.bf16.msra.mxu0 %v7948
      %7982 = vmatpush.bf16.msra.mxu0 %v7947
      %7983 = vmatpush.bf16.msra.mxu0 %v7946
      %7984 = vmatpush.bf16.msra.mxu0 %v7945
      %7985 = vmatmul.bf16.gmra.mxu0 %v7876
      %v7986 = vpop.f32.mrf.mxu0
      %v7987 = vadd.f32 %v7879, %v7986
      %v7988 = vpop.f32.mrf.mxu0
      %7989 = vdwg.mxu0
      %7990 = vmatpush.bf16.msra.mxu0 %v7960
      %7991 = vmatpush.bf16.msra.mxu0 %v7959
      %7992 = vmatpush.bf16.msra.mxu0 %v7958
      %7993 = vmatpush.bf16.msra.mxu0 %v7957
      %7994 = vmatpush.bf16.msra.mxu0 %v7956
      %7995 = vmatpush.bf16.msra.mxu0 %v7955
      %7996 = vmatpush.bf16.msra.mxu0 %v7954
      %7997 = vmatpush.bf16.msra.mxu0 %v7953
      %7998 = vmatmul.bf16.gmra.mxu0 %v7877
      %v7999 = vpop.f32.mrf.mxu0
      %v8000 = vadd.f32 %v7987, %v7999
      %v8001 = vpop.f32.mrf.mxu0
      %8002 = vdwg.mxu0
      %v8003 = vadd.f32 %v7590, %v8000
      %8004 = vst [vmem:[%s308] sm:$0x7] %v8003
      %p8005 = scmp.lt.s32.totalorder %s19, 1
      %s8006 = scalar_select %p8005, %s19, 1
      %s8007 = smul.addr %s8006, 4
      %s8008 = scalar_lea.vmem %s8, %s8007
      // Predicated region
      $region53: #{siglip_eecoder_forward.1} parent=51 // pred_check
        %p8009 = pneg %p210
      $region54: #{siglip_eecoder_forward.1} parent=51 // pred_check_branch
        %8011 = sbr.rel (%p8009) target = $region56
      $region55: #{siglip_eecoder_forward.1} parent=51 // pred_region
        _
      $region56: #{siglip_eecoder_forward.1} parent=51 // pred_fallthru
        _
    $region52: #{siglip_eecoder_forward.1} parent=5 // pred_fallthru
      _
    %p8012 = scmp.le.s32.totalorder 2, %s14
    // Predicated region
    $region57: #{siglip_eecoder_forward.1} parent=5 // pred_check
      %p8013 = pneg %p8012
    $region58: #{siglip_eecoder_forward.1} parent=5 // pred_check_branch
      %8015 = sbr.rel (%p8013) target = $region60
    $region59: #{siglip_eecoder_forward.1} parent=5 // pred_region
      %s8016 = ssub.s32 %s14, 2
      // Predicated region
      $region61: #{siglip_eecoder_forward.1} parent=59 // pred_check
        %p8017 = pneg %p216
      $region62: #{siglip_eecoder_forward.1} parent=59 // pred_check_branch
        %8019 = sbr.rel (%p8017) target = $region64
      $region63: #{siglip_eecoder_forward.1} parent=59 // pred_region
        %p8020 = scmp.lt.s32.totalorder %s20, 1
        %s8021 = scalar_select %p8020, %s20, 1
        %s8022 = smul.addr %s8021, 4
        %s8023 = scalar_lea.vmem %s8, %s8022
      $region64: #{siglip_eecoder_forward.1} parent=59 // pred_fallthru
        _
    $region60: #{siglip_eecoder_forward.1} parent=5 // pred_fallthru
      _
  $region6: #{siglip_eecoder_forward.1} parent=0 // loop_footer
    %s18 = sadd.s32 1, %s14
  $region7: #{siglip_eecoder_forward.1} parent=0 // loop_footer_branch
    %13 = sbr.rel target = $region3
  $region8: #{siglip_eecoder_forward.1} parent=0 // loop_exit
    _

</llo_original>
